<compile_context>
chip_gen: v5e
topology: v5e:2x2
jax: 0.10.0
libtpu: 0.0.40
codegen_flags: <defaults>
</compile_context>

<pallas_src>
import functools

import jax
import jax.numpy as jnp
from jax.experimental import pallas as pl
from jax.experimental.pallas import tpu as pltpu


# ----------------------------------------------------------------------------
# Kernel 1: fused conv(5x5, valid) GEMM + bias + maxpool(2x2) + tanh
# ----------------------------------------------------------------------------
def _conv_pool_tanh_kernel(pa_ref, pb_ref, pc_ref, pd_ref, w_ref, b_ref, o_ref):
    # Four im2col patch matrices, one per 2x2 pool position, share one weight.
    m = jnp.dot(pa_ref[...], w_ref[...], preferred_element_type=jnp.float32)
    m = jnp.maximum(m, jnp.dot(pb_ref[...], w_ref[...],
                               preferred_element_type=jnp.float32))
    m = jnp.maximum(m, jnp.dot(pc_ref[...], w_ref[...],
                               preferred_element_type=jnp.float32))
    m = jnp.maximum(m, jnp.dot(pd_ref[...], w_ref[...],
                               preferred_element_type=jnp.float32))
    # max(y + b) == max(y) + b (same bias for all four); tanh afterwards.
    o_ref[...] = jnp.tanh(m + b_ref[...]).astype(o_ref.dtype)


def _row_tiles(m, target=1024):
    """Large row tiles; >=2 grid steps when there is enough work (v7x megacore)."""
    if m <= 256:
        return 1, m, m
    grid = max(2, -(-m // target))
    tm = ((m + grid - 1) // grid + 7) // 8 * 8
    return grid, tm, grid * tm


def conv_pool_tanh(groups, w2d, b):
    """groups: 4 patch matrices (M, K) grouped by pool position.
    w2d: (K, Cout) GEMM-ready conv weight, b: (1, Cout).  Returns (M, Cout)."""
    M, K = groups[0].shape
    Cout = w2d.shape[1]
    grid, tm, Mpad = _row_tiles(M)
    if Mpad != M:
        groups = [jnp.pad(g, ((0, Mpad - M), (0, 0))) for g in groups]
    out = pl.pallas_call(
        _conv_pool_tanh_kernel,
        out_shape=jax.ShapeDtypeStruct((Mpad, Cout), jnp.float32),
        grid_spec=pltpu.PrefetchScalarGridSpec(
            num_scalar_prefetch=0,
            grid=(grid,),
            in_specs=[pl.BlockSpec((tm, K), lambda i: (i, 0)) for _ in range(4)]
            + [
                pl.BlockSpec((K, Cout), lambda i: (0, 0)),
                pl.BlockSpec((1, Cout), lambda i: (0, 0)),
            ],
            out_specs=pl.BlockSpec((tm, Cout), lambda i: (i, 0)),
        ),
        compiler_params=pltpu.CompilerParams(dimension_semantics=("parallel",)),
    )(*groups, w2d, b)
    return out[:M] if Mpad != M else out


# ----------------------------------------------------------------------------
# Kernel 2: conv3 + RNN (hoisted input projection) + mean + fc/fc2 + compare
# ----------------------------------------------------------------------------
def _rnn_fc_compare_kernel(
    x3_ref, w3_ref, b3_ref,
    wih_ref, whh_ref, bih_ref, bhh_ref,
    hand_ref, wfcs_ref, wfch_ref, bfc_ref,
    wfc2_ref, bfc2_ref,
    dt_ref, wcq1_ref, wct_ref, wcq2_ref, bc1_ref, wc2_ref, bc2_ref,
    o_ref,
    xproj_scr, emb_scr,
    *, seq_len, pair_batch,
):
    nb = pair_batch          # 2B sequences (img1 batch stacked over img2 batch)
    half = nb // 2           # B

    # conv3 GEMM (flatten is trivial: 1x1 spatial) fused with the RNN input
    # projection, hoisted out of the recurrence as one batched (T*2B, F) GEMM.
    feats = (
        jnp.dot(x3_ref[...], w3_ref[...], preferred_element_type=jnp.float32)
        + b3_ref[...]
    )
    xproj_scr[...] = (
        jnp.dot(feats, wih_ref[...], preferred_element_type=jnp.float32)
        + bih_ref[...] + bhh_ref[...]   # PyTorch RNN adds both biases each step
    )

    # tanh RNN (h0 = 0) + running sum for the temporal mean.  T is small, so a
    # static unroll keeps both matmuls / tanh / add visible to the scheduler.
    h = jnp.tanh(xproj_scr[pl.ds(0, nb), :])
    s = h
    for t in range(1, seq_len):
        xt = xproj_scr[pl.ds(t * nb, nb), :]
        h = jnp.tanh(
            xt + jnp.dot(h, whh_ref[...], preferred_element_type=jnp.float32)
        )
        s = s + h
    seq = s * (1.0 / seq_len)                              # mean over time

    # fc / fc2; concat([seq, handcrafted]) folded into a pre-split fc weight.
    fc1 = (
        jnp.dot(seq, wfcs_ref[...], preferred_element_type=jnp.float32)
        + jnp.dot(hand_ref[...], wfch_ref[...], preferred_element_type=jnp.float32)
        + bfc_ref[...]
    )
    emb_scr[...] = (
        jnp.dot(fc1, wfc2_ref[...], preferred_element_type=jnp.float32)
        + bfc2_ref[...]
    )

    # EmbeddingComparisonModel: cat([q1, |t1 - t2|, q2]) @ W1 as partial matmuls.
    q1 = emb_scr[pl.ds(0, half), :]
    q2 = emb_scr[pl.ds(half, half), :]
    z1 = (
        jnp.dot(q1, wcq1_ref[...], preferred_element_type=jnp.float32)
        + jnp.dot(q2, wcq2_ref[...], preferred_element_type=jnp.float32)
        + dt_ref[...] * wct_ref[...]      # (B,1) * (1,64) broadcast == dt @ W_t
        + bc1_ref[...]
    )
    h1 = 1.0 / (1.0 + jnp.exp(-z1))                        # sigmoid
    z2 = jnp.sum(h1 * wc2_ref[...], axis=-1, keepdims=True) + bc2_ref[...]
    o_ref[...] = (1.0 / (1.0 + jnp.exp(-z2))).astype(o_ref.dtype)


def rnn_fc_compare(params, x3, hand, dt, *, seq_len, pair_batch):
    N = x3.shape[0]
    Hd = params["rnn_w_hh"].shape[0]
    E = params["fc2_w"].shape[1]
    B = pair_batch // 2
    inputs = (
        x3, params["conv3_w"], params["conv3_b"],
        params["rnn_w_ih"], params["rnn_w_hh"],
        params["rnn_b_ih"], params["rnn_b_hh"],
        hand, params["fc_w_seq"], params["fc_w_hand"], params["fc_b"],
        params["fc2_w"], params["fc2_b"],
        dt, params["cmp_w_q1"], params["cmp_w_t"], params["cmp_w_q2"],
        params["cmp_b1"], params["cmp_w2"], params["cmp_b2"],
    )
    in_specs = [pl.BlockSpec(a.shape, lambda i: (0, 0)) for a in inputs]
    return pl.pallas_call(
        functools.partial(
            _rnn_fc_compare_kernel, seq_len=seq_len, pair_batch=pair_batch
        ),
        out_shape=jax.ShapeDtypeStruct((B, 1), jnp.float32),
        grid_spec=pltpu.PrefetchScalarGridSpec(
            num_scalar_prefetch=0,
            grid=(1,),
            in_specs=in_specs,
            out_specs=pl.BlockSpec((B, 1), lambda i: (0, 0)),
            scratch_shapes=[
                pltpu.VMEM((N, Hd), jnp.float32),            # hoisted x @ W_ih
                pltpu.VMEM((pair_batch, E), jnp.float32),    # embeddings
            ],
        ),
        compiler_params=pltpu.CompilerParams(dimension_semantics=("arbitrary",)),
    )(*inputs)


# ----------------------------------------------------------------------------
# Glue: pool-grouped im2col and the full Siamese forward
# ----------------------------------------------------------------------------
def _im2col_pool_groups(x, kh=5, kw=5):
    """x: (N, H, W, C) -> 4 patch matrices (N*Ho2*Wo2, kh*kw*C), one per 2x2
    pool position, plus the pooled spatial shape.  K ordering is (di, dj, ci),
    matching the (kh*kw*Cin, Cout) conv weight layout."""
    N, H, W, C = x.shape
    Ho, Wo = H - kh + 1, W - kw + 1
    Ho2, Wo2 = Ho // 2, Wo // 2
    cols = [x[:, di:di + Ho, dj:dj + Wo, :]
            for di in range(kh) for dj in range(kw)]
    p = jnp.concatenate(cols, axis=-1)                 # (N, Ho, Wo, kh*kw*C)
    K = kh * kw * C
    groups = []
    for pi in (0, 1):
        for pj in (0, 1):
            g = p[:, pi:pi + 2 * Ho2:2, pj:pj + 2 * Wo2:2, :]
            groups.append(g.reshape(N * Ho2 * Wo2, K))
    return groups, (N, Ho2, Wo2)


def siamese_forward(params, img1, feat1, img2, feat2):
    """img*: (B, T, C, H, W) f32; feat*: (B, handcraft_feat_len) with the
    timestamp in column 0 (as in the reference wrapper)."""
    B, T, C, H, W = img1.shape

    # Time / handcrafted split (matches the reference wrapper's forward).
    dt = jnp.abs(feat1[:, 0:1] - feat2[:, 0:1])                         # (B, 1)
    hand = jnp.concatenate([feat1[:, 1:], feat2[:, 1:]], axis=0)        # (2B, F_h)

    # Shared (Siamese) head: run both image stacks as ONE batch of 2B sequences.
    images = jnp.concatenate([img1, img2], axis=0)                      # (2B,T,C,H,W)
    # Single layout change: frame index = t * 2B + b  (t-major for the RNN).
    x = jnp.transpose(images, (1, 0, 3, 4, 2)).reshape(T * 2 * B, H, W, C)

    # conv1 + maxpool + tanh (one fused pallas_call)
    g1, (N, h1, w1) = _im2col_pool_groups(x)
    y1 = conv_pool_tanh(g1, params["conv1_w"], params["conv1_b"])
    y1 = y1.reshape(N, h1, w1, -1)

    # conv2 + maxpool + tanh (one fused pallas_call)
    g2, (N, h2, w2) = _im2col_pool_groups(y1)
    y2 = conv_pool_tanh(g2, params["conv2_w"], params["conv2_b"])
    y2 = y2.reshape(N, h2, w2, -1)

    # conv3 has exactly one output position for 32x32 inputs, so its im2col is
    # a plain reshape and the GEMM is fused into the RNN/fc/compare kernel.
    assert h2 == 5 and w2 == 5, "fused path assumes conv3 output is 1x1 (use 32x32 frames)"
    x3 = y2.reshape(N, h2 * w2 * y2.shape[-1])                          # (T*2B, 800)

    return rnn_fc_compare(params, x3, hand, dt, seq_len=T, pair_batch=2 * B)


# ----------------------------------------------------------------------------
# Parameter init: PyTorch-style uniform bounds, stored in kernel-ready layout
# ----------------------------------------------------------------------------
def _lenet_out_hw(H, W):
    h, w = H - 4, W - 4
    h, w = h // 2, w // 2
    h, w = h - 4, w - 4
    h, w = h // 2, w // 2
    h, w = h - 4, w - 4
    return h, w


def init_params(key, img_shape, handcraft_feat_len, embed_len=64, hidden_dim=500):
    C, H, W = img_shape
    ho, wo = _lenet_out_hw(H, W)
    cnn_out = 32 * ho * wo
    F_h = handcraft_feat_len - 1          # column 0 of the feature vector = timestamp
    fc_in = hidden_dim + F_h
    ks = jax.random.split(key, 21)

    def u(k, shape, fan_in):
        b = float(fan_in) ** -0.5
        return jax.random.uniform(k, shape, jnp.float32, -b, b)

    return {
        # conv weights GEMM-ready: (kh*kw*Cin, Cout) == transpose(OIHW,(2,3,1,0)).reshape
        "conv1_w": u(ks[0], (25 * C, 16), 25 * C),
        "conv1_b": u(ks[1], (1, 16), 25 * C),
        "conv2_w": u(ks[2], (25 * 16, 32), 25 * 16),
        "conv2_b": u(ks[3], (1, 32), 25 * 16),
        "conv3_w": u(ks[4], (25 * 32, 32), 25 * 32),
        "conv3_b": u(ks[5], (1, 32), 25 * 32),
        # RNN weights pre-transposed: (in, hidden) / (hidden, hidden)
        "rnn_w_ih": u(ks[6], (cnn_out, hidden_dim), hidden_dim),
        "rnn_w_hh": u(ks[7], (hidden_dim, hidden_dim), hidden_dim),
        "rnn_b_ih": u(ks[8], (1, hidden_dim), hidden_dim),
        "rnn_b_hh": u(ks[9], (1, hidden_dim), hidden_dim),
        # fc weight pre-transposed and pre-split so concat([seq, hand]) folds away
        "fc_w_seq": u(ks[10], (hidden_dim, 128), fc_in),
        "fc_w_hand": u(ks[11], (F_h, 128), fc_in),
        "fc_b": u(ks[12], (1, 128), fc_in),
        "fc2_w": u(ks[13], (128, embed_len), 128),
        "fc2_b": u(ks[14], (1, embed_len), 128),
        # EmbeddingComparisonModel: first linear split into [q1 | dt | q2] blocks
        "cmp_w_q1": u(ks[15], (embed_len, 64), 2 * embed_len + 1),
        "cmp_w_t": u(ks[16], (1, 64), 2 * embed_len + 1),
        "cmp_w_q2": u(ks[17], (embed_len, 64), 2 * embed_len + 1),
        "cmp_b1": u(ks[18], (1, 64), 2 * embed_len + 1),
        "cmp_w2": u(ks[19], (1, 64), 64),     # stored as a row; applied via lane-sum
        "cmp_b2": u(ks[20], (1, 1), 64),
    }


if __name__ == "__main__":
    B, T, C, H, W = 2, 4, 3, 32, 32          # seq_shape = (T, C, H, W)
    handcraft_feat_len, embed_len = 12, 64   # feat column 0 is the timestamp

    key = jax.random.PRNGKey(0)
    kp, k1, k2, k3, k4 = jax.random.split(key, 5)

    params = init_params(kp, (C, H, W), handcraft_feat_len, embed_len)
    img1 = jax.random.normal(k1, (B, T, C, H, W), jnp.float32)
    img2 = jax.random.normal(k2, (B, T, C, H, W), jnp.float32)
    feat1 = jax.random.normal(k3, (B, handcraft_feat_len), jnp.float32)
    feat2 = jax.random.normal(k4, (B, handcraft_feat_len), jnp.float32)

    fwd = jax.jit(siamese_forward)
    out = jax.block_until_ready(fwd(params, img1, feat1, img2, feat2))
    assert out.shape == (B, 1), out.shape
    assert bool(jnp.all(jnp.isfinite(out)))
    print("KERNEL_OK")
</pallas_src>

<mosaic_0001>
module attributes {stable_mosaic.version = 11 : i64} {
  func.func @_conv_pool_tanh_kernel(%arg0: i32, %arg1: memref<784x75xf32, #tpu.memory_space<vmem>>, %arg2: memref<784x75xf32, #tpu.memory_space<vmem>>, %arg3: memref<784x75xf32, #tpu.memory_space<vmem>>, %arg4: memref<784x75xf32, #tpu.memory_space<vmem>>, %arg5: memref<75x16xf32, #tpu.memory_space<vmem>>, %arg6: memref<1x16xf32, #tpu.memory_space<vmem>>, %arg7: memref<784x16xf32, #tpu.memory_space<vmem>>) attributes {dimension_semantics = [#tpu.dimension_semantics<parallel>], iteration_bounds = array<i64: 4>, scalar_prefetch = 0 : i64, scratch_operands = 0 : i64, tpu.core_type = #tpu.core_type<tc>, window_params = [{transform_indices = @transform_0, window_bounds = array<i64: 784, 75>}, {transform_indices = @transform_1, window_bounds = array<i64: 784, 75>}, {transform_indices = @transform_2, window_bounds = array<i64: 784, 75>}, {transform_indices = @transform_3, window_bounds = array<i64: 784, 75>}, {pipeline_mode = #tpu.pipeline_mode<synchronous>, transform_indices = @transform_4, window_bounds = array<i64: 75, 16>}, {pipeline_mode = #tpu.pipeline_mode<synchronous>, transform_indices = @transform_5, window_bounds = array<i64: 1, 16>}, {transform_indices = @transform_6, window_bounds = array<i64: 784, 16>}]} {
    %c0 = arith.constant 0 : index
    %c0_0 = arith.constant 0 : index
    %0 = vector.load %arg1[%c0, %c0_0] : memref<784x75xf32, #tpu.memory_space<vmem>>, vector<784x75xf32>
    %c0_1 = arith.constant 0 : index
    %c0_2 = arith.constant 0 : index
    %1 = vector.load %arg5[%c0_1, %c0_2] : memref<75x16xf32, #tpu.memory_space<vmem>>, vector<75x16xf32>
    %cst = arith.constant dense<0.000000e+00> : vector<784x16xf32>
    %2 = tpu.matmul %0, %1, %cst {dimension_numbers = #tpu.dot_dimension_numbers<[1], [0], [0], [1], [0, 0, 1, 1], [], []>} : vector<784x75xf32>, vector<75x16xf32>, vector<784x16xf32> -> vector<784x16xf32>
    %c0_3 = arith.constant 0 : index
    %c0_4 = arith.constant 0 : index
    %3 = vector.load %arg2[%c0_3, %c0_4] : memref<784x75xf32, #tpu.memory_space<vmem>>, vector<784x75xf32>
    %c0_5 = arith.constant 0 : index
    %c0_6 = arith.constant 0 : index
    %4 = vector.load %arg5[%c0_5, %c0_6] : memref<75x16xf32, #tpu.memory_space<vmem>>, vector<75x16xf32>
    %cst_7 = arith.constant dense<0.000000e+00> : vector<784x16xf32>
    %5 = tpu.matmul %3, %4, %cst_7 {dimension_numbers = #tpu.dot_dimension_numbers<[1], [0], [0], [1], [0, 0, 1, 1], [], []>} : vector<784x75xf32>, vector<75x16xf32>, vector<784x16xf32> -> vector<784x16xf32>
    %6 = arith.maximumf %2, %5 : vector<784x16xf32>
    %c0_8 = arith.constant 0 : index
    %c0_9 = arith.constant 0 : index
    %7 = vector.load %arg3[%c0_8, %c0_9] : memref<784x75xf32, #tpu.memory_space<vmem>>, vector<784x75xf32>
    %c0_10 = arith.constant 0 : index
    %c0_11 = arith.constant 0 : index
    %8 = vector.load %arg5[%c0_10, %c0_11] : memref<75x16xf32, #tpu.memory_space<vmem>>, vector<75x16xf32>
    %cst_12 = arith.constant dense<0.000000e+00> : vector<784x16xf32>
    %9 = tpu.matmul %7, %8, %cst_12 {dimension_numbers = #tpu.dot_dimension_numbers<[1], [0], [0], [1], [0, 0, 1, 1], [], []>} : vector<784x75xf32>, vector<75x16xf32>, vector<784x16xf32> -> vector<784x16xf32>
    %10 = arith.maximumf %6, %9 : vector<784x16xf32>
    %c0_13 = arith.constant 0 : index
    %c0_14 = arith.constant 0 : index
    %11 = vector.load %arg4[%c0_13, %c0_14] : memref<784x75xf32, #tpu.memory_space<vmem>>, vector<784x75xf32>
    %c0_15 = arith.constant 0 : index
    %c0_16 = arith.constant 0 : index
    %12 = vector.load %arg5[%c0_15, %c0_16] : memref<75x16xf32, #tpu.memory_space<vmem>>, vector<75x16xf32>
    %cst_17 = arith.constant dense<0.000000e+00> : vector<784x16xf32>
    %13 = tpu.matmul %11, %12, %cst_17 {dimension_numbers = #tpu.dot_dimension_numbers<[1], [0], [0], [1], [0, 0, 1, 1], [], []>} : vector<784x75xf32>, vector<75x16xf32>, vector<784x16xf32> -> vector<784x16xf32>
    %14 = arith.maximumf %10, %13 : vector<784x16xf32>
    %c0_18 = arith.constant 0 : index
    %c0_19 = arith.constant 0 : index
    %15 = vector.load %arg6[%c0_18, %c0_19] : memref<1x16xf32, #tpu.memory_space<vmem>>, vector<1x16xf32>
    %16 = vector.broadcast %15 : vector<1x16xf32> to vector<784x16xf32>
    %17 = arith.addf %14, %16 : vector<784x16xf32>
    %18 = math.tanh %17 : vector<784x16xf32>
    %c0_20 = arith.constant 0 : index
    %c0_21 = arith.constant 0 : index
    %19 = vector.load %arg7[%c0_20, %c0_21] : memref<784x16xf32, #tpu.memory_space<vmem>>, vector<784x16xf32>
    tpu.vector_store %arg7[%c0_20, %c0_21], %18 {strides = array<i32>} : memref<784x16xf32, #tpu.memory_space<vmem>>, vector<784x16xf32>,
    return
  }
  func.func @transform_0(%arg0: i32) -> (i32, i32) {
    %c0_i32 = arith.constant 0 : i32
    %c0_i32_0 = arith.constant 0 : i32
    return %arg0, %c0_i32 : i32, i32
  }
  func.func @transform_1(%arg0: i32) -> (i32, i32) {
    %c0_i32 = arith.constant 0 : i32
    %c0_i32_0 = arith.constant 0 : i32
    return %arg0, %c0_i32 : i32, i32
  }
  func.func @transform_2(%arg0: i32) -> (i32, i32) {
    %c0_i32 = arith.constant 0 : i32
    %c0_i32_0 = arith.constant 0 : i32
    return %arg0, %c0_i32 : i32, i32
  }
  func.func @transform_3(%arg0: i32) -> (i32, i32) {
    %c0_i32 = arith.constant 0 : i32
    %c0_i32_0 = arith.constant 0 : i32
    return %arg0, %c0_i32 : i32, i32
  }
  func.func @transform_4(%arg0: i32) -> (i32, i32) {
    %c0_i32 = arith.constant 0 : i32
    %c0_i32_0 = arith.constant 0 : i32
    %c0_i32_1 = arith.constant 0 : i32
    return %c0_i32, %c0_i32_0 : i32, i32
  }
  func.func @transform_5(%arg0: i32) -> (i32, i32) {
    %c0_i32 = arith.constant 0 : i32
    %c0_i32_0 = arith.constant 0 : i32
    %c0_i32_1 = arith.constant 0 : i32
    return %c0_i32, %c0_i32_0 : i32, i32
  }
  func.func @transform_6(%arg0: i32) -> (i32, i32) {
    %c0_i32 = arith.constant 0 : i32
    %c0_i32_0 = arith.constant 0 : i32
    return %arg0, %c0_i32 : i32, i32
  }
}

module attributes {stable_mosaic.version = 11 : i64} {
  func.func @_conv_pool_tanh_kernel(%arg0: i32, %arg1: memref<200x400xf32, #tpu.memory_space<vmem>>, %arg2: memref<200x400xf32, #tpu.memory_space<vmem>>, %arg3: memref<200x400xf32, #tpu.memory_space<vmem>>, %arg4: memref<200x400xf32, #tpu.memory_space<vmem>>, %arg5: memref<400x32xf32, #tpu.memory_space<vmem>>, %arg6: memref<1x32xf32, #tpu.memory_space<vmem>>, %arg7: memref<200x32xf32, #tpu.memory_space<vmem>>) attributes {dimension_semantics = [#tpu.dimension_semantics<parallel>], iteration_bounds = array<i64: 2>, scalar_prefetch = 0 : i64, scratch_operands = 0 : i64, tpu.core_type = #tpu.core_type<tc>, window_params = [{transform_indices = @transform_0, window_bounds = array<i64: 200, 400>}, {transform_indices = @transform_1, window_bounds = array<i64: 200, 400>}, {transform_indices = @transform_2, window_bounds = array<i64: 200, 400>}, {transform_indices = @transform_3, window_bounds = array<i64: 200, 400>}, {pipeline_mode = #tpu.pipeline_mode<synchronous>, transform_indices = @transform_4, window_bounds = array<i64: 400, 32>}, {pipeline_mode = #tpu.pipeline_mode<synchronous>, transform_indices = @transform_5, window_bounds = array<i64: 1, 32>}, {transform_indices = @transform_6, window_bounds = array<i64: 200, 32>}]} {
    %c0 = arith.constant 0 : index
    %c0_0 = arith.constant 0 : index
    %0 = vector.load %arg1[%c0, %c0_0] : memref<200x400xf32, #tpu.memory_space<vmem>>, vector<200x400xf32>
    %c0_1 = arith.constant 0 : index
    %c0_2 = arith.constant 0 : index
    %1 = vector.load %arg5[%c0_1, %c0_2] : memref<400x32xf32, #tpu.memory_space<vmem>>, vector<400x32xf32>
    %cst = arith.constant dense<0.000000e+00> : vector<200x32xf32>
    %2 = tpu.matmul %0, %1, %cst {dimension_numbers = #tpu.dot_dimension_numbers<[1], [0], [0], [1], [0, 0, 1, 1], [], []>} : vector<200x400xf32>, vector<400x32xf32>, vector<200x32xf32> -> vector<200x32xf32>
    %c0_3 = arith.constant 0 : index
    %c0_4 = arith.constant 0 : index
    %3 = vector.load %arg2[%c0_3, %c0_4] : memref<200x400xf32, #tpu.memory_space<vmem>>, vector<200x400xf32>
    %c0_5 = arith.constant 0 : index
    %c0_6 = arith.constant 0 : index
    %4 = vector.load %arg5[%c0_5, %c0_6] : memref<400x32xf32, #tpu.memory_space<vmem>>, vector<400x32xf32>
    %cst_7 = arith.constant dense<0.000000e+00> : vector<200x32xf32>
    %5 = tpu.matmul %3, %4, %cst_7 {dimension_numbers = #tpu.dot_dimension_numbers<[1], [0], [0], [1], [0, 0, 1, 1], [], []>} : vector<200x400xf32>, vector<400x32xf32>, vector<200x32xf32> -> vector<200x32xf32>
    %6 = arith.maximumf %2, %5 : vector<200x32xf32>
    %c0_8 = arith.constant 0 : index
    %c0_9 = arith.constant 0 : index
    %7 = vector.load %arg3[%c0_8, %c0_9] : memref<200x400xf32, #tpu.memory_space<vmem>>, vector<200x400xf32>
    %c0_10 = arith.constant 0 : index
    %c0_11 = arith.constant 0 : index
    %8 = vector.load %arg5[%c0_10, %c0_11] : memref<400x32xf32, #tpu.memory_space<vmem>>, vector<400x32xf32>
    %cst_12 = arith.constant dense<0.000000e+00> : vector<200x32xf32>
    %9 = tpu.matmul %7, %8, %cst_12 {dimension_numbers = #tpu.dot_dimension_numbers<[1], [0], [0], [1], [0, 0, 1, 1], [], []>} : vector<200x400xf32>, vector<400x32xf32>, vector<200x32xf32> -> vector<200x32xf32>
    %10 = arith.maximumf %6, %9 : vector<200x32xf32>
    %c0_13 = arith.constant 0 : index
    %c0_14 = arith.constant 0 : index
    %11 = vector.load %arg4[%c0_13, %c0_14] : memref<200x400xf32, #tpu.memory_space<vmem>>, vector<200x400xf32>
    %c0_15 = arith.constant 0 : index
    %c0_16 = arith.constant 0 : index
    %12 = vector.load %arg5[%c0_15, %c0_16] : memref<400x32xf32, #tpu.memory_space<vmem>>, vector<400x32xf32>
    %cst_17 = arith.constant dense<0.000000e+00> : vector<200x32xf32>
    %13 = tpu.matmul %11, %12, %cst_17 {dimension_numbers = #tpu.dot_dimension_numbers<[1], [0], [0], [1], [0, 0, 1, 1], [], []>} : vector<200x400xf32>, vector<400x32xf32>, vector<200x32xf32> -> vector<200x32xf32>
    %14 = arith.maximumf %10, %13 : vector<200x32xf32>
    %c0_18 = arith.constant 0 : index
    %c0_19 = arith.constant 0 : index
    %15 = vector.load %arg6[%c0_18, %c0_19] : memref<1x32xf32, #tpu.memory_space<vmem>>, vector<1x32xf32>
    %16 = vector.broadcast %15 : vector<1x32xf32> to vector<200x32xf32>
    %17 = arith.addf %14, %16 : vector<200x32xf32>
    %18 = math.tanh %17 : vector<200x32xf32>
    %c0_20 = arith.constant 0 : index
    %c0_21 = arith.constant 0 : index
    %19 = vector.load %arg7[%c0_20, %c0_21] : memref<200x32xf32, #tpu.memory_space<vmem>>, vector<200x32xf32>
    tpu.vector_store %arg7[%c0_20, %c0_21], %18 {strides = array<i32>} : memref<200x32xf32, #tpu.memory_space<vmem>>, vector<200x32xf32>,
    return
  }
  func.func @transform_0(%arg0: i32) -> (i32, i32) {
    %c0_i32 = arith.constant 0 : i32
    %c0_i32_0 = arith.constant 0 : i32
    return %arg0, %c0_i32 : i32, i32
  }
  func.func @transform_1(%arg0: i32) -> (i32, i32) {
    %c0_i32 = arith.constant 0 : i32
    %c0_i32_0 = arith.constant 0 : i32
    return %arg0, %c0_i32 : i32, i32
  }
  func.func @transform_2(%arg0: i32) -> (i32, i32) {
    %c0_i32 = arith.constant 0 : i32
    %c0_i32_0 = arith.constant 0 : i32
    return %arg0, %c0_i32 : i32, i32
  }
  func.func @transform_3(%arg0: i32) -> (i32, i32) {
    %c0_i32 = arith.constant 0 : i32
    %c0_i32_0 = arith.constant 0 : i32
    return %arg0, %c0_i32 : i32, i32
  }
  func.func @transform_4(%arg0: i32) -> (i32, i32) {
    %c0_i32 = arith.constant 0 : i32
    %c0_i32_0 = arith.constant 0 : i32
    %c0_i32_1 = arith.constant 0 : i32
    return %c0_i32, %c0_i32_0 : i32, i32
  }
  func.func @transform_5(%arg0: i32) -> (i32, i32) {
    %c0_i32 = arith.constant 0 : i32
    %c0_i32_0 = arith.constant 0 : i32
    %c0_i32_1 = arith.constant 0 : i32
    return %c0_i32, %c0_i32_0 : i32, i32
  }
  func.func @transform_6(%arg0: i32) -> (i32, i32) {
    %c0_i32 = arith.constant 0 : i32
    %c0_i32_0 = arith.constant 0 : i32
    return %arg0, %c0_i32 : i32, i32
  }
}

module attributes {stable_mosaic.version = 11 : i64} {
  func.func @_rnn_fc_compare_kernel(%arg0: i32, %arg1: memref<16x800xf32, #tpu.memory_space<vmem>>, %arg2: memref<800x32xf32, #tpu.memory_space<vmem>>, %arg3: memref<1x32xf32, #tpu.memory_space<vmem>>, %arg4: memref<32x500xf32, #tpu.memory_space<vmem>>, %arg5: memref<500x500xf32, #tpu.memory_space<vmem>>, %arg6: memref<1x500xf32, #tpu.memory_space<vmem>>, %arg7: memref<1x500xf32, #tpu.memory_space<vmem>>, %arg8: memref<4x11xf32, #tpu.memory_space<vmem>>, %arg9: memref<500x128xf32, #tpu.memory_space<vmem>>, %arg10: memref<11x128xf32, #tpu.memory_space<vmem>>, %arg11: memref<1x128xf32, #tpu.memory_space<vmem>>, %arg12: memref<128x64xf32, #tpu.memory_space<vmem>>, %arg13: memref<1x64xf32, #tpu.memory_space<vmem>>, %arg14: memref<2x1xf32, #tpu.memory_space<vmem>>, %arg15: memref<64x64xf32, #tpu.memory_space<vmem>>, %arg16: memref<1x64xf32, #tpu.memory_space<vmem>>, %arg17: memref<64x64xf32, #tpu.memory_space<vmem>>, %arg18: memref<1x64xf32, #tpu.memory_space<vmem>>, %arg19: memref<1x64xf32, #tpu.memory_space<vmem>>, %arg20: memref<1x1xf32, #tpu.memory_space<vmem>>, %arg21: memref<2x1xf32, #tpu.memory_space<vmem>>, %arg22: memref<16x500xf32, #tpu.memory_space<vmem>>, %arg23: memref<4x64xf32, #tpu.memory_space<vmem>>) attributes {dimension_semantics = [#tpu.dimension_semantics<arbitrary>], iteration_bounds = array<i64: 1>, scalar_prefetch = 0 : i64, scratch_operands = 2 : i64, tpu.core_type = #tpu.core_type<tc>, window_params = [{pipeline_mode = #tpu.pipeline_mode<synchronous>, transform_indices = @transform_0, window_bounds = array<i64: 16, 800>}, {pipeline_mode = #tpu.pipeline_mode<synchronous>, transform_indices = @transform_1, window_bounds = array<i64: 800, 32>}, {pipeline_mode = #tpu.pipeline_mode<synchronous>, transform_indices = @transform_2, window_bounds = array<i64: 1, 32>}, {pipeline_mode = #tpu.pipeline_mode<synchronous>, transform_indices = @transform_3, window_bounds = array<i64: 32, 500>}, {pipeline_mode = #tpu.pipeline_mode<synchronous>, transform_indices = @transform_4, window_bounds = array<i64: 500, 500>}, {pipeline_mode = #tpu.pipeline_mode<synchronous>, transform_indices = @transform_5, window_bounds = array<i64: 1, 500>}, {pipeline_mode = #tpu.pipeline_mode<synchronous>, transform_indices = @transform_6, window_bounds = array<i64: 1, 500>}, {pipeline_mode = #tpu.pipeline_mode<synchronous>, transform_indices = @transform_7, window_bounds = array<i64: 4, 11>}, {pipeline_mode = #tpu.pipeline_mode<synchronous>, transform_indices = @transform_8, window_bounds = array<i64: 500, 128>}, {pipeline_mode = #tpu.pipeline_mode<synchronous>, transform_indices = @transform_9, window_bounds = array<i64: 11, 128>}, {pipeline_mode = #tpu.pipeline_mode<synchronous>, transform_indices = @transform_10, window_bounds = array<i64: 1, 128>}, {pipeline_mode = #tpu.pipeline_mode<synchronous>, transform_indices = @transform_11, window_bounds = array<i64: 128, 64>}, {pipeline_mode = #tpu.pipeline_mode<synchronous>, transform_indices = @transform_12, window_bounds = array<i64: 1, 64>}, {pipeline_mode = #tpu.pipeline_mode<synchronous>, transform_indices = @transform_13, window_bounds = array<i64: 2, 1>}, {pipeline_mode = #tpu.pipeline_mode<synchronous>, transform_indices = @transform_14, window_bounds = array<i64: 64, 64>}, {pipeline_mode = #tpu.pipeline_mode<synchronous>, transform_indices = @transform_15, window_bounds = array<i64: 1, 64>}, {pipeline_mode = #tpu.pipeline_mode<synchronous>, transform_indices = @transform_16, window_bounds = array<i64: 64, 64>}, {pipeline_mode = #tpu.pipeline_mode<synchronous>, transform_indices = @transform_17, window_bounds = array<i64: 1, 64>}, {pipeline_mode = #tpu.pipeline_mode<synchronous>, transform_indices = @transform_18, window_bounds = array<i64: 1, 64>}, {pipeline_mode = #tpu.pipeline_mode<synchronous>, transform_indices = @transform_19, window_bounds = array<i64: 1, 1>}, {pipeline_mode = #tpu.pipeline_mode<synchronous>, transform_indices = @transform_20, window_bounds = array<i64: 2, 1>}]} {
    %c0 = arith.constant 0 : index
    %c0_0 = arith.constant 0 : index
    %0 = vector.load %arg1[%c0, %c0_0] : memref<16x800xf32, #tpu.memory_space<vmem>>, vector<16x800xf32>
    %c0_1 = arith.constant 0 : index
    %c0_2 = arith.constant 0 : index
    %1 = vector.load %arg2[%c0_1, %c0_2] : memref<800x32xf32, #tpu.memory_space<vmem>>, vector<800x32xf32>
    %cst = arith.constant dense<0.000000e+00> : vector<16x32xf32>
    %2 = tpu.matmul %0, %1, %cst {dimension_numbers = #tpu.dot_dimension_numbers<[1], [0], [0], [1], [0, 0, 1, 1], [], []>} : vector<16x800xf32>, vector<800x32xf32>, vector<16x32xf32> -> vector<16x32xf32>
    %c0_3 = arith.constant 0 : index
    %c0_4 = arith.constant 0 : index
    %3 = vector.load %arg3[%c0_3, %c0_4] : memref<1x32xf32, #tpu.memory_space<vmem>>, vector<1x32xf32>
    %4 = vector.broadcast %3 : vector<1x32xf32> to vector<16x32xf32>
    %5 = arith.addf %2, %4 : vector<16x32xf32>
    %c0_5 = arith.constant 0 : index
    %c0_6 = arith.constant 0 : index
    %6 = vector.load %arg4[%c0_5, %c0_6] : memref<32x500xf32, #tpu.memory_space<vmem>>, vector<32x500xf32>
    %cst_7 = arith.constant dense<0.000000e+00> : vector<16x500xf32>
    %7 = tpu.matmul %5, %6, %cst_7 {dimension_numbers = #tpu.dot_dimension_numbers<[1], [0], [0], [1], [0, 0, 1, 1], [], []>} : vector<16x32xf32>, vector<32x500xf32>, vector<16x500xf32> -> vector<16x500xf32>
    %c0_8 = arith.constant 0 : index
    %c0_9 = arith.constant 0 : index
    %8 = vector.load %arg6[%c0_8, %c0_9] : memref<1x500xf32, #tpu.memory_space<vmem>>, vector<1x500xf32>
    %9 = vector.broadcast %8 : vector<1x500xf32> to vector<16x500xf32>
    %10 = arith.addf %7, %9 : vector<16x500xf32>
    %c0_10 = arith.constant 0 : index
    %c0_11 = arith.constant 0 : index
    %11 = vector.load %arg7[%c0_10, %c0_11] : memref<1x500xf32, #tpu.memory_space<vmem>>, vector<1x500xf32>
    %12 = vector.broadcast %11 : vector<1x500xf32> to vector<16x500xf32>
    %13 = arith.addf %10, %12 : vector<16x500xf32>
    %c0_12 = arith.constant 0 : index
    %c0_13 = arith.constant 0 : index
    %14 = vector.load %arg22[%c0_12, %c0_13] : memref<16x500xf32, #tpu.memory_space<vmem>>, vector<16x500xf32>
    tpu.vector_store %arg22[%c0_12, %c0_13], %13 {strides = array<i32>} : memref<16x500xf32, #tpu.memory_space<vmem>>, vector<16x500xf32>,
    %c0_14 = arith.constant 0 : index
    %c0_15 = arith.constant 0 : index
    %15 = vector.load %arg22[%c0_14, %c0_15] : memref<16x500xf32, #tpu.memory_space<vmem>>, vector<4x500xf32>
    %16 = math.tanh %15 : vector<4x500xf32>
    %c4 = arith.constant 4 : index
    %c0_16 = arith.constant 0 : index
    %17 = vector.load %arg22[%c4, %c0_16] : memref<16x500xf32, #tpu.memory_space<vmem>>, vector<4x500xf32>
    %c0_17 = arith.constant 0 : index
    %c0_18 = arith.constant 0 : index
    %18 = vector.load %arg5[%c0_17, %c0_18] : memref<500x500xf32, #tpu.memory_space<vmem>>, vector<500x500xf32>
    %cst_19 = arith.constant dense<0.000000e+00> : vector<4x500xf32>
    %19 = tpu.matmul %16, %18, %cst_19 {dimension_numbers = #tpu.dot_dimension_numbers<[1], [0], [0], [1], [0, 0, 1, 1], [], []>} : vector<4x500xf32>, vector<500x500xf32>, vector<4x500xf32> -> vector<4x500xf32>
    %20 = arith.addf %17, %19 : vector<4x500xf32>
    %21 = math.tanh %20 : vector<4x500xf32>
    %22 = arith.addf %16, %21 : vector<4x500xf32>
    %c8 = arith.constant 8 : index
    %c0_20 = arith.constant 0 : index
    %23 = vector.load %arg22[%c8, %c0_20] : memref<16x500xf32, #tpu.memory_space<vmem>>, vector<4x500xf32>
    %c0_21 = arith.constant 0 : index
    %c0_22 = arith.constant 0 : index
    %24 = vector.load %arg5[%c0_21, %c0_22] : memref<500x500xf32, #tpu.memory_space<vmem>>, vector<500x500xf32>
    %cst_23 = arith.constant dense<0.000000e+00> : vector<4x500xf32>
    %25 = tpu.matmul %21, %24, %cst_23 {dimension_numbers = #tpu.dot_dimension_numbers<[1], [0], [0], [1], [0, 0, 1, 1], [], []>} : vector<4x500xf32>, vector<500x500xf32>, vector<4x500xf32> -> vector<4x500xf32>
    %26 = arith.addf %23, %25 : vector<4x500xf32>
    %27 = math.tanh %26 : vector<4x500xf32>
    %28 = arith.addf %22, %27 : vector<4x500xf32>
    %c12 = arith.constant 12 : index
    %c0_24 = arith.constant 0 : index
    %29 = vector.load %arg22[%c12, %c0_24] : memref<16x500xf32, #tpu.memory_space<vmem>>, vector<4x500xf32>
    %c0_25 = arith.constant 0 : index
    %c0_26 = arith.constant 0 : index
    %30 = vector.load %arg5[%c0_25, %c0_26] : memref<500x500xf32, #tpu.memory_space<vmem>>, vector<500x500xf32>
    %cst_27 = arith.constant dense<0.000000e+00> : vector<4x500xf32>
    %31 = tpu.matmul %27, %30, %cst_27 {dimension_numbers = #tpu.dot_dimension_numbers<[1], [0], [0], [1], [0, 0, 1, 1], [], []>} : vector<4x500xf32>, vector<500x500xf32>, vector<4x500xf32> -> vector<4x500xf32>
    %32 = arith.addf %29, %31 : vector<4x500xf32>
    %33 = math.tanh %32 : vector<4x500xf32>
    %34 = arith.addf %28, %33 : vector<4x500xf32>
    %cst_28 = arith.constant 2.500000e-01 : f32
    %35 = vector.broadcast %cst_28 : f32 to vector<4x500xf32>
    %36 = arith.mulf %34, %35 : vector<4x500xf32>
    %c0_29 = arith.constant 0 : index
    %c0_30 = arith.constant 0 : index
    %37 = vector.load %arg9[%c0_29, %c0_30] : memref<500x128xf32, #tpu.memory_space<vmem>>, vector<500x128xf32>
    %cst_31 = arith.constant dense<0.000000e+00> : vector<4x128xf32>
    %38 = tpu.matmul %36, %37, %cst_31 {dimension_numbers = #tpu.dot_dimension_numbers<[1], [0], [0], [1], [0, 0, 1, 1], [], []>} : vector<4x500xf32>, vector<500x128xf32>, vector<4x128xf32> -> vector<4x128xf32>
    %c0_32 = arith.constant 0 : index
    %c0_33 = arith.constant 0 : index
    %39 = vector.load %arg8[%c0_32, %c0_33] : memref<4x11xf32, #tpu.memory_space<vmem>>, vector<4x11xf32>
    %c0_34 = arith.constant 0 : index
    %c0_35 = arith.constant 0 : index
    %40 = vector.load %arg10[%c0_34, %c0_35] : memref<11x128xf32, #tpu.memory_space<vmem>>, vector<11x128xf32>
    %cst_36 = arith.constant dense<0.000000e+00> : vector<4x128xf32>
    %41 = tpu.matmul %39, %40, %cst_36 {dimension_numbers = #tpu.dot_dimension_numbers<[1], [0], [0], [1], [0, 0, 1, 1], [], []>} : vector<4x11xf32>, vector<11x128xf32>, vector<4x128xf32> -> vector<4x128xf32>
    %42 = arith.addf %38, %41 : vector<4x128xf32>
    %c0_37 = arith.constant 0 : index
    %c0_38 = arith.constant 0 : index
    %43 = vector.load %arg11[%c0_37, %c0_38] : memref<1x128xf32, #tpu.memory_space<vmem>>, vector<1x128xf32>
    %44 = vector.broadcast %43 : vector<1x128xf32> to vector<4x128xf32>
    %45 = arith.addf %42, %44 : vector<4x128xf32>
    %c0_39 = arith.constant 0 : index
    %c0_40 = arith.constant 0 : index
    %46 = vector.load %arg12[%c0_39, %c0_40] : memref<128x64xf32, #tpu.memory_space<vmem>>, vector<128x64xf32>
    %cst_41 = arith.constant dense<0.000000e+00> : vector<4x64xf32>
    %47 = tpu.matmul %45, %46, %cst_41 {dimension_numbers = #tpu.dot_dimension_numbers<[1], [0], [0], [1], [0, 0, 1, 1], [], []>} : vector<4x128xf32>, vector<128x64xf32>, vector<4x64xf32> -> vector<4x64xf32>
    %c0_42 = arith.constant 0 : index
    %c0_43 = arith.constant 0 : index
    %48 = vector.load %arg13[%c0_42, %c0_43] : memref<1x64xf32, #tpu.memory_space<vmem>>, vector<1x64xf32>
    %49 = vector.broadcast %48 : vector<1x64xf32> to vector<4x64xf32>
    %50 = arith.addf %47, %49 : vector<4x64xf32>
    %c0_44 = arith.constant 0 : index
    %c0_45 = arith.constant 0 : index
    %51 = vector.load %arg23[%c0_44, %c0_45] : memref<4x64xf32, #tpu.memory_space<vmem>>, vector<4x64xf32>
    tpu.vector_store %arg23[%c0_44, %c0_45], %50 {strides = array<i32>} : memref<4x64xf32, #tpu.memory_space<vmem>>, vector<4x64xf32>,
    %c0_46 = arith.constant 0 : index
    %c0_47 = arith.constant 0 : index
    %52 = vector.load %arg23[%c0_46, %c0_47] : memref<4x64xf32, #tpu.memory_space<vmem>>, vector<2x64xf32>
    %c2 = arith.constant 2 : index
    %c0_48 = arith.constant 0 : index
    %53 = vector.load %arg23[%c2, %c0_48] : memref<4x64xf32, #tpu.memory_space<vmem>>, vector<2x64xf32>
    %c0_49 = arith.constant 0 : index
    %c0_50 = arith.constant 0 : index
    %54 = vector.load %arg15[%c0_49, %c0_50] : memref<64x64xf32, #tpu.memory_space<vmem>>, vector<64x64xf32>
    %cst_51 = arith.constant dense<0.000000e+00> : vector<2x64xf32>
    %55 = tpu.matmul %52, %54, %cst_51 {dimension_numbers = #tpu.dot_dimension_numbers<[1], [0], [0], [1], [0, 0, 1, 1], [], []>} : vector<2x64xf32>, vector<64x64xf32>, vector<2x64xf32> -> vector<2x64xf32>
    %c0_52 = arith.constant 0 : index
    %c0_53 = arith.constant 0 : index
    %56 = vector.load %arg17[%c0_52, %c0_53] : memref<64x64xf32, #tpu.memory_space<vmem>>, vector<64x64xf32>
    %cst_54 = arith.constant dense<0.000000e+00> : vector<2x64xf32>
    %57 = tpu.matmul %53, %56, %cst_54 {dimension_numbers = #tpu.dot_dimension_numbers<[1], [0], [0], [1], [0, 0, 1, 1], [], []>} : vector<2x64xf32>, vector<64x64xf32>, vector<2x64xf32> -> vector<2x64xf32>
    %58 = arith.addf %55, %57 : vector<2x64xf32>
    %c0_55 = arith.constant 0 : index
    %c0_56 = arith.constant 0 : index
    %59 = vector.load %arg14[%c0_55, %c0_56] : memref<2x1xf32, #tpu.memory_space<vmem>>, vector<2x1xf32>
    %c0_57 = arith.constant 0 : index
    %c0_58 = arith.constant 0 : index
    %60 = vector.load %arg16[%c0_57, %c0_58] : memref<1x64xf32, #tpu.memory_space<vmem>>, vector<1x64xf32>
    %61 = vector.broadcast %59 : vector<2x1xf32> to vector<2x64xf32>
    %62 = vector.broadcast %60 : vector<1x64xf32> to vector<2x64xf32>
    %63 = arith.mulf %61, %62 : vector<2x64xf32>
    %64 = arith.addf %58, %63 : vector<2x64xf32>
    %c0_59 = arith.constant 0 : index
    %c0_60 = arith.constant 0 : index
    %65 = vector.load %arg18[%c0_59, %c0_60] : memref<1x64xf32, #tpu.memory_space<vmem>>, vector<1x64xf32>
    %66 = vector.broadcast %65 : vector<1x64xf32> to vector<2x64xf32>
    %67 = arith.addf %64, %66 : vector<2x64xf32>
    %cst_61 = arith.constant 0.000000e+00 : f32
    %68 = vector.broadcast %cst_61 : f32 to vector<2x64xf32>
    %69 = arith.subf %68, %67 : vector<2x64xf32>
    %70 = math.exp %69 : vector<2x64xf32>
    %cst_62 = arith.constant 1.000000e+00 : f32
    %71 = vector.broadcast %cst_62 : f32 to vector<2x64xf32>
    %72 = arith.addf %71, %70 : vector<2x64xf32>
    %cst_63 = arith.constant 1.000000e+00 : f32
    %73 = vector.broadcast %cst_63 : f32 to vector<2x64xf32>
    %74 = arith.divf %73, %72 : vector<2x64xf32>
    %c0_64 = arith.constant 0 : index
    %c0_65 = arith.constant 0 : index
    %75 = vector.load %arg19[%c0_64, %c0_65] : memref<1x64xf32, #tpu.memory_space<vmem>>, vector<1x64xf32>
    %76 = vector.broadcast %75 : vector<1x64xf32> to vector<2x64xf32>
    %77 = arith.mulf %74, %76 : vector<2x64xf32>
    %cst_66 = arith.constant dense<0.000000e+00> : vector<2xf32>
    %78 = vector.multi_reduction <add>, %77, %cst_66 [1] : vector<2x64xf32> to vector<2xf32>
    %79 = vector.shape_cast %78 : vector<2xf32> to vector<2x1xf32>
    %c0_67 = arith.constant 0 : index
    %c0_68 = arith.constant 0 : index
    %80 = vector.load %arg20[%c0_67, %c0_68] : memref<1x1xf32, #tpu.memory_space<vmem>>, vector<1x1xf32>
    %81 = vector.broadcast %80 : vector<1x1xf32> to vector<2x1xf32>
    %82 = arith.addf %79, %81 : vector<2x1xf32>
    %cst_69 = arith.constant 0.000000e+00 : f32
    %83 = vector.broadcast %cst_69 : f32 to vector<2x1xf32>
    %84 = arith.subf %83, %82 : vector<2x1xf32>
    %85 = math.exp %84 : vector<2x1xf32>
    %cst_70 = arith.constant 1.000000e+00 : f32
    %86 = vector.broadcast %cst_70 : f32 to vector<2x1xf32>
    %87 = arith.addf %86, %85 : vector<2x1xf32>
    %cst_71 = arith.constant 1.000000e+00 : f32
    %88 = vector.broadcast %cst_71 : f32 to vector<2x1xf32>
    %89 = arith.divf %88, %87 : vector<2x1xf32>
    %c0_72 = arith.constant 0 : index
    %c0_73 = arith.constant 0 : index
    %90 = vector.load %arg21[%c0_72, %c0_73] : memref<2x1xf32, #tpu.memory_space<vmem>>, vector<2x1xf32>
    tpu.vector_store %arg21[%c0_72, %c0_73], %89 {strides = array<i32>} : memref<2x1xf32, #tpu.memory_space<vmem>>, vector<2x1xf32>,
    return
  }
  func.func @transform_0(%arg0: i32) -> (i32, i32) {
    %c0_i32 = arith.constant 0 : i32
    %c0_i32_0 = arith.constant 0 : i32
    %c0_i32_1 = arith.constant 0 : i32
    return %c0_i32, %c0_i32_0 : i32, i32
  }
  func.func @transform_1(%arg0: i32) -> (i32, i32) {
    %c0_i32 = arith.constant 0 : i32
    %c0_i32_0 = arith.constant 0 : i32
    %c0_i32_1 = arith.constant 0 : i32
    return %c0_i32, %c0_i32_0 : i32, i32
  }
  func.func @transform_2(%arg0: i32) -> (i32, i32) {
    %c0_i32 = arith.constant 0 : i32
    %c0_i32_0 = arith.constant 0 : i32
    %c0_i32_1 = arith.constant 0 : i32
    return %c0_i32, %c0_i32_0 : i32, i32
  }
  func.func @transform_3(%arg0: i32) -> (i32, i32) {
    %c0_i32 = arith.constant 0 : i32
    %c0_i32_0 = arith.constant 0 : i32
    %c0_i32_1 = arith.constant 0 : i32
    return %c0_i32, %c0_i32_0 : i32, i32
  }
  func.func @transform_4(%arg0: i32) -> (i32, i32) {
    %c0_i32 = arith.constant 0 : i32
    %c0_i32_0 = arith.constant 0 : i32
    %c0_i32_1 = arith.constant 0 : i32
    return %c0_i32, %c0_i32_0 : i32, i32
  }
  func.func @transform_5(%arg0: i32) -> (i32, i32) {
    %c0_i32 = arith.constant 0 : i32
    %c0_i32_0 = arith.constant 0 : i32
    %c0_i32_1 = arith.constant 0 : i32
    return %c0_i32, %c0_i32_0 : i32, i32
  }
  func.func @transform_6(%arg0: i32) -> (i32, i32) {
    %c0_i32 = arith.constant 0 : i32
    %c0_i32_0 = arith.constant 0 : i32
    %c0_i32_1 = arith.constant 0 : i32
    return %c0_i32, %c0_i32_0 : i32, i32
  }
  func.func @transform_7(%arg0: i32) -> (i32, i32) {
    %c0_i32 = arith.constant 0 : i32
    %c0_i32_0 = arith.constant 0 : i32
    %c0_i32_1 = arith.constant 0 : i32
    return %c0_i32, %c0_i32_0 : i32, i32
  }
  func.func @transform_8(%arg0: i32) -> (i32, i32) {
    %c0_i32 = arith.constant 0 : i32
    %c0_i32_0 = arith.constant 0 : i32
    %c0_i32_1 = arith.constant 0 : i32
    return %c0_i32, %c0_i32_0 : i32, i32
  }
  func.func @transform_9(%arg0: i32) -> (i32, i32) {
    %c0_i32 = arith.constant 0 : i32
    %c0_i32_0 = arith.constant 0 : i32
    %c0_i32_1 = arith.constant 0 : i32
    return %c0_i32, %c0_i32_0 : i32, i32
  }
  func.func @transform_10(%arg0: i32) -> (i32, i32) {
    %c0_i32 = arith.constant 0 : i32
    %c0_i32_0 = arith.constant 0 : i32
    %c0_i32_1 = arith.constant 0 : i32
    return %c0_i32, %c0_i32_0 : i32, i32
  }
  func.func @transform_11(%arg0: i32) -> (i32, i32) {
    %c0_i32 = arith.constant 0 : i32
    %c0_i32_0 = arith.constant 0 : i32
    %c0_i32_1 = arith.constant 0 : i32
    return %c0_i32, %c0_i32_0 : i32, i32
  }
  func.func @transform_12(%arg0: i32) -> (i32, i32) {
    %c0_i32 = arith.constant 0 : i32
    %c0_i32_0 = arith.constant 0 : i32
    %c0_i32_1 = arith.constant 0 : i32
    return %c0_i32, %c0_i32_0 : i32, i32
  }
  func.func @transform_13(%arg0: i32) -> (i32, i32) {
    %c0_i32 = arith.constant 0 : i32
    %c0_i32_0 = arith.constant 0 : i32
    %c0_i32_1 = arith.constant 0 : i32
    return %c0_i32, %c0_i32_0 : i32, i32
  }
  func.func @transform_14(%arg0: i32) -> (i32, i32) {
    %c0_i32 = arith.constant 0 : i32
    %c0_i32_0 = arith.constant 0 : i32
    %c0_i32_1 = arith.constant 0 : i32
    return %c0_i32, %c0_i32_0 : i32, i32
  }
  func.func @transform_15(%arg0: i32) -> (i32, i32) {
    %c0_i32 = arith.constant 0 : i32
    %c0_i32_0 = arith.constant 0 : i32
    %c0_i32_1 = arith.constant 0 : i32
    return %c0_i32, %c0_i32_0 : i32, i32
  }
  func.func @transform_16(%arg0: i32) -> (i32, i32) {
    %c0_i32 = arith.constant 0 : i32
    %c0_i32_0 = arith.constant 0 : i32
    %c0_i32_1 = arith.constant 0 : i32
    return %c0_i32, %c0_i32_0 : i32, i32
  }
  func.func @transform_17(%arg0: i32) -> (i32, i32) {
    %c0_i32 = arith.constant 0 : i32
    %c0_i32_0 = arith.constant 0 : i32
    %c0_i32_1 = arith.constant 0 : i32
    return %c0_i32, %c0_i32_0 : i32, i32
  }
  func.func @transform_18(%arg0: i32) -> (i32, i32) {
    %c0_i32 = arith.constant 0 : i32
    %c0_i32_0 = arith.constant 0 : i32
    %c0_i32_1 = arith.constant 0 : i32
    return %c0_i32, %c0_i32_0 : i32, i32
  }
  func.func @transform_19(%arg0: i32) -> (i32, i32) {
    %c0_i32 = arith.constant 0 : i32
    %c0_i32_0 = arith.constant 0 : i32
    %c0_i32_1 = arith.constant 0 : i32
    return %c0_i32, %c0_i32_0 : i32, i32
  }
  func.func @transform_20(%arg0: i32) -> (i32, i32) {
    %c0_i32 = arith.constant 0 : i32
    %c0_i32_0 = arith.constant 0 : i32
    %c0_i32_1 = arith.constant 0 : i32
    return %c0_i32, %c0_i32_0 : i32, i32
  }
}

</mosaic_0001>

<llo_original>
// kernel: siamese_forward.3
$region0: #{siamese_forward.3}
  #allocation0 [shape = 'u32[]', space=smem, size = 0x4, offset = 0x4, fixed_abs, tag = 'smem constant byte address 0x4 - core index']
  #allocation1 [shape = 'u32[72,128]{1,0:T(1,128)}', space=vmem, size = 0x9000, scoped, tag = 'internal scratch']
  %s0 = inlined_call_operand.vmem [shape: f32[3136,75], index: 0, kind: input, shape index: {}]
  %s1 = inlined_call_operand.vmem [shape: f32[3136,75], index: 1, kind: input, shape index: {}]
  %s2 = inlined_call_operand.vmem [shape: f32[3136,75], index: 2, kind: input, shape index: {}]
  %s3 = inlined_call_operand.vmem [shape: f32[3136,75], index: 3, kind: input, shape index: {}]
  %s4 = inlined_call_operand.vmem [shape: f32[75,16], index: 4, kind: input, shape index: {}]
  %s5 = inlined_call_operand.vmem [shape: f32[1,16], index: 5, kind: input, shape index: {}]
  %s6 = inlined_call_operand.vmem [shape: f32[3136,16], index: 6, kind: output, shape index: {}]
  %s7 = sld [smem:[#allocation0]]
  $region57: #{siamese_forward.3} parent=0
    _
  %s9 = ssub.s32 1, %s7
  %s10 = scalar_select 0, %s9, %s7
  loop: start=0, step=1, limit=6
  $region2: #{siamese_forward.3} parent=0 // loop_pre_header
    _
  $region3: #{siamese_forward.3} parent=0 // loop_header
    %s12 = sphi 0, %s16
    %p13 = scmp.ge.s32.totalorder %s12, 6
    %s22 = sphi 0, %s24
    %s25 = sphi 0, %s22
    %s26 = sphi 0, %s25
    %s42 = sphi 0, %s26
    %s48 = sphi 0, %s50
    %s51 = sphi 0, %s48
    %s52 = sphi 0, %s51
    %s68 = sphi 0, %s52
    %s74 = sphi 0, %s76
    %s77 = sphi 0, %s74
    %s78 = sphi 0, %s77
    %s94 = sphi 0, %s78
    %s100 = sphi 0, %s102
    %s103 = sphi 0, %s100
    %s104 = sphi 0, %s103
    %s120 = sphi 0, %s104
    %s124 = sphi 0, %s124
    %s126 = sphi 0, %s124
    %s127 = sphi 0, %s126
    %s141 = sphi 0, %s127
    %s145 = sphi 0, %s145
    %s147 = sphi 0, %s145
    %s148 = sphi 0, %s147
    %s162 = sphi 0, %s148
    %s168 = sphi 0, %s170
    %s171 = sphi 0, %s168
    %s172 = sphi 0, %s171
    %s188 = sphi 0, %s172
  $region4: #{siamese_forward.3} parent=0 // loop_header_branch
    %15 = sbr.rel (%p13) target = $region8
  $region5: #{siamese_forward.3} parent=0 // loop_body
    %s17 = ssub.s32 %s12, 1
    %s18 = ssub.s32 %s12, 2
    %s19 = sadd.s32 %s12, 1
    %s20 = ssub.s32 %s12, %s19
    %p21 = scmp.eq.s32.totalorder %s20, 0
    %s23 = sadd.s32 %s22, 1
    %s24 = scalar_select %p21, %s22, %s23
    %p27 = pneg %p21
    %p28 = scmp.eq.s32.totalorder %s12, 3
    %p29 = por %p27, %p28
    %p30 = scmp.ne.s32.totalorder %s22, %s25
    %p31 = scmp.eq.s32.totalorder %s12, 0
    %p32 = por %p30, %p31
    %p33 = scmp.ne.s32.totalorder %s22, %s25
    %p34 = scmp.eq.s32.totalorder %s17, 3
    %p35 = por %p33, %p34
    %p36 = scmp.ne.s32.totalorder %s25, %s26
    %p37 = scmp.eq.s32.totalorder %s17, 0
    %p38 = por %p36, %p37
    %p39 = scmp.ne.s32.totalorder %s25, %s26
    %p40 = scmp.eq.s32.totalorder %s18, 3
    %p41 = por %p39, %p40
    %p43 = scmp.ne.s32.totalorder %s26, %s42
    %p44 = scmp.eq.s32.totalorder %s18, 0
    %p45 = por %p43, %p44
    %s46 = ssub.s32 %s12, %s19
    %p47 = scmp.eq.s32.totalorder %s46, 0
    %s49 = sadd.s32 %s48, 1
    %s50 = scalar_select %p47, %s48, %s49
    %p53 = pneg %p47
    %p54 = scmp.eq.s32.totalorder %s12, 3
    %p55 = por %p53, %p54
    %p56 = scmp.ne.s32.totalorder %s48, %s51
    %p57 = scmp.eq.s32.totalorder %s12, 0
    %p58 = por %p56, %p57
    %p59 = scmp.ne.s32.totalorder %s48, %s51
    %p60 = scmp.eq.s32.totalorder %s17, 3
    %p61 = por %p59, %p60
    %p62 = scmp.ne.s32.totalorder %s51, %s52
    %p63 = scmp.eq.s32.totalorder %s17, 0
    %p64 = por %p62, %p63
    %p65 = scmp.ne.s32.totalorder %s51, %s52
    %p66 = scmp.eq.s32.totalorder %s18, 3
    %p67 = por %p65, %p66
    %p69 = scmp.ne.s32.totalorder %s52, %s68
    %p70 = scmp.eq.s32.totalorder %s18, 0
    %p71 = por %p69, %p70
    %s72 = ssub.s32 %s12, %s19
    %p73 = scmp.eq.s32.totalorder %s72, 0
    %s75 = sadd.s32 %s74, 1
    %s76 = scalar_select %p73, %s74, %s75
    %p79 = pneg %p73
    %p80 = scmp.eq.s32.totalorder %s12, 3
    %p81 = por %p79, %p80
    %p82 = scmp.ne.s32.totalorder %s74, %s77
    %p83 = scmp.eq.s32.totalorder %s12, 0
    %p84 = por %p82, %p83
    %p85 = scmp.ne.s32.totalorder %s74, %s77
    %p86 = scmp.eq.s32.totalorder %s17, 3
    %p87 = por %p85, %p86
    %p88 = scmp.ne.s32.totalorder %s77, %s78
    %p89 = scmp.eq.s32.totalorder %s17, 0
    %p90 = por %p88, %p89
    %p91 = scmp.ne.s32.totalorder %s77, %s78
    %p92 = scmp.eq.s32.totalorder %s18, 3
    %p93 = por %p91, %p92
    %p95 = scmp.ne.s32.totalorder %s78, %s94
    %p96 = scmp.eq.s32.totalorder %s18, 0
    %p97 = por %p95, %p96
    %s98 = ssub.s32 %s12, %s19
    %p99 = scmp.eq.s32.totalorder %s98, 0
    %s101 = sadd.s32 %s100, 1
    %s102 = scalar_select %p99, %s100, %s101
    %p105 = pneg %p99
    %p106 = scmp.eq.s32.totalorder %s12, 3
    %p107 = por %p105, %p106
    %p108 = scmp.ne.s32.totalorder %s100, %s103
    %p109 = scmp.eq.s32.totalorder %s12, 0
    %p110 = por %p108, %p109
    %p111 = scmp.ne.s32.totalorder %s100, %s103
    %p112 = scmp.eq.s32.totalorder %s17, 3
    %p113 = por %p111, %p112
    %p114 = scmp.ne.s32.totalorder %s103, %s104
    %p115 = scmp.eq.s32.totalorder %s17, 0
    %p116 = por %p114, %p115
    %p117 = scmp.ne.s32.totalorder %s103, %s104
    %p118 = scmp.eq.s32.totalorder %s18, 3
    %p119 = por %p117, %p118
    %p121 = scmp.ne.s32.totalorder %s104, %s120
    %p122 = scmp.eq.s32.totalorder %s18, 0
    %p123 = por %p121, %p122
    %s125 = sadd.s32 %s124, 1
    %p128 = scmp.eq.s32.totalorder %s12, 3
    %p129 = scmp.ne.s32.totalorder %s124, %s126
    %p130 = scmp.eq.s32.totalorder %s12, 0
    %p131 = por %p129, %p130
    %p132 = scmp.ne.s32.totalorder %s124, %s126
    %p133 = scmp.eq.s32.totalorder %s17, 3
    %p134 = por %p132, %p133
    %p135 = scmp.ne.s32.totalorder %s126, %s127
    %p136 = scmp.eq.s32.totalorder %s17, 0
    %p137 = por %p135, %p136
    %p138 = scmp.ne.s32.totalorder %s126, %s127
    %p139 = scmp.eq.s32.totalorder %s18, 3
    %p140 = por %p138, %p139
    %p142 = scmp.ne.s32.totalorder %s127, %s141
    %p143 = scmp.eq.s32.totalorder %s18, 0
    %p144 = por %p142, %p143
    %s146 = sadd.s32 %s145, 1
    %p149 = scmp.eq.s32.totalorder %s12, 3
    %p150 = scmp.ne.s32.totalorder %s145, %s147
    %p151 = scmp.eq.s32.totalorder %s12, 0
    %p152 = por %p150, %p151
    %p153 = scmp.ne.s32.totalorder %s145, %s147
    %p154 = scmp.eq.s32.totalorder %s17, 3
    %p155 = por %p153, %p154
    %p156 = scmp.ne.s32.totalorder %s147, %s148
    %p157 = scmp.eq.s32.totalorder %s17, 0
    %p158 = por %p156, %p157
    %p159 = scmp.ne.s32.totalorder %s147, %s148
    %p160 = scmp.eq.s32.totalorder %s18, 3
    %p161 = por %p159, %p160
    %p163 = scmp.ne.s32.totalorder %s148, %s162
    %p164 = scmp.eq.s32.totalorder %s18, 0
    %p165 = por %p163, %p164
    %s166 = ssub.s32 %s12, %s19
    %p167 = scmp.eq.s32.totalorder %s166, 0
    %s169 = sadd.s32 %s168, 1
    %s170 = scalar_select %p167, %s168, %s169
    %p173 = pneg %p167
    %p174 = scmp.eq.s32.totalorder %s12, 3
    %p175 = por %p173, %p174
    %p176 = scmp.ne.s32.totalorder %s168, %s171
    %p177 = scmp.eq.s32.totalorder %s12, 0
    %p178 = por %p176, %p177
    %p179 = scmp.ne.s32.totalorder %s168, %s171
    %p180 = scmp.eq.s32.totalorder %s17, 3
    %p181 = por %p179, %p180
    %p182 = scmp.ne.s32.totalorder %s171, %s172
    %p183 = scmp.eq.s32.totalorder %s17, 0
    %p184 = por %p182, %p183
    %p185 = scmp.ne.s32.totalorder %s171, %s172
    %p186 = scmp.eq.s32.totalorder %s18, 3
    %p187 = por %p185, %p186
    %p189 = scmp.ne.s32.totalorder %s172, %s188
    %p190 = scmp.eq.s32.totalorder %s18, 0
    %p191 = por %p189, %p190
    %p192 = scmp.le.s32.totalorder 1, %s12
    %p193 = scmp.lt.s32.totalorder %s12, 5
    %p194 = pnand %p192, %p193
    %p195 = pneg %p194
    // Predicated region
    $region9: #{siamese_forward.3} parent=5 // pred_check
      _
    $region10: #{siamese_forward.3} parent=5 // pred_check_branch
      %197 = sbr.rel (%p194) target = $region12
    $region11: #{siamese_forward.3} parent=5 // pred_region
      %s198 = ssub.s32 %s12, 1
      // Predicated region
      $region13: #{siamese_forward.3} parent=11 // pred_check
        %p199 = pneg %p137
      $region14: #{siamese_forward.3} parent=11 // pred_check_branch
        %201 = sbr.rel (%p199) target = $region16
      $region15: #{siamese_forward.3} parent=11 // pred_region
        _
      $region16: #{siamese_forward.3} parent=11 // pred_fallthru
        _
      // Predicated region
      $region17: #{siamese_forward.3} parent=11 // pred_check
        %p202 = pneg %p158
      $region18: #{siamese_forward.3} parent=11 // pred_check_branch
        %204 = sbr.rel (%p202) target = $region20
      $region19: #{siamese_forward.3} parent=11 // pred_region
        _
      $region20: #{siamese_forward.3} parent=11 // pred_fallthru
        _
    $region12: #{siamese_forward.3} parent=5 // pred_fallthru
      _
    %p205 = scmp.lt.s32.totalorder %s12, 4
    // Predicated region
    $region21: #{siamese_forward.3} parent=5 // pred_check
      %p206 = pneg %p205
    $region22: #{siamese_forward.3} parent=5 // pred_check_branch
      %208 = sbr.rel (%p206) target = $region24
    $region23: #{siamese_forward.3} parent=5 // pred_region
      // Predicated region
      $region25: #{siamese_forward.3} parent=23 // pred_check
        %p209 = pneg %p32
      $region26: #{siamese_forward.3} parent=23 // pred_check_branch
        %211 = sbr.rel (%p209) target = $region28
      $region27: #{siamese_forward.3} parent=23 // pred_region
        %s212 = smul.u32 98, %s12
        %p213 = scmp.lt.s32.totalorder %s212, 391
        %s214 = scalar_select %p213, %s212, 391
        %s215 = smul.addr %s214, 8
        %s216 = scalar_lea.vmem %s0, %s215
        %s217 = smul.u32 98, %s12
      $region28: #{siamese_forward.3} parent=23 // pred_fallthru
        _
      // Predicated region
      $region29: #{siamese_forward.3} parent=23 // pred_check
        %p218 = pneg %p58
      $region30: #{siamese_forward.3} parent=23 // pred_check_branch
        %220 = sbr.rel (%p218) target = $region32
      $region31: #{siamese_forward.3} parent=23 // pred_region
        %s221 = smul.u32 98, %s12
        %p222 = scmp.lt.s32.totalorder %s221, 391
        %s223 = scalar_select %p222, %s221, 391
        %s224 = smul.addr %s223, 8
        %s225 = scalar_lea.vmem %s1, %s224
        %s226 = smul.u32 98, %s12
      $region32: #{siamese_forward.3} parent=23 // pred_fallthru
        _
      // Predicated region
      $region33: #{siamese_forward.3} parent=23 // pred_check
        %p227 = pneg %p84
      $region34: #{siamese_forward.3} parent=23 // pred_check_branch
        %229 = sbr.rel (%p227) target = $region36
      $region35: #{siamese_forward.3} parent=23 // pred_region
        %s230 = smul.u32 98, %s12
        %p231 = scmp.lt.s32.totalorder %s230, 391
        %s232 = scalar_select %p231, %s230, 391
        %s233 = smul.addr %s232, 8
        %s234 = scalar_lea.vmem %s2, %s233
        %s235 = smul.u32 98, %s12
      $region36: #{siamese_forward.3} parent=23 // pred_fallthru
        _
      // Predicated region
      $region37: #{siamese_forward.3} parent=23 // pred_check
        %p236 = pneg %p110
      $region38: #{siamese_forward.3} parent=23 // pred_check_branch
        %238 = sbr.rel (%p236) target = $region40
      $region39: #{siamese_forward.3} parent=23 // pred_region
        %s239 = smul.u32 98, %s12
        %p240 = scmp.lt.s32.totalorder %s239, 391
        %s241 = scalar_select %p240, %s239, 391
        %s242 = smul.addr %s241, 8
        %s243 = scalar_lea.vmem %s3, %s242
        %s244 = smul.u32 98, %s12
      $region40: #{siamese_forward.3} parent=23 // pred_fallthru
        _
    $region24: #{siamese_forward.3} parent=5 // pred_fallthru
      _
    %p245 = scmp.le.s32.totalorder 1, %s12
    %p246 = scmp.lt.s32.totalorder %s12, 5
    %p247 = pnand %p245, %p246
    %p248 = pneg %p247
    // Predicated region
    $region41: #{siamese_forward.3} parent=5 // pred_check
      _
    $region42: #{siamese_forward.3} parent=5 // pred_check_branch
      %250 = sbr.rel (%p247) target = $region44
    $region43: #{siamese_forward.3} parent=5 // pred_region
      %s251 = ssub.s32 %s12, 1
      %s252 = smul.u32 98, %s17
      %p253 = scmp.lt.s32.totalorder %s252, 391
      %s254 = scalar_select %p253, %s252, 391
      %s255 = smul.addr %s254, 8
      %s256 = scalar_lea.vmem %s0, %s255
      %p257 = pneg %p38
      %p258 = pneg %p35
      %s259 = smul.u32 98, %s17
      %p260 = scmp.lt.s32.totalorder %s259, 391
      %s261 = scalar_select %p260, %s259, 391
      %s262 = smul.addr %s261, 8
      %s263 = scalar_lea.vmem %s1, %s262
      %p264 = pneg %p64
      %p265 = pneg %p61
      %s266 = smul.u32 98, %s17
      %p267 = scmp.lt.s32.totalorder %s266, 391
      %s268 = scalar_select %p267, %s266, 391
      %s269 = smul.addr %s268, 8
      %s270 = scalar_lea.vmem %s2, %s269
      %p271 = pneg %p90
      %p272 = pneg %p87
      %s273 = smul.u32 98, %s17
      %p274 = scmp.lt.s32.totalorder %s273, 391
      %s275 = scalar_select %p274, %s273, 391
      %s276 = smul.addr %s275, 8
      %s277 = scalar_lea.vmem %s3, %s276
      %p278 = pneg %p116
      %p279 = pneg %p113
      %p280 = pneg %p137
      %p281 = pneg %p134
      %p282 = pneg %p158
      %p283 = pneg %p155
      %p284 = pneg %p184
      %p285 = pneg %p181
      %s286 = smul.u32 98, %s17
      %p287 = scmp.lt.s32.totalorder %s286, 391
      %s288 = scalar_select %p287, %s286, 391
      %s289 = smul.addr %s288, 8
      %s290 = scalar_lea.vmem %s6, %s289
      %s291 = smul.u32 98, %s17
      %p292 = scmp.lt.s32.totalorder %s291, 391
      %s293 = scalar_select %p292, %s291, 391
      %s294 = smul.addr %s293, 8
      %s295 = scalar_lea.vmem %s0, %s294
      %s296 = smul.u32 98, %s17
      %s297 = smul.u32 98, %s17
      %p298 = scmp.lt.s32.totalorder %s297, 391
      %s299 = scalar_select %p298, %s297, 391
      %s300 = smul.addr %s299, 8
      %s301 = scalar_lea.vmem %s1, %s300
      %s302 = smul.u32 98, %s17
      %s303 = smul.u32 98, %s17
      %p304 = scmp.lt.s32.totalorder %s303, 391
      %s305 = scalar_select %p304, %s303, 391
      %s306 = smul.addr %s305, 8
      %s307 = scalar_lea.vmem %s2, %s306
      %s308 = smul.u32 98, %s17
      %s309 = smul.u32 98, %s17
      %p310 = scmp.lt.s32.totalorder %s309, 391
      %s311 = scalar_select %p310, %s309, 391
      %s312 = smul.addr %s311, 8
      %s313 = scalar_lea.vmem %s3, %s312
      %s314 = smul.u32 98, %s17
      %s315 = smul.u32 98, %s17
      %p316 = scmp.lt.s32.totalorder %s315, 391
      %s317 = scalar_select %p316, %s315, 391
      %s318 = smul.addr %s317, 8
      %s319 = scalar_lea.vmem %s6, %s318
      %s320 = smul.u32 98, %s17
      %v321 = vld [vmem:[%s295] sm:$0xff]
      %v322 = vld [vmem:[%s295 + $0x8] sm:$0xff]
      %v323 = vld [vmem:[%s295 + $0x10] sm:$0xff]
      %v324 = vld [vmem:[%s295 + $0x18] sm:$0xff]
      %v325 = vld [vmem:[%s295 + $0x20] sm:$0xff]
      %v326 = vld [vmem:[%s295 + $0x28] sm:$0xff]
      %v327 = vld [vmem:[%s295 + $0x30] sm:$0xff]
      %v328 = vld [vmem:[%s295 + $0x38] sm:$0xff]
      %v329 = vld [vmem:[%s295 + $0x40] sm:$0xff]
      %v330 = vld [vmem:[%s295 + $0x48] sm:$0xff]
      %v331 = vld [vmem:[%s295 + $0x50] sm:$0xff]
      %v332 = vld [vmem:[%s295 + $0x58] sm:$0xff]
      %v333 = vld [vmem:[%s295 + $0x60] sm:$0xff]
      %v334 = vld [vmem:[%s295 + $0x68] sm:$0xff]
      %v335 = vld [vmem:[%s295 + $0x70] sm:$0xff]
      %v336 = vld [vmem:[%s295 + $0x78] sm:$0xff]
      %v337 = vld [vmem:[%s295 + $0x80] sm:$0xff]
      %v338 = vld [vmem:[%s295 + $0x88] sm:$0xff]
      %v339 = vld [vmem:[%s295 + $0x90] sm:$0xff]
      %v340 = vld [vmem:[%s295 + $0x98] sm:$0xff]
      %v341 = vld [vmem:[%s295 + $0xa0] sm:$0xff]
      %v342 = vld [vmem:[%s295 + $0xa8] sm:$0xff]
      %v343 = vld [vmem:[%s295 + $0xb0] sm:$0xff]
      %v344 = vld [vmem:[%s295 + $0xb8] sm:$0xff]
      %v345 = vld [vmem:[%s295 + $0xc0] sm:$0xff]
      %v346 = vld [vmem:[%s295 + $0xc8] sm:$0xff]
      %v347 = vld [vmem:[%s295 + $0xd0] sm:$0xff]
      %v348 = vld [vmem:[%s295 + $0xd8] sm:$0xff]
      %v349 = vld [vmem:[%s295 + $0xe0] sm:$0xff]
      %v350 = vld [vmem:[%s295 + $0xe8] sm:$0xff]
      %v351 = vld [vmem:[%s295 + $0xf0] sm:$0xff]
      %v352 = vld [vmem:[%s295 + $0xf8] sm:$0xff]
      %v353 = vld [vmem:[%s295 + $0x100] sm:$0xff]
      %v354 = vld [vmem:[%s295 + $0x108] sm:$0xff]
      %v355 = vld [vmem:[%s295 + $0x110] sm:$0xff]
      %v356 = vld [vmem:[%s295 + $0x118] sm:$0xff]
      %v357 = vld [vmem:[%s295 + $0x120] sm:$0xff]
      %v358 = vld [vmem:[%s295 + $0x128] sm:$0xff]
      %v359 = vld [vmem:[%s295 + $0x130] sm:$0xff]
      %v360 = vld [vmem:[%s295 + $0x138] sm:$0xff]
      %v361 = vld [vmem:[%s295 + $0x140] sm:$0xff]
      %v362 = vld [vmem:[%s295 + $0x148] sm:$0xff]
      %v363 = vld [vmem:[%s295 + $0x150] sm:$0xff]
      %v364 = vld [vmem:[%s295 + $0x158] sm:$0xff]
      %v365 = vld [vmem:[%s295 + $0x160] sm:$0xff]
      %v366 = vld [vmem:[%s295 + $0x168] sm:$0xff]
      %v367 = vld [vmem:[%s295 + $0x170] sm:$0xff]
      %v368 = vld [vmem:[%s295 + $0x178] sm:$0xff]
      %v369 = vld [vmem:[%s295 + $0x180] sm:$0xff]
      %v370 = vld [vmem:[%s295 + $0x188] sm:$0xff]
      %v371 = vld [vmem:[%s295 + $0x190] sm:$0xff]
      %v372 = vld [vmem:[%s295 + $0x198] sm:$0xff]
      %v373 = vld [vmem:[%s295 + $0x1a0] sm:$0xff]
      %v374 = vld [vmem:[%s295 + $0x1a8] sm:$0xff]
      %v375 = vld [vmem:[%s295 + $0x1b0] sm:$0xff]
      %v376 = vld [vmem:[%s295 + $0x1b8] sm:$0xff]
      %v377 = vld [vmem:[%s295 + $0x1c0] sm:$0xff]
      %v378 = vld [vmem:[%s295 + $0x1c8] sm:$0xff]
      %v379 = vld [vmem:[%s295 + $0x1d0] sm:$0xff]
      %v380 = vld [vmem:[%s295 + $0x1d8] sm:$0xff]
      %v381 = vld [vmem:[%s295 + $0x1e0] sm:$0xff]
      %v382 = vld [vmem:[%s295 + $0x1e8] sm:$0xff]
      %v383 = vld [vmem:[%s295 + $0x1f0] sm:$0xff]
      %v384 = vld [vmem:[%s295 + $0x1f8] sm:$0xff]
      %v385 = vld [vmem:[%s295 + $0x200] sm:$0xff]
      %v386 = vld [vmem:[%s295 + $0x208] sm:$0xff]
      %v387 = vld [vmem:[%s295 + $0x210] sm:$0xff]
      %v388 = vld [vmem:[%s295 + $0x218] sm:$0xff]
      %v389 = vld [vmem:[%s295 + $0x220] sm:$0xff]
      %v390 = vld [vmem:[%s295 + $0x228] sm:$0xff]
      %v391 = vld [vmem:[%s295 + $0x230] sm:$0xff]
      %v392 = vld [vmem:[%s295 + $0x238] sm:$0xff]
      %v393 = vld [vmem:[%s295 + $0x240] sm:$0xff]
      %v394 = vld [vmem:[%s295 + $0x248] sm:$0xff]
      %v395 = vld [vmem:[%s295 + $0x250] sm:$0xff]
      %v396 = vld [vmem:[%s295 + $0x258] sm:$0xff]
      %v397 = vld [vmem:[%s295 + $0x260] sm:$0xff]
      %v398 = vld [vmem:[%s295 + $0x268] sm:$0xff]
      %v399 = vld [vmem:[%s295 + $0x270] sm:$0xff]
      %v400 = vld [vmem:[%s295 + $0x278] sm:$0xff]
      %v401 = vld [vmem:[%s295 + $0x280] sm:$0xff]
      %v402 = vld [vmem:[%s295 + $0x288] sm:$0xff]
      %v403 = vld [vmem:[%s295 + $0x290] sm:$0xff]
      %v404 = vld [vmem:[%s295 + $0x298] sm:$0xff]
      %v405 = vld [vmem:[%s295 + $0x2a0] sm:$0xff]
      %v406 = vld [vmem:[%s295 + $0x2a8] sm:$0xff]
      %v407 = vld [vmem:[%s295 + $0x2b0] sm:$0xff]
      %v408 = vld [vmem:[%s295 + $0x2b8] sm:$0xff]
      %v409 = vld [vmem:[%s295 + $0x2c0] sm:$0xff]
      %v410 = vld [vmem:[%s295 + $0x2c8] sm:$0xff]
      %v411 = vld [vmem:[%s295 + $0x2d0] sm:$0xff]
      %v412 = vld [vmem:[%s295 + $0x2d8] sm:$0xff]
      %v413 = vld [vmem:[%s295 + $0x2e0] sm:$0xff]
      %v414 = vld [vmem:[%s295 + $0x2e8] sm:$0xff]
      %v415 = vld [vmem:[%s295 + $0x2f0] sm:$0xff]
      %v416 = vld [vmem:[%s295 + $0x2f8] sm:$0xff]
      %v417 = vld [vmem:[%s295 + $0x300] sm:$0xff]
      %v418 = vld [vmem:[%s295 + $0x308] sm:$0xff]
      %v419 = vld [vmem:[%s4] sm:$0xff]
      %v420 = vld [vmem:[%s4 + $0x8] sm:$0xff]
      %v421 = vld [vmem:[%s4 + $0x10] sm:$0xff]
      %v422 = vld [vmem:[%s4 + $0x18] sm:$0xff]
      %v423 = vld [vmem:[%s4 + $0x20] sm:$0xff]
      %v424 = vld [vmem:[%s4 + $0x28] sm:$0xff]
      %v425 = vld [vmem:[%s4 + $0x30] sm:$0xff]
      %v426 = vld [vmem:[%s4 + $0x38] sm:$0xff]
      %v427 = vld [vmem:[%s4 + $0x40] sm:$0xff]
      %v428 = vld [vmem:[%s4 + $0x48] sm:$0x7]
      %vm429 = vcmask 613376
      %v431 = vsel %vm429, %v321, 0
      %v434 = vsel %vm429, %v322, 0
      %v437 = vsel %vm429, %v323, 0
      %v440 = vsel %vm429, %v324, 0
      %v443 = vsel %vm429, %v325, 0
      %v446 = vsel %vm429, %v326, 0
      %v449 = vsel %vm429, %v327, 0
      %v452 = vsel %vm429, %v328, 0
      %v455 = vsel %vm429, %v329, 0
      %v458 = vsel %vm429, %v330, 0
      %v461 = vsel %vm429, %v331, 0
      %v464 = vsel %vm429, %v332, 0
      %v467 = vsel %vm429, %v333, 0
      %v470 = vsel %vm429, %v334, 0
      %v473 = vsel %vm429, %v335, 0
      %v476 = vsel %vm429, %v336, 0
      %v479 = vsel %vm429, %v337, 0
      %v482 = vsel %vm429, %v338, 0
      %v485 = vsel %vm429, %v339, 0
      %v488 = vsel %vm429, %v340, 0
      %v491 = vsel %vm429, %v341, 0
      %v494 = vsel %vm429, %v342, 0
      %v497 = vsel %vm429, %v343, 0
      %v500 = vsel %vm429, %v344, 0
      %v503 = vsel %vm429, %v345, 0
      %v506 = vsel %vm429, %v346, 0
      %v509 = vsel %vm429, %v347, 0
      %v512 = vsel %vm429, %v348, 0
      %v515 = vsel %vm429, %v349, 0
      %v518 = vsel %vm429, %v350, 0
      %v521 = vsel %vm429, %v351, 0
      %v524 = vsel %vm429, %v352, 0
      %v527 = vsel %vm429, %v353, 0
      %v530 = vsel %vm429, %v354, 0
      %v533 = vsel %vm429, %v355, 0
      %v536 = vsel %vm429, %v356, 0
      %v539 = vsel %vm429, %v357, 0
      %v542 = vsel %vm429, %v358, 0
      %v545 = vsel %vm429, %v359, 0
      %v548 = vsel %vm429, %v360, 0
      %v551 = vsel %vm429, %v361, 0
      %v554 = vsel %vm429, %v362, 0
      %v557 = vsel %vm429, %v363, 0
      %v560 = vsel %vm429, %v364, 0
      %v563 = vsel %vm429, %v365, 0
      %v566 = vsel %vm429, %v366, 0
      %v569 = vsel %vm429, %v367, 0
      %v572 = vsel %vm429, %v368, 0
      %v575 = vsel %vm429, %v369, 0
      %v578 = vsel %vm429, %v370, 0
      %v581 = vsel %vm429, %v371, 0
      %v584 = vsel %vm429, %v372, 0
      %v587 = vsel %vm429, %v373, 0
      %v590 = vsel %vm429, %v374, 0
      %v593 = vsel %vm429, %v375, 0
      %v596 = vsel %vm429, %v376, 0
      %v599 = vsel %vm429, %v377, 0
      %v602 = vsel %vm429, %v378, 0
      %v605 = vsel %vm429, %v379, 0
      %v608 = vsel %vm429, %v380, 0
      %v611 = vsel %vm429, %v381, 0
      %v614 = vsel %vm429, %v382, 0
      %v617 = vsel %vm429, %v383, 0
      %v620 = vsel %vm429, %v384, 0
      %v623 = vsel %vm429, %v385, 0
      %v626 = vsel %vm429, %v386, 0
      %v629 = vsel %vm429, %v387, 0
      %v632 = vsel %vm429, %v388, 0
      %v635 = vsel %vm429, %v389, 0
      %v638 = vsel %vm429, %v390, 0
      %v641 = vsel %vm429, %v391, 0
      %v644 = vsel %vm429, %v392, 0
      %v647 = vsel %vm429, %v393, 0
      %v650 = vsel %vm429, %v394, 0
      %v653 = vsel %vm429, %v395, 0
      %v656 = vsel %vm429, %v396, 0
      %v659 = vsel %vm429, %v397, 0
      %v662 = vsel %vm429, %v398, 0
      %v665 = vsel %vm429, %v399, 0
      %v668 = vsel %vm429, %v400, 0
      %v671 = vsel %vm429, %v401, 0
      %v674 = vsel %vm429, %v402, 0
      %v677 = vsel %vm429, %v403, 0
      %v680 = vsel %vm429, %v404, 0
      %v683 = vsel %vm429, %v405, 0
      %v686 = vsel %vm429, %v406, 0
      %v689 = vsel %vm429, %v407, 0
      %v692 = vsel %vm429, %v408, 0
      %v695 = vsel %vm429, %v409, 0
      %v698 = vsel %vm429, %v410, 0
      %v701 = vsel %vm429, %v411, 0
      %v704 = vsel %vm429, %v412, 0
      %v707 = vsel %vm429, %v413, 0
      %v710 = vsel %vm429, %v414, 0
      %v713 = vsel %vm429, %v415, 0
      %v716 = vsel %vm429, %v416, 0
      %v719 = vsel %vm429, %v417, 0
      %v722 = vsel %vm429, %v418, 0
      %vm724 = vcmask 1042432
      %v726 = vsel %vm724, %v428, 0
      %728 = vmatpush.msra.mxu0 0.0
      %729 = vmatpush.msra.mxu0 0.0
      %730 = vmatpush.msra.mxu0 0.0
      %731 = vmatpush.msra.mxu0 0.0
      %732 = vmatpush.msra.mxu0 0.0
      %733 = vmatpush.msra.mxu0 0.0
      %734 = vmatpush.msra.mxu0 %v726
      %735 = vmatpush.msra.mxu0 %v427
      %736 = vmatpush.msra.mxu0 %v426
      %737 = vmatpush.msra.mxu0 %v425
      %738 = vmatpush.msra.mxu0 %v424
      %739 = vmatpush.msra.mxu0 %v423
      %740 = vmatpush.msra.mxu0 %v422
      %741 = vmatpush.msra.mxu0 %v421
      %742 = vmatpush.msra.mxu0 %v420
      %743 = vmatpush.msra.mxu0 %v419
      %744 = vmatmul.f32.gmra.mxu0 %v431
      %v745 = vpop.f32.mrf.mxu0
      %v746 = vadd.f32 0.0, %v745
      %747 = vmatmul.f32.gmra.mxu0 %v434
      %v748 = vpop.f32.mrf.mxu0
      %v749 = vadd.f32 0.0, %v748
      %750 = vmatmul.f32.gmra.mxu0 %v437
      %v751 = vpop.f32.mrf.mxu0
      %v752 = vadd.f32 0.0, %v751
      %753 = vmatmul.f32.gmra.mxu0 %v440
      %v754 = vpop.f32.mrf.mxu0
      %v755 = vadd.f32 0.0, %v754
      %756 = vmatmul.f32.gmra.mxu0 %v443
      %v757 = vpop.f32.mrf.mxu0
      %v758 = vadd.f32 0.0, %v757
      %759 = vmatmul.f32.gmra.mxu0 %v446
      %v760 = vpop.f32.mrf.mxu0
      %v761 = vadd.f32 0.0, %v760
      %762 = vmatmul.f32.gmra.mxu0 %v449
      %v763 = vpop.f32.mrf.mxu0
      %v764 = vadd.f32 0.0, %v763
      %765 = vmatmul.f32.gmra.mxu0 %v452
      %v766 = vpop.f32.mrf.mxu0
      %v767 = vadd.f32 0.0, %v766
      %768 = vmatmul.f32.gmra.mxu0 %v455
      %v769 = vpop.f32.mrf.mxu0
      %v770 = vadd.f32 0.0, %v769
      %771 = vmatmul.f32.gmra.mxu0 %v458
      %v772 = vpop.f32.mrf.mxu0
      %v773 = vadd.f32 0.0, %v772
      %774 = vmatmul.f32.gmra.mxu0 %v461
      %v775 = vpop.f32.mrf.mxu0
      %v776 = vadd.f32 0.0, %v775
      %777 = vmatmul.f32.gmra.mxu0 %v464
      %v778 = vpop.f32.mrf.mxu0
      %v779 = vadd.f32 0.0, %v778
      %780 = vmatmul.f32.gmra.mxu0 %v467
      %v781 = vpop.f32.mrf.mxu0
      %v782 = vadd.f32 0.0, %v781
      %783 = vmatmul.f32.gmra.mxu0 %v470
      %v784 = vpop.f32.mrf.mxu0
      %v785 = vadd.f32 0.0, %v784
      %786 = vmatmul.f32.gmra.mxu0 %v473
      %v787 = vpop.f32.mrf.mxu0
      %v788 = vadd.f32 0.0, %v787
      %789 = vmatmul.f32.gmra.mxu0 %v476
      %v790 = vpop.f32.mrf.mxu0
      %v791 = vadd.f32 0.0, %v790
      %792 = vmatmul.f32.gmra.mxu0 %v479
      %v793 = vpop.f32.mrf.mxu0
      %v794 = vadd.f32 0.0, %v793
      %795 = vmatmul.f32.gmra.mxu0 %v482
      %v796 = vpop.f32.mrf.mxu0
      %v797 = vadd.f32 0.0, %v796
      %798 = vmatmul.f32.gmra.mxu0 %v485
      %v799 = vpop.f32.mrf.mxu0
      %v800 = vadd.f32 0.0, %v799
      %801 = vmatmul.f32.gmra.mxu0 %v488
      %v802 = vpop.f32.mrf.mxu0
      %v803 = vadd.f32 0.0, %v802
      %804 = vmatmul.f32.gmra.mxu0 %v491
      %v805 = vpop.f32.mrf.mxu0
      %v806 = vadd.f32 0.0, %v805
      %807 = vmatmul.f32.gmra.mxu0 %v494
      %v808 = vpop.f32.mrf.mxu0
      %v809 = vadd.f32 0.0, %v808
      %810 = vmatmul.f32.gmra.mxu0 %v497
      %v811 = vpop.f32.mrf.mxu0
      %v812 = vadd.f32 0.0, %v811
      %813 = vmatmul.f32.gmra.mxu0 %v500
      %v814 = vpop.f32.mrf.mxu0
      %v815 = vadd.f32 0.0, %v814
      %816 = vmatmul.f32.gmra.mxu0 %v503
      %v817 = vpop.f32.mrf.mxu0
      %v818 = vadd.f32 0.0, %v817
      %819 = vmatmul.f32.gmra.mxu0 %v506
      %v820 = vpop.f32.mrf.mxu0
      %v821 = vadd.f32 0.0, %v820
      %822 = vmatmul.f32.gmra.mxu0 %v509
      %v823 = vpop.f32.mrf.mxu0
      %v824 = vadd.f32 0.0, %v823
      %825 = vmatmul.f32.gmra.mxu0 %v512
      %v826 = vpop.f32.mrf.mxu0
      %v827 = vadd.f32 0.0, %v826
      %828 = vmatmul.f32.gmra.mxu0 %v515
      %v829 = vpop.f32.mrf.mxu0
      %v830 = vadd.f32 0.0, %v829
      %831 = vmatmul.f32.gmra.mxu0 %v518
      %v832 = vpop.f32.mrf.mxu0
      %v833 = vadd.f32 0.0, %v832
      %834 = vmatmul.f32.gmra.mxu0 %v521
      %v835 = vpop.f32.mrf.mxu0
      %v836 = vadd.f32 0.0, %v835
      %837 = vmatmul.f32.gmra.mxu0 %v524
      %v838 = vpop.f32.mrf.mxu0
      %v839 = vadd.f32 0.0, %v838
      %840 = vmatmul.f32.gmra.mxu0 %v527
      %v841 = vpop.f32.mrf.mxu0
      %v842 = vadd.f32 0.0, %v841
      %843 = vmatmul.f32.gmra.mxu0 %v530
      %v844 = vpop.f32.mrf.mxu0
      %v845 = vadd.f32 0.0, %v844
      %846 = vmatmul.f32.gmra.mxu0 %v533
      %v847 = vpop.f32.mrf.mxu0
      %v848 = vadd.f32 0.0, %v847
      %849 = vmatmul.f32.gmra.mxu0 %v536
      %v850 = vpop.f32.mrf.mxu0
      %v851 = vadd.f32 0.0, %v850
      %852 = vmatmul.f32.gmra.mxu0 %v539
      %v853 = vpop.f32.mrf.mxu0
      %v854 = vadd.f32 0.0, %v853
      %855 = vmatmul.f32.gmra.mxu0 %v542
      %v856 = vpop.f32.mrf.mxu0
      %v857 = vadd.f32 0.0, %v856
      %858 = vmatmul.f32.gmra.mxu0 %v545
      %v859 = vpop.f32.mrf.mxu0
      %v860 = vadd.f32 0.0, %v859
      %861 = vmatmul.f32.gmra.mxu0 %v548
      %v862 = vpop.f32.mrf.mxu0
      %v863 = vadd.f32 0.0, %v862
      %864 = vmatmul.f32.gmra.mxu0 %v551
      %v865 = vpop.f32.mrf.mxu0
      %v866 = vadd.f32 0.0, %v865
      %867 = vmatmul.f32.gmra.mxu0 %v554
      %v868 = vpop.f32.mrf.mxu0
      %v869 = vadd.f32 0.0, %v868
      %870 = vmatmul.f32.gmra.mxu0 %v557
      %v871 = vpop.f32.mrf.mxu0
      %v872 = vadd.f32 0.0, %v871
      %873 = vmatmul.f32.gmra.mxu0 %v560
      %v874 = vpop.f32.mrf.mxu0
      %v875 = vadd.f32 0.0, %v874
      %876 = vmatmul.f32.gmra.mxu0 %v563
      %v877 = vpop.f32.mrf.mxu0
      %v878 = vadd.f32 0.0, %v877
      %879 = vmatmul.f32.gmra.mxu0 %v566
      %v880 = vpop.f32.mrf.mxu0
      %v881 = vadd.f32 0.0, %v880
      %882 = vmatmul.f32.gmra.mxu0 %v569
      %v883 = vpop.f32.mrf.mxu0
      %v884 = vadd.f32 0.0, %v883
      %885 = vmatmul.f32.gmra.mxu0 %v572
      %v886 = vpop.f32.mrf.mxu0
      %v887 = vadd.f32 0.0, %v886
      %888 = vmatmul.f32.gmra.mxu0 %v575
      %v889 = vpop.f32.mrf.mxu0
      %v890 = vadd.f32 0.0, %v889
      %891 = vmatmul.f32.gmra.mxu0 %v578
      %v892 = vpop.f32.mrf.mxu0
      %v893 = vadd.f32 0.0, %v892
      %894 = vmatmul.f32.gmra.mxu0 %v581
      %v895 = vpop.f32.mrf.mxu0
      %v896 = vadd.f32 0.0, %v895
      %897 = vmatmul.f32.gmra.mxu0 %v584
      %v898 = vpop.f32.mrf.mxu0
      %v899 = vadd.f32 0.0, %v898
      %900 = vmatmul.f32.gmra.mxu0 %v587
      %v901 = vpop.f32.mrf.mxu0
      %v902 = vadd.f32 0.0, %v901
      %903 = vmatmul.f32.gmra.mxu0 %v590
      %v904 = vpop.f32.mrf.mxu0
      %v905 = vadd.f32 0.0, %v904
      %906 = vmatmul.f32.gmra.mxu0 %v593
      %v907 = vpop.f32.mrf.mxu0
      %v908 = vadd.f32 0.0, %v907
      %909 = vmatmul.f32.gmra.mxu0 %v596
      %v910 = vpop.f32.mrf.mxu0
      %v911 = vadd.f32 0.0, %v910
      %912 = vmatmul.f32.gmra.mxu0 %v599
      %v913 = vpop.f32.mrf.mxu0
      %v914 = vadd.f32 0.0, %v913
      %915 = vmatmul.f32.gmra.mxu0 %v602
      %v916 = vpop.f32.mrf.mxu0
      %v917 = vadd.f32 0.0, %v916
      %918 = vmatmul.f32.gmra.mxu0 %v605
      %v919 = vpop.f32.mrf.mxu0
      %v920 = vadd.f32 0.0, %v919
      %921 = vmatmul.f32.gmra.mxu0 %v608
      %v922 = vpop.f32.mrf.mxu0
      %v923 = vadd.f32 0.0, %v922
      %924 = vmatmul.f32.gmra.mxu0 %v611
      %v925 = vpop.f32.mrf.mxu0
      %v926 = vadd.f32 0.0, %v925
      %927 = vmatmul.f32.gmra.mxu0 %v614
      %v928 = vpop.f32.mrf.mxu0
      %v929 = vadd.f32 0.0, %v928
      %930 = vmatmul.f32.gmra.mxu0 %v617
      %v931 = vpop.f32.mrf.mxu0
      %v932 = vadd.f32 0.0, %v931
      %933 = vmatmul.f32.gmra.mxu0 %v620
      %v934 = vpop.f32.mrf.mxu0
      %v935 = vadd.f32 0.0, %v934
      %936 = vmatmul.f32.gmra.mxu0 %v623
      %v937 = vpop.f32.mrf.mxu0
      %v938 = vadd.f32 0.0, %v937
      %939 = vmatmul.f32.gmra.mxu0 %v626
      %v940 = vpop.f32.mrf.mxu0
      %v941 = vadd.f32 0.0, %v940
      %942 = vmatmul.f32.gmra.mxu0 %v629
      %v943 = vpop.f32.mrf.mxu0
      %v944 = vadd.f32 0.0, %v943
      %945 = vmatmul.f32.gmra.mxu0 %v632
      %v946 = vpop.f32.mrf.mxu0
      %v947 = vadd.f32 0.0, %v946
      %948 = vmatmul.f32.gmra.mxu0 %v635
      %v949 = vpop.f32.mrf.mxu0
      %v950 = vadd.f32 0.0, %v949
      %951 = vmatmul.f32.gmra.mxu0 %v638
      %v952 = vpop.f32.mrf.mxu0
      %v953 = vadd.f32 0.0, %v952
      %954 = vmatmul.f32.gmra.mxu0 %v641
      %v955 = vpop.f32.mrf.mxu0
      %v956 = vadd.f32 0.0, %v955
      %957 = vmatmul.f32.gmra.mxu0 %v644
      %v958 = vpop.f32.mrf.mxu0
      %v959 = vadd.f32 0.0, %v958
      %960 = vmatmul.f32.gmra.mxu0 %v647
      %v961 = vpop.f32.mrf.mxu0
      %v962 = vadd.f32 0.0, %v961
      %963 = vmatmul.f32.gmra.mxu0 %v650
      %v964 = vpop.f32.mrf.mxu0
      %v965 = vadd.f32 0.0, %v964
      %966 = vmatmul.f32.gmra.mxu0 %v653
      %v967 = vpop.f32.mrf.mxu0
      %v968 = vadd.f32 0.0, %v967
      %969 = vmatmul.f32.gmra.mxu0 %v656
      %v970 = vpop.f32.mrf.mxu0
      %v971 = vadd.f32 0.0, %v970
      %972 = vmatmul.f32.gmra.mxu0 %v659
      %v973 = vpop.f32.mrf.mxu0
      %v974 = vadd.f32 0.0, %v973
      %975 = vmatmul.f32.gmra.mxu0 %v662
      %v976 = vpop.f32.mrf.mxu0
      %v977 = vadd.f32 0.0, %v976
      %978 = vmatmul.f32.gmra.mxu0 %v665
      %v979 = vpop.f32.mrf.mxu0
      %v980 = vadd.f32 0.0, %v979
      %981 = vmatmul.f32.gmra.mxu0 %v668
      %v982 = vpop.f32.mrf.mxu0
      %v983 = vadd.f32 0.0, %v982
      %984 = vmatmul.f32.gmra.mxu0 %v671
      %v985 = vpop.f32.mrf.mxu0
      %v986 = vadd.f32 0.0, %v985
      %987 = vmatmul.f32.gmra.mxu0 %v674
      %v988 = vpop.f32.mrf.mxu0
      %v989 = vadd.f32 0.0, %v988
      %990 = vmatmul.f32.gmra.mxu0 %v677
      %v991 = vpop.f32.mrf.mxu0
      %v992 = vadd.f32 0.0, %v991
      %993 = vmatmul.f32.gmra.mxu0 %v680
      %v994 = vpop.f32.mrf.mxu0
      %v995 = vadd.f32 0.0, %v994
      %996 = vmatmul.f32.gmra.mxu0 %v683
      %v997 = vpop.f32.mrf.mxu0
      %v998 = vadd.f32 0.0, %v997
      %999 = vmatmul.f32.gmra.mxu0 %v686
      %v1000 = vpop.f32.mrf.mxu0
      %v1001 = vadd.f32 0.0, %v1000
      %1002 = vmatmul.f32.gmra.mxu0 %v689
      %v1003 = vpop.f32.mrf.mxu0
      %v1004 = vadd.f32 0.0, %v1003
      %1005 = vmatmul.f32.gmra.mxu0 %v692
      %v1006 = vpop.f32.mrf.mxu0
      %v1007 = vadd.f32 0.0, %v1006
      %1008 = vmatmul.f32.gmra.mxu0 %v695
      %v1009 = vpop.f32.mrf.mxu0
      %v1010 = vadd.f32 0.0, %v1009
      %1011 = vmatmul.f32.gmra.mxu0 %v698
      %v1012 = vpop.f32.mrf.mxu0
      %v1013 = vadd.f32 0.0, %v1012
      %1014 = vmatmul.f32.gmra.mxu0 %v701
      %v1015 = vpop.f32.mrf.mxu0
      %v1016 = vadd.f32 0.0, %v1015
      %1017 = vmatmul.f32.gmra.mxu0 %v704
      %v1018 = vpop.f32.mrf.mxu0
      %v1019 = vadd.f32 0.0, %v1018
      %1020 = vmatmul.f32.gmra.mxu0 %v707
      %v1021 = vpop.f32.mrf.mxu0
      %v1022 = vadd.f32 0.0, %v1021
      %1023 = vmatmul.f32.gmra.mxu0 %v710
      %v1024 = vpop.f32.mrf.mxu0
      %v1025 = vadd.f32 0.0, %v1024
      %1026 = vmatmul.f32.gmra.mxu0 %v713
      %v1027 = vpop.f32.mrf.mxu0
      %v1028 = vadd.f32 0.0, %v1027
      %1029 = vmatmul.f32.gmra.mxu0 %v716
      %v1030 = vpop.f32.mrf.mxu0
      %v1031 = vadd.f32 0.0, %v1030
      %1032 = vmatmul.f32.gmra.mxu0 %v719
      %v1033 = vpop.f32.mrf.mxu0
      %v1034 = vadd.f32 0.0, %v1033
      %1035 = vmatmul.f32.gmra.mxu0 %v722
      %v1036 = vpop.f32.mrf.mxu0
      %v1037 = vadd.f32 0.0, %v1036
      %1038 = vdwg.mxu0
      %v1039 = vld [vmem:[%s301] sm:$0xff]
      %v1040 = vld [vmem:[%s301 + $0x8] sm:$0xff]
      %v1041 = vld [vmem:[%s301 + $0x10] sm:$0xff]
      %v1042 = vld [vmem:[%s301 + $0x18] sm:$0xff]
      %v1043 = vld [vmem:[%s301 + $0x20] sm:$0xff]
      %v1044 = vld [vmem:[%s301 + $0x28] sm:$0xff]
      %v1045 = vld [vmem:[%s301 + $0x30] sm:$0xff]
      %v1046 = vld [vmem:[%s301 + $0x38] sm:$0xff]
      %v1047 = vld [vmem:[%s301 + $0x40] sm:$0xff]
      %v1048 = vld [vmem:[%s301 + $0x48] sm:$0xff]
      %v1049 = vld [vmem:[%s301 + $0x50] sm:$0xff]
      %v1050 = vld [vmem:[%s301 + $0x58] sm:$0xff]
      %v1051 = vld [vmem:[%s301 + $0x60] sm:$0xff]
      %v1052 = vld [vmem:[%s301 + $0x68] sm:$0xff]
      %v1053 = vld [vmem:[%s301 + $0x70] sm:$0xff]
      %v1054 = vld [vmem:[%s301 + $0x78] sm:$0xff]
      %v1055 = vld [vmem:[%s301 + $0x80] sm:$0xff]
      %v1056 = vld [vmem:[%s301 + $0x88] sm:$0xff]
      %v1057 = vld [vmem:[%s301 + $0x90] sm:$0xff]
      %v1058 = vld [vmem:[%s301 + $0x98] sm:$0xff]
      %v1059 = vld [vmem:[%s301 + $0xa0] sm:$0xff]
      %v1060 = vld [vmem:[%s301 + $0xa8] sm:$0xff]
      %v1061 = vld [vmem:[%s301 + $0xb0] sm:$0xff]
      %v1062 = vld [vmem:[%s301 + $0xb8] sm:$0xff]
      %v1063 = vld [vmem:[%s301 + $0xc0] sm:$0xff]
      %v1064 = vld [vmem:[%s301 + $0xc8] sm:$0xff]
      %v1065 = vld [vmem:[%s301 + $0xd0] sm:$0xff]
      %v1066 = vld [vmem:[%s301 + $0xd8] sm:$0xff]
      %v1067 = vld [vmem:[%s301 + $0xe0] sm:$0xff]
      %v1068 = vld [vmem:[%s301 + $0xe8] sm:$0xff]
      %v1069 = vld [vmem:[%s301 + $0xf0] sm:$0xff]
      %v1070 = vld [vmem:[%s301 + $0xf8] sm:$0xff]
      %v1071 = vld [vmem:[%s301 + $0x100] sm:$0xff]
      %v1072 = vld [vmem:[%s301 + $0x108] sm:$0xff]
      %v1073 = vld [vmem:[%s301 + $0x110] sm:$0xff]
      %v1074 = vld [vmem:[%s301 + $0x118] sm:$0xff]
      %v1075 = vld [vmem:[%s301 + $0x120] sm:$0xff]
      %v1076 = vld [vmem:[%s301 + $0x128] sm:$0xff]
      %v1077 = vld [vmem:[%s301 + $0x130] sm:$0xff]
      %v1078 = vld [vmem:[%s301 + $0x138] sm:$0xff]
      %v1079 = vld [vmem:[%s301 + $0x140] sm:$0xff]
      %v1080 = vld [vmem:[%s301 + $0x148] sm:$0xff]
      %v1081 = vld [vmem:[%s301 + $0x150] sm:$0xff]
      %v1082 = vld [vmem:[%s301 + $0x158] sm:$0xff]
      %v1083 = vld [vmem:[%s301 + $0x160] sm:$0xff]
      %v1084 = vld [vmem:[%s301 + $0x168] sm:$0xff]
      %v1085 = vld [vmem:[%s301 + $0x170] sm:$0xff]
      %v1086 = vld [vmem:[%s301 + $0x178] sm:$0xff]
      %v1087 = vld [vmem:[%s301 + $0x180] sm:$0xff]
      %v1088 = vld [vmem:[%s301 + $0x188] sm:$0xff]
      %v1089 = vld [vmem:[%s301 + $0x190] sm:$0xff]
      %v1090 = vld [vmem:[%s301 + $0x198] sm:$0xff]
      %v1091 = vld [vmem:[%s301 + $0x1a0] sm:$0xff]
      %v1092 = vld [vmem:[%s301 + $0x1a8] sm:$0xff]
      %v1093 = vld [vmem:[%s301 + $0x1b0] sm:$0xff]
      %v1094 = vld [vmem:[%s301 + $0x1b8] sm:$0xff]
      %v1095 = vld [vmem:[%s301 + $0x1c0] sm:$0xff]
      %v1096 = vld [vmem:[%s301 + $0x1c8] sm:$0xff]
      %v1097 = vld [vmem:[%s301 + $0x1d0] sm:$0xff]
      %v1098 = vld [vmem:[%s301 + $0x1d8] sm:$0xff]
      %v1099 = vld [vmem:[%s301 + $0x1e0] sm:$0xff]
      %v1100 = vld [vmem:[%s301 + $0x1e8] sm:$0xff]
      %v1101 = vld [vmem:[%s301 + $0x1f0] sm:$0xff]
      %v1102 = vld [vmem:[%s301 + $0x1f8] sm:$0xff]
      %v1103 = vld [vmem:[%s301 + $0x200] sm:$0xff]
      %v1104 = vld [vmem:[%s301 + $0x208] sm:$0xff]
      %v1105 = vld [vmem:[%s301 + $0x210] sm:$0xff]
      %v1106 = vld [vmem:[%s301 + $0x218] sm:$0xff]
      %v1107 = vld [vmem:[%s301 + $0x220] sm:$0xff]
      %v1108 = vld [vmem:[%s301 + $0x228] sm:$0xff]
      %v1109 = vld [vmem:[%s301 + $0x230] sm:$0xff]
      %v1110 = vld [vmem:[%s301 + $0x238] sm:$0xff]
      %v1111 = vld [vmem:[%s301 + $0x240] sm:$0xff]
      %v1112 = vld [vmem:[%s301 + $0x248] sm:$0xff]
      %v1113 = vld [vmem:[%s301 + $0x250] sm:$0xff]
      %v1114 = vld [vmem:[%s301 + $0x258] sm:$0xff]
      %v1115 = vld [vmem:[%s301 + $0x260] sm:$0xff]
      %v1116 = vld [vmem:[%s301 + $0x268] sm:$0xff]
      %v1117 = vld [vmem:[%s301 + $0x270] sm:$0xff]
      %v1118 = vld [vmem:[%s301 + $0x278] sm:$0xff]
      %v1119 = vld [vmem:[%s301 + $0x280] sm:$0xff]
      %v1120 = vld [vmem:[%s301 + $0x288] sm:$0xff]
      %v1121 = vld [vmem:[%s301 + $0x290] sm:$0xff]
      %v1122 = vld [vmem:[%s301 + $0x298] sm:$0xff]
      %v1123 = vld [vmem:[%s301 + $0x2a0] sm:$0xff]
      %v1124 = vld [vmem:[%s301 + $0x2a8] sm:$0xff]
      %v1125 = vld [vmem:[%s301 + $0x2b0] sm:$0xff]
      %v1126 = vld [vmem:[%s301 + $0x2b8] sm:$0xff]
      %v1127 = vld [vmem:[%s301 + $0x2c0] sm:$0xff]
      %v1128 = vld [vmem:[%s301 + $0x2c8] sm:$0xff]
      %v1129 = vld [vmem:[%s301 + $0x2d0] sm:$0xff]
      %v1130 = vld [vmem:[%s301 + $0x2d8] sm:$0xff]
      %v1131 = vld [vmem:[%s301 + $0x2e0] sm:$0xff]
      %v1132 = vld [vmem:[%s301 + $0x2e8] sm:$0xff]
      %v1133 = vld [vmem:[%s301 + $0x2f0] sm:$0xff]
      %v1134 = vld [vmem:[%s301 + $0x2f8] sm:$0xff]
      %v1135 = vld [vmem:[%s301 + $0x300] sm:$0xff]
      %v1136 = vld [vmem:[%s301 + $0x308] sm:$0xff]
      %v1138 = vsel %vm429, %v1039, 0
      %v1141 = vsel %vm429, %v1040, 0
      %v1144 = vsel %vm429, %v1041, 0
      %v1147 = vsel %vm429, %v1042, 0
      %v1150 = vsel %vm429, %v1043, 0
      %v1153 = vsel %vm429, %v1044, 0
      %v1156 = vsel %vm429, %v1045, 0
      %v1159 = vsel %vm429, %v1046, 0
      %v1162 = vsel %vm429, %v1047, 0
      %v1165 = vsel %vm429, %v1048, 0
      %v1168 = vsel %vm429, %v1049, 0
      %v1171 = vsel %vm429, %v1050, 0
      %v1174 = vsel %vm429, %v1051, 0
      %v1177 = vsel %vm429, %v1052, 0
      %v1180 = vsel %vm429, %v1053, 0
      %v1183 = vsel %vm429, %v1054, 0
      %v1186 = vsel %vm429, %v1055, 0
      %v1189 = vsel %vm429, %v1056, 0
      %v1192 = vsel %vm429, %v1057, 0
      %v1195 = vsel %vm429, %v1058, 0
      %v1198 = vsel %vm429, %v1059, 0
      %v1201 = vsel %vm429, %v1060, 0
      %v1204 = vsel %vm429, %v1061, 0
      %v1207 = vsel %vm429, %v1062, 0
      %v1210 = vsel %vm429, %v1063, 0
      %v1213 = vsel %vm429, %v1064, 0
      %v1216 = vsel %vm429, %v1065, 0
      %v1219 = vsel %vm429, %v1066, 0
      %v1222 = vsel %vm429, %v1067, 0
      %v1225 = vsel %vm429, %v1068, 0
      %v1228 = vsel %vm429, %v1069, 0
      %v1231 = vsel %vm429, %v1070, 0
      %v1234 = vsel %vm429, %v1071, 0
      %v1237 = vsel %vm429, %v1072, 0
      %v1240 = vsel %vm429, %v1073, 0
      %v1243 = vsel %vm429, %v1074, 0
      %v1246 = vsel %vm429, %v1075, 0
      %v1249 = vsel %vm429, %v1076, 0
      %v1252 = vsel %vm429, %v1077, 0
      %v1255 = vsel %vm429, %v1078, 0
      %v1258 = vsel %vm429, %v1079, 0
      %v1261 = vsel %vm429, %v1080, 0
      %v1264 = vsel %vm429, %v1081, 0
      %v1267 = vsel %vm429, %v1082, 0
      %v1270 = vsel %vm429, %v1083, 0
      %v1273 = vsel %vm429, %v1084, 0
      %v1276 = vsel %vm429, %v1085, 0
      %v1279 = vsel %vm429, %v1086, 0
      %v1282 = vsel %vm429, %v1087, 0
      %v1285 = vsel %vm429, %v1088, 0
      %v1288 = vsel %vm429, %v1089, 0
      %v1291 = vsel %vm429, %v1090, 0
      %v1294 = vsel %vm429, %v1091, 0
      %v1297 = vsel %vm429, %v1092, 0
      %v1300 = vsel %vm429, %v1093, 0
      %v1303 = vsel %vm429, %v1094, 0
      %v1306 = vsel %vm429, %v1095, 0
      %v1309 = vsel %vm429, %v1096, 0
      %v1312 = vsel %vm429, %v1097, 0
      %v1315 = vsel %vm429, %v1098, 0
      %v1318 = vsel %vm429, %v1099, 0
      %v1321 = vsel %vm429, %v1100, 0
      %v1324 = vsel %vm429, %v1101, 0
      %v1327 = vsel %vm429, %v1102, 0
      %v1330 = vsel %vm429, %v1103, 0
      %v1333 = vsel %vm429, %v1104, 0
      %v1336 = vsel %vm429, %v1105, 0
      %v1339 = vsel %vm429, %v1106, 0
      %v1342 = vsel %vm429, %v1107, 0
      %v1345 = vsel %vm429, %v1108, 0
      %v1348 = vsel %vm429, %v1109, 0
      %v1351 = vsel %vm429, %v1110, 0
      %v1354 = vsel %vm429, %v1111, 0
      %v1357 = vsel %vm429, %v1112, 0
      %v1360 = vsel %vm429, %v1113, 0
      %v1363 = vsel %vm429, %v1114, 0
      %v1366 = vsel %vm429, %v1115, 0
      %v1369 = vsel %vm429, %v1116, 0
      %v1372 = vsel %vm429, %v1117, 0
      %v1375 = vsel %vm429, %v1118, 0
      %v1378 = vsel %vm429, %v1119, 0
      %v1381 = vsel %vm429, %v1120, 0
      %v1384 = vsel %vm429, %v1121, 0
      %v1387 = vsel %vm429, %v1122, 0
      %v1390 = vsel %vm429, %v1123, 0
      %v1393 = vsel %vm429, %v1124, 0
      %v1396 = vsel %vm429, %v1125, 0
      %v1399 = vsel %vm429, %v1126, 0
      %v1402 = vsel %vm429, %v1127, 0
      %v1405 = vsel %vm429, %v1128, 0
      %v1408 = vsel %vm429, %v1129, 0
      %v1411 = vsel %vm429, %v1130, 0
      %v1414 = vsel %vm429, %v1131, 0
      %v1417 = vsel %vm429, %v1132, 0
      %v1420 = vsel %vm429, %v1133, 0
      %v1423 = vsel %vm429, %v1134, 0
      %v1426 = vsel %vm429, %v1135, 0
      %v1429 = vsel %vm429, %v1136, 0
      %1431 = vmatpush.msra.mxu0 0.0
      %1432 = vmatpush.msra.mxu0 0.0
      %1433 = vmatpush.msra.mxu0 0.0
      %1434 = vmatpush.msra.mxu0 0.0
      %1435 = vmatpush.msra.mxu0 0.0
      %1436 = vmatpush.msra.mxu0 0.0
      %1437 = vmatpush.msra.mxu0 %v726
      %1438 = vmatpush.msra.mxu0 %v427
      %1439 = vmatpush.msra.mxu0 %v426
      %1440 = vmatpush.msra.mxu0 %v425
      %1441 = vmatpush.msra.mxu0 %v424
      %1442 = vmatpush.msra.mxu0 %v423
      %1443 = vmatpush.msra.mxu0 %v422
      %1444 = vmatpush.msra.mxu0 %v421
      %1445 = vmatpush.msra.mxu0 %v420
      %1446 = vmatpush.msra.mxu0 %v419
      %1447 = vmatmul.f32.gmra.mxu0 %v1138
      %v1448 = vpop.f32.mrf.mxu0
      %v1449 = vadd.f32 0.0, %v1448
      %1450 = vmatmul.f32.gmra.mxu0 %v1141
      %v1451 = vpop.f32.mrf.mxu0
      %v1452 = vadd.f32 0.0, %v1451
      %1453 = vmatmul.f32.gmra.mxu0 %v1144
      %v1454 = vpop.f32.mrf.mxu0
      %v1455 = vadd.f32 0.0, %v1454
      %1456 = vmatmul.f32.gmra.mxu0 %v1147
      %v1457 = vpop.f32.mrf.mxu0
      %v1458 = vadd.f32 0.0, %v1457
      %1459 = vmatmul.f32.gmra.mxu0 %v1150
      %v1460 = vpop.f32.mrf.mxu0
      %v1461 = vadd.f32 0.0, %v1460
      %1462 = vmatmul.f32.gmra.mxu0 %v1153
      %v1463 = vpop.f32.mrf.mxu0
      %v1464 = vadd.f32 0.0, %v1463
      %1465 = vmatmul.f32.gmra.mxu0 %v1156
      %v1466 = vpop.f32.mrf.mxu0
      %v1467 = vadd.f32 0.0, %v1466
      %1468 = vmatmul.f32.gmra.mxu0 %v1159
      %v1469 = vpop.f32.mrf.mxu0
      %v1470 = vadd.f32 0.0, %v1469
      %1471 = vmatmul.f32.gmra.mxu0 %v1162
      %v1472 = vpop.f32.mrf.mxu0
      %v1473 = vadd.f32 0.0, %v1472
      %1474 = vmatmul.f32.gmra.mxu0 %v1165
      %v1475 = vpop.f32.mrf.mxu0
      %v1476 = vadd.f32 0.0, %v1475
      %1477 = vmatmul.f32.gmra.mxu0 %v1168
      %v1478 = vpop.f32.mrf.mxu0
      %v1479 = vadd.f32 0.0, %v1478
      %1480 = vmatmul.f32.gmra.mxu0 %v1171
      %v1481 = vpop.f32.mrf.mxu0
      %v1482 = vadd.f32 0.0, %v1481
      %1483 = vmatmul.f32.gmra.mxu0 %v1174
      %v1484 = vpop.f32.mrf.mxu0
      %v1485 = vadd.f32 0.0, %v1484
      %1486 = vmatmul.f32.gmra.mxu0 %v1177
      %v1487 = vpop.f32.mrf.mxu0
      %v1488 = vadd.f32 0.0, %v1487
      %1489 = vmatmul.f32.gmra.mxu0 %v1180
      %v1490 = vpop.f32.mrf.mxu0
      %v1491 = vadd.f32 0.0, %v1490
      %1492 = vmatmul.f32.gmra.mxu0 %v1183
      %v1493 = vpop.f32.mrf.mxu0
      %v1494 = vadd.f32 0.0, %v1493
      %1495 = vmatmul.f32.gmra.mxu0 %v1186
      %v1496 = vpop.f32.mrf.mxu0
      %v1497 = vadd.f32 0.0, %v1496
      %1498 = vmatmul.f32.gmra.mxu0 %v1189
      %v1499 = vpop.f32.mrf.mxu0
      %v1500 = vadd.f32 0.0, %v1499
      %1501 = vmatmul.f32.gmra.mxu0 %v1192
      %v1502 = vpop.f32.mrf.mxu0
      %v1503 = vadd.f32 0.0, %v1502
      %1504 = vmatmul.f32.gmra.mxu0 %v1195
      %v1505 = vpop.f32.mrf.mxu0
      %v1506 = vadd.f32 0.0, %v1505
      %1507 = vmatmul.f32.gmra.mxu0 %v1198
      %v1508 = vpop.f32.mrf.mxu0
      %v1509 = vadd.f32 0.0, %v1508
      %1510 = vmatmul.f32.gmra.mxu0 %v1201
      %v1511 = vpop.f32.mrf.mxu0
      %v1512 = vadd.f32 0.0, %v1511
      %1513 = vmatmul.f32.gmra.mxu0 %v1204
      %v1514 = vpop.f32.mrf.mxu0
      %v1515 = vadd.f32 0.0, %v1514
      %1516 = vmatmul.f32.gmra.mxu0 %v1207
      %v1517 = vpop.f32.mrf.mxu0
      %v1518 = vadd.f32 0.0, %v1517
      %1519 = vmatmul.f32.gmra.mxu0 %v1210
      %v1520 = vpop.f32.mrf.mxu0
      %v1521 = vadd.f32 0.0, %v1520
      %1522 = vmatmul.f32.gmra.mxu0 %v1213
      %v1523 = vpop.f32.mrf.mxu0
      %v1524 = vadd.f32 0.0, %v1523
      %1525 = vmatmul.f32.gmra.mxu0 %v1216
      %v1526 = vpop.f32.mrf.mxu0
      %v1527 = vadd.f32 0.0, %v1526
      %1528 = vmatmul.f32.gmra.mxu0 %v1219
      %v1529 = vpop.f32.mrf.mxu0
      %v1530 = vadd.f32 0.0, %v1529
      %1531 = vmatmul.f32.gmra.mxu0 %v1222
      %v1532 = vpop.f32.mrf.mxu0
      %v1533 = vadd.f32 0.0, %v1532
      %1534 = vmatmul.f32.gmra.mxu0 %v1225
      %v1535 = vpop.f32.mrf.mxu0
      %v1536 = vadd.f32 0.0, %v1535
      %1537 = vmatmul.f32.gmra.mxu0 %v1228
      %v1538 = vpop.f32.mrf.mxu0
      %v1539 = vadd.f32 0.0, %v1538
      %1540 = vmatmul.f32.gmra.mxu0 %v1231
      %v1541 = vpop.f32.mrf.mxu0
      %v1542 = vadd.f32 0.0, %v1541
      %1543 = vmatmul.f32.gmra.mxu0 %v1234
      %v1544 = vpop.f32.mrf.mxu0
      %v1545 = vadd.f32 0.0, %v1544
      %1546 = vmatmul.f32.gmra.mxu0 %v1237
      %v1547 = vpop.f32.mrf.mxu0
      %v1548 = vadd.f32 0.0, %v1547
      %1549 = vmatmul.f32.gmra.mxu0 %v1240
      %v1550 = vpop.f32.mrf.mxu0
      %v1551 = vadd.f32 0.0, %v1550
      %1552 = vmatmul.f32.gmra.mxu0 %v1243
      %v1553 = vpop.f32.mrf.mxu0
      %v1554 = vadd.f32 0.0, %v1553
      %1555 = vmatmul.f32.gmra.mxu0 %v1246
      %v1556 = vpop.f32.mrf.mxu0
      %v1557 = vadd.f32 0.0, %v1556
      %1558 = vmatmul.f32.gmra.mxu0 %v1249
      %v1559 = vpop.f32.mrf.mxu0
      %v1560 = vadd.f32 0.0, %v1559
      %1561 = vmatmul.f32.gmra.mxu0 %v1252
      %v1562 = vpop.f32.mrf.mxu0
      %v1563 = vadd.f32 0.0, %v1562
      %1564 = vmatmul.f32.gmra.mxu0 %v1255
      %v1565 = vpop.f32.mrf.mxu0
      %v1566 = vadd.f32 0.0, %v1565
      %1567 = vmatmul.f32.gmra.mxu0 %v1258
      %v1568 = vpop.f32.mrf.mxu0
      %v1569 = vadd.f32 0.0, %v1568
      %1570 = vmatmul.f32.gmra.mxu0 %v1261
      %v1571 = vpop.f32.mrf.mxu0
      %v1572 = vadd.f32 0.0, %v1571
      %1573 = vmatmul.f32.gmra.mxu0 %v1264
      %v1574 = vpop.f32.mrf.mxu0
      %v1575 = vadd.f32 0.0, %v1574
      %1576 = vmatmul.f32.gmra.mxu0 %v1267
      %v1577 = vpop.f32.mrf.mxu0
      %v1578 = vadd.f32 0.0, %v1577
      %1579 = vmatmul.f32.gmra.mxu0 %v1270
      %v1580 = vpop.f32.mrf.mxu0
      %v1581 = vadd.f32 0.0, %v1580
      %1582 = vmatmul.f32.gmra.mxu0 %v1273
      %v1583 = vpop.f32.mrf.mxu0
      %v1584 = vadd.f32 0.0, %v1583
      %1585 = vmatmul.f32.gmra.mxu0 %v1276
      %v1586 = vpop.f32.mrf.mxu0
      %v1587 = vadd.f32 0.0, %v1586
      %1588 = vmatmul.f32.gmra.mxu0 %v1279
      %v1589 = vpop.f32.mrf.mxu0
      %v1590 = vadd.f32 0.0, %v1589
      %1591 = vmatmul.f32.gmra.mxu0 %v1282
      %v1592 = vpop.f32.mrf.mxu0
      %v1593 = vadd.f32 0.0, %v1592
      %1594 = vmatmul.f32.gmra.mxu0 %v1285
      %v1595 = vpop.f32.mrf.mxu0
      %v1596 = vadd.f32 0.0, %v1595
      %1597 = vmatmul.f32.gmra.mxu0 %v1288
      %v1598 = vpop.f32.mrf.mxu0
      %v1599 = vadd.f32 0.0, %v1598
      %1600 = vmatmul.f32.gmra.mxu0 %v1291
      %v1601 = vpop.f32.mrf.mxu0
      %v1602 = vadd.f32 0.0, %v1601
      %1603 = vmatmul.f32.gmra.mxu0 %v1294
      %v1604 = vpop.f32.mrf.mxu0
      %v1605 = vadd.f32 0.0, %v1604
      %1606 = vmatmul.f32.gmra.mxu0 %v1297
      %v1607 = vpop.f32.mrf.mxu0
      %v1608 = vadd.f32 0.0, %v1607
      %1609 = vmatmul.f32.gmra.mxu0 %v1300
      %v1610 = vpop.f32.mrf.mxu0
      %v1611 = vadd.f32 0.0, %v1610
      %1612 = vmatmul.f32.gmra.mxu0 %v1303
      %v1613 = vpop.f32.mrf.mxu0
      %v1614 = vadd.f32 0.0, %v1613
      %1615 = vmatmul.f32.gmra.mxu0 %v1306
      %v1616 = vpop.f32.mrf.mxu0
      %v1617 = vadd.f32 0.0, %v1616
      %1618 = vmatmul.f32.gmra.mxu0 %v1309
      %v1619 = vpop.f32.mrf.mxu0
      %v1620 = vadd.f32 0.0, %v1619
      %1621 = vmatmul.f32.gmra.mxu0 %v1312
      %v1622 = vpop.f32.mrf.mxu0
      %v1623 = vadd.f32 0.0, %v1622
      %1624 = vmatmul.f32.gmra.mxu0 %v1315
      %v1625 = vpop.f32.mrf.mxu0
      %v1626 = vadd.f32 0.0, %v1625
      %1627 = vmatmul.f32.gmra.mxu0 %v1318
      %v1628 = vpop.f32.mrf.mxu0
      %v1629 = vadd.f32 0.0, %v1628
      %1630 = vmatmul.f32.gmra.mxu0 %v1321
      %v1631 = vpop.f32.mrf.mxu0
      %v1632 = vadd.f32 0.0, %v1631
      %1633 = vmatmul.f32.gmra.mxu0 %v1324
      %v1634 = vpop.f32.mrf.mxu0
      %v1635 = vadd.f32 0.0, %v1634
      %1636 = vmatmul.f32.gmra.mxu0 %v1327
      %v1637 = vpop.f32.mrf.mxu0
      %v1638 = vadd.f32 0.0, %v1637
      %1639 = vmatmul.f32.gmra.mxu0 %v1330
      %v1640 = vpop.f32.mrf.mxu0
      %v1641 = vadd.f32 0.0, %v1640
      %1642 = vmatmul.f32.gmra.mxu0 %v1333
      %v1643 = vpop.f32.mrf.mxu0
      %v1644 = vadd.f32 0.0, %v1643
      %1645 = vmatmul.f32.gmra.mxu0 %v1336
      %v1646 = vpop.f32.mrf.mxu0
      %v1647 = vadd.f32 0.0, %v1646
      %1648 = vmatmul.f32.gmra.mxu0 %v1339
      %v1649 = vpop.f32.mrf.mxu0
      %v1650 = vadd.f32 0.0, %v1649
      %1651 = vmatmul.f32.gmra.mxu0 %v1342
      %v1652 = vpop.f32.mrf.mxu0
      %v1653 = vadd.f32 0.0, %v1652
      %1654 = vmatmul.f32.gmra.mxu0 %v1345
      %v1655 = vpop.f32.mrf.mxu0
      %v1656 = vadd.f32 0.0, %v1655
      %1657 = vmatmul.f32.gmra.mxu0 %v1348
      %v1658 = vpop.f32.mrf.mxu0
      %v1659 = vadd.f32 0.0, %v1658
      %1660 = vmatmul.f32.gmra.mxu0 %v1351
      %v1661 = vpop.f32.mrf.mxu0
      %v1662 = vadd.f32 0.0, %v1661
      %1663 = vmatmul.f32.gmra.mxu0 %v1354
      %v1664 = vpop.f32.mrf.mxu0
      %v1665 = vadd.f32 0.0, %v1664
      %1666 = vmatmul.f32.gmra.mxu0 %v1357
      %v1667 = vpop.f32.mrf.mxu0
      %v1668 = vadd.f32 0.0, %v1667
      %1669 = vmatmul.f32.gmra.mxu0 %v1360
      %v1670 = vpop.f32.mrf.mxu0
      %v1671 = vadd.f32 0.0, %v1670
      %1672 = vmatmul.f32.gmra.mxu0 %v1363
      %v1673 = vpop.f32.mrf.mxu0
      %v1674 = vadd.f32 0.0, %v1673
      %1675 = vmatmul.f32.gmra.mxu0 %v1366
      %v1676 = vpop.f32.mrf.mxu0
      %v1677 = vadd.f32 0.0, %v1676
      %1678 = vmatmul.f32.gmra.mxu0 %v1369
      %v1679 = vpop.f32.mrf.mxu0
      %v1680 = vadd.f32 0.0, %v1679
      %1681 = vmatmul.f32.gmra.mxu0 %v1372
      %v1682 = vpop.f32.mrf.mxu0
      %v1683 = vadd.f32 0.0, %v1682
      %1684 = vmatmul.f32.gmra.mxu0 %v1375
      %v1685 = vpop.f32.mrf.mxu0
      %v1686 = vadd.f32 0.0, %v1685
      %1687 = vmatmul.f32.gmra.mxu0 %v1378
      %v1688 = vpop.f32.mrf.mxu0
      %v1689 = vadd.f32 0.0, %v1688
      %1690 = vmatmul.f32.gmra.mxu0 %v1381
      %v1691 = vpop.f32.mrf.mxu0
      %v1692 = vadd.f32 0.0, %v1691
      %1693 = vmatmul.f32.gmra.mxu0 %v1384
      %v1694 = vpop.f32.mrf.mxu0
      %v1695 = vadd.f32 0.0, %v1694
      %1696 = vmatmul.f32.gmra.mxu0 %v1387
      %v1697 = vpop.f32.mrf.mxu0
      %v1698 = vadd.f32 0.0, %v1697
      %1699 = vmatmul.f32.gmra.mxu0 %v1390
      %v1700 = vpop.f32.mrf.mxu0
      %v1701 = vadd.f32 0.0, %v1700
      %1702 = vmatmul.f32.gmra.mxu0 %v1393
      %v1703 = vpop.f32.mrf.mxu0
      %v1704 = vadd.f32 0.0, %v1703
      %1705 = vmatmul.f32.gmra.mxu0 %v1396
      %v1706 = vpop.f32.mrf.mxu0
      %v1707 = vadd.f32 0.0, %v1706
      %1708 = vmatmul.f32.gmra.mxu0 %v1399
      %v1709 = vpop.f32.mrf.mxu0
      %v1710 = vadd.f32 0.0, %v1709
      %1711 = vmatmul.f32.gmra.mxu0 %v1402
      %v1712 = vpop.f32.mrf.mxu0
      %v1713 = vadd.f32 0.0, %v1712
      %1714 = vmatmul.f32.gmra.mxu0 %v1405
      %v1715 = vpop.f32.mrf.mxu0
      %v1716 = vadd.f32 0.0, %v1715
      %1717 = vmatmul.f32.gmra.mxu0 %v1408
      %v1718 = vpop.f32.mrf.mxu0
      %v1719 = vadd.f32 0.0, %v1718
      %1720 = vmatmul.f32.gmra.mxu0 %v1411
      %v1721 = vpop.f32.mrf.mxu0
      %v1722 = vadd.f32 0.0, %v1721
      %1723 = vmatmul.f32.gmra.mxu0 %v1414
      %v1724 = vpop.f32.mrf.mxu0
      %v1725 = vadd.f32 0.0, %v1724
      %1726 = vmatmul.f32.gmra.mxu0 %v1417
      %v1727 = vpop.f32.mrf.mxu0
      %v1728 = vadd.f32 0.0, %v1727
      %1729 = vmatmul.f32.gmra.mxu0 %v1420
      %v1730 = vpop.f32.mrf.mxu0
      %v1731 = vadd.f32 0.0, %v1730
      %1732 = vmatmul.f32.gmra.mxu0 %v1423
      %v1733 = vpop.f32.mrf.mxu0
      %v1734 = vadd.f32 0.0, %v1733
      %1735 = vmatmul.f32.gmra.mxu0 %v1426
      %v1736 = vpop.f32.mrf.mxu0
      %v1737 = vadd.f32 0.0, %v1736
      %1738 = vmatmul.f32.gmra.mxu0 %v1429
      %v1739 = vpop.f32.mrf.mxu0
      %v1740 = vadd.f32 0.0, %v1739
      %1741 = vdwg.mxu0
      %v1742 = vmax.f32 %v746, %v1449
      %v1743 = vmax.f32 %v749, %v1452
      %v1744 = vmax.f32 %v752, %v1455
      %v1745 = vmax.f32 %v755, %v1458
      %v1746 = vmax.f32 %v758, %v1461
      %v1747 = vmax.f32 %v761, %v1464
      %v1748 = vmax.f32 %v764, %v1467
      %v1749 = vmax.f32 %v767, %v1470
      %v1750 = vmax.f32 %v770, %v1473
      %v1751 = vmax.f32 %v773, %v1476
      %v1752 = vmax.f32 %v776, %v1479
      %v1753 = vmax.f32 %v779, %v1482
      %v1754 = vmax.f32 %v782, %v1485
      %v1755 = vmax.f32 %v785, %v1488
      %v1756 = vmax.f32 %v788, %v1491
      %v1757 = vmax.f32 %v791, %v1494
      %v1758 = vmax.f32 %v794, %v1497
      %v1759 = vmax.f32 %v797, %v1500
      %v1760 = vmax.f32 %v800, %v1503
      %v1761 = vmax.f32 %v803, %v1506
      %v1762 = vmax.f32 %v806, %v1509
      %v1763 = vmax.f32 %v809, %v1512
      %v1764 = vmax.f32 %v812, %v1515
      %v1765 = vmax.f32 %v815, %v1518
      %v1766 = vmax.f32 %v818, %v1521
      %v1767 = vmax.f32 %v821, %v1524
      %v1768 = vmax.f32 %v824, %v1527
      %v1769 = vmax.f32 %v827, %v1530
      %v1770 = vmax.f32 %v830, %v1533
      %v1771 = vmax.f32 %v833, %v1536
      %v1772 = vmax.f32 %v836, %v1539
      %v1773 = vmax.f32 %v839, %v1542
      %v1774 = vmax.f32 %v842, %v1545
      %v1775 = vmax.f32 %v845, %v1548
      %v1776 = vmax.f32 %v848, %v1551
      %v1777 = vmax.f32 %v851, %v1554
      %v1778 = vmax.f32 %v854, %v1557
      %v1779 = vmax.f32 %v857, %v1560
      %v1780 = vmax.f32 %v860, %v1563
      %v1781 = vmax.f32 %v863, %v1566
      %v1782 = vmax.f32 %v866, %v1569
      %v1783 = vmax.f32 %v869, %v1572
      %v1784 = vmax.f32 %v872, %v1575
      %v1785 = vmax.f32 %v875, %v1578
      %v1786 = vmax.f32 %v878, %v1581
      %v1787 = vmax.f32 %v881, %v1584
      %v1788 = vmax.f32 %v884, %v1587
      %v1789 = vmax.f32 %v887, %v1590
      %v1790 = vmax.f32 %v890, %v1593
      %v1791 = vmax.f32 %v893, %v1596
      %v1792 = vmax.f32 %v896, %v1599
      %v1793 = vmax.f32 %v899, %v1602
      %v1794 = vmax.f32 %v902, %v1605
      %v1795 = vmax.f32 %v905, %v1608
      %v1796 = vmax.f32 %v908, %v1611
      %v1797 = vmax.f32 %v911, %v1614
      %v1798 = vmax.f32 %v914, %v1617
      %v1799 = vmax.f32 %v917, %v1620
      %v1800 = vmax.f32 %v920, %v1623
      %v1801 = vmax.f32 %v923, %v1626
      %v1802 = vmax.f32 %v926, %v1629
      %v1803 = vmax.f32 %v929, %v1632
      %v1804 = vmax.f32 %v932, %v1635
      %v1805 = vmax.f32 %v935, %v1638
      %v1806 = vmax.f32 %v938, %v1641
      %v1807 = vmax.f32 %v941, %v1644
      %v1808 = vmax.f32 %v944, %v1647
      %v1809 = vmax.f32 %v947, %v1650
      %v1810 = vmax.f32 %v950, %v1653
      %v1811 = vmax.f32 %v953, %v1656
      %v1812 = vmax.f32 %v956, %v1659
      %v1813 = vmax.f32 %v959, %v1662
      %v1814 = vmax.f32 %v962, %v1665
      %v1815 = vmax.f32 %v965, %v1668
      %v1816 = vmax.f32 %v968, %v1671
      %v1817 = vmax.f32 %v971, %v1674
      %v1818 = vmax.f32 %v974, %v1677
      %v1819 = vmax.f32 %v977, %v1680
      %v1820 = vmax.f32 %v980, %v1683
      %v1821 = vmax.f32 %v983, %v1686
      %v1822 = vmax.f32 %v986, %v1689
      %v1823 = vmax.f32 %v989, %v1692
      %v1824 = vmax.f32 %v992, %v1695
      %v1825 = vmax.f32 %v995, %v1698
      %v1826 = vmax.f32 %v998, %v1701
      %v1827 = vmax.f32 %v1001, %v1704
      %v1828 = vmax.f32 %v1004, %v1707
      %v1829 = vmax.f32 %v1007, %v1710
      %v1830 = vmax.f32 %v1010, %v1713
      %v1831 = vmax.f32 %v1013, %v1716
      %v1832 = vmax.f32 %v1016, %v1719
      %v1833 = vmax.f32 %v1019, %v1722
      %v1834 = vmax.f32 %v1022, %v1725
      %v1835 = vmax.f32 %v1025, %v1728
      %v1836 = vmax.f32 %v1028, %v1731
      %v1837 = vmax.f32 %v1031, %v1734
      %v1838 = vmax.f32 %v1034, %v1737
      %v1839 = vmax.f32 %v1037, %v1740
      %v1840 = vld [vmem:[%s307] sm:$0xff]
      %v1841 = vld [vmem:[%s307 + $0x8] sm:$0xff]
      %v1842 = vld [vmem:[%s307 + $0x10] sm:$0xff]
      %v1843 = vld [vmem:[%s307 + $0x18] sm:$0xff]
      %v1844 = vld [vmem:[%s307 + $0x20] sm:$0xff]
      %v1845 = vld [vmem:[%s307 + $0x28] sm:$0xff]
      %v1846 = vld [vmem:[%s307 + $0x30] sm:$0xff]
      %v1847 = vld [vmem:[%s307 + $0x38] sm:$0xff]
      %v1848 = vld [vmem:[%s307 + $0x40] sm:$0xff]
      %v1849 = vld [vmem:[%s307 + $0x48] sm:$0xff]
      %v1850 = vld [vmem:[%s307 + $0x50] sm:$0xff]
      %v1851 = vld [vmem:[%s307 + $0x58] sm:$0xff]
      %v1852 = vld [vmem:[%s307 + $0x60] sm:$0xff]
      %v1853 = vld [vmem:[%s307 + $0x68] sm:$0xff]
      %v1854 = vld [vmem:[%s307 + $0x70] sm:$0xff]
      %v1855 = vld [vmem:[%s307 + $0x78] sm:$0xff]
      %v1856 = vld [vmem:[%s307 + $0x80] sm:$0xff]
      %v1857 = vld [vmem:[%s307 + $0x88] sm:$0xff]
      %v1858 = vld [vmem:[%s307 + $0x90] sm:$0xff]
      %v1859 = vld [vmem:[%s307 + $0x98] sm:$0xff]
      %v1860 = vld [vmem:[%s307 + $0xa0] sm:$0xff]
      %v1861 = vld [vmem:[%s307 + $0xa8] sm:$0xff]
      %v1862 = vld [vmem:[%s307 + $0xb0] sm:$0xff]
      %v1863 = vld [vmem:[%s307 + $0xb8] sm:$0xff]
      %v1864 = vld [vmem:[%s307 + $0xc0] sm:$0xff]
      %v1865 = vld [vmem:[%s307 + $0xc8] sm:$0xff]
      %v1866 = vld [vmem:[%s307 + $0xd0] sm:$0xff]
      %v1867 = vld [vmem:[%s307 + $0xd8] sm:$0xff]
      %v1868 = vld [vmem:[%s307 + $0xe0] sm:$0xff]
      %v1869 = vld [vmem:[%s307 + $0xe8] sm:$0xff]
      %v1870 = vld [vmem:[%s307 + $0xf0] sm:$0xff]
      %v1871 = vld [vmem:[%s307 + $0xf8] sm:$0xff]
      %v1872 = vld [vmem:[%s307 + $0x100] sm:$0xff]
      %v1873 = vld [vmem:[%s307 + $0x108] sm:$0xff]
      %v1874 = vld [vmem:[%s307 + $0x110] sm:$0xff]
      %v1875 = vld [vmem:[%s307 + $0x118] sm:$0xff]
      %v1876 = vld [vmem:[%s307 + $0x120] sm:$0xff]
      %v1877 = vld [vmem:[%s307 + $0x128] sm:$0xff]
      %v1878 = vld [vmem:[%s307 + $0x130] sm:$0xff]
      %v1879 = vld [vmem:[%s307 + $0x138] sm:$0xff]
      %v1880 = vld [vmem:[%s307 + $0x140] sm:$0xff]
      %v1881 = vld [vmem:[%s307 + $0x148] sm:$0xff]
      %v1882 = vld [vmem:[%s307 + $0x150] sm:$0xff]
      %v1883 = vld [vmem:[%s307 + $0x158] sm:$0xff]
      %v1884 = vld [vmem:[%s307 + $0x160] sm:$0xff]
      %v1885 = vld [vmem:[%s307 + $0x168] sm:$0xff]
      %v1886 = vld [vmem:[%s307 + $0x170] sm:$0xff]
      %v1887 = vld [vmem:[%s307 + $0x178] sm:$0xff]
      %v1888 = vld [vmem:[%s307 + $0x180] sm:$0xff]
      %v1889 = vld [vmem:[%s307 + $0x188] sm:$0xff]
      %v1890 = vld [vmem:[%s307 + $0x190] sm:$0xff]
      %v1891 = vld [vmem:[%s307 + $0x198] sm:$0xff]
      %v1892 = vld [vmem:[%s307 + $0x1a0] sm:$0xff]
      %v1893 = vld [vmem:[%s307 + $0x1a8] sm:$0xff]
      %v1894 = vld [vmem:[%s307 + $0x1b0] sm:$0xff]
      %v1895 = vld [vmem:[%s307 + $0x1b8] sm:$0xff]
      %v1896 = vld [vmem:[%s307 + $0x1c0] sm:$0xff]
      %v1897 = vld [vmem:[%s307 + $0x1c8] sm:$0xff]
      %v1898 = vld [vmem:[%s307 + $0x1d0] sm:$0xff]
      %v1899 = vld [vmem:[%s307 + $0x1d8] sm:$0xff]
      %v1900 = vld [vmem:[%s307 + $0x1e0] sm:$0xff]
      %v1901 = vld [vmem:[%s307 + $0x1e8] sm:$0xff]
      %v1902 = vld [vmem:[%s307 + $0x1f0] sm:$0xff]
      %v1903 = vld [vmem:[%s307 + $0x1f8] sm:$0xff]
      %v1904 = vld [vmem:[%s307 + $0x200] sm:$0xff]
      %v1905 = vld [vmem:[%s307 + $0x208] sm:$0xff]
      %v1906 = vld [vmem:[%s307 + $0x210] sm:$0xff]
      %v1907 = vld [vmem:[%s307 + $0x218] sm:$0xff]
      %v1908 = vld [vmem:[%s307 + $0x220] sm:$0xff]
      %v1909 = vld [vmem:[%s307 + $0x228] sm:$0xff]
      %v1910 = vld [vmem:[%s307 + $0x230] sm:$0xff]
      %v1911 = vld [vmem:[%s307 + $0x238] sm:$0xff]
      %v1912 = vld [vmem:[%s307 + $0x240] sm:$0xff]
      %v1913 = vld [vmem:[%s307 + $0x248] sm:$0xff]
      %v1914 = vld [vmem:[%s307 + $0x250] sm:$0xff]
      %v1915 = vld [vmem:[%s307 + $0x258] sm:$0xff]
      %v1916 = vld [vmem:[%s307 + $0x260] sm:$0xff]
      %v1917 = vld [vmem:[%s307 + $0x268] sm:$0xff]
      %v1918 = vld [vmem:[%s307 + $0x270] sm:$0xff]
      %v1919 = vld [vmem:[%s307 + $0x278] sm:$0xff]
      %v1920 = vld [vmem:[%s307 + $0x280] sm:$0xff]
      %v1921 = vld [vmem:[%s307 + $0x288] sm:$0xff]
      %v1922 = vld [vmem:[%s307 + $0x290] sm:$0xff]
      %v1923 = vld [vmem:[%s307 + $0x298] sm:$0xff]
      %v1924 = vld [vmem:[%s307 + $0x2a0] sm:$0xff]
      %v1925 = vld [vmem:[%s307 + $0x2a8] sm:$0xff]
      %v1926 = vld [vmem:[%s307 + $0x2b0] sm:$0xff]
      %v1927 = vld [vmem:[%s307 + $0x2b8] sm:$0xff]
      %v1928 = vld [vmem:[%s307 + $0x2c0] sm:$0xff]
      %v1929 = vld [vmem:[%s307 + $0x2c8] sm:$0xff]
      %v1930 = vld [vmem:[%s307 + $0x2d0] sm:$0xff]
      %v1931 = vld [vmem:[%s307 + $0x2d8] sm:$0xff]
      %v1932 = vld [vmem:[%s307 + $0x2e0] sm:$0xff]
      %v1933 = vld [vmem:[%s307 + $0x2e8] sm:$0xff]
      %v1934 = vld [vmem:[%s307 + $0x2f0] sm:$0xff]
      %v1935 = vld [vmem:[%s307 + $0x2f8] sm:$0xff]
      %v1936 = vld [vmem:[%s307 + $0x300] sm:$0xff]
      %v1937 = vld [vmem:[%s307 + $0x308] sm:$0xff]
      %v1939 = vsel %vm429, %v1840, 0
      %v1942 = vsel %vm429, %v1841, 0
      %v1945 = vsel %vm429, %v1842, 0
      %v1948 = vsel %vm429, %v1843, 0
      %v1951 = vsel %vm429, %v1844, 0
      %v1954 = vsel %vm429, %v1845, 0
      %v1957 = vsel %vm429, %v1846, 0
      %v1960 = vsel %vm429, %v1847, 0
      %v1963 = vsel %vm429, %v1848, 0
      %v1966 = vsel %vm429, %v1849, 0
      %v1969 = vsel %vm429, %v1850, 0
      %v1972 = vsel %vm429, %v1851, 0
      %v1975 = vsel %vm429, %v1852, 0
      %v1978 = vsel %vm429, %v1853, 0
      %v1981 = vsel %vm429, %v1854, 0
      %v1984 = vsel %vm429, %v1855, 0
      %v1987 = vsel %vm429, %v1856, 0
      %v1990 = vsel %vm429, %v1857, 0
      %v1993 = vsel %vm429, %v1858, 0
      %v1996 = vsel %vm429, %v1859, 0
      %v1999 = vsel %vm429, %v1860, 0
      %v2002 = vsel %vm429, %v1861, 0
      %v2005 = vsel %vm429, %v1862, 0
      %v2008 = vsel %vm429, %v1863, 0
      %v2011 = vsel %vm429, %v1864, 0
      %v2014 = vsel %vm429, %v1865, 0
      %v2017 = vsel %vm429, %v1866, 0
      %v2020 = vsel %vm429, %v1867, 0
      %v2023 = vsel %vm429, %v1868, 0
      %v2026 = vsel %vm429, %v1869, 0
      %v2029 = vsel %vm429, %v1870, 0
      %v2032 = vsel %vm429, %v1871, 0
      %v2035 = vsel %vm429, %v1872, 0
      %v2038 = vsel %vm429, %v1873, 0
      %v2041 = vsel %vm429, %v1874, 0
      %v2044 = vsel %vm429, %v1875, 0
      %v2047 = vsel %vm429, %v1876, 0
      %v2050 = vsel %vm429, %v1877, 0
      %v2053 = vsel %vm429, %v1878, 0
      %v2056 = vsel %vm429, %v1879, 0
      %v2059 = vsel %vm429, %v1880, 0
      %v2062 = vsel %vm429, %v1881, 0
      %v2065 = vsel %vm429, %v1882, 0
      %v2068 = vsel %vm429, %v1883, 0
      %v2071 = vsel %vm429, %v1884, 0
      %v2074 = vsel %vm429, %v1885, 0
      %v2077 = vsel %vm429, %v1886, 0
      %v2080 = vsel %vm429, %v1887, 0
      %v2083 = vsel %vm429, %v1888, 0
      %v2086 = vsel %vm429, %v1889, 0
      %v2089 = vsel %vm429, %v1890, 0
      %v2092 = vsel %vm429, %v1891, 0
      %v2095 = vsel %vm429, %v1892, 0
      %v2098 = vsel %vm429, %v1893, 0
      %v2101 = vsel %vm429, %v1894, 0
      %v2104 = vsel %vm429, %v1895, 0
      %v2107 = vsel %vm429, %v1896, 0
      %v2110 = vsel %vm429, %v1897, 0
      %v2113 = vsel %vm429, %v1898, 0
      %v2116 = vsel %vm429, %v1899, 0
      %v2119 = vsel %vm429, %v1900, 0
      %v2122 = vsel %vm429, %v1901, 0
      %v2125 = vsel %vm429, %v1902, 0
      %v2128 = vsel %vm429, %v1903, 0
      %v2131 = vsel %vm429, %v1904, 0
      %v2134 = vsel %vm429, %v1905, 0
      %v2137 = vsel %vm429, %v1906, 0
      %v2140 = vsel %vm429, %v1907, 0
      %v2143 = vsel %vm429, %v1908, 0
      %v2146 = vsel %vm429, %v1909, 0
      %v2149 = vsel %vm429, %v1910, 0
      %v2152 = vsel %vm429, %v1911, 0
      %v2155 = vsel %vm429, %v1912, 0
      %v2158 = vsel %vm429, %v1913, 0
      %v2161 = vsel %vm429, %v1914, 0
      %v2164 = vsel %vm429, %v1915, 0
      %v2167 = vsel %vm429, %v1916, 0
      %v2170 = vsel %vm429, %v1917, 0
      %v2173 = vsel %vm429, %v1918, 0
      %v2176 = vsel %vm429, %v1919, 0
      %v2179 = vsel %vm429, %v1920, 0
      %v2182 = vsel %vm429, %v1921, 0
      %v2185 = vsel %vm429, %v1922, 0
      %v2188 = vsel %vm429, %v1923, 0
      %v2191 = vsel %vm429, %v1924, 0
      %v2194 = vsel %vm429, %v1925, 0
      %v2197 = vsel %vm429, %v1926, 0
      %v2200 = vsel %vm429, %v1927, 0
      %v2203 = vsel %vm429, %v1928, 0
      %v2206 = vsel %vm429, %v1929, 0
      %v2209 = vsel %vm429, %v1930, 0
      %v2212 = vsel %vm429, %v1931, 0
      %v2215 = vsel %vm429, %v1932, 0
      %v2218 = vsel %vm429, %v1933, 0
      %v2221 = vsel %vm429, %v1934, 0
      %v2224 = vsel %vm429, %v1935, 0
      %v2227 = vsel %vm429, %v1936, 0
      %v2230 = vsel %vm429, %v1937, 0
      %2232 = vmatpush.msra.mxu0 0.0
      %2233 = vmatpush.msra.mxu0 0.0
      %2234 = vmatpush.msra.mxu0 0.0
      %2235 = vmatpush.msra.mxu0 0.0
      %2236 = vmatpush.msra.mxu0 0.0
      %2237 = vmatpush.msra.mxu0 0.0
      %2238 = vmatpush.msra.mxu0 %v726
      %2239 = vmatpush.msra.mxu0 %v427
      %2240 = vmatpush.msra.mxu0 %v426
      %2241 = vmatpush.msra.mxu0 %v425
      %2242 = vmatpush.msra.mxu0 %v424
      %2243 = vmatpush.msra.mxu0 %v423
      %2244 = vmatpush.msra.mxu0 %v422
      %2245 = vmatpush.msra.mxu0 %v421
      %2246 = vmatpush.msra.mxu0 %v420
      %2247 = vmatpush.msra.mxu0 %v419
      %2248 = vmatmul.f32.gmra.mxu0 %v1939
      %v2249 = vpop.f32.mrf.mxu0
      %v2250 = vadd.f32 0.0, %v2249
      %2251 = vmatmul.f32.gmra.mxu0 %v1942
      %v2252 = vpop.f32.mrf.mxu0
      %v2253 = vadd.f32 0.0, %v2252
      %2254 = vmatmul.f32.gmra.mxu0 %v1945
      %v2255 = vpop.f32.mrf.mxu0
      %v2256 = vadd.f32 0.0, %v2255
      %2257 = vmatmul.f32.gmra.mxu0 %v1948
      %v2258 = vpop.f32.mrf.mxu0
      %v2259 = vadd.f32 0.0, %v2258
      %2260 = vmatmul.f32.gmra.mxu0 %v1951
      %v2261 = vpop.f32.mrf.mxu0
      %v2262 = vadd.f32 0.0, %v2261
      %2263 = vmatmul.f32.gmra.mxu0 %v1954
      %v2264 = vpop.f32.mrf.mxu0
      %v2265 = vadd.f32 0.0, %v2264
      %2266 = vmatmul.f32.gmra.mxu0 %v1957
      %v2267 = vpop.f32.mrf.mxu0
      %v2268 = vadd.f32 0.0, %v2267
      %2269 = vmatmul.f32.gmra.mxu0 %v1960
      %v2270 = vpop.f32.mrf.mxu0
      %v2271 = vadd.f32 0.0, %v2270
      %2272 = vmatmul.f32.gmra.mxu0 %v1963
      %v2273 = vpop.f32.mrf.mxu0
      %v2274 = vadd.f32 0.0, %v2273
      %2275 = vmatmul.f32.gmra.mxu0 %v1966
      %v2276 = vpop.f32.mrf.mxu0
      %v2277 = vadd.f32 0.0, %v2276
      %2278 = vmatmul.f32.gmra.mxu0 %v1969
      %v2279 = vpop.f32.mrf.mxu0
      %v2280 = vadd.f32 0.0, %v2279
      %2281 = vmatmul.f32.gmra.mxu0 %v1972
      %v2282 = vpop.f32.mrf.mxu0
      %v2283 = vadd.f32 0.0, %v2282
      %2284 = vmatmul.f32.gmra.mxu0 %v1975
      %v2285 = vpop.f32.mrf.mxu0
      %v2286 = vadd.f32 0.0, %v2285
      %2287 = vmatmul.f32.gmra.mxu0 %v1978
      %v2288 = vpop.f32.mrf.mxu0
      %v2289 = vadd.f32 0.0, %v2288
      %2290 = vmatmul.f32.gmra.mxu0 %v1981
      %v2291 = vpop.f32.mrf.mxu0
      %v2292 = vadd.f32 0.0, %v2291
      %2293 = vmatmul.f32.gmra.mxu0 %v1984
      %v2294 = vpop.f32.mrf.mxu0
      %v2295 = vadd.f32 0.0, %v2294
      %2296 = vmatmul.f32.gmra.mxu0 %v1987
      %v2297 = vpop.f32.mrf.mxu0
      %v2298 = vadd.f32 0.0, %v2297
      %2299 = vmatmul.f32.gmra.mxu0 %v1990
      %v2300 = vpop.f32.mrf.mxu0
      %v2301 = vadd.f32 0.0, %v2300
      %2302 = vmatmul.f32.gmra.mxu0 %v1993
      %v2303 = vpop.f32.mrf.mxu0
      %v2304 = vadd.f32 0.0, %v2303
      %2305 = vmatmul.f32.gmra.mxu0 %v1996
      %v2306 = vpop.f32.mrf.mxu0
      %v2307 = vadd.f32 0.0, %v2306
      %2308 = vmatmul.f32.gmra.mxu0 %v1999
      %v2309 = vpop.f32.mrf.mxu0
      %v2310 = vadd.f32 0.0, %v2309
      %2311 = vmatmul.f32.gmra.mxu0 %v2002
      %v2312 = vpop.f32.mrf.mxu0
      %v2313 = vadd.f32 0.0, %v2312
      %2314 = vmatmul.f32.gmra.mxu0 %v2005
      %v2315 = vpop.f32.mrf.mxu0
      %v2316 = vadd.f32 0.0, %v2315
      %2317 = vmatmul.f32.gmra.mxu0 %v2008
      %v2318 = vpop.f32.mrf.mxu0
      %v2319 = vadd.f32 0.0, %v2318
      %2320 = vmatmul.f32.gmra.mxu0 %v2011
      %v2321 = vpop.f32.mrf.mxu0
      %v2322 = vadd.f32 0.0, %v2321
      %2323 = vmatmul.f32.gmra.mxu0 %v2014
      %v2324 = vpop.f32.mrf.mxu0
      %v2325 = vadd.f32 0.0, %v2324
      %2326 = vmatmul.f32.gmra.mxu0 %v2017
      %v2327 = vpop.f32.mrf.mxu0
      %v2328 = vadd.f32 0.0, %v2327
      %2329 = vmatmul.f32.gmra.mxu0 %v2020
      %v2330 = vpop.f32.mrf.mxu0
      %v2331 = vadd.f32 0.0, %v2330
      %2332 = vmatmul.f32.gmra.mxu0 %v2023
      %v2333 = vpop.f32.mrf.mxu0
      %v2334 = vadd.f32 0.0, %v2333
      %2335 = vmatmul.f32.gmra.mxu0 %v2026
      %v2336 = vpop.f32.mrf.mxu0
      %v2337 = vadd.f32 0.0, %v2336
      %2338 = vmatmul.f32.gmra.mxu0 %v2029
      %v2339 = vpop.f32.mrf.mxu0
      %v2340 = vadd.f32 0.0, %v2339
      %2341 = vmatmul.f32.gmra.mxu0 %v2032
      %v2342 = vpop.f32.mrf.mxu0
      %v2343 = vadd.f32 0.0, %v2342
      %2344 = vmatmul.f32.gmra.mxu0 %v2035
      %v2345 = vpop.f32.mrf.mxu0
      %v2346 = vadd.f32 0.0, %v2345
      %2347 = vmatmul.f32.gmra.mxu0 %v2038
      %v2348 = vpop.f32.mrf.mxu0
      %v2349 = vadd.f32 0.0, %v2348
      %2350 = vmatmul.f32.gmra.mxu0 %v2041
      %v2351 = vpop.f32.mrf.mxu0
      %v2352 = vadd.f32 0.0, %v2351
      %2353 = vmatmul.f32.gmra.mxu0 %v2044
      %v2354 = vpop.f32.mrf.mxu0
      %v2355 = vadd.f32 0.0, %v2354
      %2356 = vmatmul.f32.gmra.mxu0 %v2047
      %v2357 = vpop.f32.mrf.mxu0
      %v2358 = vadd.f32 0.0, %v2357
      %2359 = vmatmul.f32.gmra.mxu0 %v2050
      %v2360 = vpop.f32.mrf.mxu0
      %v2361 = vadd.f32 0.0, %v2360
      %2362 = vmatmul.f32.gmra.mxu0 %v2053
      %v2363 = vpop.f32.mrf.mxu0
      %v2364 = vadd.f32 0.0, %v2363
      %2365 = vmatmul.f32.gmra.mxu0 %v2056
      %v2366 = vpop.f32.mrf.mxu0
      %v2367 = vadd.f32 0.0, %v2366
      %2368 = vmatmul.f32.gmra.mxu0 %v2059
      %v2369 = vpop.f32.mrf.mxu0
      %v2370 = vadd.f32 0.0, %v2369
      %2371 = vmatmul.f32.gmra.mxu0 %v2062
      %v2372 = vpop.f32.mrf.mxu0
      %v2373 = vadd.f32 0.0, %v2372
      %2374 = vmatmul.f32.gmra.mxu0 %v2065
      %v2375 = vpop.f32.mrf.mxu0
      %v2376 = vadd.f32 0.0, %v2375
      %2377 = vmatmul.f32.gmra.mxu0 %v2068
      %v2378 = vpop.f32.mrf.mxu0
      %v2379 = vadd.f32 0.0, %v2378
      %2380 = vmatmul.f32.gmra.mxu0 %v2071
      %v2381 = vpop.f32.mrf.mxu0
      %v2382 = vadd.f32 0.0, %v2381
      %2383 = vmatmul.f32.gmra.mxu0 %v2074
      %v2384 = vpop.f32.mrf.mxu0
      %v2385 = vadd.f32 0.0, %v2384
      %2386 = vmatmul.f32.gmra.mxu0 %v2077
      %v2387 = vpop.f32.mrf.mxu0
      %v2388 = vadd.f32 0.0, %v2387
      %2389 = vmatmul.f32.gmra.mxu0 %v2080
      %v2390 = vpop.f32.mrf.mxu0
      %v2391 = vadd.f32 0.0, %v2390
      %2392 = vmatmul.f32.gmra.mxu0 %v2083
      %v2393 = vpop.f32.mrf.mxu0
      %v2394 = vadd.f32 0.0, %v2393
      %2395 = vmatmul.f32.gmra.mxu0 %v2086
      %v2396 = vpop.f32.mrf.mxu0
      %v2397 = vadd.f32 0.0, %v2396
      %2398 = vmatmul.f32.gmra.mxu0 %v2089
      %v2399 = vpop.f32.mrf.mxu0
      %v2400 = vadd.f32 0.0, %v2399
      %2401 = vmatmul.f32.gmra.mxu0 %v2092
      %v2402 = vpop.f32.mrf.mxu0
      %v2403 = vadd.f32 0.0, %v2402
      %2404 = vmatmul.f32.gmra.mxu0 %v2095
      %v2405 = vpop.f32.mrf.mxu0
      %v2406 = vadd.f32 0.0, %v2405
      %2407 = vmatmul.f32.gmra.mxu0 %v2098
      %v2408 = vpop.f32.mrf.mxu0
      %v2409 = vadd.f32 0.0, %v2408
      %2410 = vmatmul.f32.gmra.mxu0 %v2101
      %v2411 = vpop.f32.mrf.mxu0
      %v2412 = vadd.f32 0.0, %v2411
      %2413 = vmatmul.f32.gmra.mxu0 %v2104
      %v2414 = vpop.f32.mrf.mxu0
      %v2415 = vadd.f32 0.0, %v2414
      %2416 = vmatmul.f32.gmra.mxu0 %v2107
      %v2417 = vpop.f32.mrf.mxu0
      %v2418 = vadd.f32 0.0, %v2417
      %2419 = vmatmul.f32.gmra.mxu0 %v2110
      %v2420 = vpop.f32.mrf.mxu0
      %v2421 = vadd.f32 0.0, %v2420
      %2422 = vmatmul.f32.gmra.mxu0 %v2113
      %v2423 = vpop.f32.mrf.mxu0
      %v2424 = vadd.f32 0.0, %v2423
      %2425 = vmatmul.f32.gmra.mxu0 %v2116
      %v2426 = vpop.f32.mrf.mxu0
      %v2427 = vadd.f32 0.0, %v2426
      %2428 = vmatmul.f32.gmra.mxu0 %v2119
      %v2429 = vpop.f32.mrf.mxu0
      %v2430 = vadd.f32 0.0, %v2429
      %2431 = vmatmul.f32.gmra.mxu0 %v2122
      %v2432 = vpop.f32.mrf.mxu0
      %v2433 = vadd.f32 0.0, %v2432
      %2434 = vmatmul.f32.gmra.mxu0 %v2125
      %v2435 = vpop.f32.mrf.mxu0
      %v2436 = vadd.f32 0.0, %v2435
      %2437 = vmatmul.f32.gmra.mxu0 %v2128
      %v2438 = vpop.f32.mrf.mxu0
      %v2439 = vadd.f32 0.0, %v2438
      %2440 = vmatmul.f32.gmra.mxu0 %v2131
      %v2441 = vpop.f32.mrf.mxu0
      %v2442 = vadd.f32 0.0, %v2441
      %2443 = vmatmul.f32.gmra.mxu0 %v2134
      %v2444 = vpop.f32.mrf.mxu0
      %v2445 = vadd.f32 0.0, %v2444
      %2446 = vmatmul.f32.gmra.mxu0 %v2137
      %v2447 = vpop.f32.mrf.mxu0
      %v2448 = vadd.f32 0.0, %v2447
      %2449 = vmatmul.f32.gmra.mxu0 %v2140
      %v2450 = vpop.f32.mrf.mxu0
      %v2451 = vadd.f32 0.0, %v2450
      %2452 = vmatmul.f32.gmra.mxu0 %v2143
      %v2453 = vpop.f32.mrf.mxu0
      %v2454 = vadd.f32 0.0, %v2453
      %2455 = vmatmul.f32.gmra.mxu0 %v2146
      %v2456 = vpop.f32.mrf.mxu0
      %v2457 = vadd.f32 0.0, %v2456
      %2458 = vmatmul.f32.gmra.mxu0 %v2149
      %v2459 = vpop.f32.mrf.mxu0
      %v2460 = vadd.f32 0.0, %v2459
      %2461 = vmatmul.f32.gmra.mxu0 %v2152
      %v2462 = vpop.f32.mrf.mxu0
      %v2463 = vadd.f32 0.0, %v2462
      %2464 = vmatmul.f32.gmra.mxu0 %v2155
      %v2465 = vpop.f32.mrf.mxu0
      %v2466 = vadd.f32 0.0, %v2465
      %2467 = vmatmul.f32.gmra.mxu0 %v2158
      %v2468 = vpop.f32.mrf.mxu0
      %v2469 = vadd.f32 0.0, %v2468
      %2470 = vmatmul.f32.gmra.mxu0 %v2161
      %v2471 = vpop.f32.mrf.mxu0
      %v2472 = vadd.f32 0.0, %v2471
      %2473 = vmatmul.f32.gmra.mxu0 %v2164
      %v2474 = vpop.f32.mrf.mxu0
      %v2475 = vadd.f32 0.0, %v2474
      %2476 = vmatmul.f32.gmra.mxu0 %v2167
      %v2477 = vpop.f32.mrf.mxu0
      %v2478 = vadd.f32 0.0, %v2477
      %2479 = vmatmul.f32.gmra.mxu0 %v2170
      %v2480 = vpop.f32.mrf.mxu0
      %v2481 = vadd.f32 0.0, %v2480
      %2482 = vmatmul.f32.gmra.mxu0 %v2173
      %v2483 = vpop.f32.mrf.mxu0
      %v2484 = vadd.f32 0.0, %v2483
      %2485 = vmatmul.f32.gmra.mxu0 %v2176
      %v2486 = vpop.f32.mrf.mxu0
      %v2487 = vadd.f32 0.0, %v2486
      %2488 = vmatmul.f32.gmra.mxu0 %v2179
      %v2489 = vpop.f32.mrf.mxu0
      %v2490 = vadd.f32 0.0, %v2489
      %2491 = vmatmul.f32.gmra.mxu0 %v2182
      %v2492 = vpop.f32.mrf.mxu0
      %v2493 = vadd.f32 0.0, %v2492
      %2494 = vmatmul.f32.gmra.mxu0 %v2185
      %v2495 = vpop.f32.mrf.mxu0
      %v2496 = vadd.f32 0.0, %v2495
      %2497 = vmatmul.f32.gmra.mxu0 %v2188
      %v2498 = vpop.f32.mrf.mxu0
      %v2499 = vadd.f32 0.0, %v2498
      %2500 = vmatmul.f32.gmra.mxu0 %v2191
      %v2501 = vpop.f32.mrf.mxu0
      %v2502 = vadd.f32 0.0, %v2501
      %2503 = vmatmul.f32.gmra.mxu0 %v2194
      %v2504 = vpop.f32.mrf.mxu0
      %v2505 = vadd.f32 0.0, %v2504
      %2506 = vmatmul.f32.gmra.mxu0 %v2197
      %v2507 = vpop.f32.mrf.mxu0
      %v2508 = vadd.f32 0.0, %v2507
      %2509 = vmatmul.f32.gmra.mxu0 %v2200
      %v2510 = vpop.f32.mrf.mxu0
      %v2511 = vadd.f32 0.0, %v2510
      %2512 = vmatmul.f32.gmra.mxu0 %v2203
      %v2513 = vpop.f32.mrf.mxu0
      %v2514 = vadd.f32 0.0, %v2513
      %2515 = vmatmul.f32.gmra.mxu0 %v2206
      %v2516 = vpop.f32.mrf.mxu0
      %v2517 = vadd.f32 0.0, %v2516
      %2518 = vmatmul.f32.gmra.mxu0 %v2209
      %v2519 = vpop.f32.mrf.mxu0
      %v2520 = vadd.f32 0.0, %v2519
      %2521 = vmatmul.f32.gmra.mxu0 %v2212
      %v2522 = vpop.f32.mrf.mxu0
      %v2523 = vadd.f32 0.0, %v2522
      %2524 = vmatmul.f32.gmra.mxu0 %v2215
      %v2525 = vpop.f32.mrf.mxu0
      %v2526 = vadd.f32 0.0, %v2525
      %2527 = vmatmul.f32.gmra.mxu0 %v2218
      %v2528 = vpop.f32.mrf.mxu0
      %v2529 = vadd.f32 0.0, %v2528
      %2530 = vmatmul.f32.gmra.mxu0 %v2221
      %v2531 = vpop.f32.mrf.mxu0
      %v2532 = vadd.f32 0.0, %v2531
      %2533 = vmatmul.f32.gmra.mxu0 %v2224
      %v2534 = vpop.f32.mrf.mxu0
      %v2535 = vadd.f32 0.0, %v2534
      %2536 = vmatmul.f32.gmra.mxu0 %v2227
      %v2537 = vpop.f32.mrf.mxu0
      %v2538 = vadd.f32 0.0, %v2537
      %2539 = vmatmul.f32.gmra.mxu0 %v2230
      %v2540 = vpop.f32.mrf.mxu0
      %v2541 = vadd.f32 0.0, %v2540
      %2542 = vdwg.mxu0
      %v2543 = vmax.f32 %v1742, %v2250
      %v2544 = vmax.f32 %v1743, %v2253
      %v2545 = vmax.f32 %v1744, %v2256
      %v2546 = vmax.f32 %v1745, %v2259
      %v2547 = vmax.f32 %v1746, %v2262
      %v2548 = vmax.f32 %v1747, %v2265
      %v2549 = vmax.f32 %v1748, %v2268
      %v2550 = vmax.f32 %v1749, %v2271
      %v2551 = vmax.f32 %v1750, %v2274
      %v2552 = vmax.f32 %v1751, %v2277
      %v2553 = vmax.f32 %v1752, %v2280
      %v2554 = vmax.f32 %v1753, %v2283
      %v2555 = vmax.f32 %v1754, %v2286
      %v2556 = vmax.f32 %v1755, %v2289
      %v2557 = vmax.f32 %v1756, %v2292
      %v2558 = vmax.f32 %v1757, %v2295
      %v2559 = vmax.f32 %v1758, %v2298
      %v2560 = vmax.f32 %v1759, %v2301
      %v2561 = vmax.f32 %v1760, %v2304
      %v2562 = vmax.f32 %v1761, %v2307
      %v2563 = vmax.f32 %v1762, %v2310
      %v2564 = vmax.f32 %v1763, %v2313
      %v2565 = vmax.f32 %v1764, %v2316
      %v2566 = vmax.f32 %v1765, %v2319
      %v2567 = vmax.f32 %v1766, %v2322
      %v2568 = vmax.f32 %v1767, %v2325
      %v2569 = vmax.f32 %v1768, %v2328
      %v2570 = vmax.f32 %v1769, %v2331
      %v2571 = vmax.f32 %v1770, %v2334
      %v2572 = vmax.f32 %v1771, %v2337
      %v2573 = vmax.f32 %v1772, %v2340
      %v2574 = vmax.f32 %v1773, %v2343
      %v2575 = vmax.f32 %v1774, %v2346
      %v2576 = vmax.f32 %v1775, %v2349
      %v2577 = vmax.f32 %v1776, %v2352
      %v2578 = vmax.f32 %v1777, %v2355
      %v2579 = vmax.f32 %v1778, %v2358
      %v2580 = vmax.f32 %v1779, %v2361
      %v2581 = vmax.f32 %v1780, %v2364
      %v2582 = vmax.f32 %v1781, %v2367
      %v2583 = vmax.f32 %v1782, %v2370
      %v2584 = vmax.f32 %v1783, %v2373
      %v2585 = vmax.f32 %v1784, %v2376
      %v2586 = vmax.f32 %v1785, %v2379
      %v2587 = vmax.f32 %v1786, %v2382
      %v2588 = vmax.f32 %v1787, %v2385
      %v2589 = vmax.f32 %v1788, %v2388
      %v2590 = vmax.f32 %v1789, %v2391
      %v2591 = vmax.f32 %v1790, %v2394
      %v2592 = vmax.f32 %v1791, %v2397
      %v2593 = vmax.f32 %v1792, %v2400
      %v2594 = vmax.f32 %v1793, %v2403
      %v2595 = vmax.f32 %v1794, %v2406
      %v2596 = vmax.f32 %v1795, %v2409
      %v2597 = vmax.f32 %v1796, %v2412
      %v2598 = vmax.f32 %v1797, %v2415
      %v2599 = vmax.f32 %v1798, %v2418
      %v2600 = vmax.f32 %v1799, %v2421
      %v2601 = vmax.f32 %v1800, %v2424
      %v2602 = vmax.f32 %v1801, %v2427
      %v2603 = vmax.f32 %v1802, %v2430
      %v2604 = vmax.f32 %v1803, %v2433
      %v2605 = vmax.f32 %v1804, %v2436
      %v2606 = vmax.f32 %v1805, %v2439
      %v2607 = vmax.f32 %v1806, %v2442
      %v2608 = vmax.f32 %v1807, %v2445
      %v2609 = vmax.f32 %v1808, %v2448
      %v2610 = vmax.f32 %v1809, %v2451
      %v2611 = vmax.f32 %v1810, %v2454
      %v2612 = vmax.f32 %v1811, %v2457
      %v2613 = vmax.f32 %v1812, %v2460
      %v2614 = vmax.f32 %v1813, %v2463
      %v2615 = vmax.f32 %v1814, %v2466
      %v2616 = vmax.f32 %v1815, %v2469
      %v2617 = vmax.f32 %v1816, %v2472
      %v2618 = vmax.f32 %v1817, %v2475
      %v2619 = vmax.f32 %v1818, %v2478
      %v2620 = vmax.f32 %v1819, %v2481
      %v2621 = vmax.f32 %v1820, %v2484
      %v2622 = vmax.f32 %v1821, %v2487
      %v2623 = vmax.f32 %v1822, %v2490
      %v2624 = vmax.f32 %v1823, %v2493
      %v2625 = vmax.f32 %v1824, %v2496
      %v2626 = vmax.f32 %v1825, %v2499
      %v2627 = vmax.f32 %v1826, %v2502
      %v2628 = vmax.f32 %v1827, %v2505
      %v2629 = vmax.f32 %v1828, %v2508
      %v2630 = vmax.f32 %v1829, %v2511
      %v2631 = vmax.f32 %v1830, %v2514
      %v2632 = vmax.f32 %v1831, %v2517
      %v2633 = vmax.f32 %v1832, %v2520
      %v2634 = vmax.f32 %v1833, %v2523
      %v2635 = vmax.f32 %v1834, %v2526
      %v2636 = vmax.f32 %v1835, %v2529
      %v2637 = vmax.f32 %v1836, %v2532
      %v2638 = vmax.f32 %v1837, %v2535
      %v2639 = vmax.f32 %v1838, %v2538
      %v2640 = vmax.f32 %v1839, %v2541
      %v2641 = vld [vmem:[%s313] sm:$0xff]
      %v2642 = vld [vmem:[%s313 + $0x8] sm:$0xff]
      %v2643 = vld [vmem:[%s313 + $0x10] sm:$0xff]
      %v2644 = vld [vmem:[%s313 + $0x18] sm:$0xff]
      %v2645 = vld [vmem:[%s313 + $0x20] sm:$0xff]
      %v2646 = vld [vmem:[%s313 + $0x28] sm:$0xff]
      %v2647 = vld [vmem:[%s313 + $0x30] sm:$0xff]
      %v2648 = vld [vmem:[%s313 + $0x38] sm:$0xff]
      %v2649 = vld [vmem:[%s313 + $0x40] sm:$0xff]
      %v2650 = vld [vmem:[%s313 + $0x48] sm:$0xff]
      %v2651 = vld [vmem:[%s313 + $0x50] sm:$0xff]
      %v2652 = vld [vmem:[%s313 + $0x58] sm:$0xff]
      %v2653 = vld [vmem:[%s313 + $0x60] sm:$0xff]
      %v2654 = vld [vmem:[%s313 + $0x68] sm:$0xff]
      %v2655 = vld [vmem:[%s313 + $0x70] sm:$0xff]
      %v2656 = vld [vmem:[%s313 + $0x78] sm:$0xff]
      %v2657 = vld [vmem:[%s313 + $0x80] sm:$0xff]
      %v2658 = vld [vmem:[%s313 + $0x88] sm:$0xff]
      %v2659 = vld [vmem:[%s313 + $0x90] sm:$0xff]
      %v2660 = vld [vmem:[%s313 + $0x98] sm:$0xff]
      %v2661 = vld [vmem:[%s313 + $0xa0] sm:$0xff]
      %v2662 = vld [vmem:[%s313 + $0xa8] sm:$0xff]
      %v2663 = vld [vmem:[%s313 + $0xb0] sm:$0xff]
      %v2664 = vld [vmem:[%s313 + $0xb8] sm:$0xff]
      %v2665 = vld [vmem:[%s313 + $0xc0] sm:$0xff]
      %v2666 = vld [vmem:[%s313 + $0xc8] sm:$0xff]
      %v2667 = vld [vmem:[%s313 + $0xd0] sm:$0xff]
      %v2668 = vld [vmem:[%s313 + $0xd8] sm:$0xff]
      %v2669 = vld [vmem:[%s313 + $0xe0] sm:$0xff]
      %v2670 = vld [vmem:[%s313 + $0xe8] sm:$0xff]
      %v2671 = vld [vmem:[%s313 + $0xf0] sm:$0xff]
      %v2672 = vld [vmem:[%s313 + $0xf8] sm:$0xff]
      %v2673 = vld [vmem:[%s313 + $0x100] sm:$0xff]
      %v2674 = vld [vmem:[%s313 + $0x108] sm:$0xff]
      %v2675 = vld [vmem:[%s313 + $0x110] sm:$0xff]
      %v2676 = vld [vmem:[%s313 + $0x118] sm:$0xff]
      %v2677 = vld [vmem:[%s313 + $0x120] sm:$0xff]
      %v2678 = vld [vmem:[%s313 + $0x128] sm:$0xff]
      %v2679 = vld [vmem:[%s313 + $0x130] sm:$0xff]
      %v2680 = vld [vmem:[%s313 + $0x138] sm:$0xff]
      %v2681 = vld [vmem:[%s313 + $0x140] sm:$0xff]
      %v2682 = vld [vmem:[%s313 + $0x148] sm:$0xff]
      %v2683 = vld [vmem:[%s313 + $0x150] sm:$0xff]
      %v2684 = vld [vmem:[%s313 + $0x158] sm:$0xff]
      %v2685 = vld [vmem:[%s313 + $0x160] sm:$0xff]
      %v2686 = vld [vmem:[%s313 + $0x168] sm:$0xff]
      %v2687 = vld [vmem:[%s313 + $0x170] sm:$0xff]
      %v2688 = vld [vmem:[%s313 + $0x178] sm:$0xff]
      %v2689 = vld [vmem:[%s313 + $0x180] sm:$0xff]
      %v2690 = vld [vmem:[%s313 + $0x188] sm:$0xff]
      %v2691 = vld [vmem:[%s313 + $0x190] sm:$0xff]
      %v2692 = vld [vmem:[%s313 + $0x198] sm:$0xff]
      %v2693 = vld [vmem:[%s313 + $0x1a0] sm:$0xff]
      %v2694 = vld [vmem:[%s313 + $0x1a8] sm:$0xff]
      %v2695 = vld [vmem:[%s313 + $0x1b0] sm:$0xff]
      %v2696 = vld [vmem:[%s313 + $0x1b8] sm:$0xff]
      %v2697 = vld [vmem:[%s313 + $0x1c0] sm:$0xff]
      %v2698 = vld [vmem:[%s313 + $0x1c8] sm:$0xff]
      %v2699 = vld [vmem:[%s313 + $0x1d0] sm:$0xff]
      %v2700 = vld [vmem:[%s313 + $0x1d8] sm:$0xff]
      %v2701 = vld [vmem:[%s313 + $0x1e0] sm:$0xff]
      %v2702 = vld [vmem:[%s313 + $0x1e8] sm:$0xff]
      %v2703 = vld [vmem:[%s313 + $0x1f0] sm:$0xff]
      %v2704 = vld [vmem:[%s313 + $0x1f8] sm:$0xff]
      %v2705 = vld [vmem:[%s313 + $0x200] sm:$0xff]
      %v2706 = vld [vmem:[%s313 + $0x208] sm:$0xff]
      %v2707 = vld [vmem:[%s313 + $0x210] sm:$0xff]
      %v2708 = vld [vmem:[%s313 + $0x218] sm:$0xff]
      %v2709 = vld [vmem:[%s313 + $0x220] sm:$0xff]
      %v2710 = vld [vmem:[%s313 + $0x228] sm:$0xff]
      %v2711 = vld [vmem:[%s313 + $0x230] sm:$0xff]
      %v2712 = vld [vmem:[%s313 + $0x238] sm:$0xff]
      %v2713 = vld [vmem:[%s313 + $0x240] sm:$0xff]
      %v2714 = vld [vmem:[%s313 + $0x248] sm:$0xff]
      %v2715 = vld [vmem:[%s313 + $0x250] sm:$0xff]
      %v2716 = vld [vmem:[%s313 + $0x258] sm:$0xff]
      %v2717 = vld [vmem:[%s313 + $0x260] sm:$0xff]
      %v2718 = vld [vmem:[%s313 + $0x268] sm:$0xff]
      %v2719 = vld [vmem:[%s313 + $0x270] sm:$0xff]
      %v2720 = vld [vmem:[%s313 + $0x278] sm:$0xff]
      %v2721 = vld [vmem:[%s313 + $0x280] sm:$0xff]
      %v2722 = vld [vmem:[%s313 + $0x288] sm:$0xff]
      %v2723 = vld [vmem:[%s313 + $0x290] sm:$0xff]
      %v2724 = vld [vmem:[%s313 + $0x298] sm:$0xff]
      %v2725 = vld [vmem:[%s313 + $0x2a0] sm:$0xff]
      %v2726 = vld [vmem:[%s313 + $0x2a8] sm:$0xff]
      %v2727 = vld [vmem:[%s313 + $0x2b0] sm:$0xff]
      %v2728 = vld [vmem:[%s313 + $0x2b8] sm:$0xff]
      %v2729 = vld [vmem:[%s313 + $0x2c0] sm:$0xff]
      %v2730 = vld [vmem:[%s313 + $0x2c8] sm:$0xff]
      %v2731 = vld [vmem:[%s313 + $0x2d0] sm:$0xff]
      %v2732 = vld [vmem:[%s313 + $0x2d8] sm:$0xff]
      %v2733 = vld [vmem:[%s313 + $0x2e0] sm:$0xff]
      %v2734 = vld [vmem:[%s313 + $0x2e8] sm:$0xff]
      %v2735 = vld [vmem:[%s313 + $0x2f0] sm:$0xff]
      %v2736 = vld [vmem:[%s313 + $0x2f8] sm:$0xff]
      %v2737 = vld [vmem:[%s313 + $0x300] sm:$0xff]
      %v2738 = vld [vmem:[%s313 + $0x308] sm:$0xff]
      %v2740 = vsel %vm429, %v2641, 0
      %v2743 = vsel %vm429, %v2642, 0
      %v2746 = vsel %vm429, %v2643, 0
      %v2749 = vsel %vm429, %v2644, 0
      %v2752 = vsel %vm429, %v2645, 0
      %v2755 = vsel %vm429, %v2646, 0
      %v2758 = vsel %vm429, %v2647, 0
      %v2761 = vsel %vm429, %v2648, 0
      %v2764 = vsel %vm429, %v2649, 0
      %v2767 = vsel %vm429, %v2650, 0
      %v2770 = vsel %vm429, %v2651, 0
      %v2773 = vsel %vm429, %v2652, 0
      %v2776 = vsel %vm429, %v2653, 0
      %v2779 = vsel %vm429, %v2654, 0
      %v2782 = vsel %vm429, %v2655, 0
      %v2785 = vsel %vm429, %v2656, 0
      %v2788 = vsel %vm429, %v2657, 0
      %v2791 = vsel %vm429, %v2658, 0
      %v2794 = vsel %vm429, %v2659, 0
      %v2797 = vsel %vm429, %v2660, 0
      %v2800 = vsel %vm429, %v2661, 0
      %v2803 = vsel %vm429, %v2662, 0
      %v2806 = vsel %vm429, %v2663, 0
      %v2809 = vsel %vm429, %v2664, 0
      %v2812 = vsel %vm429, %v2665, 0
      %v2815 = vsel %vm429, %v2666, 0
      %v2818 = vsel %vm429, %v2667, 0
      %v2821 = vsel %vm429, %v2668, 0
      %v2824 = vsel %vm429, %v2669, 0
      %v2827 = vsel %vm429, %v2670, 0
      %v2830 = vsel %vm429, %v2671, 0
      %v2833 = vsel %vm429, %v2672, 0
      %v2836 = vsel %vm429, %v2673, 0
      %v2839 = vsel %vm429, %v2674, 0
      %v2842 = vsel %vm429, %v2675, 0
      %v2845 = vsel %vm429, %v2676, 0
      %v2848 = vsel %vm429, %v2677, 0
      %v2851 = vsel %vm429, %v2678, 0
      %v2854 = vsel %vm429, %v2679, 0
      %v2857 = vsel %vm429, %v2680, 0
      %v2860 = vsel %vm429, %v2681, 0
      %v2863 = vsel %vm429, %v2682, 0
      %v2866 = vsel %vm429, %v2683, 0
      %v2869 = vsel %vm429, %v2684, 0
      %v2872 = vsel %vm429, %v2685, 0
      %v2875 = vsel %vm429, %v2686, 0
      %v2878 = vsel %vm429, %v2687, 0
      %v2881 = vsel %vm429, %v2688, 0
      %v2884 = vsel %vm429, %v2689, 0
      %v2887 = vsel %vm429, %v2690, 0
      %v2890 = vsel %vm429, %v2691, 0
      %v2893 = vsel %vm429, %v2692, 0
      %v2896 = vsel %vm429, %v2693, 0
      %v2899 = vsel %vm429, %v2694, 0
      %v2902 = vsel %vm429, %v2695, 0
      %v2905 = vsel %vm429, %v2696, 0
      %v2908 = vsel %vm429, %v2697, 0
      %v2911 = vsel %vm429, %v2698, 0
      %v2914 = vsel %vm429, %v2699, 0
      %v2917 = vsel %vm429, %v2700, 0
      %v2920 = vsel %vm429, %v2701, 0
      %v2923 = vsel %vm429, %v2702, 0
      %v2926 = vsel %vm429, %v2703, 0
      %v2929 = vsel %vm429, %v2704, 0
      %v2932 = vsel %vm429, %v2705, 0
      %v2935 = vsel %vm429, %v2706, 0
      %v2938 = vsel %vm429, %v2707, 0
      %v2941 = vsel %vm429, %v2708, 0
      %v2944 = vsel %vm429, %v2709, 0
      %v2947 = vsel %vm429, %v2710, 0
      %v2950 = vsel %vm429, %v2711, 0
      %v2953 = vsel %vm429, %v2712, 0
      %v2956 = vsel %vm429, %v2713, 0
      %v2959 = vsel %vm429, %v2714, 0
      %v2962 = vsel %vm429, %v2715, 0
      %v2965 = vsel %vm429, %v2716, 0
      %v2968 = vsel %vm429, %v2717, 0
      %v2971 = vsel %vm429, %v2718, 0
      %v2974 = vsel %vm429, %v2719, 0
      %v2977 = vsel %vm429, %v2720, 0
      %v2980 = vsel %vm429, %v2721, 0
      %v2983 = vsel %vm429, %v2722, 0
      %v2986 = vsel %vm429, %v2723, 0
      %v2989 = vsel %vm429, %v2724, 0
      %v2992 = vsel %vm429, %v2725, 0
      %v2995 = vsel %vm429, %v2726, 0
      %v2998 = vsel %vm429, %v2727, 0
      %v3001 = vsel %vm429, %v2728, 0
      %v3004 = vsel %vm429, %v2729, 0
      %v3007 = vsel %vm429, %v2730, 0
      %v3010 = vsel %vm429, %v2731, 0
      %v3013 = vsel %vm429, %v2732, 0
      %v3016 = vsel %vm429, %v2733, 0
      %v3019 = vsel %vm429, %v2734, 0
      %v3022 = vsel %vm429, %v2735, 0
      %v3025 = vsel %vm429, %v2736, 0
      %v3028 = vsel %vm429, %v2737, 0
      %v3031 = vsel %vm429, %v2738, 0
      %3033 = vmatpush.msra.mxu0 0.0
      %3034 = vmatpush.msra.mxu0 0.0
      %3035 = vmatpush.msra.mxu0 0.0
      %3036 = vmatpush.msra.mxu0 0.0
      %3037 = vmatpush.msra.mxu0 0.0
      %3038 = vmatpush.msra.mxu0 0.0
      %3039 = vmatpush.msra.mxu0 %v726
      %3040 = vmatpush.msra.mxu0 %v427
      %3041 = vmatpush.msra.mxu0 %v426
      %3042 = vmatpush.msra.mxu0 %v425
      %3043 = vmatpush.msra.mxu0 %v424
      %3044 = vmatpush.msra.mxu0 %v423
      %3045 = vmatpush.msra.mxu0 %v422
      %3046 = vmatpush.msra.mxu0 %v421
      %3047 = vmatpush.msra.mxu0 %v420
      %3048 = vmatpush.msra.mxu0 %v419
      %3049 = vmatmul.f32.gmra.mxu0 %v2740
      %v3050 = vpop.f32.mrf.mxu0
      %v3051 = vadd.f32 0.0, %v3050
      %3052 = vmatmul.f32.gmra.mxu0 %v2743
      %v3053 = vpop.f32.mrf.mxu0
      %v3054 = vadd.f32 0.0, %v3053
      %3055 = vmatmul.f32.gmra.mxu0 %v2746
      %v3056 = vpop.f32.mrf.mxu0
      %v3057 = vadd.f32 0.0, %v3056
      %3058 = vmatmul.f32.gmra.mxu0 %v2749
      %v3059 = vpop.f32.mrf.mxu0
      %v3060 = vadd.f32 0.0, %v3059
      %3061 = vmatmul.f32.gmra.mxu0 %v2752
      %v3062 = vpop.f32.mrf.mxu0
      %v3063 = vadd.f32 0.0, %v3062
      %3064 = vmatmul.f32.gmra.mxu0 %v2755
      %v3065 = vpop.f32.mrf.mxu0
      %v3066 = vadd.f32 0.0, %v3065
      %3067 = vmatmul.f32.gmra.mxu0 %v2758
      %v3068 = vpop.f32.mrf.mxu0
      %v3069 = vadd.f32 0.0, %v3068
      %3070 = vmatmul.f32.gmra.mxu0 %v2761
      %v3071 = vpop.f32.mrf.mxu0
      %v3072 = vadd.f32 0.0, %v3071
      %3073 = vmatmul.f32.gmra.mxu0 %v2764
      %v3074 = vpop.f32.mrf.mxu0
      %v3075 = vadd.f32 0.0, %v3074
      %3076 = vmatmul.f32.gmra.mxu0 %v2767
      %v3077 = vpop.f32.mrf.mxu0
      %v3078 = vadd.f32 0.0, %v3077
      %3079 = vmatmul.f32.gmra.mxu0 %v2770
      %v3080 = vpop.f32.mrf.mxu0
      %v3081 = vadd.f32 0.0, %v3080
      %3082 = vmatmul.f32.gmra.mxu0 %v2773
      %v3083 = vpop.f32.mrf.mxu0
      %v3084 = vadd.f32 0.0, %v3083
      %3085 = vmatmul.f32.gmra.mxu0 %v2776
      %v3086 = vpop.f32.mrf.mxu0
      %v3087 = vadd.f32 0.0, %v3086
      %3088 = vmatmul.f32.gmra.mxu0 %v2779
      %v3089 = vpop.f32.mrf.mxu0
      %v3090 = vadd.f32 0.0, %v3089
      %3091 = vmatmul.f32.gmra.mxu0 %v2782
      %v3092 = vpop.f32.mrf.mxu0
      %v3093 = vadd.f32 0.0, %v3092
      %3094 = vmatmul.f32.gmra.mxu0 %v2785
      %v3095 = vpop.f32.mrf.mxu0
      %v3096 = vadd.f32 0.0, %v3095
      %3097 = vmatmul.f32.gmra.mxu0 %v2788
      %v3098 = vpop.f32.mrf.mxu0
      %v3099 = vadd.f32 0.0, %v3098
      %3100 = vmatmul.f32.gmra.mxu0 %v2791
      %v3101 = vpop.f32.mrf.mxu0
      %v3102 = vadd.f32 0.0, %v3101
      %3103 = vmatmul.f32.gmra.mxu0 %v2794
      %v3104 = vpop.f32.mrf.mxu0
      %v3105 = vadd.f32 0.0, %v3104
      %3106 = vmatmul.f32.gmra.mxu0 %v2797
      %v3107 = vpop.f32.mrf.mxu0
      %v3108 = vadd.f32 0.0, %v3107
      %3109 = vmatmul.f32.gmra.mxu0 %v2800
      %v3110 = vpop.f32.mrf.mxu0
      %v3111 = vadd.f32 0.0, %v3110
      %3112 = vmatmul.f32.gmra.mxu0 %v2803
      %v3113 = vpop.f32.mrf.mxu0
      %v3114 = vadd.f32 0.0, %v3113
      %3115 = vmatmul.f32.gmra.mxu0 %v2806
      %v3116 = vpop.f32.mrf.mxu0
      %v3117 = vadd.f32 0.0, %v3116
      %3118 = vmatmul.f32.gmra.mxu0 %v2809
      %v3119 = vpop.f32.mrf.mxu0
      %v3120 = vadd.f32 0.0, %v3119
      %3121 = vmatmul.f32.gmra.mxu0 %v2812
      %v3122 = vpop.f32.mrf.mxu0
      %v3123 = vadd.f32 0.0, %v3122
      %3124 = vmatmul.f32.gmra.mxu0 %v2815
      %v3125 = vpop.f32.mrf.mxu0
      %v3126 = vadd.f32 0.0, %v3125
      %3127 = vmatmul.f32.gmra.mxu0 %v2818
      %v3128 = vpop.f32.mrf.mxu0
      %v3129 = vadd.f32 0.0, %v3128
      %3130 = vmatmul.f32.gmra.mxu0 %v2821
      %v3131 = vpop.f32.mrf.mxu0
      %v3132 = vadd.f32 0.0, %v3131
      %3133 = vmatmul.f32.gmra.mxu0 %v2824
      %v3134 = vpop.f32.mrf.mxu0
      %v3135 = vadd.f32 0.0, %v3134
      %3136 = vmatmul.f32.gmra.mxu0 %v2827
      %v3137 = vpop.f32.mrf.mxu0
      %v3138 = vadd.f32 0.0, %v3137
      %3139 = vmatmul.f32.gmra.mxu0 %v2830
      %v3140 = vpop.f32.mrf.mxu0
      %v3141 = vadd.f32 0.0, %v3140
      %3142 = vmatmul.f32.gmra.mxu0 %v2833
      %v3143 = vpop.f32.mrf.mxu0
      %v3144 = vadd.f32 0.0, %v3143
      %3145 = vmatmul.f32.gmra.mxu0 %v2836
      %v3146 = vpop.f32.mrf.mxu0
      %v3147 = vadd.f32 0.0, %v3146
      %3148 = vmatmul.f32.gmra.mxu0 %v2839
      %v3149 = vpop.f32.mrf.mxu0
      %v3150 = vadd.f32 0.0, %v3149
      %3151 = vmatmul.f32.gmra.mxu0 %v2842
      %v3152 = vpop.f32.mrf.mxu0
      %v3153 = vadd.f32 0.0, %v3152
      %3154 = vmatmul.f32.gmra.mxu0 %v2845
      %v3155 = vpop.f32.mrf.mxu0
      %v3156 = vadd.f32 0.0, %v3155
      %3157 = vmatmul.f32.gmra.mxu0 %v2848
      %v3158 = vpop.f32.mrf.mxu0
      %v3159 = vadd.f32 0.0, %v3158
      %3160 = vmatmul.f32.gmra.mxu0 %v2851
      %v3161 = vpop.f32.mrf.mxu0
      %v3162 = vadd.f32 0.0, %v3161
      %3163 = vmatmul.f32.gmra.mxu0 %v2854
      %v3164 = vpop.f32.mrf.mxu0
      %v3165 = vadd.f32 0.0, %v3164
      %3166 = vmatmul.f32.gmra.mxu0 %v2857
      %v3167 = vpop.f32.mrf.mxu0
      %v3168 = vadd.f32 0.0, %v3167
      %3169 = vmatmul.f32.gmra.mxu0 %v2860
      %v3170 = vpop.f32.mrf.mxu0
      %v3171 = vadd.f32 0.0, %v3170
      %3172 = vmatmul.f32.gmra.mxu0 %v2863
      %v3173 = vpop.f32.mrf.mxu0
      %v3174 = vadd.f32 0.0, %v3173
      %3175 = vmatmul.f32.gmra.mxu0 %v2866
      %v3176 = vpop.f32.mrf.mxu0
      %v3177 = vadd.f32 0.0, %v3176
      %3178 = vmatmul.f32.gmra.mxu0 %v2869
      %v3179 = vpop.f32.mrf.mxu0
      %v3180 = vadd.f32 0.0, %v3179
      %3181 = vmatmul.f32.gmra.mxu0 %v2872
      %v3182 = vpop.f32.mrf.mxu0
      %v3183 = vadd.f32 0.0, %v3182
      %3184 = vmatmul.f32.gmra.mxu0 %v2875
      %v3185 = vpop.f32.mrf.mxu0
      %v3186 = vadd.f32 0.0, %v3185
      %3187 = vmatmul.f32.gmra.mxu0 %v2878
      %v3188 = vpop.f32.mrf.mxu0
      %v3189 = vadd.f32 0.0, %v3188
      %3190 = vmatmul.f32.gmra.mxu0 %v2881
      %v3191 = vpop.f32.mrf.mxu0
      %v3192 = vadd.f32 0.0, %v3191
      %3193 = vmatmul.f32.gmra.mxu0 %v2884
      %v3194 = vpop.f32.mrf.mxu0
      %v3195 = vadd.f32 0.0, %v3194
      %3196 = vmatmul.f32.gmra.mxu0 %v2887
      %v3197 = vpop.f32.mrf.mxu0
      %v3198 = vadd.f32 0.0, %v3197
      %3199 = vmatmul.f32.gmra.mxu0 %v2890
      %v3200 = vpop.f32.mrf.mxu0
      %v3201 = vadd.f32 0.0, %v3200
      %3202 = vmatmul.f32.gmra.mxu0 %v2893
      %v3203 = vpop.f32.mrf.mxu0
      %v3204 = vadd.f32 0.0, %v3203
      %3205 = vmatmul.f32.gmra.mxu0 %v2896
      %v3206 = vpop.f32.mrf.mxu0
      %v3207 = vadd.f32 0.0, %v3206
      %3208 = vmatmul.f32.gmra.mxu0 %v2899
      %v3209 = vpop.f32.mrf.mxu0
      %v3210 = vadd.f32 0.0, %v3209
      %3211 = vmatmul.f32.gmra.mxu0 %v2902
      %v3212 = vpop.f32.mrf.mxu0
      %v3213 = vadd.f32 0.0, %v3212
      %3214 = vmatmul.f32.gmra.mxu0 %v2905
      %v3215 = vpop.f32.mrf.mxu0
      %v3216 = vadd.f32 0.0, %v3215
      %3217 = vmatmul.f32.gmra.mxu0 %v2908
      %v3218 = vpop.f32.mrf.mxu0
      %v3219 = vadd.f32 0.0, %v3218
      %3220 = vmatmul.f32.gmra.mxu0 %v2911
      %v3221 = vpop.f32.mrf.mxu0
      %v3222 = vadd.f32 0.0, %v3221
      %3223 = vmatmul.f32.gmra.mxu0 %v2914
      %v3224 = vpop.f32.mrf.mxu0
      %v3225 = vadd.f32 0.0, %v3224
      %3226 = vmatmul.f32.gmra.mxu0 %v2917
      %v3227 = vpop.f32.mrf.mxu0
      %v3228 = vadd.f32 0.0, %v3227
      %3229 = vmatmul.f32.gmra.mxu0 %v2920
      %v3230 = vpop.f32.mrf.mxu0
      %v3231 = vadd.f32 0.0, %v3230
      %3232 = vmatmul.f32.gmra.mxu0 %v2923
      %v3233 = vpop.f32.mrf.mxu0
      %v3234 = vadd.f32 0.0, %v3233
      %3235 = vmatmul.f32.gmra.mxu0 %v2926
      %v3236 = vpop.f32.mrf.mxu0
      %v3237 = vadd.f32 0.0, %v3236
      %3238 = vmatmul.f32.gmra.mxu0 %v2929
      %v3239 = vpop.f32.mrf.mxu0
      %v3240 = vadd.f32 0.0, %v3239
      %3241 = vmatmul.f32.gmra.mxu0 %v2932
      %v3242 = vpop.f32.mrf.mxu0
      %v3243 = vadd.f32 0.0, %v3242
      %3244 = vmatmul.f32.gmra.mxu0 %v2935
      %v3245 = vpop.f32.mrf.mxu0
      %v3246 = vadd.f32 0.0, %v3245
      %3247 = vmatmul.f32.gmra.mxu0 %v2938
      %v3248 = vpop.f32.mrf.mxu0
      %v3249 = vadd.f32 0.0, %v3248
      %3250 = vmatmul.f32.gmra.mxu0 %v2941
      %v3251 = vpop.f32.mrf.mxu0
      %v3252 = vadd.f32 0.0, %v3251
      %3253 = vmatmul.f32.gmra.mxu0 %v2944
      %v3254 = vpop.f32.mrf.mxu0
      %v3255 = vadd.f32 0.0, %v3254
      %3256 = vmatmul.f32.gmra.mxu0 %v2947
      %v3257 = vpop.f32.mrf.mxu0
      %v3258 = vadd.f32 0.0, %v3257
      %3259 = vmatmul.f32.gmra.mxu0 %v2950
      %v3260 = vpop.f32.mrf.mxu0
      %v3261 = vadd.f32 0.0, %v3260
      %3262 = vmatmul.f32.gmra.mxu0 %v2953
      %v3263 = vpop.f32.mrf.mxu0
      %v3264 = vadd.f32 0.0, %v3263
      %3265 = vmatmul.f32.gmra.mxu0 %v2956
      %v3266 = vpop.f32.mrf.mxu0
      %v3267 = vadd.f32 0.0, %v3266
      %3268 = vmatmul.f32.gmra.mxu0 %v2959
      %v3269 = vpop.f32.mrf.mxu0
      %v3270 = vadd.f32 0.0, %v3269
      %3271 = vmatmul.f32.gmra.mxu0 %v2962
      %v3272 = vpop.f32.mrf.mxu0
      %v3273 = vadd.f32 0.0, %v3272
      %3274 = vmatmul.f32.gmra.mxu0 %v2965
      %v3275 = vpop.f32.mrf.mxu0
      %v3276 = vadd.f32 0.0, %v3275
      %3277 = vmatmul.f32.gmra.mxu0 %v2968
      %v3278 = vpop.f32.mrf.mxu0
      %v3279 = vadd.f32 0.0, %v3278
      %3280 = vmatmul.f32.gmra.mxu0 %v2971
      %v3281 = vpop.f32.mrf.mxu0
      %v3282 = vadd.f32 0.0, %v3281
      %3283 = vmatmul.f32.gmra.mxu0 %v2974
      %v3284 = vpop.f32.mrf.mxu0
      %v3285 = vadd.f32 0.0, %v3284
      %3286 = vmatmul.f32.gmra.mxu0 %v2977
      %v3287 = vpop.f32.mrf.mxu0
      %v3288 = vadd.f32 0.0, %v3287
      %3289 = vmatmul.f32.gmra.mxu0 %v2980
      %v3290 = vpop.f32.mrf.mxu0
      %v3291 = vadd.f32 0.0, %v3290
      %3292 = vmatmul.f32.gmra.mxu0 %v2983
      %v3293 = vpop.f32.mrf.mxu0
      %v3294 = vadd.f32 0.0, %v3293
      %3295 = vmatmul.f32.gmra.mxu0 %v2986
      %v3296 = vpop.f32.mrf.mxu0
      %v3297 = vadd.f32 0.0, %v3296
      %3298 = vmatmul.f32.gmra.mxu0 %v2989
      %v3299 = vpop.f32.mrf.mxu0
      %v3300 = vadd.f32 0.0, %v3299
      %3301 = vmatmul.f32.gmra.mxu0 %v2992
      %v3302 = vpop.f32.mrf.mxu0
      %v3303 = vadd.f32 0.0, %v3302
      %3304 = vmatmul.f32.gmra.mxu0 %v2995
      %v3305 = vpop.f32.mrf.mxu0
      %v3306 = vadd.f32 0.0, %v3305
      %3307 = vmatmul.f32.gmra.mxu0 %v2998
      %v3308 = vpop.f32.mrf.mxu0
      %v3309 = vadd.f32 0.0, %v3308
      %3310 = vmatmul.f32.gmra.mxu0 %v3001
      %v3311 = vpop.f32.mrf.mxu0
      %v3312 = vadd.f32 0.0, %v3311
      %3313 = vmatmul.f32.gmra.mxu0 %v3004
      %v3314 = vpop.f32.mrf.mxu0
      %v3315 = vadd.f32 0.0, %v3314
      %3316 = vmatmul.f32.gmra.mxu0 %v3007
      %v3317 = vpop.f32.mrf.mxu0
      %v3318 = vadd.f32 0.0, %v3317
      %3319 = vmatmul.f32.gmra.mxu0 %v3010
      %v3320 = vpop.f32.mrf.mxu0
      %v3321 = vadd.f32 0.0, %v3320
      %3322 = vmatmul.f32.gmra.mxu0 %v3013
      %v3323 = vpop.f32.mrf.mxu0
      %v3324 = vadd.f32 0.0, %v3323
      %3325 = vmatmul.f32.gmra.mxu0 %v3016
      %v3326 = vpop.f32.mrf.mxu0
      %v3327 = vadd.f32 0.0, %v3326
      %3328 = vmatmul.f32.gmra.mxu0 %v3019
      %v3329 = vpop.f32.mrf.mxu0
      %v3330 = vadd.f32 0.0, %v3329
      %3331 = vmatmul.f32.gmra.mxu0 %v3022
      %v3332 = vpop.f32.mrf.mxu0
      %v3333 = vadd.f32 0.0, %v3332
      %3334 = vmatmul.f32.gmra.mxu0 %v3025
      %v3335 = vpop.f32.mrf.mxu0
      %v3336 = vadd.f32 0.0, %v3335
      %3337 = vmatmul.f32.gmra.mxu0 %v3028
      %v3338 = vpop.f32.mrf.mxu0
      %v3339 = vadd.f32 0.0, %v3338
      %3340 = vmatmul.f32.gmra.mxu0 %v3031
      %v3341 = vpop.f32.mrf.mxu0
      %v3342 = vadd.f32 0.0, %v3341
      %3343 = vdwg.mxu0
      %v3344 = vmax.f32 %v2543, %v3051
      %v3345 = vmax.f32 %v2544, %v3054
      %v3346 = vmax.f32 %v2545, %v3057
      %v3347 = vmax.f32 %v2546, %v3060
      %v3348 = vmax.f32 %v2547, %v3063
      %v3349 = vmax.f32 %v2548, %v3066
      %v3350 = vmax.f32 %v2549, %v3069
      %v3351 = vmax.f32 %v2550, %v3072
      %v3352 = vmax.f32 %v2551, %v3075
      %v3353 = vmax.f32 %v2552, %v3078
      %v3354 = vmax.f32 %v2553, %v3081
      %v3355 = vmax.f32 %v2554, %v3084
      %v3356 = vmax.f32 %v2555, %v3087
      %v3357 = vmax.f32 %v2556, %v3090
      %v3358 = vmax.f32 %v2557, %v3093
      %v3359 = vmax.f32 %v2558, %v3096
      %v3360 = vmax.f32 %v2559, %v3099
      %v3361 = vmax.f32 %v2560, %v3102
      %v3362 = vmax.f32 %v2561, %v3105
      %v3363 = vmax.f32 %v2562, %v3108
      %v3364 = vmax.f32 %v2563, %v3111
      %v3365 = vmax.f32 %v2564, %v3114
      %v3366 = vmax.f32 %v2565, %v3117
      %v3367 = vmax.f32 %v2566, %v3120
      %v3368 = vmax.f32 %v2567, %v3123
      %v3369 = vmax.f32 %v2568, %v3126
      %v3370 = vmax.f32 %v2569, %v3129
      %v3371 = vmax.f32 %v2570, %v3132
      %v3372 = vmax.f32 %v2571, %v3135
      %v3373 = vmax.f32 %v2572, %v3138
      %v3374 = vmax.f32 %v2573, %v3141
      %v3375 = vmax.f32 %v2574, %v3144
      %v3376 = vmax.f32 %v2575, %v3147
      %v3377 = vmax.f32 %v2576, %v3150
      %v3378 = vmax.f32 %v2577, %v3153
      %v3379 = vmax.f32 %v2578, %v3156
      %v3380 = vmax.f32 %v2579, %v3159
      %v3381 = vmax.f32 %v2580, %v3162
      %v3382 = vmax.f32 %v2581, %v3165
      %v3383 = vmax.f32 %v2582, %v3168
      %v3384 = vmax.f32 %v2583, %v3171
      %v3385 = vmax.f32 %v2584, %v3174
      %v3386 = vmax.f32 %v2585, %v3177
      %v3387 = vmax.f32 %v2586, %v3180
      %v3388 = vmax.f32 %v2587, %v3183
      %v3389 = vmax.f32 %v2588, %v3186
      %v3390 = vmax.f32 %v2589, %v3189
      %v3391 = vmax.f32 %v2590, %v3192
      %v3392 = vmax.f32 %v2591, %v3195
      %v3393 = vmax.f32 %v2592, %v3198
      %v3394 = vmax.f32 %v2593, %v3201
      %v3395 = vmax.f32 %v2594, %v3204
      %v3396 = vmax.f32 %v2595, %v3207
      %v3397 = vmax.f32 %v2596, %v3210
      %v3398 = vmax.f32 %v2597, %v3213
      %v3399 = vmax.f32 %v2598, %v3216
      %v3400 = vmax.f32 %v2599, %v3219
      %v3401 = vmax.f32 %v2600, %v3222
      %v3402 = vmax.f32 %v2601, %v3225
      %v3403 = vmax.f32 %v2602, %v3228
      %v3404 = vmax.f32 %v2603, %v3231
      %v3405 = vmax.f32 %v2604, %v3234
      %v3406 = vmax.f32 %v2605, %v3237
      %v3407 = vmax.f32 %v2606, %v3240
      %v3408 = vmax.f32 %v2607, %v3243
      %v3409 = vmax.f32 %v2608, %v3246
      %v3410 = vmax.f32 %v2609, %v3249
      %v3411 = vmax.f32 %v2610, %v3252
      %v3412 = vmax.f32 %v2611, %v3255
      %v3413 = vmax.f32 %v2612, %v3258
      %v3414 = vmax.f32 %v2613, %v3261
      %v3415 = vmax.f32 %v2614, %v3264
      %v3416 = vmax.f32 %v2615, %v3267
      %v3417 = vmax.f32 %v2616, %v3270
      %v3418 = vmax.f32 %v2617, %v3273
      %v3419 = vmax.f32 %v2618, %v3276
      %v3420 = vmax.f32 %v2619, %v3279
      %v3421 = vmax.f32 %v2620, %v3282
      %v3422 = vmax.f32 %v2621, %v3285
      %v3423 = vmax.f32 %v2622, %v3288
      %v3424 = vmax.f32 %v2623, %v3291
      %v3425 = vmax.f32 %v2624, %v3294
      %v3426 = vmax.f32 %v2625, %v3297
      %v3427 = vmax.f32 %v2626, %v3300
      %v3428 = vmax.f32 %v2627, %v3303
      %v3429 = vmax.f32 %v2628, %v3306
      %v3430 = vmax.f32 %v2629, %v3309
      %v3431 = vmax.f32 %v2630, %v3312
      %v3432 = vmax.f32 %v2631, %v3315
      %v3433 = vmax.f32 %v2632, %v3318
      %v3434 = vmax.f32 %v2633, %v3321
      %v3435 = vmax.f32 %v2634, %v3324
      %v3436 = vmax.f32 %v2635, %v3327
      %v3437 = vmax.f32 %v2636, %v3330
      %v3438 = vmax.f32 %v2637, %v3333
      %v3439 = vmax.f32 %v2638, %v3336
      %v3440 = vmax.f32 %v2639, %v3339
      %v3441 = vmax.f32 %v2640, %v3342
      %v3442 = vld [vmem:[%s5] sm:$0x1]
      %v3444 = vperm.slane %v3442, 0
      %v3446 = vadd.f32 %v3344, %v3444
      %v3447 = vadd.f32 %v3345, %v3444
      %v3448 = vadd.f32 %v3346, %v3444
      %v3449 = vadd.f32 %v3347, %v3444
      %v3450 = vadd.f32 %v3348, %v3444
      %v3451 = vadd.f32 %v3349, %v3444
      %v3452 = vadd.f32 %v3350, %v3444
      %v3453 = vadd.f32 %v3351, %v3444
      %v3454 = vadd.f32 %v3352, %v3444
      %v3455 = vadd.f32 %v3353, %v3444
      %v3456 = vadd.f32 %v3354, %v3444
      %v3457 = vadd.f32 %v3355, %v3444
      %v3458 = vadd.f32 %v3356, %v3444
      %v3459 = vadd.f32 %v3357, %v3444
      %v3460 = vadd.f32 %v3358, %v3444
      %v3461 = vadd.f32 %v3359, %v3444
      %v3462 = vadd.f32 %v3360, %v3444
      %v3463 = vadd.f32 %v3361, %v3444
      %v3464 = vadd.f32 %v3362, %v3444
      %v3465 = vadd.f32 %v3363, %v3444
      %v3466 = vadd.f32 %v3364, %v3444
      %v3467 = vadd.f32 %v3365, %v3444
      %v3468 = vadd.f32 %v3366, %v3444
      %v3469 = vadd.f32 %v3367, %v3444
      %v3470 = vadd.f32 %v3368, %v3444
      %v3471 = vadd.f32 %v3369, %v3444
      %v3472 = vadd.f32 %v3370, %v3444
      %v3473 = vadd.f32 %v3371, %v3444
      %v3474 = vadd.f32 %v3372, %v3444
      %v3475 = vadd.f32 %v3373, %v3444
      %v3476 = vadd.f32 %v3374, %v3444
      %v3477 = vadd.f32 %v3375, %v3444
      %v3478 = vadd.f32 %v3376, %v3444
      %v3479 = vadd.f32 %v3377, %v3444
      %v3480 = vadd.f32 %v3378, %v3444
      %v3481 = vadd.f32 %v3379, %v3444
      %v3482 = vadd.f32 %v3380, %v3444
      %v3483 = vadd.f32 %v3381, %v3444
      %v3484 = vadd.f32 %v3382, %v3444
      %v3485 = vadd.f32 %v3383, %v3444
      %v3486 = vadd.f32 %v3384, %v3444
      %v3487 = vadd.f32 %v3385, %v3444
      %v3488 = vadd.f32 %v3386, %v3444
      %v3489 = vadd.f32 %v3387, %v3444
      %v3490 = vadd.f32 %v3388, %v3444
      %v3491 = vadd.f32 %v3389, %v3444
      %v3492 = vadd.f32 %v3390, %v3444
      %v3493 = vadd.f32 %v3391, %v3444
      %v3494 = vadd.f32 %v3392, %v3444
      %v3495 = vadd.f32 %v3393, %v3444
      %v3496 = vadd.f32 %v3394, %v3444
      %v3497 = vadd.f32 %v3395, %v3444
      %v3498 = vadd.f32 %v3396, %v3444
      %v3499 = vadd.f32 %v3397, %v3444
      %v3500 = vadd.f32 %v3398, %v3444
      %v3501 = vadd.f32 %v3399, %v3444
      %v3502 = vadd.f32 %v3400, %v3444
      %v3503 = vadd.f32 %v3401, %v3444
      %v3504 = vadd.f32 %v3402, %v3444
      %v3505 = vadd.f32 %v3403, %v3444
      %v3506 = vadd.f32 %v3404, %v3444
      %v3507 = vadd.f32 %v3405, %v3444
      %v3508 = vadd.f32 %v3406, %v3444
      %v3509 = vadd.f32 %v3407, %v3444
      %v3510 = vadd.f32 %v3408, %v3444
      %v3511 = vadd.f32 %v3409, %v3444
      %v3512 = vadd.f32 %v3410, %v3444
      %v3513 = vadd.f32 %v3411, %v3444
      %v3514 = vadd.f32 %v3412, %v3444
      %v3515 = vadd.f32 %v3413, %v3444
      %v3516 = vadd.f32 %v3414, %v3444
      %v3517 = vadd.f32 %v3415, %v3444
      %v3518 = vadd.f32 %v3416, %v3444
      %v3519 = vadd.f32 %v3417, %v3444
      %v3520 = vadd.f32 %v3418, %v3444
      %v3521 = vadd.f32 %v3419, %v3444
      %v3522 = vadd.f32 %v3420, %v3444
      %v3523 = vadd.f32 %v3421, %v3444
      %v3524 = vadd.f32 %v3422, %v3444
      %v3525 = vadd.f32 %v3423, %v3444
      %v3526 = vadd.f32 %v3424, %v3444
      %v3527 = vadd.f32 %v3425, %v3444
      %v3528 = vadd.f32 %v3426, %v3444
      %v3529 = vadd.f32 %v3427, %v3444
      %v3530 = vadd.f32 %v3428, %v3444
      %v3531 = vadd.f32 %v3429, %v3444
      %v3532 = vadd.f32 %v3430, %v3444
      %v3533 = vadd.f32 %v3431, %v3444
      %v3534 = vadd.f32 %v3432, %v3444
      %v3535 = vadd.f32 %v3433, %v3444
      %v3536 = vadd.f32 %v3434, %v3444
      %v3537 = vadd.f32 %v3435, %v3444
      %v3538 = vadd.f32 %v3436, %v3444
      %v3539 = vadd.f32 %v3437, %v3444
      %v3540 = vadd.f32 %v3438, %v3444
      %v3541 = vadd.f32 %v3439, %v3444
      %v3542 = vadd.f32 %v3440, %v3444
      %v3543 = vadd.f32 %v3441, %v3444
      %v3544 = vtanh.pop %v3446
      %v3545 = vtanh.pop %v3447
      %v3546 = vtanh.pop %v3448
      %v3547 = vtanh.pop %v3449
      %v3548 = vtanh.pop %v3450
      %v3549 = vtanh.pop %v3451
      %v3550 = vtanh.pop %v3452
      %v3551 = vtanh.pop %v3453
      %v3552 = vtanh.pop %v3454
      %v3553 = vtanh.pop %v3455
      %v3554 = vtanh.pop %v3456
      %v3555 = vtanh.pop %v3457
      %v3556 = vtanh.pop %v3458
      %v3557 = vtanh.pop %v3459
      %v3558 = vtanh.pop %v3460
      %v3559 = vtanh.pop %v3461
      %v3560 = vtanh.pop %v3462
      %v3561 = vtanh.pop %v3463
      %v3562 = vtanh.pop %v3464
      %v3563 = vtanh.pop %v3465
      %v3564 = vtanh.pop %v3466
      %v3565 = vtanh.pop %v3467
      %v3566 = vtanh.pop %v3468
      %v3567 = vtanh.pop %v3469
      %v3568 = vtanh.pop %v3470
      %v3569 = vtanh.pop %v3471
      %v3570 = vtanh.pop %v3472
      %v3571 = vtanh.pop %v3473
      %v3572 = vtanh.pop %v3474
      %v3573 = vtanh.pop %v3475
      %v3574 = vtanh.pop %v3476
      %v3575 = vtanh.pop %v3477
      %v3576 = vtanh.pop %v3478
      %v3577 = vtanh.pop %v3479
      %v3578 = vtanh.pop %v3480
      %v3579 = vtanh.pop %v3481
      %v3580 = vtanh.pop %v3482
      %v3581 = vtanh.pop %v3483
      %v3582 = vtanh.pop %v3484
      %v3583 = vtanh.pop %v3485
      %v3584 = vtanh.pop %v3486
      %v3585 = vtanh.pop %v3487
      %v3586 = vtanh.pop %v3488
      %v3587 = vtanh.pop %v3489
      %v3588 = vtanh.pop %v3490
      %v3589 = vtanh.pop %v3491
      %v3590 = vtanh.pop %v3492
      %v3591 = vtanh.pop %v3493
      %v3592 = vtanh.pop %v3494
      %v3593 = vtanh.pop %v3495
      %v3594 = vtanh.pop %v3496
      %v3595 = vtanh.pop %v3497
      %v3596 = vtanh.pop %v3498
      %v3597 = vtanh.pop %v3499
      %v3598 = vtanh.pop %v3500
      %v3599 = vtanh.pop %v3501
      %v3600 = vtanh.pop %v3502
      %v3601 = vtanh.pop %v3503
      %v3602 = vtanh.pop %v3504
      %v3603 = vtanh.pop %v3505
      %v3604 = vtanh.pop %v3506
      %v3605 = vtanh.pop %v3507
      %v3606 = vtanh.pop %v3508
      %v3607 = vtanh.pop %v3509
      %v3608 = vtanh.pop %v3510
      %v3609 = vtanh.pop %v3511
      %v3610 = vtanh.pop %v3512
      %v3611 = vtanh.pop %v3513
      %v3612 = vtanh.pop %v3514
      %v3613 = vtanh.pop %v3515
      %v3614 = vtanh.pop %v3516
      %v3615 = vtanh.pop %v3517
      %v3616 = vtanh.pop %v3518
      %v3617 = vtanh.pop %v3519
      %v3618 = vtanh.pop %v3520
      %v3619 = vtanh.pop %v3521
      %v3620 = vtanh.pop %v3522
      %v3621 = vtanh.pop %v3523
      %v3622 = vtanh.pop %v3524
      %v3623 = vtanh.pop %v3525
      %v3624 = vtanh.pop %v3526
      %v3625 = vtanh.pop %v3527
      %v3626 = vtanh.pop %v3528
      %v3627 = vtanh.pop %v3529
      %v3628 = vtanh.pop %v3530
      %v3629 = vtanh.pop %v3531
      %v3630 = vtanh.pop %v3532
      %v3631 = vtanh.pop %v3533
      %v3632 = vtanh.pop %v3534
      %v3633 = vtanh.pop %v3535
      %v3634 = vtanh.pop %v3536
      %v3635 = vtanh.pop %v3537
      %v3636 = vtanh.pop %v3538
      %v3637 = vtanh.pop %v3539
      %v3638 = vtanh.pop %v3540
      %v3639 = vtanh.pop %v3541
      %v3640 = vtanh.pop %v3542
      %v3641 = vtanh.pop %v3543
      %vm3642 = vcmask 130048
      %3643 = vst.msk [vmem:[%s319] sm:$0xff] %vm3642, %v3544
      %3644 = vst.msk [vmem:[%s319 + $0x8] sm:$0xff] %vm3642, %v3545
      %3645 = vst.msk [vmem:[%s319 + $0x10] sm:$0xff] %vm3642, %v3546
      %3646 = vst.msk [vmem:[%s319 + $0x18] sm:$0xff] %vm3642, %v3547
      %3647 = vst.msk [vmem:[%s319 + $0x20] sm:$0xff] %vm3642, %v3548
      %3648 = vst.msk [vmem:[%s319 + $0x28] sm:$0xff] %vm3642, %v3549
      %3649 = vst.msk [vmem:[%s319 + $0x30] sm:$0xff] %vm3642, %v3550
      %3650 = vst.msk [vmem:[%s319 + $0x38] sm:$0xff] %vm3642, %v3551
      %3651 = vst.msk [vmem:[%s319 + $0x40] sm:$0xff] %vm3642, %v3552
      %3652 = vst.msk [vmem:[%s319 + $0x48] sm:$0xff] %vm3642, %v3553
      %3653 = vst.msk [vmem:[%s319 + $0x50] sm:$0xff] %vm3642, %v3554
      %3654 = vst.msk [vmem:[%s319 + $0x58] sm:$0xff] %vm3642, %v3555
      %3655 = vst.msk [vmem:[%s319 + $0x60] sm:$0xff] %vm3642, %v3556
      %3656 = vst.msk [vmem:[%s319 + $0x68] sm:$0xff] %vm3642, %v3557
      %3657 = vst.msk [vmem:[%s319 + $0x70] sm:$0xff] %vm3642, %v3558
      %3658 = vst.msk [vmem:[%s319 + $0x78] sm:$0xff] %vm3642, %v3559
      %3659 = vst.msk [vmem:[%s319 + $0x80] sm:$0xff] %vm3642, %v3560
      %3660 = vst.msk [vmem:[%s319 + $0x88] sm:$0xff] %vm3642, %v3561
      %3661 = vst.msk [vmem:[%s319 + $0x90] sm:$0xff] %vm3642, %v3562
      %3662 = vst.msk [vmem:[%s319 + $0x98] sm:$0xff] %vm3642, %v3563
      %3663 = vst.msk [vmem:[%s319 + $0xa0] sm:$0xff] %vm3642, %v3564
      %3664 = vst.msk [vmem:[%s319 + $0xa8] sm:$0xff] %vm3642, %v3565
      %3665 = vst.msk [vmem:[%s319 + $0xb0] sm:$0xff] %vm3642, %v3566
      %3666 = vst.msk [vmem:[%s319 + $0xb8] sm:$0xff] %vm3642, %v3567
      %3667 = vst.msk [vmem:[%s319 + $0xc0] sm:$0xff] %vm3642, %v3568
      %3668 = vst.msk [vmem:[%s319 + $0xc8] sm:$0xff] %vm3642, %v3569
      %3669 = vst.msk [vmem:[%s319 + $0xd0] sm:$0xff] %vm3642, %v3570
      %3670 = vst.msk [vmem:[%s319 + $0xd8] sm:$0xff] %vm3642, %v3571
      %3671 = vst.msk [vmem:[%s319 + $0xe0] sm:$0xff] %vm3642, %v3572
      %3672 = vst.msk [vmem:[%s319 + $0xe8] sm:$0xff] %vm3642, %v3573
      %3673 = vst.msk [vmem:[%s319 + $0xf0] sm:$0xff] %vm3642, %v3574
      %3674 = vst.msk [vmem:[%s319 + $0xf8] sm:$0xff] %vm3642, %v3575
      %3675 = vst.msk [vmem:[%s319 + $0x100] sm:$0xff] %vm3642, %v3576
      %3676 = vst.msk [vmem:[%s319 + $0x108] sm:$0xff] %vm3642, %v3577
      %3677 = vst.msk [vmem:[%s319 + $0x110] sm:$0xff] %vm3642, %v3578
      %3678 = vst.msk [vmem:[%s319 + $0x118] sm:$0xff] %vm3642, %v3579
      %3679 = vst.msk [vmem:[%s319 + $0x120] sm:$0xff] %vm3642, %v3580
      %3680 = vst.msk [vmem:[%s319 + $0x128] sm:$0xff] %vm3642, %v3581
      %3681 = vst.msk [vmem:[%s319 + $0x130] sm:$0xff] %vm3642, %v3582
      %3682 = vst.msk [vmem:[%s319 + $0x138] sm:$0xff] %vm3642, %v3583
      %3683 = vst.msk [vmem:[%s319 + $0x140] sm:$0xff] %vm3642, %v3584
      %3684 = vst.msk [vmem:[%s319 + $0x148] sm:$0xff] %vm3642, %v3585
      %3685 = vst.msk [vmem:[%s319 + $0x150] sm:$0xff] %vm3642, %v3586
      %3686 = vst.msk [vmem:[%s319 + $0x158] sm:$0xff] %vm3642, %v3587
      %3687 = vst.msk [vmem:[%s319 + $0x160] sm:$0xff] %vm3642, %v3588
      %3688 = vst.msk [vmem:[%s319 + $0x168] sm:$0xff] %vm3642, %v3589
      %3689 = vst.msk [vmem:[%s319 + $0x170] sm:$0xff] %vm3642, %v3590
      %3690 = vst.msk [vmem:[%s319 + $0x178] sm:$0xff] %vm3642, %v3591
      %3691 = vst.msk [vmem:[%s319 + $0x180] sm:$0xff] %vm3642, %v3592
      %3692 = vst.msk [vmem:[%s319 + $0x188] sm:$0xff] %vm3642, %v3593
      %3693 = vst.msk [vmem:[%s319 + $0x190] sm:$0xff] %vm3642, %v3594
      %3694 = vst.msk [vmem:[%s319 + $0x198] sm:$0xff] %vm3642, %v3595
      %3695 = vst.msk [vmem:[%s319 + $0x1a0] sm:$0xff] %vm3642, %v3596
      %3696 = vst.msk [vmem:[%s319 + $0x1a8] sm:$0xff] %vm3642, %v3597
      %3697 = vst.msk [vmem:[%s319 + $0x1b0] sm:$0xff] %vm3642, %v3598
      %3698 = vst.msk [vmem:[%s319 + $0x1b8] sm:$0xff] %vm3642, %v3599
      %3699 = vst.msk [vmem:[%s319 + $0x1c0] sm:$0xff] %vm3642, %v3600
      %3700 = vst.msk [vmem:[%s319 + $0x1c8] sm:$0xff] %vm3642, %v3601
      %3701 = vst.msk [vmem:[%s319 + $0x1d0] sm:$0xff] %vm3642, %v3602
      %3702 = vst.msk [vmem:[%s319 + $0x1d8] sm:$0xff] %vm3642, %v3603
      %3703 = vst.msk [vmem:[%s319 + $0x1e0] sm:$0xff] %vm3642, %v3604
      %3704 = vst.msk [vmem:[%s319 + $0x1e8] sm:$0xff] %vm3642, %v3605
      %3705 = vst.msk [vmem:[%s319 + $0x1f0] sm:$0xff] %vm3642, %v3606
      %3706 = vst.msk [vmem:[%s319 + $0x1f8] sm:$0xff] %vm3642, %v3607
      %3707 = vst.msk [vmem:[%s319 + $0x200] sm:$0xff] %vm3642, %v3608
      %3708 = vst.msk [vmem:[%s319 + $0x208] sm:$0xff] %vm3642, %v3609
      %3709 = vst.msk [vmem:[%s319 + $0x210] sm:$0xff] %vm3642, %v3610
      %3710 = vst.msk [vmem:[%s319 + $0x218] sm:$0xff] %vm3642, %v3611
      %3711 = vst.msk [vmem:[%s319 + $0x220] sm:$0xff] %vm3642, %v3612
      %3712 = vst.msk [vmem:[%s319 + $0x228] sm:$0xff] %vm3642, %v3613
      %3713 = vst.msk [vmem:[%s319 + $0x230] sm:$0xff] %vm3642, %v3614
      %3714 = vst.msk [vmem:[%s319 + $0x238] sm:$0xff] %vm3642, %v3615
      %3715 = vst.msk [vmem:[%s319 + $0x240] sm:$0xff] %vm3642, %v3616
      %3716 = vst.msk [vmem:[%s319 + $0x248] sm:$0xff] %vm3642, %v3617
      %3717 = vst.msk [vmem:[%s319 + $0x250] sm:$0xff] %vm3642, %v3618
      %3718 = vst.msk [vmem:[%s319 + $0x258] sm:$0xff] %vm3642, %v3619
      %3719 = vst.msk [vmem:[%s319 + $0x260] sm:$0xff] %vm3642, %v3620
      %3720 = vst.msk [vmem:[%s319 + $0x268] sm:$0xff] %vm3642, %v3621
      %3721 = vst.msk [vmem:[%s319 + $0x270] sm:$0xff] %vm3642, %v3622
      %3722 = vst.msk [vmem:[%s319 + $0x278] sm:$0xff] %vm3642, %v3623
      %3723 = vst.msk [vmem:[%s319 + $0x280] sm:$0xff] %vm3642, %v3624
      %3724 = vst.msk [vmem:[%s319 + $0x288] sm:$0xff] %vm3642, %v3625
      %3725 = vst.msk [vmem:[%s319 + $0x290] sm:$0xff] %vm3642, %v3626
      %3726 = vst.msk [vmem:[%s319 + $0x298] sm:$0xff] %vm3642, %v3627
      %3727 = vst.msk [vmem:[%s319 + $0x2a0] sm:$0xff] %vm3642, %v3628
      %3728 = vst.msk [vmem:[%s319 + $0x2a8] sm:$0xff] %vm3642, %v3629
      %3729 = vst.msk [vmem:[%s319 + $0x2b0] sm:$0xff] %vm3642, %v3630
      %3730 = vst.msk [vmem:[%s319 + $0x2b8] sm:$0xff] %vm3642, %v3631
      %3731 = vst.msk [vmem:[%s319 + $0x2c0] sm:$0xff] %vm3642, %v3632
      %3732 = vst.msk [vmem:[%s319 + $0x2c8] sm:$0xff] %vm3642, %v3633
      %3733 = vst.msk [vmem:[%s319 + $0x2d0] sm:$0xff] %vm3642, %v3634
      %3734 = vst.msk [vmem:[%s319 + $0x2d8] sm:$0xff] %vm3642, %v3635
      %3735 = vst.msk [vmem:[%s319 + $0x2e0] sm:$0xff] %vm3642, %v3636
      %3736 = vst.msk [vmem:[%s319 + $0x2e8] sm:$0xff] %vm3642, %v3637
      %3737 = vst.msk [vmem:[%s319 + $0x2f0] sm:$0xff] %vm3642, %v3638
      %3738 = vst.msk [vmem:[%s319 + $0x2f8] sm:$0xff] %vm3642, %v3639
      %3739 = vst.msk [vmem:[%s319 + $0x300] sm:$0xff] %vm3642, %v3640
      %3740 = vst.msk [vmem:[%s319 + $0x308] sm:$0xff] %vm3642, %v3641
      %s3741 = smul.u32 98, %s17
      %p3742 = scmp.lt.s32.totalorder %s3741, 391
      %s3743 = scalar_select %p3742, %s3741, 391
      %s3744 = smul.addr %s3743, 8
      %s3745 = scalar_lea.vmem %s6, %s3744
      // Predicated region
      $region45: #{siamese_forward.3} parent=43 // pred_check
        %p3746 = pneg %p181
      $region46: #{siamese_forward.3} parent=43 // pred_check_branch
        %3748 = sbr.rel (%p3746) target = $region48
      $region47: #{siamese_forward.3} parent=43 // pred_region
        %s3749 = smul.u32 98, %s17
      $region48: #{siamese_forward.3} parent=43 // pred_fallthru
        _
    $region44: #{siamese_forward.3} parent=5 // pred_fallthru
      _
    %p3750 = scmp.le.s32.totalorder 2, %s12
    // Predicated region
    $region49: #{siamese_forward.3} parent=5 // pred_check
      %p3751 = pneg %p3750
    $region50: #{siamese_forward.3} parent=5 // pred_check_branch
      %3753 = sbr.rel (%p3751) target = $region52
    $region51: #{siamese_forward.3} parent=5 // pred_region
      %s3754 = ssub.s32 %s12, 2
      // Predicated region
      $region53: #{siamese_forward.3} parent=51 // pred_check
        %p3755 = pneg %p187
      $region54: #{siamese_forward.3} parent=51 // pred_check_branch
        %3757 = sbr.rel (%p3755) target = $region56
      $region55: #{siamese_forward.3} parent=51 // pred_region
        %s3758 = smul.u32 98, %s18
        %p3759 = scmp.lt.s32.totalorder %s3758, 391
        %s3760 = scalar_select %p3759, %s3758, 391
        %s3761 = smul.addr %s3760, 8
        %s3762 = scalar_lea.vmem %s6, %s3761
      $region56: #{siamese_forward.3} parent=51 // pred_fallthru
        _
    $region52: #{siamese_forward.3} parent=5 // pred_fallthru
      _
  $region6: #{siamese_forward.3} parent=0 // loop_footer
    %s16 = sadd.s32 1, %s12
  $region7: #{siamese_forward.3} parent=0 // loop_footer_branch
    %11 = sbr.rel target = $region3
  $region8: #{siamese_forward.3} parent=0 // loop_exit
    _

// kernel: siamese_forward.4
$region0: #{siamese_forward.4}
  #allocation0 [shape = 'u32[]', space=smem, size = 0x4, offset = 0x4, fixed_abs, tag = 'smem constant byte address 0x4 - core index']
  #allocation1 [shape = 'u32[72,128]{1,0:T(1,128)}', space=vmem, size = 0x9000, scoped, tag = 'internal scratch']
  %s0 = inlined_call_operand.vmem [shape: f32[400,400], index: 0, kind: input, shape index: {}]
  %s1 = inlined_call_operand.vmem [shape: f32[400,400], index: 1, kind: input, shape index: {}]
  %s2 = inlined_call_operand.vmem [shape: f32[400,400], index: 2, kind: input, shape index: {}]
  %s3 = inlined_call_operand.vmem [shape: f32[400,400], index: 3, kind: input, shape index: {}]
  %s4 = inlined_call_operand.vmem [shape: f32[400,32], index: 4, kind: input, shape index: {}]
  %s5 = inlined_call_operand.vmem [shape: f32[1,32], index: 5, kind: input, shape index: {}]
  %s6 = inlined_call_operand.vmem [shape: f32[400,32], index: 6, kind: output, shape index: {}]
  %s7 = sld [smem:[#allocation0]]
  $region57: #{siamese_forward.4} parent=0
    _
  %s9 = ssub.s32 1, %s7
  %s10 = scalar_select 0, %s9, %s7
  loop: start=0, step=1, limit=4
  $region2: #{siamese_forward.4} parent=0 // loop_pre_header
    _
  $region3: #{siamese_forward.4} parent=0 // loop_header
    %s12 = sphi 0, %s16
    %p13 = scmp.ge.s32.totalorder %s12, 4
    %s22 = sphi 0, %s24
    %s25 = sphi 0, %s22
    %s26 = sphi 0, %s25
    %s42 = sphi 0, %s26
    %s48 = sphi 0, %s50
    %s51 = sphi 0, %s48
    %s52 = sphi 0, %s51
    %s68 = sphi 0, %s52
    %s74 = sphi 0, %s76
    %s77 = sphi 0, %s74
    %s78 = sphi 0, %s77
    %s94 = sphi 0, %s78
    %s100 = sphi 0, %s102
    %s103 = sphi 0, %s100
    %s104 = sphi 0, %s103
    %s120 = sphi 0, %s104
    %s124 = sphi 0, %s124
    %s126 = sphi 0, %s124
    %s127 = sphi 0, %s126
    %s141 = sphi 0, %s127
    %s145 = sphi 0, %s145
    %s147 = sphi 0, %s145
    %s148 = sphi 0, %s147
    %s162 = sphi 0, %s148
    %s168 = sphi 0, %s170
    %s171 = sphi 0, %s168
    %s172 = sphi 0, %s171
    %s188 = sphi 0, %s172
  $region4: #{siamese_forward.4} parent=0 // loop_header_branch
    %15 = sbr.rel (%p13) target = $region8
  $region5: #{siamese_forward.4} parent=0 // loop_body
    %s17 = ssub.s32 %s12, 1
    %s18 = ssub.s32 %s12, 2
    %s19 = sadd.s32 %s12, 1
    %s20 = ssub.s32 %s12, %s19
    %p21 = scmp.eq.s32.totalorder %s20, 0
    %s23 = sadd.s32 %s22, 1
    %s24 = scalar_select %p21, %s22, %s23
    %p27 = pneg %p21
    %p28 = scmp.eq.s32.totalorder %s12, 1
    %p29 = por %p27, %p28
    %p30 = scmp.ne.s32.totalorder %s22, %s25
    %p31 = scmp.eq.s32.totalorder %s12, 0
    %p32 = por %p30, %p31
    %p33 = scmp.ne.s32.totalorder %s22, %s25
    %p34 = scmp.eq.s32.totalorder %s17, 1
    %p35 = por %p33, %p34
    %p36 = scmp.ne.s32.totalorder %s25, %s26
    %p37 = scmp.eq.s32.totalorder %s17, 0
    %p38 = por %p36, %p37
    %p39 = scmp.ne.s32.totalorder %s25, %s26
    %p40 = scmp.eq.s32.totalorder %s18, 1
    %p41 = por %p39, %p40
    %p43 = scmp.ne.s32.totalorder %s26, %s42
    %p44 = scmp.eq.s32.totalorder %s18, 0
    %p45 = por %p43, %p44
    %s46 = ssub.s32 %s12, %s19
    %p47 = scmp.eq.s32.totalorder %s46, 0
    %s49 = sadd.s32 %s48, 1
    %s50 = scalar_select %p47, %s48, %s49
    %p53 = pneg %p47
    %p54 = scmp.eq.s32.totalorder %s12, 1
    %p55 = por %p53, %p54
    %p56 = scmp.ne.s32.totalorder %s48, %s51
    %p57 = scmp.eq.s32.totalorder %s12, 0
    %p58 = por %p56, %p57
    %p59 = scmp.ne.s32.totalorder %s48, %s51
    %p60 = scmp.eq.s32.totalorder %s17, 1
    %p61 = por %p59, %p60
    %p62 = scmp.ne.s32.totalorder %s51, %s52
    %p63 = scmp.eq.s32.totalorder %s17, 0
    %p64 = por %p62, %p63
    %p65 = scmp.ne.s32.totalorder %s51, %s52
    %p66 = scmp.eq.s32.totalorder %s18, 1
    %p67 = por %p65, %p66
    %p69 = scmp.ne.s32.totalorder %s52, %s68
    %p70 = scmp.eq.s32.totalorder %s18, 0
    %p71 = por %p69, %p70
    %s72 = ssub.s32 %s12, %s19
    %p73 = scmp.eq.s32.totalorder %s72, 0
    %s75 = sadd.s32 %s74, 1
    %s76 = scalar_select %p73, %s74, %s75
    %p79 = pneg %p73
    %p80 = scmp.eq.s32.totalorder %s12, 1
    %p81 = por %p79, %p80
    %p82 = scmp.ne.s32.totalorder %s74, %s77
    %p83 = scmp.eq.s32.totalorder %s12, 0
    %p84 = por %p82, %p83
    %p85 = scmp.ne.s32.totalorder %s74, %s77
    %p86 = scmp.eq.s32.totalorder %s17, 1
    %p87 = por %p85, %p86
    %p88 = scmp.ne.s32.totalorder %s77, %s78
    %p89 = scmp.eq.s32.totalorder %s17, 0
    %p90 = por %p88, %p89
    %p91 = scmp.ne.s32.totalorder %s77, %s78
    %p92 = scmp.eq.s32.totalorder %s18, 1
    %p93 = por %p91, %p92
    %p95 = scmp.ne.s32.totalorder %s78, %s94
    %p96 = scmp.eq.s32.totalorder %s18, 0
    %p97 = por %p95, %p96
    %s98 = ssub.s32 %s12, %s19
    %p99 = scmp.eq.s32.totalorder %s98, 0
    %s101 = sadd.s32 %s100, 1
    %s102 = scalar_select %p99, %s100, %s101
    %p105 = pneg %p99
    %p106 = scmp.eq.s32.totalorder %s12, 1
    %p107 = por %p105, %p106
    %p108 = scmp.ne.s32.totalorder %s100, %s103
    %p109 = scmp.eq.s32.totalorder %s12, 0
    %p110 = por %p108, %p109
    %p111 = scmp.ne.s32.totalorder %s100, %s103
    %p112 = scmp.eq.s32.totalorder %s17, 1
    %p113 = por %p111, %p112
    %p114 = scmp.ne.s32.totalorder %s103, %s104
    %p115 = scmp.eq.s32.totalorder %s17, 0
    %p116 = por %p114, %p115
    %p117 = scmp.ne.s32.totalorder %s103, %s104
    %p118 = scmp.eq.s32.totalorder %s18, 1
    %p119 = por %p117, %p118
    %p121 = scmp.ne.s32.totalorder %s104, %s120
    %p122 = scmp.eq.s32.totalorder %s18, 0
    %p123 = por %p121, %p122
    %s125 = sadd.s32 %s124, 1
    %p128 = scmp.eq.s32.totalorder %s12, 1
    %p129 = scmp.ne.s32.totalorder %s124, %s126
    %p130 = scmp.eq.s32.totalorder %s12, 0
    %p131 = por %p129, %p130
    %p132 = scmp.ne.s32.totalorder %s124, %s126
    %p133 = scmp.eq.s32.totalorder %s17, 1
    %p134 = por %p132, %p133
    %p135 = scmp.ne.s32.totalorder %s126, %s127
    %p136 = scmp.eq.s32.totalorder %s17, 0
    %p137 = por %p135, %p136
    %p138 = scmp.ne.s32.totalorder %s126, %s127
    %p139 = scmp.eq.s32.totalorder %s18, 1
    %p140 = por %p138, %p139
    %p142 = scmp.ne.s32.totalorder %s127, %s141
    %p143 = scmp.eq.s32.totalorder %s18, 0
    %p144 = por %p142, %p143
    %s146 = sadd.s32 %s145, 1
    %p149 = scmp.eq.s32.totalorder %s12, 1
    %p150 = scmp.ne.s32.totalorder %s145, %s147
    %p151 = scmp.eq.s32.totalorder %s12, 0
    %p152 = por %p150, %p151
    %p153 = scmp.ne.s32.totalorder %s145, %s147
    %p154 = scmp.eq.s32.totalorder %s17, 1
    %p155 = por %p153, %p154
    %p156 = scmp.ne.s32.totalorder %s147, %s148
    %p157 = scmp.eq.s32.totalorder %s17, 0
    %p158 = por %p156, %p157
    %p159 = scmp.ne.s32.totalorder %s147, %s148
    %p160 = scmp.eq.s32.totalorder %s18, 1
    %p161 = por %p159, %p160
    %p163 = scmp.ne.s32.totalorder %s148, %s162
    %p164 = scmp.eq.s32.totalorder %s18, 0
    %p165 = por %p163, %p164
    %s166 = ssub.s32 %s12, %s19
    %p167 = scmp.eq.s32.totalorder %s166, 0
    %s169 = sadd.s32 %s168, 1
    %s170 = scalar_select %p167, %s168, %s169
    %p173 = pneg %p167
    %p174 = scmp.eq.s32.totalorder %s12, 1
    %p175 = por %p173, %p174
    %p176 = scmp.ne.s32.totalorder %s168, %s171
    %p177 = scmp.eq.s32.totalorder %s12, 0
    %p178 = por %p176, %p177
    %p179 = scmp.ne.s32.totalorder %s168, %s171
    %p180 = scmp.eq.s32.totalorder %s17, 1
    %p181 = por %p179, %p180
    %p182 = scmp.ne.s32.totalorder %s171, %s172
    %p183 = scmp.eq.s32.totalorder %s17, 0
    %p184 = por %p182, %p183
    %p185 = scmp.ne.s32.totalorder %s171, %s172
    %p186 = scmp.eq.s32.totalorder %s18, 1
    %p187 = por %p185, %p186
    %p189 = scmp.ne.s32.totalorder %s172, %s188
    %p190 = scmp.eq.s32.totalorder %s18, 0
    %p191 = por %p189, %p190
    %p192 = scmp.le.s32.totalorder 1, %s12
    %p193 = scmp.lt.s32.totalorder %s12, 3
    %p194 = pnand %p192, %p193
    %p195 = pneg %p194
    // Predicated region
    $region9: #{siamese_forward.4} parent=5 // pred_check
      _
    $region10: #{siamese_forward.4} parent=5 // pred_check_branch
      %197 = sbr.rel (%p194) target = $region12
    $region11: #{siamese_forward.4} parent=5 // pred_region
      %s198 = ssub.s32 %s12, 1
      // Predicated region
      $region13: #{siamese_forward.4} parent=11 // pred_check
        %p199 = pneg %p137
      $region14: #{siamese_forward.4} parent=11 // pred_check_branch
        %201 = sbr.rel (%p199) target = $region16
      $region15: #{siamese_forward.4} parent=11 // pred_region
        _
      $region16: #{siamese_forward.4} parent=11 // pred_fallthru
        _
      // Predicated region
      $region17: #{siamese_forward.4} parent=11 // pred_check
        %p202 = pneg %p158
      $region18: #{siamese_forward.4} parent=11 // pred_check_branch
        %204 = sbr.rel (%p202) target = $region20
      $region19: #{siamese_forward.4} parent=11 // pred_region
        _
      $region20: #{siamese_forward.4} parent=11 // pred_fallthru
        _
    $region12: #{siamese_forward.4} parent=5 // pred_fallthru
      _
    %p205 = scmp.lt.s32.totalorder %s12, 2
    // Predicated region
    $region21: #{siamese_forward.4} parent=5 // pred_check
      %p206 = pneg %p205
    $region22: #{siamese_forward.4} parent=5 // pred_check_branch
      %208 = sbr.rel (%p206) target = $region24
    $region23: #{siamese_forward.4} parent=5 // pred_region
      // Predicated region
      $region25: #{siamese_forward.4} parent=23 // pred_check
        %p209 = pneg %p32
      $region26: #{siamese_forward.4} parent=23 // pred_check_branch
        %211 = sbr.rel (%p209) target = $region28
      $region27: #{siamese_forward.4} parent=23 // pred_region
        %s212 = smul.u32 25, %s12
        %p213 = scmp.lt.s32.totalorder %s212, 49
        %s214 = scalar_select %p213, %s212, 49
        %s215 = smul.addr %s214, 4
        %s216 = smul.addr %s215, 8
        %s217 = scalar_lea.vmem %s0, %s216
        %s218 = smul.u32 25, %s12
      $region28: #{siamese_forward.4} parent=23 // pred_fallthru
        _
      // Predicated region
      $region29: #{siamese_forward.4} parent=23 // pred_check
        %p219 = pneg %p58
      $region30: #{siamese_forward.4} parent=23 // pred_check_branch
        %221 = sbr.rel (%p219) target = $region32
      $region31: #{siamese_forward.4} parent=23 // pred_region
        %s222 = smul.u32 25, %s12
        %p223 = scmp.lt.s32.totalorder %s222, 49
        %s224 = scalar_select %p223, %s222, 49
        %s225 = smul.addr %s224, 4
        %s226 = smul.addr %s225, 8
        %s227 = scalar_lea.vmem %s1, %s226
        %s228 = smul.u32 25, %s12
      $region32: #{siamese_forward.4} parent=23 // pred_fallthru
        _
      // Predicated region
      $region33: #{siamese_forward.4} parent=23 // pred_check
        %p229 = pneg %p84
      $region34: #{siamese_forward.4} parent=23 // pred_check_branch
        %231 = sbr.rel (%p229) target = $region36
      $region35: #{siamese_forward.4} parent=23 // pred_region
        %s232 = smul.u32 25, %s12
        %p233 = scmp.lt.s32.totalorder %s232, 49
        %s234 = scalar_select %p233, %s232, 49
        %s235 = smul.addr %s234, 4
        %s236 = smul.addr %s235, 8
        %s237 = scalar_lea.vmem %s2, %s236
        %s238 = smul.u32 25, %s12
      $region36: #{siamese_forward.4} parent=23 // pred_fallthru
        _
      // Predicated region
      $region37: #{siamese_forward.4} parent=23 // pred_check
        %p239 = pneg %p110
      $region38: #{siamese_forward.4} parent=23 // pred_check_branch
        %241 = sbr.rel (%p239) target = $region40
      $region39: #{siamese_forward.4} parent=23 // pred_region
        %s242 = smul.u32 25, %s12
        %p243 = scmp.lt.s32.totalorder %s242, 49
        %s244 = scalar_select %p243, %s242, 49
        %s245 = smul.addr %s244, 4
        %s246 = smul.addr %s245, 8
        %s247 = scalar_lea.vmem %s3, %s246
        %s248 = smul.u32 25, %s12
      $region40: #{siamese_forward.4} parent=23 // pred_fallthru
        _
    $region24: #{siamese_forward.4} parent=5 // pred_fallthru
      _
    %p249 = scmp.le.s32.totalorder 1, %s12
    %p250 = scmp.lt.s32.totalorder %s12, 3
    %p251 = pnand %p249, %p250
    %p252 = pneg %p251
    // Predicated region
    $region41: #{siamese_forward.4} parent=5 // pred_check
      _
    $region42: #{siamese_forward.4} parent=5 // pred_check_branch
      %254 = sbr.rel (%p251) target = $region44
    $region43: #{siamese_forward.4} parent=5 // pred_region
      %s255 = ssub.s32 %s12, 1
      %s256 = smul.u32 25, %s17
      %p257 = scmp.lt.s32.totalorder %s256, 49
      %s258 = scalar_select %p257, %s256, 49
      %s259 = smul.addr %s258, 4
      %s260 = smul.addr %s259, 8
      %s261 = scalar_lea.vmem %s0, %s260
      %p262 = pneg %p38
      %p263 = pneg %p35
      %s264 = smul.u32 25, %s17
      %p265 = scmp.lt.s32.totalorder %s264, 49
      %s266 = scalar_select %p265, %s264, 49
      %s267 = smul.addr %s266, 4
      %s268 = smul.addr %s267, 8
      %s269 = scalar_lea.vmem %s1, %s268
      %p270 = pneg %p64
      %p271 = pneg %p61
      %s272 = smul.u32 25, %s17
      %p273 = scmp.lt.s32.totalorder %s272, 49
      %s274 = scalar_select %p273, %s272, 49
      %s275 = smul.addr %s274, 4
      %s276 = smul.addr %s275, 8
      %s277 = scalar_lea.vmem %s2, %s276
      %p278 = pneg %p90
      %p279 = pneg %p87
      %s280 = smul.u32 25, %s17
      %p281 = scmp.lt.s32.totalorder %s280, 49
      %s282 = scalar_select %p281, %s280, 49
      %s283 = smul.addr %s282, 4
      %s284 = smul.addr %s283, 8
      %s285 = scalar_lea.vmem %s3, %s284
      %p286 = pneg %p116
      %p287 = pneg %p113
      %p288 = pneg %p137
      %p289 = pneg %p134
      %p290 = pneg %p158
      %p291 = pneg %p155
      %p292 = pneg %p184
      %p293 = pneg %p181
      %s294 = smul.u32 25, %s17
      %p295 = scmp.lt.s32.totalorder %s294, 49
      %s296 = scalar_select %p295, %s294, 49
      %s297 = smul.addr %s296, 8
      %s298 = scalar_lea.vmem %s6, %s297
      %s299 = smul.u32 25, %s17
      %p300 = scmp.lt.s32.totalorder %s299, 49
      %s301 = scalar_select %p300, %s299, 49
      %s302 = smul.addr %s301, 4
      %s303 = smul.addr %s302, 8
      %s304 = scalar_lea.vmem %s0, %s303
      %s305 = smul.u32 25, %s17
      %s306 = smul.u32 25, %s17
      %p307 = scmp.lt.s32.totalorder %s306, 49
      %s308 = scalar_select %p307, %s306, 49
      %s309 = smul.addr %s308, 4
      %s310 = smul.addr %s309, 8
      %s311 = scalar_lea.vmem %s1, %s310
      %s312 = smul.u32 25, %s17
      %s313 = smul.u32 25, %s17
      %p314 = scmp.lt.s32.totalorder %s313, 49
      %s315 = scalar_select %p314, %s313, 49
      %s316 = smul.addr %s315, 4
      %s317 = smul.addr %s316, 8
      %s318 = scalar_lea.vmem %s2, %s317
      %s319 = smul.u32 25, %s17
      %s320 = smul.u32 25, %s17
      %p321 = scmp.lt.s32.totalorder %s320, 49
      %s322 = scalar_select %p321, %s320, 49
      %s323 = smul.addr %s322, 4
      %s324 = smul.addr %s323, 8
      %s325 = scalar_lea.vmem %s3, %s324
      %s326 = smul.u32 25, %s17
      %s327 = smul.u32 25, %s17
      %p328 = scmp.lt.s32.totalorder %s327, 49
      %s329 = scalar_select %p328, %s327, 49
      %s330 = smul.addr %s329, 8
      %s331 = scalar_lea.vmem %s6, %s330
      %s332 = smul.u32 25, %s17
      %v333 = vld [vmem:[%s304] sm:$0xff]
      %v334 = vld [vmem:[%s304 + $0x8] sm:$0xff]
      %v335 = vld [vmem:[%s304 + $0x10] sm:$0xff]
      %v336 = vld [vmem:[%s304 + $0x18] sm:$0xff]
      %v337 = vld [vmem:[%s304 + $0x20] sm:$0xff]
      %v338 = vld [vmem:[%s304 + $0x28] sm:$0xff]
      %v339 = vld [vmem:[%s304 + $0x30] sm:$0xff]
      %v340 = vld [vmem:[%s304 + $0x38] sm:$0xff]
      %v341 = vld [vmem:[%s304 + $0x40] sm:$0xff]
      %v342 = vld [vmem:[%s304 + $0x48] sm:$0xff]
      %v343 = vld [vmem:[%s304 + $0x50] sm:$0xff]
      %v344 = vld [vmem:[%s304 + $0x58] sm:$0xff]
      %v345 = vld [vmem:[%s304 + $0x60] sm:$0xff]
      %v346 = vld [vmem:[%s304 + $0x68] sm:$0xff]
      %v347 = vld [vmem:[%s304 + $0x70] sm:$0xff]
      %v348 = vld [vmem:[%s304 + $0x78] sm:$0xff]
      %v349 = vld [vmem:[%s304 + $0x80] sm:$0xff]
      %v350 = vld [vmem:[%s304 + $0x88] sm:$0xff]
      %v351 = vld [vmem:[%s304 + $0x90] sm:$0xff]
      %v352 = vld [vmem:[%s304 + $0x98] sm:$0xff]
      %v353 = vld [vmem:[%s304 + $0xa0] sm:$0xff]
      %v354 = vld [vmem:[%s304 + $0xa8] sm:$0xff]
      %v355 = vld [vmem:[%s304 + $0xb0] sm:$0xff]
      %v356 = vld [vmem:[%s304 + $0xb8] sm:$0xff]
      %v357 = vld [vmem:[%s304 + $0xc0] sm:$0xff]
      %v358 = vld [vmem:[%s304 + $0xc8] sm:$0xff]
      %v359 = vld [vmem:[%s304 + $0xd0] sm:$0xff]
      %v360 = vld [vmem:[%s304 + $0xd8] sm:$0xff]
      %v361 = vld [vmem:[%s304 + $0xe0] sm:$0xff]
      %v362 = vld [vmem:[%s304 + $0xe8] sm:$0xff]
      %v363 = vld [vmem:[%s304 + $0xf0] sm:$0xff]
      %v364 = vld [vmem:[%s304 + $0xf8] sm:$0xff]
      %v365 = vld [vmem:[%s304 + $0x100] sm:$0xff]
      %v366 = vld [vmem:[%s304 + $0x108] sm:$0xff]
      %v367 = vld [vmem:[%s304 + $0x110] sm:$0xff]
      %v368 = vld [vmem:[%s304 + $0x118] sm:$0xff]
      %v369 = vld [vmem:[%s304 + $0x120] sm:$0xff]
      %v370 = vld [vmem:[%s304 + $0x128] sm:$0xff]
      %v371 = vld [vmem:[%s304 + $0x130] sm:$0xff]
      %v372 = vld [vmem:[%s304 + $0x138] sm:$0xff]
      %v373 = vld [vmem:[%s304 + $0x140] sm:$0xff]
      %v374 = vld [vmem:[%s304 + $0x148] sm:$0xff]
      %v375 = vld [vmem:[%s304 + $0x150] sm:$0xff]
      %v376 = vld [vmem:[%s304 + $0x158] sm:$0xff]
      %v377 = vld [vmem:[%s304 + $0x160] sm:$0xff]
      %v378 = vld [vmem:[%s304 + $0x168] sm:$0xff]
      %v379 = vld [vmem:[%s304 + $0x170] sm:$0xff]
      %v380 = vld [vmem:[%s304 + $0x178] sm:$0xff]
      %v381 = vld [vmem:[%s304 + $0x180] sm:$0xff]
      %v382 = vld [vmem:[%s304 + $0x188] sm:$0xff]
      %v383 = vld [vmem:[%s304 + $0x190] sm:$0xff]
      %v384 = vld [vmem:[%s304 + $0x198] sm:$0xff]
      %v385 = vld [vmem:[%s304 + $0x1a0] sm:$0xff]
      %v386 = vld [vmem:[%s304 + $0x1a8] sm:$0xff]
      %v387 = vld [vmem:[%s304 + $0x1b0] sm:$0xff]
      %v388 = vld [vmem:[%s304 + $0x1b8] sm:$0xff]
      %v389 = vld [vmem:[%s304 + $0x1c0] sm:$0xff]
      %v390 = vld [vmem:[%s304 + $0x1c8] sm:$0xff]
      %v391 = vld [vmem:[%s304 + $0x1d0] sm:$0xff]
      %v392 = vld [vmem:[%s304 + $0x1d8] sm:$0xff]
      %v393 = vld [vmem:[%s304 + $0x1e0] sm:$0xff]
      %v394 = vld [vmem:[%s304 + $0x1e8] sm:$0xff]
      %v395 = vld [vmem:[%s304 + $0x1f0] sm:$0xff]
      %v396 = vld [vmem:[%s304 + $0x1f8] sm:$0xff]
      %v397 = vld [vmem:[%s304 + $0x200] sm:$0xff]
      %v398 = vld [vmem:[%s304 + $0x208] sm:$0xff]
      %v399 = vld [vmem:[%s304 + $0x210] sm:$0xff]
      %v400 = vld [vmem:[%s304 + $0x218] sm:$0xff]
      %v401 = vld [vmem:[%s304 + $0x220] sm:$0xff]
      %v402 = vld [vmem:[%s304 + $0x228] sm:$0xff]
      %v403 = vld [vmem:[%s304 + $0x230] sm:$0xff]
      %v404 = vld [vmem:[%s304 + $0x238] sm:$0xff]
      %v405 = vld [vmem:[%s304 + $0x240] sm:$0xff]
      %v406 = vld [vmem:[%s304 + $0x248] sm:$0xff]
      %v407 = vld [vmem:[%s304 + $0x250] sm:$0xff]
      %v408 = vld [vmem:[%s304 + $0x258] sm:$0xff]
      %v409 = vld [vmem:[%s304 + $0x260] sm:$0xff]
      %v410 = vld [vmem:[%s304 + $0x268] sm:$0xff]
      %v411 = vld [vmem:[%s304 + $0x270] sm:$0xff]
      %v412 = vld [vmem:[%s304 + $0x278] sm:$0xff]
      %v413 = vld [vmem:[%s304 + $0x280] sm:$0xff]
      %v414 = vld [vmem:[%s304 + $0x288] sm:$0xff]
      %v415 = vld [vmem:[%s304 + $0x290] sm:$0xff]
      %v416 = vld [vmem:[%s304 + $0x298] sm:$0xff]
      %v417 = vld [vmem:[%s304 + $0x2a0] sm:$0xff]
      %v418 = vld [vmem:[%s304 + $0x2a8] sm:$0xff]
      %v419 = vld [vmem:[%s304 + $0x2b0] sm:$0xff]
      %v420 = vld [vmem:[%s304 + $0x2b8] sm:$0xff]
      %v421 = vld [vmem:[%s304 + $0x2c0] sm:$0xff]
      %v422 = vld [vmem:[%s304 + $0x2c8] sm:$0xff]
      %v423 = vld [vmem:[%s304 + $0x2d0] sm:$0xff]
      %v424 = vld [vmem:[%s304 + $0x2d8] sm:$0xff]
      %v425 = vld [vmem:[%s304 + $0x2e0] sm:$0xff]
      %v426 = vld [vmem:[%s304 + $0x2e8] sm:$0xff]
      %v427 = vld [vmem:[%s304 + $0x2f0] sm:$0xff]
      %v428 = vld [vmem:[%s304 + $0x2f8] sm:$0xff]
      %v429 = vld [vmem:[%s304 + $0x300] sm:$0xff]
      %v430 = vld [vmem:[%s304 + $0x308] sm:$0xff]
      %v431 = vld [vmem:[%s304 + $0x310] sm:$0xff]
      %v432 = vld [vmem:[%s304 + $0x318] sm:$0xff]
      %v433 = vld [vmem:[%s4] sm:$0xff]
      %v434 = vld [vmem:[%s4 + $0x8] sm:$0xff]
      %v435 = vld [vmem:[%s4 + $0x10] sm:$0xff]
      %v436 = vld [vmem:[%s4 + $0x18] sm:$0xff]
      %v437 = vld [vmem:[%s4 + $0x20] sm:$0xff]
      %v438 = vld [vmem:[%s4 + $0x28] sm:$0xff]
      %v439 = vld [vmem:[%s4 + $0x30] sm:$0xff]
      %v440 = vld [vmem:[%s4 + $0x38] sm:$0xff]
      %v441 = vld [vmem:[%s4 + $0x40] sm:$0xff]
      %v442 = vld [vmem:[%s4 + $0x48] sm:$0xff]
      %v443 = vld [vmem:[%s4 + $0x50] sm:$0xff]
      %v444 = vld [vmem:[%s4 + $0x58] sm:$0xff]
      %v445 = vld [vmem:[%s4 + $0x60] sm:$0xff]
      %v446 = vld [vmem:[%s4 + $0x68] sm:$0xff]
      %v447 = vld [vmem:[%s4 + $0x70] sm:$0xff]
      %v448 = vld [vmem:[%s4 + $0x78] sm:$0xff]
      %v449 = vld [vmem:[%s4 + $0x80] sm:$0xff]
      %v450 = vld [vmem:[%s4 + $0x88] sm:$0xff]
      %v451 = vld [vmem:[%s4 + $0x90] sm:$0xff]
      %v452 = vld [vmem:[%s4 + $0x98] sm:$0xff]
      %v453 = vld [vmem:[%s4 + $0xa0] sm:$0xff]
      %v454 = vld [vmem:[%s4 + $0xa8] sm:$0xff]
      %v455 = vld [vmem:[%s4 + $0xb0] sm:$0xff]
      %v456 = vld [vmem:[%s4 + $0xb8] sm:$0xff]
      %v457 = vld [vmem:[%s4 + $0xc0] sm:$0xff]
      %v458 = vld [vmem:[%s4 + $0xc8] sm:$0xff]
      %v459 = vld [vmem:[%s4 + $0xd0] sm:$0xff]
      %v460 = vld [vmem:[%s4 + $0xd8] sm:$0xff]
      %v461 = vld [vmem:[%s4 + $0xe0] sm:$0xff]
      %v462 = vld [vmem:[%s4 + $0xe8] sm:$0xff]
      %v463 = vld [vmem:[%s4 + $0xf0] sm:$0xff]
      %v464 = vld [vmem:[%s4 + $0xf8] sm:$0xff]
      %v465 = vld [vmem:[%s4 + $0x100] sm:$0xff]
      %v466 = vld [vmem:[%s4 + $0x108] sm:$0xff]
      %v467 = vld [vmem:[%s4 + $0x110] sm:$0xff]
      %v468 = vld [vmem:[%s4 + $0x118] sm:$0xff]
      %v469 = vld [vmem:[%s4 + $0x120] sm:$0xff]
      %v470 = vld [vmem:[%s4 + $0x128] sm:$0xff]
      %v471 = vld [vmem:[%s4 + $0x130] sm:$0xff]
      %v472 = vld [vmem:[%s4 + $0x138] sm:$0xff]
      %v473 = vld [vmem:[%s4 + $0x140] sm:$0xff]
      %v474 = vld [vmem:[%s4 + $0x148] sm:$0xff]
      %v475 = vld [vmem:[%s4 + $0x150] sm:$0xff]
      %v476 = vld [vmem:[%s4 + $0x158] sm:$0xff]
      %v477 = vld [vmem:[%s4 + $0x160] sm:$0xff]
      %v478 = vld [vmem:[%s4 + $0x168] sm:$0xff]
      %v479 = vld [vmem:[%s4 + $0x170] sm:$0xff]
      %v480 = vld [vmem:[%s4 + $0x178] sm:$0xff]
      %v481 = vld [vmem:[%s4 + $0x180] sm:$0xff]
      %v482 = vld [vmem:[%s4 + $0x188] sm:$0xff]
      %vm483 = vcmask 130048
      %v485 = vsel %vm483, %v336, 0
      %v488 = vsel %vm483, %v340, 0
      %v491 = vsel %vm483, %v344, 0
      %v494 = vsel %vm483, %v348, 0
      %v497 = vsel %vm483, %v352, 0
      %v500 = vsel %vm483, %v356, 0
      %v503 = vsel %vm483, %v360, 0
      %v506 = vsel %vm483, %v364, 0
      %v509 = vsel %vm483, %v368, 0
      %v512 = vsel %vm483, %v372, 0
      %v515 = vsel %vm483, %v376, 0
      %v518 = vsel %vm483, %v380, 0
      %v521 = vsel %vm483, %v384, 0
      %v524 = vsel %vm483, %v388, 0
      %v527 = vsel %vm483, %v392, 0
      %v530 = vsel %vm483, %v396, 0
      %v533 = vsel %vm483, %v400, 0
      %v536 = vsel %vm483, %v404, 0
      %v539 = vsel %vm483, %v408, 0
      %v542 = vsel %vm483, %v412, 0
      %v545 = vsel %vm483, %v416, 0
      %v548 = vsel %vm483, %v420, 0
      %v551 = vsel %vm483, %v424, 0
      %v554 = vsel %vm483, %v428, 0
      %v557 = vsel %vm483, %v432, 0
      %559 = vmatpush.msra.mxu0 %v448
      %560 = vmatpush.msra.mxu0 %v447
      %561 = vmatpush.msra.mxu0 %v446
      %562 = vmatpush.msra.mxu0 %v445
      %563 = vmatpush.msra.mxu0 %v444
      %564 = vmatpush.msra.mxu0 %v443
      %565 = vmatpush.msra.mxu0 %v442
      %566 = vmatpush.msra.mxu0 %v441
      %567 = vmatpush.msra.mxu0 %v440
      %568 = vmatpush.msra.mxu0 %v439
      %569 = vmatpush.msra.mxu0 %v438
      %570 = vmatpush.msra.mxu0 %v437
      %571 = vmatpush.msra.mxu0 %v436
      %572 = vmatpush.msra.mxu0 %v435
      %573 = vmatpush.msra.mxu0 %v434
      %574 = vmatpush.msra.mxu0 %v433
      %575 = vmatmul.f32.gmra.mxu0 %v333
      %v576 = vpop.f32.mrf.mxu0
      %v577 = vadd.f32 0.0, %v576
      %578 = vmatmul.f32.gmra.mxu0 %v337
      %v579 = vpop.f32.mrf.mxu0
      %v580 = vadd.f32 0.0, %v579
      %581 = vmatmul.f32.gmra.mxu0 %v341
      %v582 = vpop.f32.mrf.mxu0
      %v583 = vadd.f32 0.0, %v582
      %584 = vmatmul.f32.gmra.mxu0 %v345
      %v585 = vpop.f32.mrf.mxu0
      %v586 = vadd.f32 0.0, %v585
      %587 = vmatmul.f32.gmra.mxu0 %v349
      %v588 = vpop.f32.mrf.mxu0
      %v589 = vadd.f32 0.0, %v588
      %590 = vmatmul.f32.gmra.mxu0 %v353
      %v591 = vpop.f32.mrf.mxu0
      %v592 = vadd.f32 0.0, %v591
      %593 = vmatmul.f32.gmra.mxu0 %v357
      %v594 = vpop.f32.mrf.mxu0
      %v595 = vadd.f32 0.0, %v594
      %596 = vmatmul.f32.gmra.mxu0 %v361
      %v597 = vpop.f32.mrf.mxu0
      %v598 = vadd.f32 0.0, %v597
      %599 = vmatmul.f32.gmra.mxu0 %v365
      %v600 = vpop.f32.mrf.mxu0
      %v601 = vadd.f32 0.0, %v600
      %602 = vmatmul.f32.gmra.mxu0 %v369
      %v603 = vpop.f32.mrf.mxu0
      %v604 = vadd.f32 0.0, %v603
      %605 = vmatmul.f32.gmra.mxu0 %v373
      %v606 = vpop.f32.mrf.mxu0
      %v607 = vadd.f32 0.0, %v606
      %608 = vmatmul.f32.gmra.mxu0 %v377
      %v609 = vpop.f32.mrf.mxu0
      %v610 = vadd.f32 0.0, %v609
      %611 = vmatmul.f32.gmra.mxu0 %v381
      %v612 = vpop.f32.mrf.mxu0
      %v613 = vadd.f32 0.0, %v612
      %614 = vmatmul.f32.gmra.mxu0 %v385
      %v615 = vpop.f32.mrf.mxu0
      %v616 = vadd.f32 0.0, %v615
      %617 = vmatmul.f32.gmra.mxu0 %v389
      %v618 = vpop.f32.mrf.mxu0
      %v619 = vadd.f32 0.0, %v618
      %620 = vmatmul.f32.gmra.mxu0 %v393
      %v621 = vpop.f32.mrf.mxu0
      %v622 = vadd.f32 0.0, %v621
      %623 = vmatmul.f32.gmra.mxu0 %v397
      %v624 = vpop.f32.mrf.mxu0
      %v625 = vadd.f32 0.0, %v624
      %626 = vmatmul.f32.gmra.mxu0 %v401
      %v627 = vpop.f32.mrf.mxu0
      %v628 = vadd.f32 0.0, %v627
      %629 = vmatmul.f32.gmra.mxu0 %v405
      %v630 = vpop.f32.mrf.mxu0
      %v631 = vadd.f32 0.0, %v630
      %632 = vmatmul.f32.gmra.mxu0 %v409
      %v633 = vpop.f32.mrf.mxu0
      %v634 = vadd.f32 0.0, %v633
      %635 = vmatmul.f32.gmra.mxu0 %v413
      %v636 = vpop.f32.mrf.mxu0
      %v637 = vadd.f32 0.0, %v636
      %638 = vmatmul.f32.gmra.mxu0 %v417
      %v639 = vpop.f32.mrf.mxu0
      %v640 = vadd.f32 0.0, %v639
      %641 = vmatmul.f32.gmra.mxu0 %v421
      %v642 = vpop.f32.mrf.mxu0
      %v643 = vadd.f32 0.0, %v642
      %644 = vmatmul.f32.gmra.mxu0 %v425
      %v645 = vpop.f32.mrf.mxu0
      %v646 = vadd.f32 0.0, %v645
      %647 = vmatmul.f32.gmra.mxu0 %v429
      %v648 = vpop.f32.mrf.mxu0
      %v649 = vadd.f32 0.0, %v648
      %650 = vdwg.mxu0
      %651 = vmatpush.msra.mxu0 %v464
      %652 = vmatpush.msra.mxu0 %v463
      %653 = vmatpush.msra.mxu0 %v462
      %654 = vmatpush.msra.mxu0 %v461
      %655 = vmatpush.msra.mxu0 %v460
      %656 = vmatpush.msra.mxu0 %v459
      %657 = vmatpush.msra.mxu0 %v458
      %658 = vmatpush.msra.mxu0 %v457
      %659 = vmatpush.msra.mxu0 %v456
      %660 = vmatpush.msra.mxu0 %v455
      %661 = vmatpush.msra.mxu0 %v454
      %662 = vmatpush.msra.mxu0 %v453
      %663 = vmatpush.msra.mxu0 %v452
      %664 = vmatpush.msra.mxu0 %v451
      %665 = vmatpush.msra.mxu0 %v450
      %666 = vmatpush.msra.mxu0 %v449
      %667 = vmatmul.f32.gmra.mxu0 %v334
      %v668 = vpop.f32.mrf.mxu0
      %v669 = vadd.f32 %v577, %v668
      %670 = vmatmul.f32.gmra.mxu0 %v338
      %v671 = vpop.f32.mrf.mxu0
      %v672 = vadd.f32 %v580, %v671
      %673 = vmatmul.f32.gmra.mxu0 %v342
      %v674 = vpop.f32.mrf.mxu0
      %v675 = vadd.f32 %v583, %v674
      %676 = vmatmul.f32.gmra.mxu0 %v346
      %v677 = vpop.f32.mrf.mxu0
      %v678 = vadd.f32 %v586, %v677
      %679 = vmatmul.f32.gmra.mxu0 %v350
      %v680 = vpop.f32.mrf.mxu0
      %v681 = vadd.f32 %v589, %v680
      %682 = vmatmul.f32.gmra.mxu0 %v354
      %v683 = vpop.f32.mrf.mxu0
      %v684 = vadd.f32 %v592, %v683
      %685 = vmatmul.f32.gmra.mxu0 %v358
      %v686 = vpop.f32.mrf.mxu0
      %v687 = vadd.f32 %v595, %v686
      %688 = vmatmul.f32.gmra.mxu0 %v362
      %v689 = vpop.f32.mrf.mxu0
      %v690 = vadd.f32 %v598, %v689
      %691 = vmatmul.f32.gmra.mxu0 %v366
      %v692 = vpop.f32.mrf.mxu0
      %v693 = vadd.f32 %v601, %v692
      %694 = vmatmul.f32.gmra.mxu0 %v370
      %v695 = vpop.f32.mrf.mxu0
      %v696 = vadd.f32 %v604, %v695
      %697 = vmatmul.f32.gmra.mxu0 %v374
      %v698 = vpop.f32.mrf.mxu0
      %v699 = vadd.f32 %v607, %v698
      %700 = vmatmul.f32.gmra.mxu0 %v378
      %v701 = vpop.f32.mrf.mxu0
      %v702 = vadd.f32 %v610, %v701
      %703 = vmatmul.f32.gmra.mxu0 %v382
      %v704 = vpop.f32.mrf.mxu0
      %v705 = vadd.f32 %v613, %v704
      %706 = vmatmul.f32.gmra.mxu0 %v386
      %v707 = vpop.f32.mrf.mxu0
      %v708 = vadd.f32 %v616, %v707
      %709 = vmatmul.f32.gmra.mxu0 %v390
      %v710 = vpop.f32.mrf.mxu0
      %v711 = vadd.f32 %v619, %v710
      %712 = vmatmul.f32.gmra.mxu0 %v394
      %v713 = vpop.f32.mrf.mxu0
      %v714 = vadd.f32 %v622, %v713
      %715 = vmatmul.f32.gmra.mxu0 %v398
      %v716 = vpop.f32.mrf.mxu0
      %v717 = vadd.f32 %v625, %v716
      %718 = vmatmul.f32.gmra.mxu0 %v402
      %v719 = vpop.f32.mrf.mxu0
      %v720 = vadd.f32 %v628, %v719
      %721 = vmatmul.f32.gmra.mxu0 %v406
      %v722 = vpop.f32.mrf.mxu0
      %v723 = vadd.f32 %v631, %v722
      %724 = vmatmul.f32.gmra.mxu0 %v410
      %v725 = vpop.f32.mrf.mxu0
      %v726 = vadd.f32 %v634, %v725
      %727 = vmatmul.f32.gmra.mxu0 %v414
      %v728 = vpop.f32.mrf.mxu0
      %v729 = vadd.f32 %v637, %v728
      %730 = vmatmul.f32.gmra.mxu0 %v418
      %v731 = vpop.f32.mrf.mxu0
      %v732 = vadd.f32 %v640, %v731
      %733 = vmatmul.f32.gmra.mxu0 %v422
      %v734 = vpop.f32.mrf.mxu0
      %v735 = vadd.f32 %v643, %v734
      %736 = vmatmul.f32.gmra.mxu0 %v426
      %v737 = vpop.f32.mrf.mxu0
      %v738 = vadd.f32 %v646, %v737
      %739 = vmatmul.f32.gmra.mxu0 %v430
      %v740 = vpop.f32.mrf.mxu0
      %v741 = vadd.f32 %v649, %v740
      %742 = vdwg.mxu0
      %743 = vmatpush.msra.mxu0 %v480
      %744 = vmatpush.msra.mxu0 %v479
      %745 = vmatpush.msra.mxu0 %v478
      %746 = vmatpush.msra.mxu0 %v477
      %747 = vmatpush.msra.mxu0 %v476
      %748 = vmatpush.msra.mxu0 %v475
      %749 = vmatpush.msra.mxu0 %v474
      %750 = vmatpush.msra.mxu0 %v473
      %751 = vmatpush.msra.mxu0 %v472
      %752 = vmatpush.msra.mxu0 %v471
      %753 = vmatpush.msra.mxu0 %v470
      %754 = vmatpush.msra.mxu0 %v469
      %755 = vmatpush.msra.mxu0 %v468
      %756 = vmatpush.msra.mxu0 %v467
      %757 = vmatpush.msra.mxu0 %v466
      %758 = vmatpush.msra.mxu0 %v465
      %759 = vmatmul.f32.gmra.mxu0 %v335
      %v760 = vpop.f32.mrf.mxu0
      %v761 = vadd.f32 %v669, %v760
      %762 = vmatmul.f32.gmra.mxu0 %v339
      %v763 = vpop.f32.mrf.mxu0
      %v764 = vadd.f32 %v672, %v763
      %765 = vmatmul.f32.gmra.mxu0 %v343
      %v766 = vpop.f32.mrf.mxu0
      %v767 = vadd.f32 %v675, %v766
      %768 = vmatmul.f32.gmra.mxu0 %v347
      %v769 = vpop.f32.mrf.mxu0
      %v770 = vadd.f32 %v678, %v769
      %771 = vmatmul.f32.gmra.mxu0 %v351
      %v772 = vpop.f32.mrf.mxu0
      %v773 = vadd.f32 %v681, %v772
      %774 = vmatmul.f32.gmra.mxu0 %v355
      %v775 = vpop.f32.mrf.mxu0
      %v776 = vadd.f32 %v684, %v775
      %777 = vmatmul.f32.gmra.mxu0 %v359
      %v778 = vpop.f32.mrf.mxu0
      %v779 = vadd.f32 %v687, %v778
      %780 = vmatmul.f32.gmra.mxu0 %v363
      %v781 = vpop.f32.mrf.mxu0
      %v782 = vadd.f32 %v690, %v781
      %783 = vmatmul.f32.gmra.mxu0 %v367
      %v784 = vpop.f32.mrf.mxu0
      %v785 = vadd.f32 %v693, %v784
      %786 = vmatmul.f32.gmra.mxu0 %v371
      %v787 = vpop.f32.mrf.mxu0
      %v788 = vadd.f32 %v696, %v787
      %789 = vmatmul.f32.gmra.mxu0 %v375
      %v790 = vpop.f32.mrf.mxu0
      %v791 = vadd.f32 %v699, %v790
      %792 = vmatmul.f32.gmra.mxu0 %v379
      %v793 = vpop.f32.mrf.mxu0
      %v794 = vadd.f32 %v702, %v793
      %795 = vmatmul.f32.gmra.mxu0 %v383
      %v796 = vpop.f32.mrf.mxu0
      %v797 = vadd.f32 %v705, %v796
      %798 = vmatmul.f32.gmra.mxu0 %v387
      %v799 = vpop.f32.mrf.mxu0
      %v800 = vadd.f32 %v708, %v799
      %801 = vmatmul.f32.gmra.mxu0 %v391
      %v802 = vpop.f32.mrf.mxu0
      %v803 = vadd.f32 %v711, %v802
      %804 = vmatmul.f32.gmra.mxu0 %v395
      %v805 = vpop.f32.mrf.mxu0
      %v806 = vadd.f32 %v714, %v805
      %807 = vmatmul.f32.gmra.mxu0 %v399
      %v808 = vpop.f32.mrf.mxu0
      %v809 = vadd.f32 %v717, %v808
      %810 = vmatmul.f32.gmra.mxu0 %v403
      %v811 = vpop.f32.mrf.mxu0
      %v812 = vadd.f32 %v720, %v811
      %813 = vmatmul.f32.gmra.mxu0 %v407
      %v814 = vpop.f32.mrf.mxu0
      %v815 = vadd.f32 %v723, %v814
      %816 = vmatmul.f32.gmra.mxu0 %v411
      %v817 = vpop.f32.mrf.mxu0
      %v818 = vadd.f32 %v726, %v817
      %819 = vmatmul.f32.gmra.mxu0 %v415
      %v820 = vpop.f32.mrf.mxu0
      %v821 = vadd.f32 %v729, %v820
      %822 = vmatmul.f32.gmra.mxu0 %v419
      %v823 = vpop.f32.mrf.mxu0
      %v824 = vadd.f32 %v732, %v823
      %825 = vmatmul.f32.gmra.mxu0 %v423
      %v826 = vpop.f32.mrf.mxu0
      %v827 = vadd.f32 %v735, %v826
      %828 = vmatmul.f32.gmra.mxu0 %v427
      %v829 = vpop.f32.mrf.mxu0
      %v830 = vadd.f32 %v738, %v829
      %831 = vmatmul.f32.gmra.mxu0 %v431
      %v832 = vpop.f32.mrf.mxu0
      %v833 = vadd.f32 %v741, %v832
      %834 = vdwg.mxu0
      %835 = vmatpush.msra.mxu0 0.0
      %836 = vmatpush.msra.mxu0 0.0
      %837 = vmatpush.msra.mxu0 0.0
      %838 = vmatpush.msra.mxu0 0.0
      %839 = vmatpush.msra.mxu0 0.0
      %840 = vmatpush.msra.mxu0 0.0
      %841 = vmatpush.msra.mxu0 0.0
      %842 = vmatpush.msra.mxu0 0.0
      %843 = vmatpush.msra.mxu0 0.0
      %844 = vmatpush.msra.mxu0 0.0
      %845 = vmatpush.msra.mxu0 0.0
      %846 = vmatpush.msra.mxu0 0.0
      %847 = vmatpush.msra.mxu0 0.0
      %848 = vmatpush.msra.mxu0 0.0
      %849 = vmatpush.msra.mxu0 %v482
      %850 = vmatpush.msra.mxu0 %v481
      %851 = vmatmul.f32.gmra.mxu0 %v485
      %v852 = vpop.f32.mrf.mxu0
      %v853 = vadd.f32 %v761, %v852
      %854 = vmatmul.f32.gmra.mxu0 %v488
      %v855 = vpop.f32.mrf.mxu0
      %v856 = vadd.f32 %v764, %v855
      %857 = vmatmul.f32.gmra.mxu0 %v491
      %v858 = vpop.f32.mrf.mxu0
      %v859 = vadd.f32 %v767, %v858
      %860 = vmatmul.f32.gmra.mxu0 %v494
      %v861 = vpop.f32.mrf.mxu0
      %v862 = vadd.f32 %v770, %v861
      %863 = vmatmul.f32.gmra.mxu0 %v497
      %v864 = vpop.f32.mrf.mxu0
      %v865 = vadd.f32 %v773, %v864
      %866 = vmatmul.f32.gmra.mxu0 %v500
      %v867 = vpop.f32.mrf.mxu0
      %v868 = vadd.f32 %v776, %v867
      %869 = vmatmul.f32.gmra.mxu0 %v503
      %v870 = vpop.f32.mrf.mxu0
      %v871 = vadd.f32 %v779, %v870
      %872 = vmatmul.f32.gmra.mxu0 %v506
      %v873 = vpop.f32.mrf.mxu0
      %v874 = vadd.f32 %v782, %v873
      %875 = vmatmul.f32.gmra.mxu0 %v509
      %v876 = vpop.f32.mrf.mxu0
      %v877 = vadd.f32 %v785, %v876
      %878 = vmatmul.f32.gmra.mxu0 %v512
      %v879 = vpop.f32.mrf.mxu0
      %v880 = vadd.f32 %v788, %v879
      %881 = vmatmul.f32.gmra.mxu0 %v515
      %v882 = vpop.f32.mrf.mxu0
      %v883 = vadd.f32 %v791, %v882
      %884 = vmatmul.f32.gmra.mxu0 %v518
      %v885 = vpop.f32.mrf.mxu0
      %v886 = vadd.f32 %v794, %v885
      %887 = vmatmul.f32.gmra.mxu0 %v521
      %v888 = vpop.f32.mrf.mxu0
      %v889 = vadd.f32 %v797, %v888
      %890 = vmatmul.f32.gmra.mxu0 %v524
      %v891 = vpop.f32.mrf.mxu0
      %v892 = vadd.f32 %v800, %v891
      %893 = vmatmul.f32.gmra.mxu0 %v527
      %v894 = vpop.f32.mrf.mxu0
      %v895 = vadd.f32 %v803, %v894
      %896 = vmatmul.f32.gmra.mxu0 %v530
      %v897 = vpop.f32.mrf.mxu0
      %v898 = vadd.f32 %v806, %v897
      %899 = vmatmul.f32.gmra.mxu0 %v533
      %v900 = vpop.f32.mrf.mxu0
      %v901 = vadd.f32 %v809, %v900
      %902 = vmatmul.f32.gmra.mxu0 %v536
      %v903 = vpop.f32.mrf.mxu0
      %v904 = vadd.f32 %v812, %v903
      %905 = vmatmul.f32.gmra.mxu0 %v539
      %v906 = vpop.f32.mrf.mxu0
      %v907 = vadd.f32 %v815, %v906
      %908 = vmatmul.f32.gmra.mxu0 %v542
      %v909 = vpop.f32.mrf.mxu0
      %v910 = vadd.f32 %v818, %v909
      %911 = vmatmul.f32.gmra.mxu0 %v545
      %v912 = vpop.f32.mrf.mxu0
      %v913 = vadd.f32 %v821, %v912
      %914 = vmatmul.f32.gmra.mxu0 %v548
      %v915 = vpop.f32.mrf.mxu0
      %v916 = vadd.f32 %v824, %v915
      %917 = vmatmul.f32.gmra.mxu0 %v551
      %v918 = vpop.f32.mrf.mxu0
      %v919 = vadd.f32 %v827, %v918
      %920 = vmatmul.f32.gmra.mxu0 %v554
      %v921 = vpop.f32.mrf.mxu0
      %v922 = vadd.f32 %v830, %v921
      %923 = vmatmul.f32.gmra.mxu0 %v557
      %v924 = vpop.f32.mrf.mxu0
      %v925 = vadd.f32 %v833, %v924
      %926 = vdwg.mxu0
      %v927 = vld [vmem:[%s311] sm:$0xff]
      %v928 = vld [vmem:[%s311 + $0x8] sm:$0xff]
      %v929 = vld [vmem:[%s311 + $0x10] sm:$0xff]
      %v930 = vld [vmem:[%s311 + $0x18] sm:$0xff]
      %v931 = vld [vmem:[%s311 + $0x20] sm:$0xff]
      %v932 = vld [vmem:[%s311 + $0x28] sm:$0xff]
      %v933 = vld [vmem:[%s311 + $0x30] sm:$0xff]
      %v934 = vld [vmem:[%s311 + $0x38] sm:$0xff]
      %v935 = vld [vmem:[%s311 + $0x40] sm:$0xff]
      %v936 = vld [vmem:[%s311 + $0x48] sm:$0xff]
      %v937 = vld [vmem:[%s311 + $0x50] sm:$0xff]
      %v938 = vld [vmem:[%s311 + $0x58] sm:$0xff]
      %v939 = vld [vmem:[%s311 + $0x60] sm:$0xff]
      %v940 = vld [vmem:[%s311 + $0x68] sm:$0xff]
      %v941 = vld [vmem:[%s311 + $0x70] sm:$0xff]
      %v942 = vld [vmem:[%s311 + $0x78] sm:$0xff]
      %v943 = vld [vmem:[%s311 + $0x80] sm:$0xff]
      %v944 = vld [vmem:[%s311 + $0x88] sm:$0xff]
      %v945 = vld [vmem:[%s311 + $0x90] sm:$0xff]
      %v946 = vld [vmem:[%s311 + $0x98] sm:$0xff]
      %v947 = vld [vmem:[%s311 + $0xa0] sm:$0xff]
      %v948 = vld [vmem:[%s311 + $0xa8] sm:$0xff]
      %v949 = vld [vmem:[%s311 + $0xb0] sm:$0xff]
      %v950 = vld [vmem:[%s311 + $0xb8] sm:$0xff]
      %v951 = vld [vmem:[%s311 + $0xc0] sm:$0xff]
      %v952 = vld [vmem:[%s311 + $0xc8] sm:$0xff]
      %v953 = vld [vmem:[%s311 + $0xd0] sm:$0xff]
      %v954 = vld [vmem:[%s311 + $0xd8] sm:$0xff]
      %v955 = vld [vmem:[%s311 + $0xe0] sm:$0xff]
      %v956 = vld [vmem:[%s311 + $0xe8] sm:$0xff]
      %v957 = vld [vmem:[%s311 + $0xf0] sm:$0xff]
      %v958 = vld [vmem:[%s311 + $0xf8] sm:$0xff]
      %v959 = vld [vmem:[%s311 + $0x100] sm:$0xff]
      %v960 = vld [vmem:[%s311 + $0x108] sm:$0xff]
      %v961 = vld [vmem:[%s311 + $0x110] sm:$0xff]
      %v962 = vld [vmem:[%s311 + $0x118] sm:$0xff]
      %v963 = vld [vmem:[%s311 + $0x120] sm:$0xff]
      %v964 = vld [vmem:[%s311 + $0x128] sm:$0xff]
      %v965 = vld [vmem:[%s311 + $0x130] sm:$0xff]
      %v966 = vld [vmem:[%s311 + $0x138] sm:$0xff]
      %v967 = vld [vmem:[%s311 + $0x140] sm:$0xff]
      %v968 = vld [vmem:[%s311 + $0x148] sm:$0xff]
      %v969 = vld [vmem:[%s311 + $0x150] sm:$0xff]
      %v970 = vld [vmem:[%s311 + $0x158] sm:$0xff]
      %v971 = vld [vmem:[%s311 + $0x160] sm:$0xff]
      %v972 = vld [vmem:[%s311 + $0x168] sm:$0xff]
      %v973 = vld [vmem:[%s311 + $0x170] sm:$0xff]
      %v974 = vld [vmem:[%s311 + $0x178] sm:$0xff]
      %v975 = vld [vmem:[%s311 + $0x180] sm:$0xff]
      %v976 = vld [vmem:[%s311 + $0x188] sm:$0xff]
      %v977 = vld [vmem:[%s311 + $0x190] sm:$0xff]
      %v978 = vld [vmem:[%s311 + $0x198] sm:$0xff]
      %v979 = vld [vmem:[%s311 + $0x1a0] sm:$0xff]
      %v980 = vld [vmem:[%s311 + $0x1a8] sm:$0xff]
      %v981 = vld [vmem:[%s311 + $0x1b0] sm:$0xff]
      %v982 = vld [vmem:[%s311 + $0x1b8] sm:$0xff]
      %v983 = vld [vmem:[%s311 + $0x1c0] sm:$0xff]
      %v984 = vld [vmem:[%s311 + $0x1c8] sm:$0xff]
      %v985 = vld [vmem:[%s311 + $0x1d0] sm:$0xff]
      %v986 = vld [vmem:[%s311 + $0x1d8] sm:$0xff]
      %v987 = vld [vmem:[%s311 + $0x1e0] sm:$0xff]
      %v988 = vld [vmem:[%s311 + $0x1e8] sm:$0xff]
      %v989 = vld [vmem:[%s311 + $0x1f0] sm:$0xff]
      %v990 = vld [vmem:[%s311 + $0x1f8] sm:$0xff]
      %v991 = vld [vmem:[%s311 + $0x200] sm:$0xff]
      %v992 = vld [vmem:[%s311 + $0x208] sm:$0xff]
      %v993 = vld [vmem:[%s311 + $0x210] sm:$0xff]
      %v994 = vld [vmem:[%s311 + $0x218] sm:$0xff]
      %v995 = vld [vmem:[%s311 + $0x220] sm:$0xff]
      %v996 = vld [vmem:[%s311 + $0x228] sm:$0xff]
      %v997 = vld [vmem:[%s311 + $0x230] sm:$0xff]
      %v998 = vld [vmem:[%s311 + $0x238] sm:$0xff]
      %v999 = vld [vmem:[%s311 + $0x240] sm:$0xff]
      %v1000 = vld [vmem:[%s311 + $0x248] sm:$0xff]
      %v1001 = vld [vmem:[%s311 + $0x250] sm:$0xff]
      %v1002 = vld [vmem:[%s311 + $0x258] sm:$0xff]
      %v1003 = vld [vmem:[%s311 + $0x260] sm:$0xff]
      %v1004 = vld [vmem:[%s311 + $0x268] sm:$0xff]
      %v1005 = vld [vmem:[%s311 + $0x270] sm:$0xff]
      %v1006 = vld [vmem:[%s311 + $0x278] sm:$0xff]
      %v1007 = vld [vmem:[%s311 + $0x280] sm:$0xff]
      %v1008 = vld [vmem:[%s311 + $0x288] sm:$0xff]
      %v1009 = vld [vmem:[%s311 + $0x290] sm:$0xff]
      %v1010 = vld [vmem:[%s311 + $0x298] sm:$0xff]
      %v1011 = vld [vmem:[%s311 + $0x2a0] sm:$0xff]
      %v1012 = vld [vmem:[%s311 + $0x2a8] sm:$0xff]
      %v1013 = vld [vmem:[%s311 + $0x2b0] sm:$0xff]
      %v1014 = vld [vmem:[%s311 + $0x2b8] sm:$0xff]
      %v1015 = vld [vmem:[%s311 + $0x2c0] sm:$0xff]
      %v1016 = vld [vmem:[%s311 + $0x2c8] sm:$0xff]
      %v1017 = vld [vmem:[%s311 + $0x2d0] sm:$0xff]
      %v1018 = vld [vmem:[%s311 + $0x2d8] sm:$0xff]
      %v1019 = vld [vmem:[%s311 + $0x2e0] sm:$0xff]
      %v1020 = vld [vmem:[%s311 + $0x2e8] sm:$0xff]
      %v1021 = vld [vmem:[%s311 + $0x2f0] sm:$0xff]
      %v1022 = vld [vmem:[%s311 + $0x2f8] sm:$0xff]
      %v1023 = vld [vmem:[%s311 + $0x300] sm:$0xff]
      %v1024 = vld [vmem:[%s311 + $0x308] sm:$0xff]
      %v1025 = vld [vmem:[%s311 + $0x310] sm:$0xff]
      %v1026 = vld [vmem:[%s311 + $0x318] sm:$0xff]
      %v1028 = vsel %vm483, %v930, 0
      %v1031 = vsel %vm483, %v934, 0
      %v1034 = vsel %vm483, %v938, 0
      %v1037 = vsel %vm483, %v942, 0
      %v1040 = vsel %vm483, %v946, 0
      %v1043 = vsel %vm483, %v950, 0
      %v1046 = vsel %vm483, %v954, 0
      %v1049 = vsel %vm483, %v958, 0
      %v1052 = vsel %vm483, %v962, 0
      %v1055 = vsel %vm483, %v966, 0
      %v1058 = vsel %vm483, %v970, 0
      %v1061 = vsel %vm483, %v974, 0
      %v1064 = vsel %vm483, %v978, 0
      %v1067 = vsel %vm483, %v982, 0
      %v1070 = vsel %vm483, %v986, 0
      %v1073 = vsel %vm483, %v990, 0
      %v1076 = vsel %vm483, %v994, 0
      %v1079 = vsel %vm483, %v998, 0
      %v1082 = vsel %vm483, %v1002, 0
      %v1085 = vsel %vm483, %v1006, 0
      %v1088 = vsel %vm483, %v1010, 0
      %v1091 = vsel %vm483, %v1014, 0
      %v1094 = vsel %vm483, %v1018, 0
      %v1097 = vsel %vm483, %v1022, 0
      %v1100 = vsel %vm483, %v1026, 0
      %1102 = vmatpush.msra.mxu0 %v448
      %1103 = vmatpush.msra.mxu0 %v447
      %1104 = vmatpush.msra.mxu0 %v446
      %1105 = vmatpush.msra.mxu0 %v445
      %1106 = vmatpush.msra.mxu0 %v444
      %1107 = vmatpush.msra.mxu0 %v443
      %1108 = vmatpush.msra.mxu0 %v442
      %1109 = vmatpush.msra.mxu0 %v441
      %1110 = vmatpush.msra.mxu0 %v440
      %1111 = vmatpush.msra.mxu0 %v439
      %1112 = vmatpush.msra.mxu0 %v438
      %1113 = vmatpush.msra.mxu0 %v437
      %1114 = vmatpush.msra.mxu0 %v436
      %1115 = vmatpush.msra.mxu0 %v435
      %1116 = vmatpush.msra.mxu0 %v434
      %1117 = vmatpush.msra.mxu0 %v433
      %1118 = vmatmul.f32.gmra.mxu0 %v927
      %v1119 = vpop.f32.mrf.mxu0
      %v1120 = vadd.f32 0.0, %v1119
      %1121 = vmatmul.f32.gmra.mxu0 %v931
      %v1122 = vpop.f32.mrf.mxu0
      %v1123 = vadd.f32 0.0, %v1122
      %1124 = vmatmul.f32.gmra.mxu0 %v935
      %v1125 = vpop.f32.mrf.mxu0
      %v1126 = vadd.f32 0.0, %v1125
      %1127 = vmatmul.f32.gmra.mxu0 %v939
      %v1128 = vpop.f32.mrf.mxu0
      %v1129 = vadd.f32 0.0, %v1128
      %1130 = vmatmul.f32.gmra.mxu0 %v943
      %v1131 = vpop.f32.mrf.mxu0
      %v1132 = vadd.f32 0.0, %v1131
      %1133 = vmatmul.f32.gmra.mxu0 %v947
      %v1134 = vpop.f32.mrf.mxu0
      %v1135 = vadd.f32 0.0, %v1134
      %1136 = vmatmul.f32.gmra.mxu0 %v951
      %v1137 = vpop.f32.mrf.mxu0
      %v1138 = vadd.f32 0.0, %v1137
      %1139 = vmatmul.f32.gmra.mxu0 %v955
      %v1140 = vpop.f32.mrf.mxu0
      %v1141 = vadd.f32 0.0, %v1140
      %1142 = vmatmul.f32.gmra.mxu0 %v959
      %v1143 = vpop.f32.mrf.mxu0
      %v1144 = vadd.f32 0.0, %v1143
      %1145 = vmatmul.f32.gmra.mxu0 %v963
      %v1146 = vpop.f32.mrf.mxu0
      %v1147 = vadd.f32 0.0, %v1146
      %1148 = vmatmul.f32.gmra.mxu0 %v967
      %v1149 = vpop.f32.mrf.mxu0
      %v1150 = vadd.f32 0.0, %v1149
      %1151 = vmatmul.f32.gmra.mxu0 %v971
      %v1152 = vpop.f32.mrf.mxu0
      %v1153 = vadd.f32 0.0, %v1152
      %1154 = vmatmul.f32.gmra.mxu0 %v975
      %v1155 = vpop.f32.mrf.mxu0
      %v1156 = vadd.f32 0.0, %v1155
      %1157 = vmatmul.f32.gmra.mxu0 %v979
      %v1158 = vpop.f32.mrf.mxu0
      %v1159 = vadd.f32 0.0, %v1158
      %1160 = vmatmul.f32.gmra.mxu0 %v983
      %v1161 = vpop.f32.mrf.mxu0
      %v1162 = vadd.f32 0.0, %v1161
      %1163 = vmatmul.f32.gmra.mxu0 %v987
      %v1164 = vpop.f32.mrf.mxu0
      %v1165 = vadd.f32 0.0, %v1164
      %1166 = vmatmul.f32.gmra.mxu0 %v991
      %v1167 = vpop.f32.mrf.mxu0
      %v1168 = vadd.f32 0.0, %v1167
      %1169 = vmatmul.f32.gmra.mxu0 %v995
      %v1170 = vpop.f32.mrf.mxu0
      %v1171 = vadd.f32 0.0, %v1170
      %1172 = vmatmul.f32.gmra.mxu0 %v999
      %v1173 = vpop.f32.mrf.mxu0
      %v1174 = vadd.f32 0.0, %v1173
      %1175 = vmatmul.f32.gmra.mxu0 %v1003
      %v1176 = vpop.f32.mrf.mxu0
      %v1177 = vadd.f32 0.0, %v1176
      %1178 = vmatmul.f32.gmra.mxu0 %v1007
      %v1179 = vpop.f32.mrf.mxu0
      %v1180 = vadd.f32 0.0, %v1179
      %1181 = vmatmul.f32.gmra.mxu0 %v1011
      %v1182 = vpop.f32.mrf.mxu0
      %v1183 = vadd.f32 0.0, %v1182
      %1184 = vmatmul.f32.gmra.mxu0 %v1015
      %v1185 = vpop.f32.mrf.mxu0
      %v1186 = vadd.f32 0.0, %v1185
      %1187 = vmatmul.f32.gmra.mxu0 %v1019
      %v1188 = vpop.f32.mrf.mxu0
      %v1189 = vadd.f32 0.0, %v1188
      %1190 = vmatmul.f32.gmra.mxu0 %v1023
      %v1191 = vpop.f32.mrf.mxu0
      %v1192 = vadd.f32 0.0, %v1191
      %1193 = vdwg.mxu0
      %1194 = vmatpush.msra.mxu0 %v464
      %1195 = vmatpush.msra.mxu0 %v463
      %1196 = vmatpush.msra.mxu0 %v462
      %1197 = vmatpush.msra.mxu0 %v461
      %1198 = vmatpush.msra.mxu0 %v460
      %1199 = vmatpush.msra.mxu0 %v459
      %1200 = vmatpush.msra.mxu0 %v458
      %1201 = vmatpush.msra.mxu0 %v457
      %1202 = vmatpush.msra.mxu0 %v456
      %1203 = vmatpush.msra.mxu0 %v455
      %1204 = vmatpush.msra.mxu0 %v454
      %1205 = vmatpush.msra.mxu0 %v453
      %1206 = vmatpush.msra.mxu0 %v452
      %1207 = vmatpush.msra.mxu0 %v451
      %1208 = vmatpush.msra.mxu0 %v450
      %1209 = vmatpush.msra.mxu0 %v449
      %1210 = vmatmul.f32.gmra.mxu0 %v928
      %v1211 = vpop.f32.mrf.mxu0
      %v1212 = vadd.f32 %v1120, %v1211
      %1213 = vmatmul.f32.gmra.mxu0 %v932
      %v1214 = vpop.f32.mrf.mxu0
      %v1215 = vadd.f32 %v1123, %v1214
      %1216 = vmatmul.f32.gmra.mxu0 %v936
      %v1217 = vpop.f32.mrf.mxu0
      %v1218 = vadd.f32 %v1126, %v1217
      %1219 = vmatmul.f32.gmra.mxu0 %v940
      %v1220 = vpop.f32.mrf.mxu0
      %v1221 = vadd.f32 %v1129, %v1220
      %1222 = vmatmul.f32.gmra.mxu0 %v944
      %v1223 = vpop.f32.mrf.mxu0
      %v1224 = vadd.f32 %v1132, %v1223
      %1225 = vmatmul.f32.gmra.mxu0 %v948
      %v1226 = vpop.f32.mrf.mxu0
      %v1227 = vadd.f32 %v1135, %v1226
      %1228 = vmatmul.f32.gmra.mxu0 %v952
      %v1229 = vpop.f32.mrf.mxu0
      %v1230 = vadd.f32 %v1138, %v1229
      %1231 = vmatmul.f32.gmra.mxu0 %v956
      %v1232 = vpop.f32.mrf.mxu0
      %v1233 = vadd.f32 %v1141, %v1232
      %1234 = vmatmul.f32.gmra.mxu0 %v960
      %v1235 = vpop.f32.mrf.mxu0
      %v1236 = vadd.f32 %v1144, %v1235
      %1237 = vmatmul.f32.gmra.mxu0 %v964
      %v1238 = vpop.f32.mrf.mxu0
      %v1239 = vadd.f32 %v1147, %v1238
      %1240 = vmatmul.f32.gmra.mxu0 %v968
      %v1241 = vpop.f32.mrf.mxu0
      %v1242 = vadd.f32 %v1150, %v1241
      %1243 = vmatmul.f32.gmra.mxu0 %v972
      %v1244 = vpop.f32.mrf.mxu0
      %v1245 = vadd.f32 %v1153, %v1244
      %1246 = vmatmul.f32.gmra.mxu0 %v976
      %v1247 = vpop.f32.mrf.mxu0
      %v1248 = vadd.f32 %v1156, %v1247
      %1249 = vmatmul.f32.gmra.mxu0 %v980
      %v1250 = vpop.f32.mrf.mxu0
      %v1251 = vadd.f32 %v1159, %v1250
      %1252 = vmatmul.f32.gmra.mxu0 %v984
      %v1253 = vpop.f32.mrf.mxu0
      %v1254 = vadd.f32 %v1162, %v1253
      %1255 = vmatmul.f32.gmra.mxu0 %v988
      %v1256 = vpop.f32.mrf.mxu0
      %v1257 = vadd.f32 %v1165, %v1256
      %1258 = vmatmul.f32.gmra.mxu0 %v992
      %v1259 = vpop.f32.mrf.mxu0
      %v1260 = vadd.f32 %v1168, %v1259
      %1261 = vmatmul.f32.gmra.mxu0 %v996
      %v1262 = vpop.f32.mrf.mxu0
      %v1263 = vadd.f32 %v1171, %v1262
      %1264 = vmatmul.f32.gmra.mxu0 %v1000
      %v1265 = vpop.f32.mrf.mxu0
      %v1266 = vadd.f32 %v1174, %v1265
      %1267 = vmatmul.f32.gmra.mxu0 %v1004
      %v1268 = vpop.f32.mrf.mxu0
      %v1269 = vadd.f32 %v1177, %v1268
      %1270 = vmatmul.f32.gmra.mxu0 %v1008
      %v1271 = vpop.f32.mrf.mxu0
      %v1272 = vadd.f32 %v1180, %v1271
      %1273 = vmatmul.f32.gmra.mxu0 %v1012
      %v1274 = vpop.f32.mrf.mxu0
      %v1275 = vadd.f32 %v1183, %v1274
      %1276 = vmatmul.f32.gmra.mxu0 %v1016
      %v1277 = vpop.f32.mrf.mxu0
      %v1278 = vadd.f32 %v1186, %v1277
      %1279 = vmatmul.f32.gmra.mxu0 %v1020
      %v1280 = vpop.f32.mrf.mxu0
      %v1281 = vadd.f32 %v1189, %v1280
      %1282 = vmatmul.f32.gmra.mxu0 %v1024
      %v1283 = vpop.f32.mrf.mxu0
      %v1284 = vadd.f32 %v1192, %v1283
      %1285 = vdwg.mxu0
      %1286 = vmatpush.msra.mxu0 %v480
      %1287 = vmatpush.msra.mxu0 %v479
      %1288 = vmatpush.msra.mxu0 %v478
      %1289 = vmatpush.msra.mxu0 %v477
      %1290 = vmatpush.msra.mxu0 %v476
      %1291 = vmatpush.msra.mxu0 %v475
      %1292 = vmatpush.msra.mxu0 %v474
      %1293 = vmatpush.msra.mxu0 %v473
      %1294 = vmatpush.msra.mxu0 %v472
      %1295 = vmatpush.msra.mxu0 %v471
      %1296 = vmatpush.msra.mxu0 %v470
      %1297 = vmatpush.msra.mxu0 %v469
      %1298 = vmatpush.msra.mxu0 %v468
      %1299 = vmatpush.msra.mxu0 %v467
      %1300 = vmatpush.msra.mxu0 %v466
      %1301 = vmatpush.msra.mxu0 %v465
      %1302 = vmatmul.f32.gmra.mxu0 %v929
      %v1303 = vpop.f32.mrf.mxu0
      %v1304 = vadd.f32 %v1212, %v1303
      %1305 = vmatmul.f32.gmra.mxu0 %v933
      %v1306 = vpop.f32.mrf.mxu0
      %v1307 = vadd.f32 %v1215, %v1306
      %1308 = vmatmul.f32.gmra.mxu0 %v937
      %v1309 = vpop.f32.mrf.mxu0
      %v1310 = vadd.f32 %v1218, %v1309
      %1311 = vmatmul.f32.gmra.mxu0 %v941
      %v1312 = vpop.f32.mrf.mxu0
      %v1313 = vadd.f32 %v1221, %v1312
      %1314 = vmatmul.f32.gmra.mxu0 %v945
      %v1315 = vpop.f32.mrf.mxu0
      %v1316 = vadd.f32 %v1224, %v1315
      %1317 = vmatmul.f32.gmra.mxu0 %v949
      %v1318 = vpop.f32.mrf.mxu0
      %v1319 = vadd.f32 %v1227, %v1318
      %1320 = vmatmul.f32.gmra.mxu0 %v953
      %v1321 = vpop.f32.mrf.mxu0
      %v1322 = vadd.f32 %v1230, %v1321
      %1323 = vmatmul.f32.gmra.mxu0 %v957
      %v1324 = vpop.f32.mrf.mxu0
      %v1325 = vadd.f32 %v1233, %v1324
      %1326 = vmatmul.f32.gmra.mxu0 %v961
      %v1327 = vpop.f32.mrf.mxu0
      %v1328 = vadd.f32 %v1236, %v1327
      %1329 = vmatmul.f32.gmra.mxu0 %v965
      %v1330 = vpop.f32.mrf.mxu0
      %v1331 = vadd.f32 %v1239, %v1330
      %1332 = vmatmul.f32.gmra.mxu0 %v969
      %v1333 = vpop.f32.mrf.mxu0
      %v1334 = vadd.f32 %v1242, %v1333
      %1335 = vmatmul.f32.gmra.mxu0 %v973
      %v1336 = vpop.f32.mrf.mxu0
      %v1337 = vadd.f32 %v1245, %v1336
      %1338 = vmatmul.f32.gmra.mxu0 %v977
      %v1339 = vpop.f32.mrf.mxu0
      %v1340 = vadd.f32 %v1248, %v1339
      %1341 = vmatmul.f32.gmra.mxu0 %v981
      %v1342 = vpop.f32.mrf.mxu0
      %v1343 = vadd.f32 %v1251, %v1342
      %1344 = vmatmul.f32.gmra.mxu0 %v985
      %v1345 = vpop.f32.mrf.mxu0
      %v1346 = vadd.f32 %v1254, %v1345
      %1347 = vmatmul.f32.gmra.mxu0 %v989
      %v1348 = vpop.f32.mrf.mxu0
      %v1349 = vadd.f32 %v1257, %v1348
      %1350 = vmatmul.f32.gmra.mxu0 %v993
      %v1351 = vpop.f32.mrf.mxu0
      %v1352 = vadd.f32 %v1260, %v1351
      %1353 = vmatmul.f32.gmra.mxu0 %v997
      %v1354 = vpop.f32.mrf.mxu0
      %v1355 = vadd.f32 %v1263, %v1354
      %1356 = vmatmul.f32.gmra.mxu0 %v1001
      %v1357 = vpop.f32.mrf.mxu0
      %v1358 = vadd.f32 %v1266, %v1357
      %1359 = vmatmul.f32.gmra.mxu0 %v1005
      %v1360 = vpop.f32.mrf.mxu0
      %v1361 = vadd.f32 %v1269, %v1360
      %1362 = vmatmul.f32.gmra.mxu0 %v1009
      %v1363 = vpop.f32.mrf.mxu0
      %v1364 = vadd.f32 %v1272, %v1363
      %1365 = vmatmul.f32.gmra.mxu0 %v1013
      %v1366 = vpop.f32.mrf.mxu0
      %v1367 = vadd.f32 %v1275, %v1366
      %1368 = vmatmul.f32.gmra.mxu0 %v1017
      %v1369 = vpop.f32.mrf.mxu0
      %v1370 = vadd.f32 %v1278, %v1369
      %1371 = vmatmul.f32.gmra.mxu0 %v1021
      %v1372 = vpop.f32.mrf.mxu0
      %v1373 = vadd.f32 %v1281, %v1372
      %1374 = vmatmul.f32.gmra.mxu0 %v1025
      %v1375 = vpop.f32.mrf.mxu0
      %v1376 = vadd.f32 %v1284, %v1375
      %1377 = vdwg.mxu0
      %1378 = vmatpush.msra.mxu0 0.0
      %1379 = vmatpush.msra.mxu0 0.0
      %1380 = vmatpush.msra.mxu0 0.0
      %1381 = vmatpush.msra.mxu0 0.0
      %1382 = vmatpush.msra.mxu0 0.0
      %1383 = vmatpush.msra.mxu0 0.0
      %1384 = vmatpush.msra.mxu0 0.0
      %1385 = vmatpush.msra.mxu0 0.0
      %1386 = vmatpush.msra.mxu0 0.0
      %1387 = vmatpush.msra.mxu0 0.0
      %1388 = vmatpush.msra.mxu0 0.0
      %1389 = vmatpush.msra.mxu0 0.0
      %1390 = vmatpush.msra.mxu0 0.0
      %1391 = vmatpush.msra.mxu0 0.0
      %1392 = vmatpush.msra.mxu0 %v482
      %1393 = vmatpush.msra.mxu0 %v481
      %1394 = vmatmul.f32.gmra.mxu0 %v1028
      %v1395 = vpop.f32.mrf.mxu0
      %v1396 = vadd.f32 %v1304, %v1395
      %1397 = vmatmul.f32.gmra.mxu0 %v1031
      %v1398 = vpop.f32.mrf.mxu0
      %v1399 = vadd.f32 %v1307, %v1398
      %1400 = vmatmul.f32.gmra.mxu0 %v1034
      %v1401 = vpop.f32.mrf.mxu0
      %v1402 = vadd.f32 %v1310, %v1401
      %1403 = vmatmul.f32.gmra.mxu0 %v1037
      %v1404 = vpop.f32.mrf.mxu0
      %v1405 = vadd.f32 %v1313, %v1404
      %1406 = vmatmul.f32.gmra.mxu0 %v1040
      %v1407 = vpop.f32.mrf.mxu0
      %v1408 = vadd.f32 %v1316, %v1407
      %1409 = vmatmul.f32.gmra.mxu0 %v1043
      %v1410 = vpop.f32.mrf.mxu0
      %v1411 = vadd.f32 %v1319, %v1410
      %1412 = vmatmul.f32.gmra.mxu0 %v1046
      %v1413 = vpop.f32.mrf.mxu0
      %v1414 = vadd.f32 %v1322, %v1413
      %1415 = vmatmul.f32.gmra.mxu0 %v1049
      %v1416 = vpop.f32.mrf.mxu0
      %v1417 = vadd.f32 %v1325, %v1416
      %1418 = vmatmul.f32.gmra.mxu0 %v1052
      %v1419 = vpop.f32.mrf.mxu0
      %v1420 = vadd.f32 %v1328, %v1419
      %1421 = vmatmul.f32.gmra.mxu0 %v1055
      %v1422 = vpop.f32.mrf.mxu0
      %v1423 = vadd.f32 %v1331, %v1422
      %1424 = vmatmul.f32.gmra.mxu0 %v1058
      %v1425 = vpop.f32.mrf.mxu0
      %v1426 = vadd.f32 %v1334, %v1425
      %1427 = vmatmul.f32.gmra.mxu0 %v1061
      %v1428 = vpop.f32.mrf.mxu0
      %v1429 = vadd.f32 %v1337, %v1428
      %1430 = vmatmul.f32.gmra.mxu0 %v1064
      %v1431 = vpop.f32.mrf.mxu0
      %v1432 = vadd.f32 %v1340, %v1431
      %1433 = vmatmul.f32.gmra.mxu0 %v1067
      %v1434 = vpop.f32.mrf.mxu0
      %v1435 = vadd.f32 %v1343, %v1434
      %1436 = vmatmul.f32.gmra.mxu0 %v1070
      %v1437 = vpop.f32.mrf.mxu0
      %v1438 = vadd.f32 %v1346, %v1437
      %1439 = vmatmul.f32.gmra.mxu0 %v1073
      %v1440 = vpop.f32.mrf.mxu0
      %v1441 = vadd.f32 %v1349, %v1440
      %1442 = vmatmul.f32.gmra.mxu0 %v1076
      %v1443 = vpop.f32.mrf.mxu0
      %v1444 = vadd.f32 %v1352, %v1443
      %1445 = vmatmul.f32.gmra.mxu0 %v1079
      %v1446 = vpop.f32.mrf.mxu0
      %v1447 = vadd.f32 %v1355, %v1446
      %1448 = vmatmul.f32.gmra.mxu0 %v1082
      %v1449 = vpop.f32.mrf.mxu0
      %v1450 = vadd.f32 %v1358, %v1449
      %1451 = vmatmul.f32.gmra.mxu0 %v1085
      %v1452 = vpop.f32.mrf.mxu0
      %v1453 = vadd.f32 %v1361, %v1452
      %1454 = vmatmul.f32.gmra.mxu0 %v1088
      %v1455 = vpop.f32.mrf.mxu0
      %v1456 = vadd.f32 %v1364, %v1455
      %1457 = vmatmul.f32.gmra.mxu0 %v1091
      %v1458 = vpop.f32.mrf.mxu0
      %v1459 = vadd.f32 %v1367, %v1458
      %1460 = vmatmul.f32.gmra.mxu0 %v1094
      %v1461 = vpop.f32.mrf.mxu0
      %v1462 = vadd.f32 %v1370, %v1461
      %1463 = vmatmul.f32.gmra.mxu0 %v1097
      %v1464 = vpop.f32.mrf.mxu0
      %v1465 = vadd.f32 %v1373, %v1464
      %1466 = vmatmul.f32.gmra.mxu0 %v1100
      %v1467 = vpop.f32.mrf.mxu0
      %v1468 = vadd.f32 %v1376, %v1467
      %1469 = vdwg.mxu0
      %v1470 = vmax.f32 %v853, %v1396
      %v1471 = vmax.f32 %v856, %v1399
      %v1472 = vmax.f32 %v859, %v1402
      %v1473 = vmax.f32 %v862, %v1405
      %v1474 = vmax.f32 %v865, %v1408
      %v1475 = vmax.f32 %v868, %v1411
      %v1476 = vmax.f32 %v871, %v1414
      %v1477 = vmax.f32 %v874, %v1417
      %v1478 = vmax.f32 %v877, %v1420
      %v1479 = vmax.f32 %v880, %v1423
      %v1480 = vmax.f32 %v883, %v1426
      %v1481 = vmax.f32 %v886, %v1429
      %v1482 = vmax.f32 %v889, %v1432
      %v1483 = vmax.f32 %v892, %v1435
      %v1484 = vmax.f32 %v895, %v1438
      %v1485 = vmax.f32 %v898, %v1441
      %v1486 = vmax.f32 %v901, %v1444
      %v1487 = vmax.f32 %v904, %v1447
      %v1488 = vmax.f32 %v907, %v1450
      %v1489 = vmax.f32 %v910, %v1453
      %v1490 = vmax.f32 %v913, %v1456
      %v1491 = vmax.f32 %v916, %v1459
      %v1492 = vmax.f32 %v919, %v1462
      %v1493 = vmax.f32 %v922, %v1465
      %v1494 = vmax.f32 %v925, %v1468
      %v1495 = vld [vmem:[%s318] sm:$0xff]
      %v1496 = vld [vmem:[%s318 + $0x8] sm:$0xff]
      %v1497 = vld [vmem:[%s318 + $0x10] sm:$0xff]
      %v1498 = vld [vmem:[%s318 + $0x18] sm:$0xff]
      %v1499 = vld [vmem:[%s318 + $0x20] sm:$0xff]
      %v1500 = vld [vmem:[%s318 + $0x28] sm:$0xff]
      %v1501 = vld [vmem:[%s318 + $0x30] sm:$0xff]
      %v1502 = vld [vmem:[%s318 + $0x38] sm:$0xff]
      %v1503 = vld [vmem:[%s318 + $0x40] sm:$0xff]
      %v1504 = vld [vmem:[%s318 + $0x48] sm:$0xff]
      %v1505 = vld [vmem:[%s318 + $0x50] sm:$0xff]
      %v1506 = vld [vmem:[%s318 + $0x58] sm:$0xff]
      %v1507 = vld [vmem:[%s318 + $0x60] sm:$0xff]
      %v1508 = vld [vmem:[%s318 + $0x68] sm:$0xff]
      %v1509 = vld [vmem:[%s318 + $0x70] sm:$0xff]
      %v1510 = vld [vmem:[%s318 + $0x78] sm:$0xff]
      %v1511 = vld [vmem:[%s318 + $0x80] sm:$0xff]
      %v1512 = vld [vmem:[%s318 + $0x88] sm:$0xff]
      %v1513 = vld [vmem:[%s318 + $0x90] sm:$0xff]
      %v1514 = vld [vmem:[%s318 + $0x98] sm:$0xff]
      %v1515 = vld [vmem:[%s318 + $0xa0] sm:$0xff]
      %v1516 = vld [vmem:[%s318 + $0xa8] sm:$0xff]
      %v1517 = vld [vmem:[%s318 + $0xb0] sm:$0xff]
      %v1518 = vld [vmem:[%s318 + $0xb8] sm:$0xff]
      %v1519 = vld [vmem:[%s318 + $0xc0] sm:$0xff]
      %v1520 = vld [vmem:[%s318 + $0xc8] sm:$0xff]
      %v1521 = vld [vmem:[%s318 + $0xd0] sm:$0xff]
      %v1522 = vld [vmem:[%s318 + $0xd8] sm:$0xff]
      %v1523 = vld [vmem:[%s318 + $0xe0] sm:$0xff]
      %v1524 = vld [vmem:[%s318 + $0xe8] sm:$0xff]
      %v1525 = vld [vmem:[%s318 + $0xf0] sm:$0xff]
      %v1526 = vld [vmem:[%s318 + $0xf8] sm:$0xff]
      %v1527 = vld [vmem:[%s318 + $0x100] sm:$0xff]
      %v1528 = vld [vmem:[%s318 + $0x108] sm:$0xff]
      %v1529 = vld [vmem:[%s318 + $0x110] sm:$0xff]
      %v1530 = vld [vmem:[%s318 + $0x118] sm:$0xff]
      %v1531 = vld [vmem:[%s318 + $0x120] sm:$0xff]
      %v1532 = vld [vmem:[%s318 + $0x128] sm:$0xff]
      %v1533 = vld [vmem:[%s318 + $0x130] sm:$0xff]
      %v1534 = vld [vmem:[%s318 + $0x138] sm:$0xff]
      %v1535 = vld [vmem:[%s318 + $0x140] sm:$0xff]
      %v1536 = vld [vmem:[%s318 + $0x148] sm:$0xff]
      %v1537 = vld [vmem:[%s318 + $0x150] sm:$0xff]
      %v1538 = vld [vmem:[%s318 + $0x158] sm:$0xff]
      %v1539 = vld [vmem:[%s318 + $0x160] sm:$0xff]
      %v1540 = vld [vmem:[%s318 + $0x168] sm:$0xff]
      %v1541 = vld [vmem:[%s318 + $0x170] sm:$0xff]
      %v1542 = vld [vmem:[%s318 + $0x178] sm:$0xff]
      %v1543 = vld [vmem:[%s318 + $0x180] sm:$0xff]
      %v1544 = vld [vmem:[%s318 + $0x188] sm:$0xff]
      %v1545 = vld [vmem:[%s318 + $0x190] sm:$0xff]
      %v1546 = vld [vmem:[%s318 + $0x198] sm:$0xff]
      %v1547 = vld [vmem:[%s318 + $0x1a0] sm:$0xff]
      %v1548 = vld [vmem:[%s318 + $0x1a8] sm:$0xff]
      %v1549 = vld [vmem:[%s318 + $0x1b0] sm:$0xff]
      %v1550 = vld [vmem:[%s318 + $0x1b8] sm:$0xff]
      %v1551 = vld [vmem:[%s318 + $0x1c0] sm:$0xff]
      %v1552 = vld [vmem:[%s318 + $0x1c8] sm:$0xff]
      %v1553 = vld [vmem:[%s318 + $0x1d0] sm:$0xff]
      %v1554 = vld [vmem:[%s318 + $0x1d8] sm:$0xff]
      %v1555 = vld [vmem:[%s318 + $0x1e0] sm:$0xff]
      %v1556 = vld [vmem:[%s318 + $0x1e8] sm:$0xff]
      %v1557 = vld [vmem:[%s318 + $0x1f0] sm:$0xff]
      %v1558 = vld [vmem:[%s318 + $0x1f8] sm:$0xff]
      %v1559 = vld [vmem:[%s318 + $0x200] sm:$0xff]
      %v1560 = vld [vmem:[%s318 + $0x208] sm:$0xff]
      %v1561 = vld [vmem:[%s318 + $0x210] sm:$0xff]
      %v1562 = vld [vmem:[%s318 + $0x218] sm:$0xff]
      %v1563 = vld [vmem:[%s318 + $0x220] sm:$0xff]
      %v1564 = vld [vmem:[%s318 + $0x228] sm:$0xff]
      %v1565 = vld [vmem:[%s318 + $0x230] sm:$0xff]
      %v1566 = vld [vmem:[%s318 + $0x238] sm:$0xff]
      %v1567 = vld [vmem:[%s318 + $0x240] sm:$0xff]
      %v1568 = vld [vmem:[%s318 + $0x248] sm:$0xff]
      %v1569 = vld [vmem:[%s318 + $0x250] sm:$0xff]
      %v1570 = vld [vmem:[%s318 + $0x258] sm:$0xff]
      %v1571 = vld [vmem:[%s318 + $0x260] sm:$0xff]
      %v1572 = vld [vmem:[%s318 + $0x268] sm:$0xff]
      %v1573 = vld [vmem:[%s318 + $0x270] sm:$0xff]
      %v1574 = vld [vmem:[%s318 + $0x278] sm:$0xff]
      %v1575 = vld [vmem:[%s318 + $0x280] sm:$0xff]
      %v1576 = vld [vmem:[%s318 + $0x288] sm:$0xff]
      %v1577 = vld [vmem:[%s318 + $0x290] sm:$0xff]
      %v1578 = vld [vmem:[%s318 + $0x298] sm:$0xff]
      %v1579 = vld [vmem:[%s318 + $0x2a0] sm:$0xff]
      %v1580 = vld [vmem:[%s318 + $0x2a8] sm:$0xff]
      %v1581 = vld [vmem:[%s318 + $0x2b0] sm:$0xff]
      %v1582 = vld [vmem:[%s318 + $0x2b8] sm:$0xff]
      %v1583 = vld [vmem:[%s318 + $0x2c0] sm:$0xff]
      %v1584 = vld [vmem:[%s318 + $0x2c8] sm:$0xff]
      %v1585 = vld [vmem:[%s318 + $0x2d0] sm:$0xff]
      %v1586 = vld [vmem:[%s318 + $0x2d8] sm:$0xff]
      %v1587 = vld [vmem:[%s318 + $0x2e0] sm:$0xff]
      %v1588 = vld [vmem:[%s318 + $0x2e8] sm:$0xff]
      %v1589 = vld [vmem:[%s318 + $0x2f0] sm:$0xff]
      %v1590 = vld [vmem:[%s318 + $0x2f8] sm:$0xff]
      %v1591 = vld [vmem:[%s318 + $0x300] sm:$0xff]
      %v1592 = vld [vmem:[%s318 + $0x308] sm:$0xff]
      %v1593 = vld [vmem:[%s318 + $0x310] sm:$0xff]
      %v1594 = vld [vmem:[%s318 + $0x318] sm:$0xff]
      %v1596 = vsel %vm483, %v1498, 0
      %v1599 = vsel %vm483, %v1502, 0
      %v1602 = vsel %vm483, %v1506, 0
      %v1605 = vsel %vm483, %v1510, 0
      %v1608 = vsel %vm483, %v1514, 0
      %v1611 = vsel %vm483, %v1518, 0
      %v1614 = vsel %vm483, %v1522, 0
      %v1617 = vsel %vm483, %v1526, 0
      %v1620 = vsel %vm483, %v1530, 0
      %v1623 = vsel %vm483, %v1534, 0
      %v1626 = vsel %vm483, %v1538, 0
      %v1629 = vsel %vm483, %v1542, 0
      %v1632 = vsel %vm483, %v1546, 0
      %v1635 = vsel %vm483, %v1550, 0
      %v1638 = vsel %vm483, %v1554, 0
      %v1641 = vsel %vm483, %v1558, 0
      %v1644 = vsel %vm483, %v1562, 0
      %v1647 = vsel %vm483, %v1566, 0
      %v1650 = vsel %vm483, %v1570, 0
      %v1653 = vsel %vm483, %v1574, 0
      %v1656 = vsel %vm483, %v1578, 0
      %v1659 = vsel %vm483, %v1582, 0
      %v1662 = vsel %vm483, %v1586, 0
      %v1665 = vsel %vm483, %v1590, 0
      %v1668 = vsel %vm483, %v1594, 0
      %1670 = vmatpush.msra.mxu0 %v448
      %1671 = vmatpush.msra.mxu0 %v447
      %1672 = vmatpush.msra.mxu0 %v446
      %1673 = vmatpush.msra.mxu0 %v445
      %1674 = vmatpush.msra.mxu0 %v444
      %1675 = vmatpush.msra.mxu0 %v443
      %1676 = vmatpush.msra.mxu0 %v442
      %1677 = vmatpush.msra.mxu0 %v441
      %1678 = vmatpush.msra.mxu0 %v440
      %1679 = vmatpush.msra.mxu0 %v439
      %1680 = vmatpush.msra.mxu0 %v438
      %1681 = vmatpush.msra.mxu0 %v437
      %1682 = vmatpush.msra.mxu0 %v436
      %1683 = vmatpush.msra.mxu0 %v435
      %1684 = vmatpush.msra.mxu0 %v434
      %1685 = vmatpush.msra.mxu0 %v433
      %1686 = vmatmul.f32.gmra.mxu0 %v1495
      %v1687 = vpop.f32.mrf.mxu0
      %v1688 = vadd.f32 0.0, %v1687
      %1689 = vmatmul.f32.gmra.mxu0 %v1499
      %v1690 = vpop.f32.mrf.mxu0
      %v1691 = vadd.f32 0.0, %v1690
      %1692 = vmatmul.f32.gmra.mxu0 %v1503
      %v1693 = vpop.f32.mrf.mxu0
      %v1694 = vadd.f32 0.0, %v1693
      %1695 = vmatmul.f32.gmra.mxu0 %v1507
      %v1696 = vpop.f32.mrf.mxu0
      %v1697 = vadd.f32 0.0, %v1696
      %1698 = vmatmul.f32.gmra.mxu0 %v1511
      %v1699 = vpop.f32.mrf.mxu0
      %v1700 = vadd.f32 0.0, %v1699
      %1701 = vmatmul.f32.gmra.mxu0 %v1515
      %v1702 = vpop.f32.mrf.mxu0
      %v1703 = vadd.f32 0.0, %v1702
      %1704 = vmatmul.f32.gmra.mxu0 %v1519
      %v1705 = vpop.f32.mrf.mxu0
      %v1706 = vadd.f32 0.0, %v1705
      %1707 = vmatmul.f32.gmra.mxu0 %v1523
      %v1708 = vpop.f32.mrf.mxu0
      %v1709 = vadd.f32 0.0, %v1708
      %1710 = vmatmul.f32.gmra.mxu0 %v1527
      %v1711 = vpop.f32.mrf.mxu0
      %v1712 = vadd.f32 0.0, %v1711
      %1713 = vmatmul.f32.gmra.mxu0 %v1531
      %v1714 = vpop.f32.mrf.mxu0
      %v1715 = vadd.f32 0.0, %v1714
      %1716 = vmatmul.f32.gmra.mxu0 %v1535
      %v1717 = vpop.f32.mrf.mxu0
      %v1718 = vadd.f32 0.0, %v1717
      %1719 = vmatmul.f32.gmra.mxu0 %v1539
      %v1720 = vpop.f32.mrf.mxu0
      %v1721 = vadd.f32 0.0, %v1720
      %1722 = vmatmul.f32.gmra.mxu0 %v1543
      %v1723 = vpop.f32.mrf.mxu0
      %v1724 = vadd.f32 0.0, %v1723
      %1725 = vmatmul.f32.gmra.mxu0 %v1547
      %v1726 = vpop.f32.mrf.mxu0
      %v1727 = vadd.f32 0.0, %v1726
      %1728 = vmatmul.f32.gmra.mxu0 %v1551
      %v1729 = vpop.f32.mrf.mxu0
      %v1730 = vadd.f32 0.0, %v1729
      %1731 = vmatmul.f32.gmra.mxu0 %v1555
      %v1732 = vpop.f32.mrf.mxu0
      %v1733 = vadd.f32 0.0, %v1732
      %1734 = vmatmul.f32.gmra.mxu0 %v1559
      %v1735 = vpop.f32.mrf.mxu0
      %v1736 = vadd.f32 0.0, %v1735
      %1737 = vmatmul.f32.gmra.mxu0 %v1563
      %v1738 = vpop.f32.mrf.mxu0
      %v1739 = vadd.f32 0.0, %v1738
      %1740 = vmatmul.f32.gmra.mxu0 %v1567
      %v1741 = vpop.f32.mrf.mxu0
      %v1742 = vadd.f32 0.0, %v1741
      %1743 = vmatmul.f32.gmra.mxu0 %v1571
      %v1744 = vpop.f32.mrf.mxu0
      %v1745 = vadd.f32 0.0, %v1744
      %1746 = vmatmul.f32.gmra.mxu0 %v1575
      %v1747 = vpop.f32.mrf.mxu0
      %v1748 = vadd.f32 0.0, %v1747
      %1749 = vmatmul.f32.gmra.mxu0 %v1579
      %v1750 = vpop.f32.mrf.mxu0
      %v1751 = vadd.f32 0.0, %v1750
      %1752 = vmatmul.f32.gmra.mxu0 %v1583
      %v1753 = vpop.f32.mrf.mxu0
      %v1754 = vadd.f32 0.0, %v1753
      %1755 = vmatmul.f32.gmra.mxu0 %v1587
      %v1756 = vpop.f32.mrf.mxu0
      %v1757 = vadd.f32 0.0, %v1756
      %1758 = vmatmul.f32.gmra.mxu0 %v1591
      %v1759 = vpop.f32.mrf.mxu0
      %v1760 = vadd.f32 0.0, %v1759
      %1761 = vdwg.mxu0
      %1762 = vmatpush.msra.mxu0 %v464
      %1763 = vmatpush.msra.mxu0 %v463
      %1764 = vmatpush.msra.mxu0 %v462
      %1765 = vmatpush.msra.mxu0 %v461
      %1766 = vmatpush.msra.mxu0 %v460
      %1767 = vmatpush.msra.mxu0 %v459
      %1768 = vmatpush.msra.mxu0 %v458
      %1769 = vmatpush.msra.mxu0 %v457
      %1770 = vmatpush.msra.mxu0 %v456
      %1771 = vmatpush.msra.mxu0 %v455
      %1772 = vmatpush.msra.mxu0 %v454
      %1773 = vmatpush.msra.mxu0 %v453
      %1774 = vmatpush.msra.mxu0 %v452
      %1775 = vmatpush.msra.mxu0 %v451
      %1776 = vmatpush.msra.mxu0 %v450
      %1777 = vmatpush.msra.mxu0 %v449
      %1778 = vmatmul.f32.gmra.mxu0 %v1496
      %v1779 = vpop.f32.mrf.mxu0
      %v1780 = vadd.f32 %v1688, %v1779
      %1781 = vmatmul.f32.gmra.mxu0 %v1500
      %v1782 = vpop.f32.mrf.mxu0
      %v1783 = vadd.f32 %v1691, %v1782
      %1784 = vmatmul.f32.gmra.mxu0 %v1504
      %v1785 = vpop.f32.mrf.mxu0
      %v1786 = vadd.f32 %v1694, %v1785
      %1787 = vmatmul.f32.gmra.mxu0 %v1508
      %v1788 = vpop.f32.mrf.mxu0
      %v1789 = vadd.f32 %v1697, %v1788
      %1790 = vmatmul.f32.gmra.mxu0 %v1512
      %v1791 = vpop.f32.mrf.mxu0
      %v1792 = vadd.f32 %v1700, %v1791
      %1793 = vmatmul.f32.gmra.mxu0 %v1516
      %v1794 = vpop.f32.mrf.mxu0
      %v1795 = vadd.f32 %v1703, %v1794
      %1796 = vmatmul.f32.gmra.mxu0 %v1520
      %v1797 = vpop.f32.mrf.mxu0
      %v1798 = vadd.f32 %v1706, %v1797
      %1799 = vmatmul.f32.gmra.mxu0 %v1524
      %v1800 = vpop.f32.mrf.mxu0
      %v1801 = vadd.f32 %v1709, %v1800
      %1802 = vmatmul.f32.gmra.mxu0 %v1528
      %v1803 = vpop.f32.mrf.mxu0
      %v1804 = vadd.f32 %v1712, %v1803
      %1805 = vmatmul.f32.gmra.mxu0 %v1532
      %v1806 = vpop.f32.mrf.mxu0
      %v1807 = vadd.f32 %v1715, %v1806
      %1808 = vmatmul.f32.gmra.mxu0 %v1536
      %v1809 = vpop.f32.mrf.mxu0
      %v1810 = vadd.f32 %v1718, %v1809
      %1811 = vmatmul.f32.gmra.mxu0 %v1540
      %v1812 = vpop.f32.mrf.mxu0
      %v1813 = vadd.f32 %v1721, %v1812
      %1814 = vmatmul.f32.gmra.mxu0 %v1544
      %v1815 = vpop.f32.mrf.mxu0
      %v1816 = vadd.f32 %v1724, %v1815
      %1817 = vmatmul.f32.gmra.mxu0 %v1548
      %v1818 = vpop.f32.mrf.mxu0
      %v1819 = vadd.f32 %v1727, %v1818
      %1820 = vmatmul.f32.gmra.mxu0 %v1552
      %v1821 = vpop.f32.mrf.mxu0
      %v1822 = vadd.f32 %v1730, %v1821
      %1823 = vmatmul.f32.gmra.mxu0 %v1556
      %v1824 = vpop.f32.mrf.mxu0
      %v1825 = vadd.f32 %v1733, %v1824
      %1826 = vmatmul.f32.gmra.mxu0 %v1560
      %v1827 = vpop.f32.mrf.mxu0
      %v1828 = vadd.f32 %v1736, %v1827
      %1829 = vmatmul.f32.gmra.mxu0 %v1564
      %v1830 = vpop.f32.mrf.mxu0
      %v1831 = vadd.f32 %v1739, %v1830
      %1832 = vmatmul.f32.gmra.mxu0 %v1568
      %v1833 = vpop.f32.mrf.mxu0
      %v1834 = vadd.f32 %v1742, %v1833
      %1835 = vmatmul.f32.gmra.mxu0 %v1572
      %v1836 = vpop.f32.mrf.mxu0
      %v1837 = vadd.f32 %v1745, %v1836
      %1838 = vmatmul.f32.gmra.mxu0 %v1576
      %v1839 = vpop.f32.mrf.mxu0
      %v1840 = vadd.f32 %v1748, %v1839
      %1841 = vmatmul.f32.gmra.mxu0 %v1580
      %v1842 = vpop.f32.mrf.mxu0
      %v1843 = vadd.f32 %v1751, %v1842
      %1844 = vmatmul.f32.gmra.mxu0 %v1584
      %v1845 = vpop.f32.mrf.mxu0
      %v1846 = vadd.f32 %v1754, %v1845
      %1847 = vmatmul.f32.gmra.mxu0 %v1588
      %v1848 = vpop.f32.mrf.mxu0
      %v1849 = vadd.f32 %v1757, %v1848
      %1850 = vmatmul.f32.gmra.mxu0 %v1592
      %v1851 = vpop.f32.mrf.mxu0
      %v1852 = vadd.f32 %v1760, %v1851
      %1853 = vdwg.mxu0
      %1854 = vmatpush.msra.mxu0 %v480
      %1855 = vmatpush.msra.mxu0 %v479
      %1856 = vmatpush.msra.mxu0 %v478
      %1857 = vmatpush.msra.mxu0 %v477
      %1858 = vmatpush.msra.mxu0 %v476
      %1859 = vmatpush.msra.mxu0 %v475
      %1860 = vmatpush.msra.mxu0 %v474
      %1861 = vmatpush.msra.mxu0 %v473
      %1862 = vmatpush.msra.mxu0 %v472
      %1863 = vmatpush.msra.mxu0 %v471
      %1864 = vmatpush.msra.mxu0 %v470
      %1865 = vmatpush.msra.mxu0 %v469
      %1866 = vmatpush.msra.mxu0 %v468
      %1867 = vmatpush.msra.mxu0 %v467
      %1868 = vmatpush.msra.mxu0 %v466
      %1869 = vmatpush.msra.mxu0 %v465
      %1870 = vmatmul.f32.gmra.mxu0 %v1497
      %v1871 = vpop.f32.mrf.mxu0
      %v1872 = vadd.f32 %v1780, %v1871
      %1873 = vmatmul.f32.gmra.mxu0 %v1501
      %v1874 = vpop.f32.mrf.mxu0
      %v1875 = vadd.f32 %v1783, %v1874
      %1876 = vmatmul.f32.gmra.mxu0 %v1505
      %v1877 = vpop.f32.mrf.mxu0
      %v1878 = vadd.f32 %v1786, %v1877
      %1879 = vmatmul.f32.gmra.mxu0 %v1509
      %v1880 = vpop.f32.mrf.mxu0
      %v1881 = vadd.f32 %v1789, %v1880
      %1882 = vmatmul.f32.gmra.mxu0 %v1513
      %v1883 = vpop.f32.mrf.mxu0
      %v1884 = vadd.f32 %v1792, %v1883
      %1885 = vmatmul.f32.gmra.mxu0 %v1517
      %v1886 = vpop.f32.mrf.mxu0
      %v1887 = vadd.f32 %v1795, %v1886
      %1888 = vmatmul.f32.gmra.mxu0 %v1521
      %v1889 = vpop.f32.mrf.mxu0
      %v1890 = vadd.f32 %v1798, %v1889
      %1891 = vmatmul.f32.gmra.mxu0 %v1525
      %v1892 = vpop.f32.mrf.mxu0
      %v1893 = vadd.f32 %v1801, %v1892
      %1894 = vmatmul.f32.gmra.mxu0 %v1529
      %v1895 = vpop.f32.mrf.mxu0
      %v1896 = vadd.f32 %v1804, %v1895
      %1897 = vmatmul.f32.gmra.mxu0 %v1533
      %v1898 = vpop.f32.mrf.mxu0
      %v1899 = vadd.f32 %v1807, %v1898
      %1900 = vmatmul.f32.gmra.mxu0 %v1537
      %v1901 = vpop.f32.mrf.mxu0
      %v1902 = vadd.f32 %v1810, %v1901
      %1903 = vmatmul.f32.gmra.mxu0 %v1541
      %v1904 = vpop.f32.mrf.mxu0
      %v1905 = vadd.f32 %v1813, %v1904
      %1906 = vmatmul.f32.gmra.mxu0 %v1545
      %v1907 = vpop.f32.mrf.mxu0
      %v1908 = vadd.f32 %v1816, %v1907
      %1909 = vmatmul.f32.gmra.mxu0 %v1549
      %v1910 = vpop.f32.mrf.mxu0
      %v1911 = vadd.f32 %v1819, %v1910
      %1912 = vmatmul.f32.gmra.mxu0 %v1553
      %v1913 = vpop.f32.mrf.mxu0
      %v1914 = vadd.f32 %v1822, %v1913
      %1915 = vmatmul.f32.gmra.mxu0 %v1557
      %v1916 = vpop.f32.mrf.mxu0
      %v1917 = vadd.f32 %v1825, %v1916
      %1918 = vmatmul.f32.gmra.mxu0 %v1561
      %v1919 = vpop.f32.mrf.mxu0
      %v1920 = vadd.f32 %v1828, %v1919
      %1921 = vmatmul.f32.gmra.mxu0 %v1565
      %v1922 = vpop.f32.mrf.mxu0
      %v1923 = vadd.f32 %v1831, %v1922
      %1924 = vmatmul.f32.gmra.mxu0 %v1569
      %v1925 = vpop.f32.mrf.mxu0
      %v1926 = vadd.f32 %v1834, %v1925
      %1927 = vmatmul.f32.gmra.mxu0 %v1573
      %v1928 = vpop.f32.mrf.mxu0
      %v1929 = vadd.f32 %v1837, %v1928
      %1930 = vmatmul.f32.gmra.mxu0 %v1577
      %v1931 = vpop.f32.mrf.mxu0
      %v1932 = vadd.f32 %v1840, %v1931
      %1933 = vmatmul.f32.gmra.mxu0 %v1581
      %v1934 = vpop.f32.mrf.mxu0
      %v1935 = vadd.f32 %v1843, %v1934
      %1936 = vmatmul.f32.gmra.mxu0 %v1585
      %v1937 = vpop.f32.mrf.mxu0
      %v1938 = vadd.f32 %v1846, %v1937
      %1939 = vmatmul.f32.gmra.mxu0 %v1589
      %v1940 = vpop.f32.mrf.mxu0
      %v1941 = vadd.f32 %v1849, %v1940
      %1942 = vmatmul.f32.gmra.mxu0 %v1593
      %v1943 = vpop.f32.mrf.mxu0
      %v1944 = vadd.f32 %v1852, %v1943
      %1945 = vdwg.mxu0
      %1946 = vmatpush.msra.mxu0 0.0
      %1947 = vmatpush.msra.mxu0 0.0
      %1948 = vmatpush.msra.mxu0 0.0
      %1949 = vmatpush.msra.mxu0 0.0
      %1950 = vmatpush.msra.mxu0 0.0
      %1951 = vmatpush.msra.mxu0 0.0
      %1952 = vmatpush.msra.mxu0 0.0
      %1953 = vmatpush.msra.mxu0 0.0
      %1954 = vmatpush.msra.mxu0 0.0
      %1955 = vmatpush.msra.mxu0 0.0
      %1956 = vmatpush.msra.mxu0 0.0
      %1957 = vmatpush.msra.mxu0 0.0
      %1958 = vmatpush.msra.mxu0 0.0
      %1959 = vmatpush.msra.mxu0 0.0
      %1960 = vmatpush.msra.mxu0 %v482
      %1961 = vmatpush.msra.mxu0 %v481
      %1962 = vmatmul.f32.gmra.mxu0 %v1596
      %v1963 = vpop.f32.mrf.mxu0
      %v1964 = vadd.f32 %v1872, %v1963
      %1965 = vmatmul.f32.gmra.mxu0 %v1599
      %v1966 = vpop.f32.mrf.mxu0
      %v1967 = vadd.f32 %v1875, %v1966
      %1968 = vmatmul.f32.gmra.mxu0 %v1602
      %v1969 = vpop.f32.mrf.mxu0
      %v1970 = vadd.f32 %v1878, %v1969
      %1971 = vmatmul.f32.gmra.mxu0 %v1605
      %v1972 = vpop.f32.mrf.mxu0
      %v1973 = vadd.f32 %v1881, %v1972
      %1974 = vmatmul.f32.gmra.mxu0 %v1608
      %v1975 = vpop.f32.mrf.mxu0
      %v1976 = vadd.f32 %v1884, %v1975
      %1977 = vmatmul.f32.gmra.mxu0 %v1611
      %v1978 = vpop.f32.mrf.mxu0
      %v1979 = vadd.f32 %v1887, %v1978
      %1980 = vmatmul.f32.gmra.mxu0 %v1614
      %v1981 = vpop.f32.mrf.mxu0
      %v1982 = vadd.f32 %v1890, %v1981
      %1983 = vmatmul.f32.gmra.mxu0 %v1617
      %v1984 = vpop.f32.mrf.mxu0
      %v1985 = vadd.f32 %v1893, %v1984
      %1986 = vmatmul.f32.gmra.mxu0 %v1620
      %v1987 = vpop.f32.mrf.mxu0
      %v1988 = vadd.f32 %v1896, %v1987
      %1989 = vmatmul.f32.gmra.mxu0 %v1623
      %v1990 = vpop.f32.mrf.mxu0
      %v1991 = vadd.f32 %v1899, %v1990
      %1992 = vmatmul.f32.gmra.mxu0 %v1626
      %v1993 = vpop.f32.mrf.mxu0
      %v1994 = vadd.f32 %v1902, %v1993
      %1995 = vmatmul.f32.gmra.mxu0 %v1629
      %v1996 = vpop.f32.mrf.mxu0
      %v1997 = vadd.f32 %v1905, %v1996
      %1998 = vmatmul.f32.gmra.mxu0 %v1632
      %v1999 = vpop.f32.mrf.mxu0
      %v2000 = vadd.f32 %v1908, %v1999
      %2001 = vmatmul.f32.gmra.mxu0 %v1635
      %v2002 = vpop.f32.mrf.mxu0
      %v2003 = vadd.f32 %v1911, %v2002
      %2004 = vmatmul.f32.gmra.mxu0 %v1638
      %v2005 = vpop.f32.mrf.mxu0
      %v2006 = vadd.f32 %v1914, %v2005
      %2007 = vmatmul.f32.gmra.mxu0 %v1641
      %v2008 = vpop.f32.mrf.mxu0
      %v2009 = vadd.f32 %v1917, %v2008
      %2010 = vmatmul.f32.gmra.mxu0 %v1644
      %v2011 = vpop.f32.mrf.mxu0
      %v2012 = vadd.f32 %v1920, %v2011
      %2013 = vmatmul.f32.gmra.mxu0 %v1647
      %v2014 = vpop.f32.mrf.mxu0
      %v2015 = vadd.f32 %v1923, %v2014
      %2016 = vmatmul.f32.gmra.mxu0 %v1650
      %v2017 = vpop.f32.mrf.mxu0
      %v2018 = vadd.f32 %v1926, %v2017
      %2019 = vmatmul.f32.gmra.mxu0 %v1653
      %v2020 = vpop.f32.mrf.mxu0
      %v2021 = vadd.f32 %v1929, %v2020
      %2022 = vmatmul.f32.gmra.mxu0 %v1656
      %v2023 = vpop.f32.mrf.mxu0
      %v2024 = vadd.f32 %v1932, %v2023
      %2025 = vmatmul.f32.gmra.mxu0 %v1659
      %v2026 = vpop.f32.mrf.mxu0
      %v2027 = vadd.f32 %v1935, %v2026
      %2028 = vmatmul.f32.gmra.mxu0 %v1662
      %v2029 = vpop.f32.mrf.mxu0
      %v2030 = vadd.f32 %v1938, %v2029
      %2031 = vmatmul.f32.gmra.mxu0 %v1665
      %v2032 = vpop.f32.mrf.mxu0
      %v2033 = vadd.f32 %v1941, %v2032
      %2034 = vmatmul.f32.gmra.mxu0 %v1668
      %v2035 = vpop.f32.mrf.mxu0
      %v2036 = vadd.f32 %v1944, %v2035
      %2037 = vdwg.mxu0
      %v2038 = vmax.f32 %v1470, %v1964
      %v2039 = vmax.f32 %v1471, %v1967
      %v2040 = vmax.f32 %v1472, %v1970
      %v2041 = vmax.f32 %v1473, %v1973
      %v2042 = vmax.f32 %v1474, %v1976
      %v2043 = vmax.f32 %v1475, %v1979
      %v2044 = vmax.f32 %v1476, %v1982
      %v2045 = vmax.f32 %v1477, %v1985
      %v2046 = vmax.f32 %v1478, %v1988
      %v2047 = vmax.f32 %v1479, %v1991
      %v2048 = vmax.f32 %v1480, %v1994
      %v2049 = vmax.f32 %v1481, %v1997
      %v2050 = vmax.f32 %v1482, %v2000
      %v2051 = vmax.f32 %v1483, %v2003
      %v2052 = vmax.f32 %v1484, %v2006
      %v2053 = vmax.f32 %v1485, %v2009
      %v2054 = vmax.f32 %v1486, %v2012
      %v2055 = vmax.f32 %v1487, %v2015
      %v2056 = vmax.f32 %v1488, %v2018
      %v2057 = vmax.f32 %v1489, %v2021
      %v2058 = vmax.f32 %v1490, %v2024
      %v2059 = vmax.f32 %v1491, %v2027
      %v2060 = vmax.f32 %v1492, %v2030
      %v2061 = vmax.f32 %v1493, %v2033
      %v2062 = vmax.f32 %v1494, %v2036
      %v2063 = vld [vmem:[%s325] sm:$0xff]
      %v2064 = vld [vmem:[%s325 + $0x8] sm:$0xff]
      %v2065 = vld [vmem:[%s325 + $0x10] sm:$0xff]
      %v2066 = vld [vmem:[%s325 + $0x18] sm:$0xff]
      %v2067 = vld [vmem:[%s325 + $0x20] sm:$0xff]
      %v2068 = vld [vmem:[%s325 + $0x28] sm:$0xff]
      %v2069 = vld [vmem:[%s325 + $0x30] sm:$0xff]
      %v2070 = vld [vmem:[%s325 + $0x38] sm:$0xff]
      %v2071 = vld [vmem:[%s325 + $0x40] sm:$0xff]
      %v2072 = vld [vmem:[%s325 + $0x48] sm:$0xff]
      %v2073 = vld [vmem:[%s325 + $0x50] sm:$0xff]
      %v2074 = vld [vmem:[%s325 + $0x58] sm:$0xff]
      %v2075 = vld [vmem:[%s325 + $0x60] sm:$0xff]
      %v2076 = vld [vmem:[%s325 + $0x68] sm:$0xff]
      %v2077 = vld [vmem:[%s325 + $0x70] sm:$0xff]
      %v2078 = vld [vmem:[%s325 + $0x78] sm:$0xff]
      %v2079 = vld [vmem:[%s325 + $0x80] sm:$0xff]
      %v2080 = vld [vmem:[%s325 + $0x88] sm:$0xff]
      %v2081 = vld [vmem:[%s325 + $0x90] sm:$0xff]
      %v2082 = vld [vmem:[%s325 + $0x98] sm:$0xff]
      %v2083 = vld [vmem:[%s325 + $0xa0] sm:$0xff]
      %v2084 = vld [vmem:[%s325 + $0xa8] sm:$0xff]
      %v2085 = vld [vmem:[%s325 + $0xb0] sm:$0xff]
      %v2086 = vld [vmem:[%s325 + $0xb8] sm:$0xff]
      %v2087 = vld [vmem:[%s325 + $0xc0] sm:$0xff]
      %v2088 = vld [vmem:[%s325 + $0xc8] sm:$0xff]
      %v2089 = vld [vmem:[%s325 + $0xd0] sm:$0xff]
      %v2090 = vld [vmem:[%s325 + $0xd8] sm:$0xff]
      %v2091 = vld [vmem:[%s325 + $0xe0] sm:$0xff]
      %v2092 = vld [vmem:[%s325 + $0xe8] sm:$0xff]
      %v2093 = vld [vmem:[%s325 + $0xf0] sm:$0xff]
      %v2094 = vld [vmem:[%s325 + $0xf8] sm:$0xff]
      %v2095 = vld [vmem:[%s325 + $0x100] sm:$0xff]
      %v2096 = vld [vmem:[%s325 + $0x108] sm:$0xff]
      %v2097 = vld [vmem:[%s325 + $0x110] sm:$0xff]
      %v2098 = vld [vmem:[%s325 + $0x118] sm:$0xff]
      %v2099 = vld [vmem:[%s325 + $0x120] sm:$0xff]
      %v2100 = vld [vmem:[%s325 + $0x128] sm:$0xff]
      %v2101 = vld [vmem:[%s325 + $0x130] sm:$0xff]
      %v2102 = vld [vmem:[%s325 + $0x138] sm:$0xff]
      %v2103 = vld [vmem:[%s325 + $0x140] sm:$0xff]
      %v2104 = vld [vmem:[%s325 + $0x148] sm:$0xff]
      %v2105 = vld [vmem:[%s325 + $0x150] sm:$0xff]
      %v2106 = vld [vmem:[%s325 + $0x158] sm:$0xff]
      %v2107 = vld [vmem:[%s325 + $0x160] sm:$0xff]
      %v2108 = vld [vmem:[%s325 + $0x168] sm:$0xff]
      %v2109 = vld [vmem:[%s325 + $0x170] sm:$0xff]
      %v2110 = vld [vmem:[%s325 + $0x178] sm:$0xff]
      %v2111 = vld [vmem:[%s325 + $0x180] sm:$0xff]
      %v2112 = vld [vmem:[%s325 + $0x188] sm:$0xff]
      %v2113 = vld [vmem:[%s325 + $0x190] sm:$0xff]
      %v2114 = vld [vmem:[%s325 + $0x198] sm:$0xff]
      %v2115 = vld [vmem:[%s325 + $0x1a0] sm:$0xff]
      %v2116 = vld [vmem:[%s325 + $0x1a8] sm:$0xff]
      %v2117 = vld [vmem:[%s325 + $0x1b0] sm:$0xff]
      %v2118 = vld [vmem:[%s325 + $0x1b8] sm:$0xff]
      %v2119 = vld [vmem:[%s325 + $0x1c0] sm:$0xff]
      %v2120 = vld [vmem:[%s325 + $0x1c8] sm:$0xff]
      %v2121 = vld [vmem:[%s325 + $0x1d0] sm:$0xff]
      %v2122 = vld [vmem:[%s325 + $0x1d8] sm:$0xff]
      %v2123 = vld [vmem:[%s325 + $0x1e0] sm:$0xff]
      %v2124 = vld [vmem:[%s325 + $0x1e8] sm:$0xff]
      %v2125 = vld [vmem:[%s325 + $0x1f0] sm:$0xff]
      %v2126 = vld [vmem:[%s325 + $0x1f8] sm:$0xff]
      %v2127 = vld [vmem:[%s325 + $0x200] sm:$0xff]
      %v2128 = vld [vmem:[%s325 + $0x208] sm:$0xff]
      %v2129 = vld [vmem:[%s325 + $0x210] sm:$0xff]
      %v2130 = vld [vmem:[%s325 + $0x218] sm:$0xff]
      %v2131 = vld [vmem:[%s325 + $0x220] sm:$0xff]
      %v2132 = vld [vmem:[%s325 + $0x228] sm:$0xff]
      %v2133 = vld [vmem:[%s325 + $0x230] sm:$0xff]
      %v2134 = vld [vmem:[%s325 + $0x238] sm:$0xff]
      %v2135 = vld [vmem:[%s325 + $0x240] sm:$0xff]
      %v2136 = vld [vmem:[%s325 + $0x248] sm:$0xff]
      %v2137 = vld [vmem:[%s325 + $0x250] sm:$0xff]
      %v2138 = vld [vmem:[%s325 + $0x258] sm:$0xff]
      %v2139 = vld [vmem:[%s325 + $0x260] sm:$0xff]
      %v2140 = vld [vmem:[%s325 + $0x268] sm:$0xff]
      %v2141 = vld [vmem:[%s325 + $0x270] sm:$0xff]
      %v2142 = vld [vmem:[%s325 + $0x278] sm:$0xff]
      %v2143 = vld [vmem:[%s325 + $0x280] sm:$0xff]
      %v2144 = vld [vmem:[%s325 + $0x288] sm:$0xff]
      %v2145 = vld [vmem:[%s325 + $0x290] sm:$0xff]
      %v2146 = vld [vmem:[%s325 + $0x298] sm:$0xff]
      %v2147 = vld [vmem:[%s325 + $0x2a0] sm:$0xff]
      %v2148 = vld [vmem:[%s325 + $0x2a8] sm:$0xff]
      %v2149 = vld [vmem:[%s325 + $0x2b0] sm:$0xff]
      %v2150 = vld [vmem:[%s325 + $0x2b8] sm:$0xff]
      %v2151 = vld [vmem:[%s325 + $0x2c0] sm:$0xff]
      %v2152 = vld [vmem:[%s325 + $0x2c8] sm:$0xff]
      %v2153 = vld [vmem:[%s325 + $0x2d0] sm:$0xff]
      %v2154 = vld [vmem:[%s325 + $0x2d8] sm:$0xff]
      %v2155 = vld [vmem:[%s325 + $0x2e0] sm:$0xff]
      %v2156 = vld [vmem:[%s325 + $0x2e8] sm:$0xff]
      %v2157 = vld [vmem:[%s325 + $0x2f0] sm:$0xff]
      %v2158 = vld [vmem:[%s325 + $0x2f8] sm:$0xff]
      %v2159 = vld [vmem:[%s325 + $0x300] sm:$0xff]
      %v2160 = vld [vmem:[%s325 + $0x308] sm:$0xff]
      %v2161 = vld [vmem:[%s325 + $0x310] sm:$0xff]
      %v2162 = vld [vmem:[%s325 + $0x318] sm:$0xff]
      %v2164 = vsel %vm483, %v2066, 0
      %v2167 = vsel %vm483, %v2070, 0
      %v2170 = vsel %vm483, %v2074, 0
      %v2173 = vsel %vm483, %v2078, 0
      %v2176 = vsel %vm483, %v2082, 0
      %v2179 = vsel %vm483, %v2086, 0
      %v2182 = vsel %vm483, %v2090, 0
      %v2185 = vsel %vm483, %v2094, 0
      %v2188 = vsel %vm483, %v2098, 0
      %v2191 = vsel %vm483, %v2102, 0
      %v2194 = vsel %vm483, %v2106, 0
      %v2197 = vsel %vm483, %v2110, 0
      %v2200 = vsel %vm483, %v2114, 0
      %v2203 = vsel %vm483, %v2118, 0
      %v2206 = vsel %vm483, %v2122, 0
      %v2209 = vsel %vm483, %v2126, 0
      %v2212 = vsel %vm483, %v2130, 0
      %v2215 = vsel %vm483, %v2134, 0
      %v2218 = vsel %vm483, %v2138, 0
      %v2221 = vsel %vm483, %v2142, 0
      %v2224 = vsel %vm483, %v2146, 0
      %v2227 = vsel %vm483, %v2150, 0
      %v2230 = vsel %vm483, %v2154, 0
      %v2233 = vsel %vm483, %v2158, 0
      %v2236 = vsel %vm483, %v2162, 0
      %2238 = vmatpush.msra.mxu0 %v448
      %2239 = vmatpush.msra.mxu0 %v447
      %2240 = vmatpush.msra.mxu0 %v446
      %2241 = vmatpush.msra.mxu0 %v445
      %2242 = vmatpush.msra.mxu0 %v444
      %2243 = vmatpush.msra.mxu0 %v443
      %2244 = vmatpush.msra.mxu0 %v442
      %2245 = vmatpush.msra.mxu0 %v441
      %2246 = vmatpush.msra.mxu0 %v440
      %2247 = vmatpush.msra.mxu0 %v439
      %2248 = vmatpush.msra.mxu0 %v438
      %2249 = vmatpush.msra.mxu0 %v437
      %2250 = vmatpush.msra.mxu0 %v436
      %2251 = vmatpush.msra.mxu0 %v435
      %2252 = vmatpush.msra.mxu0 %v434
      %2253 = vmatpush.msra.mxu0 %v433
      %2254 = vmatmul.f32.gmra.mxu0 %v2063
      %v2255 = vpop.f32.mrf.mxu0
      %v2256 = vadd.f32 0.0, %v2255
      %2257 = vmatmul.f32.gmra.mxu0 %v2067
      %v2258 = vpop.f32.mrf.mxu0
      %v2259 = vadd.f32 0.0, %v2258
      %2260 = vmatmul.f32.gmra.mxu0 %v2071
      %v2261 = vpop.f32.mrf.mxu0
      %v2262 = vadd.f32 0.0, %v2261
      %2263 = vmatmul.f32.gmra.mxu0 %v2075
      %v2264 = vpop.f32.mrf.mxu0
      %v2265 = vadd.f32 0.0, %v2264
      %2266 = vmatmul.f32.gmra.mxu0 %v2079
      %v2267 = vpop.f32.mrf.mxu0
      %v2268 = vadd.f32 0.0, %v2267
      %2269 = vmatmul.f32.gmra.mxu0 %v2083
      %v2270 = vpop.f32.mrf.mxu0
      %v2271 = vadd.f32 0.0, %v2270
      %2272 = vmatmul.f32.gmra.mxu0 %v2087
      %v2273 = vpop.f32.mrf.mxu0
      %v2274 = vadd.f32 0.0, %v2273
      %2275 = vmatmul.f32.gmra.mxu0 %v2091
      %v2276 = vpop.f32.mrf.mxu0
      %v2277 = vadd.f32 0.0, %v2276
      %2278 = vmatmul.f32.gmra.mxu0 %v2095
      %v2279 = vpop.f32.mrf.mxu0
      %v2280 = vadd.f32 0.0, %v2279
      %2281 = vmatmul.f32.gmra.mxu0 %v2099
      %v2282 = vpop.f32.mrf.mxu0
      %v2283 = vadd.f32 0.0, %v2282
      %2284 = vmatmul.f32.gmra.mxu0 %v2103
      %v2285 = vpop.f32.mrf.mxu0
      %v2286 = vadd.f32 0.0, %v2285
      %2287 = vmatmul.f32.gmra.mxu0 %v2107
      %v2288 = vpop.f32.mrf.mxu0
      %v2289 = vadd.f32 0.0, %v2288
      %2290 = vmatmul.f32.gmra.mxu0 %v2111
      %v2291 = vpop.f32.mrf.mxu0
      %v2292 = vadd.f32 0.0, %v2291
      %2293 = vmatmul.f32.gmra.mxu0 %v2115
      %v2294 = vpop.f32.mrf.mxu0
      %v2295 = vadd.f32 0.0, %v2294
      %2296 = vmatmul.f32.gmra.mxu0 %v2119
      %v2297 = vpop.f32.mrf.mxu0
      %v2298 = vadd.f32 0.0, %v2297
      %2299 = vmatmul.f32.gmra.mxu0 %v2123
      %v2300 = vpop.f32.mrf.mxu0
      %v2301 = vadd.f32 0.0, %v2300
      %2302 = vmatmul.f32.gmra.mxu0 %v2127
      %v2303 = vpop.f32.mrf.mxu0
      %v2304 = vadd.f32 0.0, %v2303
      %2305 = vmatmul.f32.gmra.mxu0 %v2131
      %v2306 = vpop.f32.mrf.mxu0
      %v2307 = vadd.f32 0.0, %v2306
      %2308 = vmatmul.f32.gmra.mxu0 %v2135
      %v2309 = vpop.f32.mrf.mxu0
      %v2310 = vadd.f32 0.0, %v2309
      %2311 = vmatmul.f32.gmra.mxu0 %v2139
      %v2312 = vpop.f32.mrf.mxu0
      %v2313 = vadd.f32 0.0, %v2312
      %2314 = vmatmul.f32.gmra.mxu0 %v2143
      %v2315 = vpop.f32.mrf.mxu0
      %v2316 = vadd.f32 0.0, %v2315
      %2317 = vmatmul.f32.gmra.mxu0 %v2147
      %v2318 = vpop.f32.mrf.mxu0
      %v2319 = vadd.f32 0.0, %v2318
      %2320 = vmatmul.f32.gmra.mxu0 %v2151
      %v2321 = vpop.f32.mrf.mxu0
      %v2322 = vadd.f32 0.0, %v2321
      %2323 = vmatmul.f32.gmra.mxu0 %v2155
      %v2324 = vpop.f32.mrf.mxu0
      %v2325 = vadd.f32 0.0, %v2324
      %2326 = vmatmul.f32.gmra.mxu0 %v2159
      %v2327 = vpop.f32.mrf.mxu0
      %v2328 = vadd.f32 0.0, %v2327
      %2329 = vdwg.mxu0
      %2330 = vmatpush.msra.mxu0 %v464
      %2331 = vmatpush.msra.mxu0 %v463
      %2332 = vmatpush.msra.mxu0 %v462
      %2333 = vmatpush.msra.mxu0 %v461
      %2334 = vmatpush.msra.mxu0 %v460
      %2335 = vmatpush.msra.mxu0 %v459
      %2336 = vmatpush.msra.mxu0 %v458
      %2337 = vmatpush.msra.mxu0 %v457
      %2338 = vmatpush.msra.mxu0 %v456
      %2339 = vmatpush.msra.mxu0 %v455
      %2340 = vmatpush.msra.mxu0 %v454
      %2341 = vmatpush.msra.mxu0 %v453
      %2342 = vmatpush.msra.mxu0 %v452
      %2343 = vmatpush.msra.mxu0 %v451
      %2344 = vmatpush.msra.mxu0 %v450
      %2345 = vmatpush.msra.mxu0 %v449
      %2346 = vmatmul.f32.gmra.mxu0 %v2064
      %v2347 = vpop.f32.mrf.mxu0
      %v2348 = vadd.f32 %v2256, %v2347
      %2349 = vmatmul.f32.gmra.mxu0 %v2068
      %v2350 = vpop.f32.mrf.mxu0
      %v2351 = vadd.f32 %v2259, %v2350
      %2352 = vmatmul.f32.gmra.mxu0 %v2072
      %v2353 = vpop.f32.mrf.mxu0
      %v2354 = vadd.f32 %v2262, %v2353
      %2355 = vmatmul.f32.gmra.mxu0 %v2076
      %v2356 = vpop.f32.mrf.mxu0
      %v2357 = vadd.f32 %v2265, %v2356
      %2358 = vmatmul.f32.gmra.mxu0 %v2080
      %v2359 = vpop.f32.mrf.mxu0
      %v2360 = vadd.f32 %v2268, %v2359
      %2361 = vmatmul.f32.gmra.mxu0 %v2084
      %v2362 = vpop.f32.mrf.mxu0
      %v2363 = vadd.f32 %v2271, %v2362
      %2364 = vmatmul.f32.gmra.mxu0 %v2088
      %v2365 = vpop.f32.mrf.mxu0
      %v2366 = vadd.f32 %v2274, %v2365
      %2367 = vmatmul.f32.gmra.mxu0 %v2092
      %v2368 = vpop.f32.mrf.mxu0
      %v2369 = vadd.f32 %v2277, %v2368
      %2370 = vmatmul.f32.gmra.mxu0 %v2096
      %v2371 = vpop.f32.mrf.mxu0
      %v2372 = vadd.f32 %v2280, %v2371
      %2373 = vmatmul.f32.gmra.mxu0 %v2100
      %v2374 = vpop.f32.mrf.mxu0
      %v2375 = vadd.f32 %v2283, %v2374
      %2376 = vmatmul.f32.gmra.mxu0 %v2104
      %v2377 = vpop.f32.mrf.mxu0
      %v2378 = vadd.f32 %v2286, %v2377
      %2379 = vmatmul.f32.gmra.mxu0 %v2108
      %v2380 = vpop.f32.mrf.mxu0
      %v2381 = vadd.f32 %v2289, %v2380
      %2382 = vmatmul.f32.gmra.mxu0 %v2112
      %v2383 = vpop.f32.mrf.mxu0
      %v2384 = vadd.f32 %v2292, %v2383
      %2385 = vmatmul.f32.gmra.mxu0 %v2116
      %v2386 = vpop.f32.mrf.mxu0
      %v2387 = vadd.f32 %v2295, %v2386
      %2388 = vmatmul.f32.gmra.mxu0 %v2120
      %v2389 = vpop.f32.mrf.mxu0
      %v2390 = vadd.f32 %v2298, %v2389
      %2391 = vmatmul.f32.gmra.mxu0 %v2124
      %v2392 = vpop.f32.mrf.mxu0
      %v2393 = vadd.f32 %v2301, %v2392
      %2394 = vmatmul.f32.gmra.mxu0 %v2128
      %v2395 = vpop.f32.mrf.mxu0
      %v2396 = vadd.f32 %v2304, %v2395
      %2397 = vmatmul.f32.gmra.mxu0 %v2132
      %v2398 = vpop.f32.mrf.mxu0
      %v2399 = vadd.f32 %v2307, %v2398
      %2400 = vmatmul.f32.gmra.mxu0 %v2136
      %v2401 = vpop.f32.mrf.mxu0
      %v2402 = vadd.f32 %v2310, %v2401
      %2403 = vmatmul.f32.gmra.mxu0 %v2140
      %v2404 = vpop.f32.mrf.mxu0
      %v2405 = vadd.f32 %v2313, %v2404
      %2406 = vmatmul.f32.gmra.mxu0 %v2144
      %v2407 = vpop.f32.mrf.mxu0
      %v2408 = vadd.f32 %v2316, %v2407
      %2409 = vmatmul.f32.gmra.mxu0 %v2148
      %v2410 = vpop.f32.mrf.mxu0
      %v2411 = vadd.f32 %v2319, %v2410
      %2412 = vmatmul.f32.gmra.mxu0 %v2152
      %v2413 = vpop.f32.mrf.mxu0
      %v2414 = vadd.f32 %v2322, %v2413
      %2415 = vmatmul.f32.gmra.mxu0 %v2156
      %v2416 = vpop.f32.mrf.mxu0
      %v2417 = vadd.f32 %v2325, %v2416
      %2418 = vmatmul.f32.gmra.mxu0 %v2160
      %v2419 = vpop.f32.mrf.mxu0
      %v2420 = vadd.f32 %v2328, %v2419
      %2421 = vdwg.mxu0
      %2422 = vmatpush.msra.mxu0 %v480
      %2423 = vmatpush.msra.mxu0 %v479
      %2424 = vmatpush.msra.mxu0 %v478
      %2425 = vmatpush.msra.mxu0 %v477
      %2426 = vmatpush.msra.mxu0 %v476
      %2427 = vmatpush.msra.mxu0 %v475
      %2428 = vmatpush.msra.mxu0 %v474
      %2429 = vmatpush.msra.mxu0 %v473
      %2430 = vmatpush.msra.mxu0 %v472
      %2431 = vmatpush.msra.mxu0 %v471
      %2432 = vmatpush.msra.mxu0 %v470
      %2433 = vmatpush.msra.mxu0 %v469
      %2434 = vmatpush.msra.mxu0 %v468
      %2435 = vmatpush.msra.mxu0 %v467
      %2436 = vmatpush.msra.mxu0 %v466
      %2437 = vmatpush.msra.mxu0 %v465
      %2438 = vmatmul.f32.gmra.mxu0 %v2065
      %v2439 = vpop.f32.mrf.mxu0
      %v2440 = vadd.f32 %v2348, %v2439
      %2441 = vmatmul.f32.gmra.mxu0 %v2069
      %v2442 = vpop.f32.mrf.mxu0
      %v2443 = vadd.f32 %v2351, %v2442
      %2444 = vmatmul.f32.gmra.mxu0 %v2073
      %v2445 = vpop.f32.mrf.mxu0
      %v2446 = vadd.f32 %v2354, %v2445
      %2447 = vmatmul.f32.gmra.mxu0 %v2077
      %v2448 = vpop.f32.mrf.mxu0
      %v2449 = vadd.f32 %v2357, %v2448
      %2450 = vmatmul.f32.gmra.mxu0 %v2081
      %v2451 = vpop.f32.mrf.mxu0
      %v2452 = vadd.f32 %v2360, %v2451
      %2453 = vmatmul.f32.gmra.mxu0 %v2085
      %v2454 = vpop.f32.mrf.mxu0
      %v2455 = vadd.f32 %v2363, %v2454
      %2456 = vmatmul.f32.gmra.mxu0 %v2089
      %v2457 = vpop.f32.mrf.mxu0
      %v2458 = vadd.f32 %v2366, %v2457
      %2459 = vmatmul.f32.gmra.mxu0 %v2093
      %v2460 = vpop.f32.mrf.mxu0
      %v2461 = vadd.f32 %v2369, %v2460
      %2462 = vmatmul.f32.gmra.mxu0 %v2097
      %v2463 = vpop.f32.mrf.mxu0
      %v2464 = vadd.f32 %v2372, %v2463
      %2465 = vmatmul.f32.gmra.mxu0 %v2101
      %v2466 = vpop.f32.mrf.mxu0
      %v2467 = vadd.f32 %v2375, %v2466
      %2468 = vmatmul.f32.gmra.mxu0 %v2105
      %v2469 = vpop.f32.mrf.mxu0
      %v2470 = vadd.f32 %v2378, %v2469
      %2471 = vmatmul.f32.gmra.mxu0 %v2109
      %v2472 = vpop.f32.mrf.mxu0
      %v2473 = vadd.f32 %v2381, %v2472
      %2474 = vmatmul.f32.gmra.mxu0 %v2113
      %v2475 = vpop.f32.mrf.mxu0
      %v2476 = vadd.f32 %v2384, %v2475
      %2477 = vmatmul.f32.gmra.mxu0 %v2117
      %v2478 = vpop.f32.mrf.mxu0
      %v2479 = vadd.f32 %v2387, %v2478
      %2480 = vmatmul.f32.gmra.mxu0 %v2121
      %v2481 = vpop.f32.mrf.mxu0
      %v2482 = vadd.f32 %v2390, %v2481
      %2483 = vmatmul.f32.gmra.mxu0 %v2125
      %v2484 = vpop.f32.mrf.mxu0
      %v2485 = vadd.f32 %v2393, %v2484
      %2486 = vmatmul.f32.gmra.mxu0 %v2129
      %v2487 = vpop.f32.mrf.mxu0
      %v2488 = vadd.f32 %v2396, %v2487
      %2489 = vmatmul.f32.gmra.mxu0 %v2133
      %v2490 = vpop.f32.mrf.mxu0
      %v2491 = vadd.f32 %v2399, %v2490
      %2492 = vmatmul.f32.gmra.mxu0 %v2137
      %v2493 = vpop.f32.mrf.mxu0
      %v2494 = vadd.f32 %v2402, %v2493
      %2495 = vmatmul.f32.gmra.mxu0 %v2141
      %v2496 = vpop.f32.mrf.mxu0
      %v2497 = vadd.f32 %v2405, %v2496
      %2498 = vmatmul.f32.gmra.mxu0 %v2145
      %v2499 = vpop.f32.mrf.mxu0
      %v2500 = vadd.f32 %v2408, %v2499
      %2501 = vmatmul.f32.gmra.mxu0 %v2149
      %v2502 = vpop.f32.mrf.mxu0
      %v2503 = vadd.f32 %v2411, %v2502
      %2504 = vmatmul.f32.gmra.mxu0 %v2153
      %v2505 = vpop.f32.mrf.mxu0
      %v2506 = vadd.f32 %v2414, %v2505
      %2507 = vmatmul.f32.gmra.mxu0 %v2157
      %v2508 = vpop.f32.mrf.mxu0
      %v2509 = vadd.f32 %v2417, %v2508
      %2510 = vmatmul.f32.gmra.mxu0 %v2161
      %v2511 = vpop.f32.mrf.mxu0
      %v2512 = vadd.f32 %v2420, %v2511
      %2513 = vdwg.mxu0
      %2514 = vmatpush.msra.mxu0 0.0
      %2515 = vmatpush.msra.mxu0 0.0
      %2516 = vmatpush.msra.mxu0 0.0
      %2517 = vmatpush.msra.mxu0 0.0
      %2518 = vmatpush.msra.mxu0 0.0
      %2519 = vmatpush.msra.mxu0 0.0
      %2520 = vmatpush.msra.mxu0 0.0
      %2521 = vmatpush.msra.mxu0 0.0
      %2522 = vmatpush.msra.mxu0 0.0
      %2523 = vmatpush.msra.mxu0 0.0
      %2524 = vmatpush.msra.mxu0 0.0
      %2525 = vmatpush.msra.mxu0 0.0
      %2526 = vmatpush.msra.mxu0 0.0
      %2527 = vmatpush.msra.mxu0 0.0
      %2528 = vmatpush.msra.mxu0 %v482
      %2529 = vmatpush.msra.mxu0 %v481
      %2530 = vmatmul.f32.gmra.mxu0 %v2164
      %v2531 = vpop.f32.mrf.mxu0
      %v2532 = vadd.f32 %v2440, %v2531
      %2533 = vmatmul.f32.gmra.mxu0 %v2167
      %v2534 = vpop.f32.mrf.mxu0
      %v2535 = vadd.f32 %v2443, %v2534
      %2536 = vmatmul.f32.gmra.mxu0 %v2170
      %v2537 = vpop.f32.mrf.mxu0
      %v2538 = vadd.f32 %v2446, %v2537
      %2539 = vmatmul.f32.gmra.mxu0 %v2173
      %v2540 = vpop.f32.mrf.mxu0
      %v2541 = vadd.f32 %v2449, %v2540
      %2542 = vmatmul.f32.gmra.mxu0 %v2176
      %v2543 = vpop.f32.mrf.mxu0
      %v2544 = vadd.f32 %v2452, %v2543
      %2545 = vmatmul.f32.gmra.mxu0 %v2179
      %v2546 = vpop.f32.mrf.mxu0
      %v2547 = vadd.f32 %v2455, %v2546
      %2548 = vmatmul.f32.gmra.mxu0 %v2182
      %v2549 = vpop.f32.mrf.mxu0
      %v2550 = vadd.f32 %v2458, %v2549
      %2551 = vmatmul.f32.gmra.mxu0 %v2185
      %v2552 = vpop.f32.mrf.mxu0
      %v2553 = vadd.f32 %v2461, %v2552
      %2554 = vmatmul.f32.gmra.mxu0 %v2188
      %v2555 = vpop.f32.mrf.mxu0
      %v2556 = vadd.f32 %v2464, %v2555
      %2557 = vmatmul.f32.gmra.mxu0 %v2191
      %v2558 = vpop.f32.mrf.mxu0
      %v2559 = vadd.f32 %v2467, %v2558
      %2560 = vmatmul.f32.gmra.mxu0 %v2194
      %v2561 = vpop.f32.mrf.mxu0
      %v2562 = vadd.f32 %v2470, %v2561
      %2563 = vmatmul.f32.gmra.mxu0 %v2197
      %v2564 = vpop.f32.mrf.mxu0
      %v2565 = vadd.f32 %v2473, %v2564
      %2566 = vmatmul.f32.gmra.mxu0 %v2200
      %v2567 = vpop.f32.mrf.mxu0
      %v2568 = vadd.f32 %v2476, %v2567
      %2569 = vmatmul.f32.gmra.mxu0 %v2203
      %v2570 = vpop.f32.mrf.mxu0
      %v2571 = vadd.f32 %v2479, %v2570
      %2572 = vmatmul.f32.gmra.mxu0 %v2206
      %v2573 = vpop.f32.mrf.mxu0
      %v2574 = vadd.f32 %v2482, %v2573
      %2575 = vmatmul.f32.gmra.mxu0 %v2209
      %v2576 = vpop.f32.mrf.mxu0
      %v2577 = vadd.f32 %v2485, %v2576
      %2578 = vmatmul.f32.gmra.mxu0 %v2212
      %v2579 = vpop.f32.mrf.mxu0
      %v2580 = vadd.f32 %v2488, %v2579
      %2581 = vmatmul.f32.gmra.mxu0 %v2215
      %v2582 = vpop.f32.mrf.mxu0
      %v2583 = vadd.f32 %v2491, %v2582
      %2584 = vmatmul.f32.gmra.mxu0 %v2218
      %v2585 = vpop.f32.mrf.mxu0
      %v2586 = vadd.f32 %v2494, %v2585
      %2587 = vmatmul.f32.gmra.mxu0 %v2221
      %v2588 = vpop.f32.mrf.mxu0
      %v2589 = vadd.f32 %v2497, %v2588
      %2590 = vmatmul.f32.gmra.mxu0 %v2224
      %v2591 = vpop.f32.mrf.mxu0
      %v2592 = vadd.f32 %v2500, %v2591
      %2593 = vmatmul.f32.gmra.mxu0 %v2227
      %v2594 = vpop.f32.mrf.mxu0
      %v2595 = vadd.f32 %v2503, %v2594
      %2596 = vmatmul.f32.gmra.mxu0 %v2230
      %v2597 = vpop.f32.mrf.mxu0
      %v2598 = vadd.f32 %v2506, %v2597
      %2599 = vmatmul.f32.gmra.mxu0 %v2233
      %v2600 = vpop.f32.mrf.mxu0
      %v2601 = vadd.f32 %v2509, %v2600
      %2602 = vmatmul.f32.gmra.mxu0 %v2236
      %v2603 = vpop.f32.mrf.mxu0
      %v2604 = vadd.f32 %v2512, %v2603
      %2605 = vdwg.mxu0
      %v2606 = vmax.f32 %v2038, %v2532
      %v2607 = vmax.f32 %v2039, %v2535
      %v2608 = vmax.f32 %v2040, %v2538
      %v2609 = vmax.f32 %v2041, %v2541
      %v2610 = vmax.f32 %v2042, %v2544
      %v2611 = vmax.f32 %v2043, %v2547
      %v2612 = vmax.f32 %v2044, %v2550
      %v2613 = vmax.f32 %v2045, %v2553
      %v2614 = vmax.f32 %v2046, %v2556
      %v2615 = vmax.f32 %v2047, %v2559
      %v2616 = vmax.f32 %v2048, %v2562
      %v2617 = vmax.f32 %v2049, %v2565
      %v2618 = vmax.f32 %v2050, %v2568
      %v2619 = vmax.f32 %v2051, %v2571
      %v2620 = vmax.f32 %v2052, %v2574
      %v2621 = vmax.f32 %v2053, %v2577
      %v2622 = vmax.f32 %v2054, %v2580
      %v2623 = vmax.f32 %v2055, %v2583
      %v2624 = vmax.f32 %v2056, %v2586
      %v2625 = vmax.f32 %v2057, %v2589
      %v2626 = vmax.f32 %v2058, %v2592
      %v2627 = vmax.f32 %v2059, %v2595
      %v2628 = vmax.f32 %v2060, %v2598
      %v2629 = vmax.f32 %v2061, %v2601
      %v2630 = vmax.f32 %v2062, %v2604
      %v2631 = vld [vmem:[%s5] sm:$0x1]
      %v2633 = vperm.slane %v2631, 0
      %v2635 = vadd.f32 %v2606, %v2633
      %v2636 = vadd.f32 %v2607, %v2633
      %v2637 = vadd.f32 %v2608, %v2633
      %v2638 = vadd.f32 %v2609, %v2633
      %v2639 = vadd.f32 %v2610, %v2633
      %v2640 = vadd.f32 %v2611, %v2633
      %v2641 = vadd.f32 %v2612, %v2633
      %v2642 = vadd.f32 %v2613, %v2633
      %v2643 = vadd.f32 %v2614, %v2633
      %v2644 = vadd.f32 %v2615, %v2633
      %v2645 = vadd.f32 %v2616, %v2633
      %v2646 = vadd.f32 %v2617, %v2633
      %v2647 = vadd.f32 %v2618, %v2633
      %v2648 = vadd.f32 %v2619, %v2633
      %v2649 = vadd.f32 %v2620, %v2633
      %v2650 = vadd.f32 %v2621, %v2633
      %v2651 = vadd.f32 %v2622, %v2633
      %v2652 = vadd.f32 %v2623, %v2633
      %v2653 = vadd.f32 %v2624, %v2633
      %v2654 = vadd.f32 %v2625, %v2633
      %v2655 = vadd.f32 %v2626, %v2633
      %v2656 = vadd.f32 %v2627, %v2633
      %v2657 = vadd.f32 %v2628, %v2633
      %v2658 = vadd.f32 %v2629, %v2633
      %v2659 = vadd.f32 %v2630, %v2633
      %v2660 = vtanh.pop %v2635
      %v2661 = vtanh.pop %v2636
      %v2662 = vtanh.pop %v2637
      %v2663 = vtanh.pop %v2638
      %v2664 = vtanh.pop %v2639
      %v2665 = vtanh.pop %v2640
      %v2666 = vtanh.pop %v2641
      %v2667 = vtanh.pop %v2642
      %v2668 = vtanh.pop %v2643
      %v2669 = vtanh.pop %v2644
      %v2670 = vtanh.pop %v2645
      %v2671 = vtanh.pop %v2646
      %v2672 = vtanh.pop %v2647
      %v2673 = vtanh.pop %v2648
      %v2674 = vtanh.pop %v2649
      %v2675 = vtanh.pop %v2650
      %v2676 = vtanh.pop %v2651
      %v2677 = vtanh.pop %v2652
      %v2678 = vtanh.pop %v2653
      %v2679 = vtanh.pop %v2654
      %v2680 = vtanh.pop %v2655
      %v2681 = vtanh.pop %v2656
      %v2682 = vtanh.pop %v2657
      %v2683 = vtanh.pop %v2658
      %v2684 = vtanh.pop %v2659
      %vm2685 = vcmask 261120
      %2686 = vst.msk [vmem:[%s331] sm:$0xff] %vm2685, %v2660
      %2687 = vst.msk [vmem:[%s331 + $0x8] sm:$0xff] %vm2685, %v2661
      %2688 = vst.msk [vmem:[%s331 + $0x10] sm:$0xff] %vm2685, %v2662
      %2689 = vst.msk [vmem:[%s331 + $0x18] sm:$0xff] %vm2685, %v2663
      %2690 = vst.msk [vmem:[%s331 + $0x20] sm:$0xff] %vm2685, %v2664
      %2691 = vst.msk [vmem:[%s331 + $0x28] sm:$0xff] %vm2685, %v2665
      %2692 = vst.msk [vmem:[%s331 + $0x30] sm:$0xff] %vm2685, %v2666
      %2693 = vst.msk [vmem:[%s331 + $0x38] sm:$0xff] %vm2685, %v2667
      %2694 = vst.msk [vmem:[%s331 + $0x40] sm:$0xff] %vm2685, %v2668
      %2695 = vst.msk [vmem:[%s331 + $0x48] sm:$0xff] %vm2685, %v2669
      %2696 = vst.msk [vmem:[%s331 + $0x50] sm:$0xff] %vm2685, %v2670
      %2697 = vst.msk [vmem:[%s331 + $0x58] sm:$0xff] %vm2685, %v2671
      %2698 = vst.msk [vmem:[%s331 + $0x60] sm:$0xff] %vm2685, %v2672
      %2699 = vst.msk [vmem:[%s331 + $0x68] sm:$0xff] %vm2685, %v2673
      %2700 = vst.msk [vmem:[%s331 + $0x70] sm:$0xff] %vm2685, %v2674
      %2701 = vst.msk [vmem:[%s331 + $0x78] sm:$0xff] %vm2685, %v2675
      %2702 = vst.msk [vmem:[%s331 + $0x80] sm:$0xff] %vm2685, %v2676
      %2703 = vst.msk [vmem:[%s331 + $0x88] sm:$0xff] %vm2685, %v2677
      %2704 = vst.msk [vmem:[%s331 + $0x90] sm:$0xff] %vm2685, %v2678
      %2705 = vst.msk [vmem:[%s331 + $0x98] sm:$0xff] %vm2685, %v2679
      %2706 = vst.msk [vmem:[%s331 + $0xa0] sm:$0xff] %vm2685, %v2680
      %2707 = vst.msk [vmem:[%s331 + $0xa8] sm:$0xff] %vm2685, %v2681
      %2708 = vst.msk [vmem:[%s331 + $0xb0] sm:$0xff] %vm2685, %v2682
      %2709 = vst.msk [vmem:[%s331 + $0xb8] sm:$0xff] %vm2685, %v2683
      %2710 = vst.msk [vmem:[%s331 + $0xc0] sm:$0xff] %vm2685, %v2684
      %s2711 = smul.u32 25, %s17
      %p2712 = scmp.lt.s32.totalorder %s2711, 49
      %s2713 = scalar_select %p2712, %s2711, 49
      %s2714 = smul.addr %s2713, 8
      %s2715 = scalar_lea.vmem %s6, %s2714
      // Predicated region
      $region45: #{siamese_forward.4} parent=43 // pred_check
        %p2716 = pneg %p181
      $region46: #{siamese_forward.4} parent=43 // pred_check_branch
        %2718 = sbr.rel (%p2716) target = $region48
      $region47: #{siamese_forward.4} parent=43 // pred_region
        %s2719 = smul.u32 25, %s17
      $region48: #{siamese_forward.4} parent=43 // pred_fallthru
        _
    $region44: #{siamese_forward.4} parent=5 // pred_fallthru
      _
    %p2720 = scmp.le.s32.totalorder 2, %s12
    // Predicated region
    $region49: #{siamese_forward.4} parent=5 // pred_check
      %p2721 = pneg %p2720
    $region50: #{siamese_forward.4} parent=5 // pred_check_branch
      %2723 = sbr.rel (%p2721) target = $region52
    $region51: #{siamese_forward.4} parent=5 // pred_region
      %s2724 = ssub.s32 %s12, 2
      // Predicated region
      $region53: #{siamese_forward.4} parent=51 // pred_check
        %p2725 = pneg %p187
      $region54: #{siamese_forward.4} parent=51 // pred_check_branch
        %2727 = sbr.rel (%p2725) target = $region56
      $region55: #{siamese_forward.4} parent=51 // pred_region
        %s2728 = smul.u32 25, %s18
        %p2729 = scmp.lt.s32.totalorder %s2728, 49
        %s2730 = scalar_select %p2729, %s2728, 49
        %s2731 = smul.addr %s2730, 8
        %s2732 = scalar_lea.vmem %s6, %s2731
      $region56: #{siamese_forward.4} parent=51 // pred_fallthru
        _
    $region52: #{siamese_forward.4} parent=5 // pred_fallthru
      _
  $region6: #{siamese_forward.4} parent=0 // loop_footer
    %s16 = sadd.s32 1, %s12
  $region7: #{siamese_forward.4} parent=0 // loop_footer_branch
    %11 = sbr.rel target = $region3
  $region8: #{siamese_forward.4} parent=0 // loop_exit
    _

// kernel: siamese_forward.5
$region0: #{siamese_forward.5}
  #allocation0 [shape = 'u32[]', space=smem, size = 0x4, offset = 0x4, fixed_abs, tag = 'smem constant byte address 0x4 - core index']
  #allocation1 [shape = 'u32[72,128]{1,0:T(1,128)}', space=vmem, size = 0x9000, scoped, tag = 'internal scratch']
  #allocation2 [shape = 'f32[16,500]{1,0:T(8,128)}', space=vmem, size = 0x8000, scoped, tag = 'scratch operand']
  #allocation3 [shape = 'f32[4,64]{1,0:T(4,128)}', space=vmem, size = 0x800, scoped, tag = 'scratch operand']
  #allocation4 [shape = 'f32[1,1]{1,0:T(1,128)S(1)}', space=vmem, size = 0x200, scoped, tag = 'scoped memory for siamese_forward.5']
  %s0 = inlined_call_operand.vmem [shape: f32[16,800], index: 0, kind: input, shape index: {}]
  %s1 = inlined_call_operand.vmem [shape: f32[800,32], index: 1, kind: input, shape index: {}]
  %s2 = inlined_call_operand.vmem [shape: f32[1,32], index: 2, kind: input, shape index: {}]
  %s3 = inlined_call_operand.vmem [shape: f32[32,500], index: 3, kind: input, shape index: {}]
  %s4 = inlined_call_operand.vmem [shape: f32[500,500], index: 4, kind: input, shape index: {}]
  %s5 = inlined_call_operand.vmem [shape: f32[1,500], index: 5, kind: input, shape index: {}]
  %s6 = inlined_call_operand.vmem [shape: f32[1,500], index: 6, kind: input, shape index: {}]
  %s7 = inlined_call_operand.vmem [shape: f32[4,11], index: 7, kind: input, shape index: {}]
  %s8 = inlined_call_operand.vmem [shape: f32[500,128], index: 8, kind: input, shape index: {}]
  %s9 = inlined_call_operand.vmem [shape: f32[11,128], index: 9, kind: input, shape index: {}]
  %s10 = inlined_call_operand.vmem [shape: f32[1,128], index: 10, kind: input, shape index: {}]
  %s11 = inlined_call_operand.vmem [shape: f32[128,64], index: 11, kind: input, shape index: {}]
  %s12 = inlined_call_operand.vmem [shape: f32[1,64], index: 12, kind: input, shape index: {}]
  %s13 = inlined_call_operand.vmem [shape: f32[2,1], index: 13, kind: input, shape index: {}]
  %s14 = inlined_call_operand.vmem [shape: f32[64,64], index: 14, kind: input, shape index: {}]
  %s15 = inlined_call_operand.vmem [shape: f32[1,64], index: 15, kind: input, shape index: {}]
  %s16 = inlined_call_operand.vmem [shape: f32[64,64], index: 16, kind: input, shape index: {}]
  %s17 = inlined_call_operand.vmem [shape: f32[1,64], index: 17, kind: input, shape index: {}]
  %s18 = inlined_call_operand.vmem [shape: f32[1,64], index: 18, kind: input, shape index: {}]
  %s19 = inlined_call_operand.<no memory space> [shape: f32[1,1], index: 19, kind: input, shape index: {}]
  %s20 = inlined_call_operand.vmem [shape: f32[2,1], index: 20, kind: output, shape index: {}]
  %s21 = sld [smem:[#allocation0]]
  $region90: #{siamese_forward.5} parent=0
    _
  %s23 = ssub.s32 1, %s21
  %s24 = scalar_select 0, %s23, %s21
  %v25 = vstv %s19
  %26 = vst [vmem:[#allocation4] sm:$0x1] %v25
  // Predicated region
  $region2: #{siamese_forward.5} parent=0 // pred_check
    _
  $region3: #{siamese_forward.5} parent=0 // pred_check_branch
    %28 = sbr.rel (0) target = $region5
  $region4: #{siamese_forward.5} parent=0 // pred_region
    _
  $region5: #{siamese_forward.5} parent=0 // pred_fallthru
    _
  // Predicated region
  $region6: #{siamese_forward.5} parent=0 // pred_check
    _
  $region7: #{siamese_forward.5} parent=0 // pred_check_branch
    %30 = sbr.rel (0) target = $region9
  $region8: #{siamese_forward.5} parent=0 // pred_region
    _
  $region9: #{siamese_forward.5} parent=0 // pred_fallthru
    _
  // Predicated region
  $region10: #{siamese_forward.5} parent=0 // pred_check
    _
  $region11: #{siamese_forward.5} parent=0 // pred_check_branch
    %32 = sbr.rel (0) target = $region13
  $region12: #{siamese_forward.5} parent=0 // pred_region
    _
  $region13: #{siamese_forward.5} parent=0 // pred_fallthru
    _
  // Predicated region
  $region14: #{siamese_forward.5} parent=0 // pred_check
    _
  $region15: #{siamese_forward.5} parent=0 // pred_check_branch
    %34 = sbr.rel (0) target = $region17
  $region16: #{siamese_forward.5} parent=0 // pred_region
    _
  $region17: #{siamese_forward.5} parent=0 // pred_fallthru
    _
  // Predicated region
  $region18: #{siamese_forward.5} parent=0 // pred_check
    _
  $region19: #{siamese_forward.5} parent=0 // pred_check_branch
    %36 = sbr.rel (0) target = $region21
  $region20: #{siamese_forward.5} parent=0 // pred_region
    _
  $region21: #{siamese_forward.5} parent=0 // pred_fallthru
    _
  // Predicated region
  $region22: #{siamese_forward.5} parent=0 // pred_check
    _
  $region23: #{siamese_forward.5} parent=0 // pred_check_branch
    %38 = sbr.rel (0) target = $region25
  $region24: #{siamese_forward.5} parent=0 // pred_region
    _
  $region25: #{siamese_forward.5} parent=0 // pred_fallthru
    _
  // Predicated region
  $region26: #{siamese_forward.5} parent=0 // pred_check
    _
  $region27: #{siamese_forward.5} parent=0 // pred_check_branch
    %40 = sbr.rel (0) target = $region29
  $region28: #{siamese_forward.5} parent=0 // pred_region
    _
  $region29: #{siamese_forward.5} parent=0 // pred_fallthru
    _
  // Predicated region
  $region30: #{siamese_forward.5} parent=0 // pred_check
    _
  $region31: #{siamese_forward.5} parent=0 // pred_check_branch
    %42 = sbr.rel (0) target = $region33
  $region32: #{siamese_forward.5} parent=0 // pred_region
    _
  $region33: #{siamese_forward.5} parent=0 // pred_fallthru
    _
  // Predicated region
  $region34: #{siamese_forward.5} parent=0 // pred_check
    _
  $region35: #{siamese_forward.5} parent=0 // pred_check_branch
    %44 = sbr.rel (0) target = $region37
  $region36: #{siamese_forward.5} parent=0 // pred_region
    _
  $region37: #{siamese_forward.5} parent=0 // pred_fallthru
    _
  // Predicated region
  $region38: #{siamese_forward.5} parent=0 // pred_check
    _
  $region39: #{siamese_forward.5} parent=0 // pred_check_branch
    %46 = sbr.rel (0) target = $region41
  $region40: #{siamese_forward.5} parent=0 // pred_region
    _
  $region41: #{siamese_forward.5} parent=0 // pred_fallthru
    _
  // Predicated region
  $region42: #{siamese_forward.5} parent=0 // pred_check
    _
  $region43: #{siamese_forward.5} parent=0 // pred_check_branch
    %48 = sbr.rel (0) target = $region45
  $region44: #{siamese_forward.5} parent=0 // pred_region
    _
  $region45: #{siamese_forward.5} parent=0 // pred_fallthru
    _
  // Predicated region
  $region46: #{siamese_forward.5} parent=0 // pred_check
    _
  $region47: #{siamese_forward.5} parent=0 // pred_check_branch
    %50 = sbr.rel (0) target = $region49
  $region48: #{siamese_forward.5} parent=0 // pred_region
    _
  $region49: #{siamese_forward.5} parent=0 // pred_fallthru
    _
  // Predicated region
  $region50: #{siamese_forward.5} parent=0 // pred_check
    _
  $region51: #{siamese_forward.5} parent=0 // pred_check_branch
    %52 = sbr.rel (0) target = $region53
  $region52: #{siamese_forward.5} parent=0 // pred_region
    _
  $region53: #{siamese_forward.5} parent=0 // pred_fallthru
    _
  // Predicated region
  $region54: #{siamese_forward.5} parent=0 // pred_check
    _
  $region55: #{siamese_forward.5} parent=0 // pred_check_branch
    %54 = sbr.rel (0) target = $region57
  $region56: #{siamese_forward.5} parent=0 // pred_region
    _
  $region57: #{siamese_forward.5} parent=0 // pred_fallthru
    _
  // Predicated region
  $region58: #{siamese_forward.5} parent=0 // pred_check
    _
  $region59: #{siamese_forward.5} parent=0 // pred_check_branch
    %56 = sbr.rel (0) target = $region61
  $region60: #{siamese_forward.5} parent=0 // pred_region
    _
  $region61: #{siamese_forward.5} parent=0 // pred_fallthru
    _
  // Predicated region
  $region62: #{siamese_forward.5} parent=0 // pred_check
    _
  $region63: #{siamese_forward.5} parent=0 // pred_check_branch
    %58 = sbr.rel (0) target = $region65
  $region64: #{siamese_forward.5} parent=0 // pred_region
    _
  $region65: #{siamese_forward.5} parent=0 // pred_fallthru
    _
  // Predicated region
  $region66: #{siamese_forward.5} parent=0 // pred_check
    _
  $region67: #{siamese_forward.5} parent=0 // pred_check_branch
    %60 = sbr.rel (0) target = $region69
  $region68: #{siamese_forward.5} parent=0 // pred_region
    _
  $region69: #{siamese_forward.5} parent=0 // pred_fallthru
    _
  // Predicated region
  $region70: #{siamese_forward.5} parent=0 // pred_check
    _
  $region71: #{siamese_forward.5} parent=0 // pred_check_branch
    %62 = sbr.rel (0) target = $region73
  $region72: #{siamese_forward.5} parent=0 // pred_region
    _
  $region73: #{siamese_forward.5} parent=0 // pred_fallthru
    _
  // Predicated region
  $region74: #{siamese_forward.5} parent=0 // pred_check
    _
  $region75: #{siamese_forward.5} parent=0 // pred_check_branch
    %64 = sbr.rel (0) target = $region77
  $region76: #{siamese_forward.5} parent=0 // pred_region
    _
  $region77: #{siamese_forward.5} parent=0 // pred_fallthru
    _
  // Predicated region
  $region78: #{siamese_forward.5} parent=0 // pred_check
    _
  $region79: #{siamese_forward.5} parent=0 // pred_check_branch
    %66 = sbr.rel (0) target = $region81
  $region80: #{siamese_forward.5} parent=0 // pred_region
    _
  $region81: #{siamese_forward.5} parent=0 // pred_fallthru
    _
  %v67 = vld [vmem:[%s0] sm:$0xff]
  %v68 = vld [vmem:[%s0 + $0x8] sm:$0xff]
  %v69 = vld [vmem:[%s0 + $0x10] sm:$0xff]
  %v70 = vld [vmem:[%s0 + $0x18] sm:$0xff]
  %v71 = vld [vmem:[%s0 + $0x20] sm:$0xff]
  %v72 = vld [vmem:[%s0 + $0x28] sm:$0xff]
  %v73 = vld [vmem:[%s0 + $0x30] sm:$0xff]
  %v74 = vld [vmem:[%s0 + $0x38] sm:$0xff]
  %v75 = vld [vmem:[%s0 + $0x40] sm:$0xff]
  %v76 = vld [vmem:[%s0 + $0x48] sm:$0xff]
  %v77 = vld [vmem:[%s0 + $0x50] sm:$0xff]
  %v78 = vld [vmem:[%s0 + $0x58] sm:$0xff]
  %v79 = vld [vmem:[%s0 + $0x60] sm:$0xff]
  %v80 = vld [vmem:[%s0 + $0x68] sm:$0xff]
  %v81 = vld [vmem:[%s1] sm:$0xff]
  %v82 = vld [vmem:[%s1 + $0x8] sm:$0xff]
  %v83 = vld [vmem:[%s1 + $0x10] sm:$0xff]
  %v84 = vld [vmem:[%s1 + $0x18] sm:$0xff]
  %v85 = vld [vmem:[%s1 + $0x20] sm:$0xff]
  %v86 = vld [vmem:[%s1 + $0x28] sm:$0xff]
  %v87 = vld [vmem:[%s1 + $0x30] sm:$0xff]
  %v88 = vld [vmem:[%s1 + $0x38] sm:$0xff]
  %v89 = vld [vmem:[%s1 + $0x40] sm:$0xff]
  %v90 = vld [vmem:[%s1 + $0x48] sm:$0xff]
  %v91 = vld [vmem:[%s1 + $0x50] sm:$0xff]
  %v92 = vld [vmem:[%s1 + $0x58] sm:$0xff]
  %v93 = vld [vmem:[%s1 + $0x60] sm:$0xff]
  %v94 = vld [vmem:[%s1 + $0x68] sm:$0xff]
  %v95 = vld [vmem:[%s1 + $0x70] sm:$0xff]
  %v96 = vld [vmem:[%s1 + $0x78] sm:$0xff]
  %v97 = vld [vmem:[%s1 + $0x80] sm:$0xff]
  %v98 = vld [vmem:[%s1 + $0x88] sm:$0xff]
  %v99 = vld [vmem:[%s1 + $0x90] sm:$0xff]
  %v100 = vld [vmem:[%s1 + $0x98] sm:$0xff]
  %v101 = vld [vmem:[%s1 + $0xa0] sm:$0xff]
  %v102 = vld [vmem:[%s1 + $0xa8] sm:$0xff]
  %v103 = vld [vmem:[%s1 + $0xb0] sm:$0xff]
  %v104 = vld [vmem:[%s1 + $0xb8] sm:$0xff]
  %v105 = vld [vmem:[%s1 + $0xc0] sm:$0xff]
  %v106 = vld [vmem:[%s1 + $0xc8] sm:$0xff]
  %v107 = vld [vmem:[%s1 + $0xd0] sm:$0xff]
  %v108 = vld [vmem:[%s1 + $0xd8] sm:$0xff]
  %v109 = vld [vmem:[%s1 + $0xe0] sm:$0xff]
  %v110 = vld [vmem:[%s1 + $0xe8] sm:$0xff]
  %v111 = vld [vmem:[%s1 + $0xf0] sm:$0xff]
  %v112 = vld [vmem:[%s1 + $0xf8] sm:$0xff]
  %v113 = vld [vmem:[%s1 + $0x100] sm:$0xff]
  %v114 = vld [vmem:[%s1 + $0x108] sm:$0xff]
  %v115 = vld [vmem:[%s1 + $0x110] sm:$0xff]
  %v116 = vld [vmem:[%s1 + $0x118] sm:$0xff]
  %v117 = vld [vmem:[%s1 + $0x120] sm:$0xff]
  %v118 = vld [vmem:[%s1 + $0x128] sm:$0xff]
  %v119 = vld [vmem:[%s1 + $0x130] sm:$0xff]
  %v120 = vld [vmem:[%s1 + $0x138] sm:$0xff]
  %v121 = vld [vmem:[%s1 + $0x140] sm:$0xff]
  %v122 = vld [vmem:[%s1 + $0x148] sm:$0xff]
  %v123 = vld [vmem:[%s1 + $0x150] sm:$0xff]
  %v124 = vld [vmem:[%s1 + $0x158] sm:$0xff]
  %v125 = vld [vmem:[%s1 + $0x160] sm:$0xff]
  %v126 = vld [vmem:[%s1 + $0x168] sm:$0xff]
  %v127 = vld [vmem:[%s1 + $0x170] sm:$0xff]
  %v128 = vld [vmem:[%s1 + $0x178] sm:$0xff]
  %v129 = vld [vmem:[%s1 + $0x180] sm:$0xff]
  %v130 = vld [vmem:[%s1 + $0x188] sm:$0xff]
  %v131 = vld [vmem:[%s1 + $0x190] sm:$0xff]
  %v132 = vld [vmem:[%s1 + $0x198] sm:$0xff]
  %v133 = vld [vmem:[%s1 + $0x1a0] sm:$0xff]
  %v134 = vld [vmem:[%s1 + $0x1a8] sm:$0xff]
  %v135 = vld [vmem:[%s1 + $0x1b0] sm:$0xff]
  %v136 = vld [vmem:[%s1 + $0x1b8] sm:$0xff]
  %v137 = vld [vmem:[%s1 + $0x1c0] sm:$0xff]
  %v138 = vld [vmem:[%s1 + $0x1c8] sm:$0xff]
  %v139 = vld [vmem:[%s1 + $0x1d0] sm:$0xff]
  %v140 = vld [vmem:[%s1 + $0x1d8] sm:$0xff]
  %v141 = vld [vmem:[%s1 + $0x1e0] sm:$0xff]
  %v142 = vld [vmem:[%s1 + $0x1e8] sm:$0xff]
  %v143 = vld [vmem:[%s1 + $0x1f0] sm:$0xff]
  %v144 = vld [vmem:[%s1 + $0x1f8] sm:$0xff]
  %v145 = vld [vmem:[%s1 + $0x200] sm:$0xff]
  %v146 = vld [vmem:[%s1 + $0x208] sm:$0xff]
  %v147 = vld [vmem:[%s1 + $0x210] sm:$0xff]
  %v148 = vld [vmem:[%s1 + $0x218] sm:$0xff]
  %v149 = vld [vmem:[%s1 + $0x220] sm:$0xff]
  %v150 = vld [vmem:[%s1 + $0x228] sm:$0xff]
  %v151 = vld [vmem:[%s1 + $0x230] sm:$0xff]
  %v152 = vld [vmem:[%s1 + $0x238] sm:$0xff]
  %v153 = vld [vmem:[%s1 + $0x240] sm:$0xff]
  %v154 = vld [vmem:[%s1 + $0x248] sm:$0xff]
  %v155 = vld [vmem:[%s1 + $0x250] sm:$0xff]
  %v156 = vld [vmem:[%s1 + $0x258] sm:$0xff]
  %v157 = vld [vmem:[%s1 + $0x260] sm:$0xff]
  %v158 = vld [vmem:[%s1 + $0x268] sm:$0xff]
  %v159 = vld [vmem:[%s1 + $0x270] sm:$0xff]
  %v160 = vld [vmem:[%s1 + $0x278] sm:$0xff]
  %v161 = vld [vmem:[%s1 + $0x280] sm:$0xff]
  %v162 = vld [vmem:[%s1 + $0x288] sm:$0xff]
  %v163 = vld [vmem:[%s1 + $0x290] sm:$0xff]
  %v164 = vld [vmem:[%s1 + $0x298] sm:$0xff]
  %v165 = vld [vmem:[%s1 + $0x2a0] sm:$0xff]
  %v166 = vld [vmem:[%s1 + $0x2a8] sm:$0xff]
  %v167 = vld [vmem:[%s1 + $0x2b0] sm:$0xff]
  %v168 = vld [vmem:[%s1 + $0x2b8] sm:$0xff]
  %v169 = vld [vmem:[%s1 + $0x2c0] sm:$0xff]
  %v170 = vld [vmem:[%s1 + $0x2c8] sm:$0xff]
  %v171 = vld [vmem:[%s1 + $0x2d0] sm:$0xff]
  %v172 = vld [vmem:[%s1 + $0x2d8] sm:$0xff]
  %v173 = vld [vmem:[%s1 + $0x2e0] sm:$0xff]
  %v174 = vld [vmem:[%s1 + $0x2e8] sm:$0xff]
  %v175 = vld [vmem:[%s1 + $0x2f0] sm:$0xff]
  %v176 = vld [vmem:[%s1 + $0x2f8] sm:$0xff]
  %v177 = vld [vmem:[%s1 + $0x300] sm:$0xff]
  %v178 = vld [vmem:[%s1 + $0x308] sm:$0xff]
  %v179 = vld [vmem:[%s1 + $0x310] sm:$0xff]
  %v180 = vld [vmem:[%s1 + $0x318] sm:$0xff]
  %v181 = vld [vmem:[%s2] sm:$0x1]
  %v183 = vperm.slane %v181, 0
  %vm185 = vcmask 261120
  %v187 = vsel %vm185, %v73, 0
  %v190 = vsel %vm185, %v80, 0
  %192 = vmatpush.msra.mxu0 %v96
  %193 = vmatpush.msra.mxu0 %v95
  %194 = vmatpush.msra.mxu0 %v94
  %195 = vmatpush.msra.mxu0 %v93
  %196 = vmatpush.msra.mxu0 %v92
  %197 = vmatpush.msra.mxu0 %v91
  %198 = vmatpush.msra.mxu0 %v90
  %199 = vmatpush.msra.mxu0 %v89
  %200 = vmatpush.msra.mxu0 %v88
  %201 = vmatpush.msra.mxu0 %v87
  %202 = vmatpush.msra.mxu0 %v86
  %203 = vmatpush.msra.mxu0 %v85
  %204 = vmatpush.msra.mxu0 %v84
  %205 = vmatpush.msra.mxu0 %v83
  %206 = vmatpush.msra.mxu0 %v82
  %207 = vmatpush.msra.mxu0 %v81
  %208 = vmatmul.f32.gmra.mxu0 %v67
  %v209 = vpop.f32.mrf.mxu0
  %v210 = vadd.f32 %v183, %v209
  %211 = vmatmul.f32.gmra.mxu0 %v74
  %v212 = vpop.f32.mrf.mxu0
  %v213 = vadd.f32 %v183, %v212
  %214 = vdwg.mxu0
  %215 = vmatpush.msra.mxu0 %v112
  %216 = vmatpush.msra.mxu0 %v111
  %217 = vmatpush.msra.mxu0 %v110
  %218 = vmatpush.msra.mxu0 %v109
  %219 = vmatpush.msra.mxu0 %v108
  %220 = vmatpush.msra.mxu0 %v107
  %221 = vmatpush.msra.mxu0 %v106
  %222 = vmatpush.msra.mxu0 %v105
  %223 = vmatpush.msra.mxu0 %v104
  %224 = vmatpush.msra.mxu0 %v103
  %225 = vmatpush.msra.mxu0 %v102
  %226 = vmatpush.msra.mxu0 %v101
  %227 = vmatpush.msra.mxu0 %v100
  %228 = vmatpush.msra.mxu0 %v99
  %229 = vmatpush.msra.mxu0 %v98
  %230 = vmatpush.msra.mxu0 %v97
  %231 = vmatmul.f32.gmra.mxu0 %v68
  %v232 = vpop.f32.mrf.mxu0
  %v233 = vadd.f32 %v210, %v232
  %234 = vmatmul.f32.gmra.mxu0 %v75
  %v235 = vpop.f32.mrf.mxu0
  %v236 = vadd.f32 %v213, %v235
  %237 = vdwg.mxu0
  %238 = vmatpush.msra.mxu0 %v128
  %239 = vmatpush.msra.mxu0 %v127
  %240 = vmatpush.msra.mxu0 %v126
  %241 = vmatpush.msra.mxu0 %v125
  %242 = vmatpush.msra.mxu0 %v124
  %243 = vmatpush.msra.mxu0 %v123
  %244 = vmatpush.msra.mxu0 %v122
  %245 = vmatpush.msra.mxu0 %v121
  %246 = vmatpush.msra.mxu0 %v120
  %247 = vmatpush.msra.mxu0 %v119
  %248 = vmatpush.msra.mxu0 %v118
  %249 = vmatpush.msra.mxu0 %v117
  %250 = vmatpush.msra.mxu0 %v116
  %251 = vmatpush.msra.mxu0 %v115
  %252 = vmatpush.msra.mxu0 %v114
  %253 = vmatpush.msra.mxu0 %v113
  %254 = vmatmul.f32.gmra.mxu0 %v69
  %v255 = vpop.f32.mrf.mxu0
  %v256 = vadd.f32 %v233, %v255
  %257 = vmatmul.f32.gmra.mxu0 %v76
  %v258 = vpop.f32.mrf.mxu0
  %v259 = vadd.f32 %v236, %v258
  %260 = vdwg.mxu0
  %261 = vmatpush.msra.mxu0 %v144
  %262 = vmatpush.msra.mxu0 %v143
  %263 = vmatpush.msra.mxu0 %v142
  %264 = vmatpush.msra.mxu0 %v141
  %265 = vmatpush.msra.mxu0 %v140
  %266 = vmatpush.msra.mxu0 %v139
  %267 = vmatpush.msra.mxu0 %v138
  %268 = vmatpush.msra.mxu0 %v137
  %269 = vmatpush.msra.mxu0 %v136
  %270 = vmatpush.msra.mxu0 %v135
  %271 = vmatpush.msra.mxu0 %v134
  %272 = vmatpush.msra.mxu0 %v133
  %273 = vmatpush.msra.mxu0 %v132
  %274 = vmatpush.msra.mxu0 %v131
  %275 = vmatpush.msra.mxu0 %v130
  %276 = vmatpush.msra.mxu0 %v129
  %277 = vmatmul.f32.gmra.mxu0 %v70
  %v278 = vpop.f32.mrf.mxu0
  %v279 = vadd.f32 %v256, %v278
  %280 = vmatmul.f32.gmra.mxu0 %v77
  %v281 = vpop.f32.mrf.mxu0
  %v282 = vadd.f32 %v259, %v281
  %283 = vdwg.mxu0
  %284 = vmatpush.msra.mxu0 %v160
  %285 = vmatpush.msra.mxu0 %v159
  %286 = vmatpush.msra.mxu0 %v158
  %287 = vmatpush.msra.mxu0 %v157
  %288 = vmatpush.msra.mxu0 %v156
  %289 = vmatpush.msra.mxu0 %v155
  %290 = vmatpush.msra.mxu0 %v154
  %291 = vmatpush.msra.mxu0 %v153
  %292 = vmatpush.msra.mxu0 %v152
  %293 = vmatpush.msra.mxu0 %v151
  %294 = vmatpush.msra.mxu0 %v150
  %295 = vmatpush.msra.mxu0 %v149
  %296 = vmatpush.msra.mxu0 %v148
  %297 = vmatpush.msra.mxu0 %v147
  %298 = vmatpush.msra.mxu0 %v146
  %299 = vmatpush.msra.mxu0 %v145
  %300 = vmatmul.f32.gmra.mxu0 %v71
  %v301 = vpop.f32.mrf.mxu0
  %v302 = vadd.f32 %v279, %v301
  %303 = vmatmul.f32.gmra.mxu0 %v78
  %v304 = vpop.f32.mrf.mxu0
  %v305 = vadd.f32 %v282, %v304
  %306 = vdwg.mxu0
  %307 = vmatpush.msra.mxu0 %v176
  %308 = vmatpush.msra.mxu0 %v175
  %309 = vmatpush.msra.mxu0 %v174
  %310 = vmatpush.msra.mxu0 %v173
  %311 = vmatpush.msra.mxu0 %v172
  %312 = vmatpush.msra.mxu0 %v171
  %313 = vmatpush.msra.mxu0 %v170
  %314 = vmatpush.msra.mxu0 %v169
  %315 = vmatpush.msra.mxu0 %v168
  %316 = vmatpush.msra.mxu0 %v167
  %317 = vmatpush.msra.mxu0 %v166
  %318 = vmatpush.msra.mxu0 %v165
  %319 = vmatpush.msra.mxu0 %v164
  %320 = vmatpush.msra.mxu0 %v163
  %321 = vmatpush.msra.mxu0 %v162
  %322 = vmatpush.msra.mxu0 %v161
  %323 = vmatmul.f32.gmra.mxu0 %v72
  %v324 = vpop.f32.mrf.mxu0
  %v325 = vadd.f32 %v302, %v324
  %326 = vmatmul.f32.gmra.mxu0 %v79
  %v327 = vpop.f32.mrf.mxu0
  %v328 = vadd.f32 %v305, %v327
  %329 = vdwg.mxu0
  %330 = vmatpush.msra.mxu0 0.0
  %331 = vmatpush.msra.mxu0 0.0
  %332 = vmatpush.msra.mxu0 0.0
  %333 = vmatpush.msra.mxu0 0.0
  %334 = vmatpush.msra.mxu0 0.0
  %335 = vmatpush.msra.mxu0 0.0
  %336 = vmatpush.msra.mxu0 0.0
  %337 = vmatpush.msra.mxu0 0.0
  %338 = vmatpush.msra.mxu0 0.0
  %339 = vmatpush.msra.mxu0 0.0
  %340 = vmatpush.msra.mxu0 0.0
  %341 = vmatpush.msra.mxu0 0.0
  %342 = vmatpush.msra.mxu0 %v180
  %343 = vmatpush.msra.mxu0 %v179
  %344 = vmatpush.msra.mxu0 %v178
  %345 = vmatpush.msra.mxu0 %v177
  %346 = vmatmul.f32.gmra.mxu0 %v187
  %v347 = vpop.f32.mrf.mxu0
  %v348 = vadd.f32 %v325, %v347
  %349 = vmatmul.f32.gmra.mxu0 %v190
  %v350 = vpop.f32.mrf.mxu0
  %v351 = vadd.f32 %v328, %v350
  %352 = vdwg.mxu0
  %v353 = vld [vmem:[%s3] sm:$0xff]
  %v354 = vld [vmem:[%s3 + $0x8] sm:$0xff]
  %v355 = vld [vmem:[%s3 + $0x10] sm:$0xff]
  %v356 = vld [vmem:[%s3 + $0x18] sm:$0xff]
  %v357 = vld [vmem:[%s3 + $0x20] sm:$0xff]
  %v358 = vld [vmem:[%s3 + $0x28] sm:$0xff]
  %v359 = vld [vmem:[%s3 + $0x30] sm:$0xff]
  %v360 = vld [vmem:[%s3 + $0x38] sm:$0xff]
  %v361 = vld [vmem:[%s3 + $0x40] sm:$0xff]
  %v362 = vld [vmem:[%s3 + $0x48] sm:$0xff]
  %v363 = vld [vmem:[%s3 + $0x50] sm:$0xff]
  %v364 = vld [vmem:[%s3 + $0x58] sm:$0xff]
  %v365 = vld [vmem:[%s3 + $0x60] sm:$0xff]
  %v366 = vld [vmem:[%s3 + $0x68] sm:$0xff]
  %v367 = vld [vmem:[%s3 + $0x70] sm:$0xff]
  %v368 = vld [vmem:[%s3 + $0x78] sm:$0xff]
  %v369 = vld [vmem:[%s5] sm:$0xf]
  %v371 = vperm.slane %v369, 0
  %v372 = vperm.slane %v369, 1
  %v373 = vperm.slane %v369, 2
  %v374 = vperm.slane %v369, 3
  %v380 = vsel %vm185, %v348, 0
  %v383 = vsel %vm185, %v351, 0
  %385 = vmatpush.msra.mxu0 0.0
  %386 = vmatpush.msra.mxu0 0.0
  %387 = vmatpush.msra.mxu0 0.0
  %388 = vmatpush.msra.mxu0 0.0
  %389 = vmatpush.msra.mxu0 0.0
  %390 = vmatpush.msra.mxu0 0.0
  %391 = vmatpush.msra.mxu0 0.0
  %392 = vmatpush.msra.mxu0 0.0
  %393 = vmatpush.msra.mxu0 0.0
  %394 = vmatpush.msra.mxu0 0.0
  %395 = vmatpush.msra.mxu0 0.0
  %396 = vmatpush.msra.mxu0 0.0
  %397 = vmatpush.msra.mxu0 %v365
  %398 = vmatpush.msra.mxu0 %v361
  %399 = vmatpush.msra.mxu0 %v357
  %400 = vmatpush.msra.mxu0 %v353
  %401 = vmatmul.f32.gmra.mxu0 %v380
  %v402 = vpop.f32.mrf.mxu0
  %v403 = vadd.f32 %v371, %v402
  %404 = vmatmul.f32.gmra.mxu0 %v383
  %v405 = vpop.f32.mrf.mxu0
  %v406 = vadd.f32 %v371, %v405
  %407 = vdwg.mxu0
  %408 = vmatpush.msra.mxu0 0.0
  %409 = vmatpush.msra.mxu0 0.0
  %410 = vmatpush.msra.mxu0 0.0
  %411 = vmatpush.msra.mxu0 0.0
  %412 = vmatpush.msra.mxu0 0.0
  %413 = vmatpush.msra.mxu0 0.0
  %414 = vmatpush.msra.mxu0 0.0
  %415 = vmatpush.msra.mxu0 0.0
  %416 = vmatpush.msra.mxu0 0.0
  %417 = vmatpush.msra.mxu0 0.0
  %418 = vmatpush.msra.mxu0 0.0
  %419 = vmatpush.msra.mxu0 0.0
  %420 = vmatpush.msra.mxu0 %v366
  %421 = vmatpush.msra.mxu0 %v362
  %422 = vmatpush.msra.mxu0 %v358
  %423 = vmatpush.msra.mxu0 %v354
  %424 = vmatmul.f32.gmra.mxu0 %v380
  %v425 = vpop.f32.mrf.mxu0
  %v426 = vadd.f32 %v372, %v425
  %427 = vmatmul.f32.gmra.mxu0 %v383
  %v428 = vpop.f32.mrf.mxu0
  %v429 = vadd.f32 %v372, %v428
  %430 = vdwg.mxu0
  %431 = vmatpush.msra.mxu0 0.0
  %432 = vmatpush.msra.mxu0 0.0
  %433 = vmatpush.msra.mxu0 0.0
  %434 = vmatpush.msra.mxu0 0.0
  %435 = vmatpush.msra.mxu0 0.0
  %436 = vmatpush.msra.mxu0 0.0
  %437 = vmatpush.msra.mxu0 0.0
  %438 = vmatpush.msra.mxu0 0.0
  %439 = vmatpush.msra.mxu0 0.0
  %440 = vmatpush.msra.mxu0 0.0
  %441 = vmatpush.msra.mxu0 0.0
  %442 = vmatpush.msra.mxu0 0.0
  %443 = vmatpush.msra.mxu0 %v367
  %444 = vmatpush.msra.mxu0 %v363
  %445 = vmatpush.msra.mxu0 %v359
  %446 = vmatpush.msra.mxu0 %v355
  %447 = vmatmul.f32.gmra.mxu0 %v380
  %v448 = vpop.f32.mrf.mxu0
  %v449 = vadd.f32 %v373, %v448
  %450 = vmatmul.f32.gmra.mxu0 %v383
  %v451 = vpop.f32.mrf.mxu0
  %v452 = vadd.f32 %v373, %v451
  %453 = vdwg.mxu0
  %454 = vmatpush.msra.mxu0 0.0
  %455 = vmatpush.msra.mxu0 0.0
  %456 = vmatpush.msra.mxu0 0.0
  %457 = vmatpush.msra.mxu0 0.0
  %458 = vmatpush.msra.mxu0 0.0
  %459 = vmatpush.msra.mxu0 0.0
  %460 = vmatpush.msra.mxu0 0.0
  %461 = vmatpush.msra.mxu0 0.0
  %462 = vmatpush.msra.mxu0 0.0
  %463 = vmatpush.msra.mxu0 0.0
  %464 = vmatpush.msra.mxu0 0.0
  %465 = vmatpush.msra.mxu0 0.0
  %466 = vmatpush.msra.mxu0 %v368
  %467 = vmatpush.msra.mxu0 %v364
  %468 = vmatpush.msra.mxu0 %v360
  %469 = vmatpush.msra.mxu0 %v356
  %470 = vmatmul.f32.gmra.mxu0 %v380
  %v471 = vpop.f32.mrf.mxu0
  %v472 = vadd.f32 %v374, %v471
  %473 = vmatmul.f32.gmra.mxu0 %v383
  %v474 = vpop.f32.mrf.mxu0
  %v475 = vadd.f32 %v374, %v474
  %476 = vdwg.mxu0
  %v477 = vld [vmem:[%s6] sm:$0xf]
  %v479 = vperm.slane %v477, 0
  %v480 = vperm.slane %v477, 1
  %v481 = vperm.slane %v477, 2
  %v482 = vperm.slane %v477, 3
  %v487 = vadd.f32 %v403, %v479
  %v488 = vadd.f32 %v426, %v480
  %v489 = vadd.f32 %v449, %v481
  %v490 = vadd.f32 %v472, %v482
  %v491 = vadd.f32 %v406, %v479
  %v492 = vadd.f32 %v429, %v480
  %v493 = vadd.f32 %v452, %v481
  %v494 = vadd.f32 %v475, %v482
  %495 = vst [vmem:[#allocation2] sm:$0xff] %v487
  %496 = vst [vmem:[#allocation2 + $0x8] sm:$0xff] %v488
  %497 = vst [vmem:[#allocation2 + $0x10] sm:$0xff] %v489
  %vm498 = vcmask 949248
  %499 = vst.msk [vmem:[#allocation2 + $0x18] sm:$0xff] %vm498, %v490
  %500 = vst [vmem:[#allocation2 + $0x20] sm:$0xff] %v491
  %501 = vst [vmem:[#allocation2 + $0x28] sm:$0xff] %v492
  %502 = vst [vmem:[#allocation2 + $0x30] sm:$0xff] %v493
  %503 = vst.msk [vmem:[#allocation2 + $0x38] sm:$0xff] %vm498, %v494
  %v504 = vld [vmem:[#allocation2] sm:$0xf]
  %v505 = vld [vmem:[#allocation2 + $0x8] sm:$0xf]
  %v506 = vld [vmem:[#allocation2 + $0x10] sm:$0xf]
  %v507 = vld [vmem:[#allocation2 + $0x18] sm:$0xf]
  %v508 = vtanh.pop %v504
  %v509 = vtanh.pop %v505
  %v510 = vtanh.pop %v506
  %v511 = vtanh.pop %v507
  %v512 = vld [vmem:[#allocation2] sm:$0xf0]
  %v513 = vld [vmem:[#allocation2 + $0x8] sm:$0xf0]
  %v514 = vld [vmem:[#allocation2 + $0x10] sm:$0xf0]
  %v515 = vld [vmem:[#allocation2 + $0x18] sm:$0xf0]
  %v516 = vld [vmem:[%s4] sm:$0xff]
  %v517 = vld [vmem:[%s4 + $0x8] sm:$0xff]
  %v518 = vld [vmem:[%s4 + $0x10] sm:$0xff]
  %v519 = vld [vmem:[%s4 + $0x18] sm:$0xff]
  %v520 = vld [vmem:[%s4 + $0x20] sm:$0xff]
  %v521 = vld [vmem:[%s4 + $0x28] sm:$0xff]
  %v522 = vld [vmem:[%s4 + $0x30] sm:$0xff]
  %v523 = vld [vmem:[%s4 + $0x38] sm:$0xff]
  %v524 = vld [vmem:[%s4 + $0x40] sm:$0xff]
  %v525 = vld [vmem:[%s4 + $0x48] sm:$0xff]
  %v526 = vld [vmem:[%s4 + $0x50] sm:$0xff]
  %v527 = vld [vmem:[%s4 + $0x58] sm:$0xff]
  %v528 = vld [vmem:[%s4 + $0x60] sm:$0xff]
  %v529 = vld [vmem:[%s4 + $0x68] sm:$0xff]
  %v530 = vld [vmem:[%s4 + $0x70] sm:$0xff]
  %v531 = vld [vmem:[%s4 + $0x78] sm:$0xff]
  %v532 = vld [vmem:[%s4 + $0x80] sm:$0xff]
  %v533 = vld [vmem:[%s4 + $0x88] sm:$0xff]
  %v534 = vld [vmem:[%s4 + $0x90] sm:$0xff]
  %v535 = vld [vmem:[%s4 + $0x98] sm:$0xff]
  %v536 = vld [vmem:[%s4 + $0xa0] sm:$0xff]
  %v537 = vld [vmem:[%s4 + $0xa8] sm:$0xff]
  %v538 = vld [vmem:[%s4 + $0xb0] sm:$0xff]
  %v539 = vld [vmem:[%s4 + $0xb8] sm:$0xff]
  %v540 = vld [vmem:[%s4 + $0xc0] sm:$0xff]
  %v541 = vld [vmem:[%s4 + $0xc8] sm:$0xff]
  %v542 = vld [vmem:[%s4 + $0xd0] sm:$0xff]
  %v543 = vld [vmem:[%s4 + $0xd8] sm:$0xff]
  %v544 = vld [vmem:[%s4 + $0xe0] sm:$0xff]
  %v545 = vld [vmem:[%s4 + $0xe8] sm:$0xff]
  %v546 = vld [vmem:[%s4 + $0xf0] sm:$0xff]
  %v547 = vld [vmem:[%s4 + $0xf8] sm:$0xff]
  %v548 = vld [vmem:[%s4 + $0x100] sm:$0xff]
  %v549 = vld [vmem:[%s4 + $0x108] sm:$0xff]
  %v550 = vld [vmem:[%s4 + $0x110] sm:$0xff]
  %v551 = vld [vmem:[%s4 + $0x118] sm:$0xff]
  %v552 = vld [vmem:[%s4 + $0x120] sm:$0xff]
  %v553 = vld [vmem:[%s4 + $0x128] sm:$0xff]
  %v554 = vld [vmem:[%s4 + $0x130] sm:$0xff]
  %v555 = vld [vmem:[%s4 + $0x138] sm:$0xff]
  %v556 = vld [vmem:[%s4 + $0x140] sm:$0xff]
  %v557 = vld [vmem:[%s4 + $0x148] sm:$0xff]
  %v558 = vld [vmem:[%s4 + $0x150] sm:$0xff]
  %v559 = vld [vmem:[%s4 + $0x158] sm:$0xff]
  %v560 = vld [vmem:[%s4 + $0x160] sm:$0xff]
  %v561 = vld [vmem:[%s4 + $0x168] sm:$0xff]
  %v562 = vld [vmem:[%s4 + $0x170] sm:$0xff]
  %v563 = vld [vmem:[%s4 + $0x178] sm:$0xff]
  %v564 = vld [vmem:[%s4 + $0x180] sm:$0xff]
  %v565 = vld [vmem:[%s4 + $0x188] sm:$0xff]
  %v566 = vld [vmem:[%s4 + $0x190] sm:$0xff]
  %v567 = vld [vmem:[%s4 + $0x198] sm:$0xff]
  %v568 = vld [vmem:[%s4 + $0x1a0] sm:$0xff]
  %v569 = vld [vmem:[%s4 + $0x1a8] sm:$0xff]
  %v570 = vld [vmem:[%s4 + $0x1b0] sm:$0xff]
  %v571 = vld [vmem:[%s4 + $0x1b8] sm:$0xff]
  %v572 = vld [vmem:[%s4 + $0x1c0] sm:$0xff]
  %v573 = vld [vmem:[%s4 + $0x1c8] sm:$0xff]
  %v574 = vld [vmem:[%s4 + $0x1d0] sm:$0xff]
  %v575 = vld [vmem:[%s4 + $0x1d8] sm:$0xff]
  %v576 = vld [vmem:[%s4 + $0x1e0] sm:$0xff]
  %v577 = vld [vmem:[%s4 + $0x1e8] sm:$0xff]
  %v578 = vld [vmem:[%s4 + $0x1f0] sm:$0xff]
  %v579 = vld [vmem:[%s4 + $0x1f8] sm:$0xff]
  %v580 = vld [vmem:[%s4 + $0x200] sm:$0xff]
  %v581 = vld [vmem:[%s4 + $0x208] sm:$0xff]
  %v582 = vld [vmem:[%s4 + $0x210] sm:$0xff]
  %v583 = vld [vmem:[%s4 + $0x218] sm:$0xff]
  %v584 = vld [vmem:[%s4 + $0x220] sm:$0xff]
  %v585 = vld [vmem:[%s4 + $0x228] sm:$0xff]
  %v586 = vld [vmem:[%s4 + $0x230] sm:$0xff]
  %v587 = vld [vmem:[%s4 + $0x238] sm:$0xff]
  %v588 = vld [vmem:[%s4 + $0x240] sm:$0xff]
  %v589 = vld [vmem:[%s4 + $0x248] sm:$0xff]
  %v590 = vld [vmem:[%s4 + $0x250] sm:$0xff]
  %v591 = vld [vmem:[%s4 + $0x258] sm:$0xff]
  %v592 = vld [vmem:[%s4 + $0x260] sm:$0xff]
  %v593 = vld [vmem:[%s4 + $0x268] sm:$0xff]
  %v594 = vld [vmem:[%s4 + $0x270] sm:$0xff]
  %v595 = vld [vmem:[%s4 + $0x278] sm:$0xff]
  %v596 = vld [vmem:[%s4 + $0x280] sm:$0xff]
  %v597 = vld [vmem:[%s4 + $0x288] sm:$0xff]
  %v598 = vld [vmem:[%s4 + $0x290] sm:$0xff]
  %v599 = vld [vmem:[%s4 + $0x298] sm:$0xff]
  %v600 = vld [vmem:[%s4 + $0x2a0] sm:$0xff]
  %v601 = vld [vmem:[%s4 + $0x2a8] sm:$0xff]
  %v602 = vld [vmem:[%s4 + $0x2b0] sm:$0xff]
  %v603 = vld [vmem:[%s4 + $0x2b8] sm:$0xff]
  %v604 = vld [vmem:[%s4 + $0x2c0] sm:$0xff]
  %v605 = vld [vmem:[%s4 + $0x2c8] sm:$0xff]
  %v606 = vld [vmem:[%s4 + $0x2d0] sm:$0xff]
  %v607 = vld [vmem:[%s4 + $0x2d8] sm:$0xff]
  %v608 = vld [vmem:[%s4 + $0x2e0] sm:$0xff]
  %v609 = vld [vmem:[%s4 + $0x2e8] sm:$0xff]
  %v610 = vld [vmem:[%s4 + $0x2f0] sm:$0xff]
  %v611 = vld [vmem:[%s4 + $0x2f8] sm:$0xff]
  %v612 = vld [vmem:[%s4 + $0x300] sm:$0xff]
  %v613 = vld [vmem:[%s4 + $0x308] sm:$0xff]
  %v614 = vld [vmem:[%s4 + $0x310] sm:$0xff]
  %v615 = vld [vmem:[%s4 + $0x318] sm:$0xff]
  %v616 = vld [vmem:[%s4 + $0x320] sm:$0xff]
  %v617 = vld [vmem:[%s4 + $0x328] sm:$0xff]
  %v618 = vld [vmem:[%s4 + $0x330] sm:$0xff]
  %v619 = vld [vmem:[%s4 + $0x338] sm:$0xff]
  %v620 = vld [vmem:[%s4 + $0x340] sm:$0xff]
  %v621 = vld [vmem:[%s4 + $0x348] sm:$0xff]
  %v622 = vld [vmem:[%s4 + $0x350] sm:$0xff]
  %v623 = vld [vmem:[%s4 + $0x358] sm:$0xff]
  %v624 = vld [vmem:[%s4 + $0x360] sm:$0xff]
  %v625 = vld [vmem:[%s4 + $0x368] sm:$0xff]
  %v626 = vld [vmem:[%s4 + $0x370] sm:$0xff]
  %v627 = vld [vmem:[%s4 + $0x378] sm:$0xff]
  %v628 = vld [vmem:[%s4 + $0x380] sm:$0xff]
  %v629 = vld [vmem:[%s4 + $0x388] sm:$0xff]
  %v630 = vld [vmem:[%s4 + $0x390] sm:$0xff]
  %v631 = vld [vmem:[%s4 + $0x398] sm:$0xff]
  %v632 = vld [vmem:[%s4 + $0x3a0] sm:$0xff]
  %v633 = vld [vmem:[%s4 + $0x3a8] sm:$0xff]
  %v634 = vld [vmem:[%s4 + $0x3b0] sm:$0xff]
  %v635 = vld [vmem:[%s4 + $0x3b8] sm:$0xff]
  %v636 = vld [vmem:[%s4 + $0x3c0] sm:$0xff]
  %v637 = vld [vmem:[%s4 + $0x3c8] sm:$0xff]
  %v638 = vld [vmem:[%s4 + $0x3d0] sm:$0xff]
  %v639 = vld [vmem:[%s4 + $0x3d8] sm:$0xff]
  %v640 = vld [vmem:[%s4 + $0x3e0] sm:$0xff]
  %v641 = vld [vmem:[%s4 + $0x3e8] sm:$0xff]
  %v642 = vld [vmem:[%s4 + $0x3f0] sm:$0xff]
  %v643 = vld [vmem:[%s4 + $0x3f8] sm:$0xff]
  %v644 = vld [vmem:[%s4 + $0x400] sm:$0xff]
  %v645 = vld [vmem:[%s4 + $0x408] sm:$0xff]
  %v646 = vld [vmem:[%s4 + $0x410] sm:$0xff]
  %v647 = vld [vmem:[%s4 + $0x418] sm:$0xff]
  %v648 = vld [vmem:[%s4 + $0x420] sm:$0xff]
  %v649 = vld [vmem:[%s4 + $0x428] sm:$0xff]
  %v650 = vld [vmem:[%s4 + $0x430] sm:$0xff]
  %v651 = vld [vmem:[%s4 + $0x438] sm:$0xff]
  %v652 = vld [vmem:[%s4 + $0x440] sm:$0xff]
  %v653 = vld [vmem:[%s4 + $0x448] sm:$0xff]
  %v654 = vld [vmem:[%s4 + $0x450] sm:$0xff]
  %v655 = vld [vmem:[%s4 + $0x458] sm:$0xff]
  %v656 = vld [vmem:[%s4 + $0x460] sm:$0xff]
  %v657 = vld [vmem:[%s4 + $0x468] sm:$0xff]
  %v658 = vld [vmem:[%s4 + $0x470] sm:$0xff]
  %v659 = vld [vmem:[%s4 + $0x478] sm:$0xff]
  %v660 = vld [vmem:[%s4 + $0x480] sm:$0xff]
  %v661 = vld [vmem:[%s4 + $0x488] sm:$0xff]
  %v662 = vld [vmem:[%s4 + $0x490] sm:$0xff]
  %v663 = vld [vmem:[%s4 + $0x498] sm:$0xff]
  %v664 = vld [vmem:[%s4 + $0x4a0] sm:$0xff]
  %v665 = vld [vmem:[%s4 + $0x4a8] sm:$0xff]
  %v666 = vld [vmem:[%s4 + $0x4b0] sm:$0xff]
  %v667 = vld [vmem:[%s4 + $0x4b8] sm:$0xff]
  %v668 = vld [vmem:[%s4 + $0x4c0] sm:$0xff]
  %v669 = vld [vmem:[%s4 + $0x4c8] sm:$0xff]
  %v670 = vld [vmem:[%s4 + $0x4d0] sm:$0xff]
  %v671 = vld [vmem:[%s4 + $0x4d8] sm:$0xff]
  %v672 = vld [vmem:[%s4 + $0x4e0] sm:$0xff]
  %v673 = vld [vmem:[%s4 + $0x4e8] sm:$0xff]
  %v674 = vld [vmem:[%s4 + $0x4f0] sm:$0xff]
  %v675 = vld [vmem:[%s4 + $0x4f8] sm:$0xff]
  %v676 = vld [vmem:[%s4 + $0x500] sm:$0xff]
  %v677 = vld [vmem:[%s4 + $0x508] sm:$0xff]
  %v678 = vld [vmem:[%s4 + $0x510] sm:$0xff]
  %v679 = vld [vmem:[%s4 + $0x518] sm:$0xff]
  %v680 = vld [vmem:[%s4 + $0x520] sm:$0xff]
  %v681 = vld [vmem:[%s4 + $0x528] sm:$0xff]
  %v682 = vld [vmem:[%s4 + $0x530] sm:$0xff]
  %v683 = vld [vmem:[%s4 + $0x538] sm:$0xff]
  %v684 = vld [vmem:[%s4 + $0x540] sm:$0xff]
  %v685 = vld [vmem:[%s4 + $0x548] sm:$0xff]
  %v686 = vld [vmem:[%s4 + $0x550] sm:$0xff]
  %v687 = vld [vmem:[%s4 + $0x558] sm:$0xff]
  %v688 = vld [vmem:[%s4 + $0x560] sm:$0xff]
  %v689 = vld [vmem:[%s4 + $0x568] sm:$0xff]
  %v690 = vld [vmem:[%s4 + $0x570] sm:$0xff]
  %v691 = vld [vmem:[%s4 + $0x578] sm:$0xff]
  %v692 = vld [vmem:[%s4 + $0x580] sm:$0xff]
  %v693 = vld [vmem:[%s4 + $0x588] sm:$0xff]
  %v694 = vld [vmem:[%s4 + $0x590] sm:$0xff]
  %v695 = vld [vmem:[%s4 + $0x598] sm:$0xff]
  %v696 = vld [vmem:[%s4 + $0x5a0] sm:$0xff]
  %v697 = vld [vmem:[%s4 + $0x5a8] sm:$0xff]
  %v698 = vld [vmem:[%s4 + $0x5b0] sm:$0xff]
  %v699 = vld [vmem:[%s4 + $0x5b8] sm:$0xff]
  %v700 = vld [vmem:[%s4 + $0x5c0] sm:$0xff]
  %v701 = vld [vmem:[%s4 + $0x5c8] sm:$0xff]
  %v702 = vld [vmem:[%s4 + $0x5d0] sm:$0xff]
  %v703 = vld [vmem:[%s4 + $0x5d8] sm:$0xff]
  %v704 = vld [vmem:[%s4 + $0x5e0] sm:$0xff]
  %v705 = vld [vmem:[%s4 + $0x5e8] sm:$0xff]
  %v706 = vld [vmem:[%s4 + $0x5f0] sm:$0xff]
  %v707 = vld [vmem:[%s4 + $0x5f8] sm:$0xff]
  %v708 = vld [vmem:[%s4 + $0x600] sm:$0xff]
  %v709 = vld [vmem:[%s4 + $0x608] sm:$0xff]
  %v710 = vld [vmem:[%s4 + $0x610] sm:$0xff]
  %v711 = vld [vmem:[%s4 + $0x618] sm:$0xff]
  %v712 = vld [vmem:[%s4 + $0x620] sm:$0xff]
  %v713 = vld [vmem:[%s4 + $0x628] sm:$0xff]
  %v714 = vld [vmem:[%s4 + $0x630] sm:$0xff]
  %v715 = vld [vmem:[%s4 + $0x638] sm:$0xff]
  %v716 = vld [vmem:[%s4 + $0x640] sm:$0xff]
  %v717 = vld [vmem:[%s4 + $0x648] sm:$0xff]
  %v718 = vld [vmem:[%s4 + $0x650] sm:$0xff]
  %v719 = vld [vmem:[%s4 + $0x658] sm:$0xff]
  %v720 = vld [vmem:[%s4 + $0x660] sm:$0xff]
  %v721 = vld [vmem:[%s4 + $0x668] sm:$0xff]
  %v722 = vld [vmem:[%s4 + $0x670] sm:$0xff]
  %v723 = vld [vmem:[%s4 + $0x678] sm:$0xff]
  %v724 = vld [vmem:[%s4 + $0x680] sm:$0xff]
  %v725 = vld [vmem:[%s4 + $0x688] sm:$0xff]
  %v726 = vld [vmem:[%s4 + $0x690] sm:$0xff]
  %v727 = vld [vmem:[%s4 + $0x698] sm:$0xff]
  %v728 = vld [vmem:[%s4 + $0x6a0] sm:$0xff]
  %v729 = vld [vmem:[%s4 + $0x6a8] sm:$0xff]
  %v730 = vld [vmem:[%s4 + $0x6b0] sm:$0xff]
  %v731 = vld [vmem:[%s4 + $0x6b8] sm:$0xff]
  %v732 = vld [vmem:[%s4 + $0x6c0] sm:$0xff]
  %v733 = vld [vmem:[%s4 + $0x6c8] sm:$0xff]
  %v734 = vld [vmem:[%s4 + $0x6d0] sm:$0xff]
  %v735 = vld [vmem:[%s4 + $0x6d8] sm:$0xff]
  %v736 = vld [vmem:[%s4 + $0x6e0] sm:$0xff]
  %v737 = vld [vmem:[%s4 + $0x6e8] sm:$0xff]
  %v738 = vld [vmem:[%s4 + $0x6f0] sm:$0xff]
  %v739 = vld [vmem:[%s4 + $0x6f8] sm:$0xff]
  %v740 = vld [vmem:[%s4 + $0x700] sm:$0xff]
  %v741 = vld [vmem:[%s4 + $0x708] sm:$0xff]
  %v742 = vld [vmem:[%s4 + $0x710] sm:$0xff]
  %v743 = vld [vmem:[%s4 + $0x718] sm:$0xff]
  %v744 = vld [vmem:[%s4 + $0x720] sm:$0xff]
  %v745 = vld [vmem:[%s4 + $0x728] sm:$0xff]
  %v746 = vld [vmem:[%s4 + $0x730] sm:$0xff]
  %v747 = vld [vmem:[%s4 + $0x738] sm:$0xff]
  %v748 = vld [vmem:[%s4 + $0x740] sm:$0xff]
  %v749 = vld [vmem:[%s4 + $0x748] sm:$0xff]
  %v750 = vld [vmem:[%s4 + $0x750] sm:$0xff]
  %v751 = vld [vmem:[%s4 + $0x758] sm:$0xff]
  %v752 = vld [vmem:[%s4 + $0x760] sm:$0xff]
  %v753 = vld [vmem:[%s4 + $0x768] sm:$0xff]
  %v754 = vld [vmem:[%s4 + $0x770] sm:$0xff]
  %v755 = vld [vmem:[%s4 + $0x778] sm:$0xff]
  %v756 = vld [vmem:[%s4 + $0x780] sm:$0xff]
  %v757 = vld [vmem:[%s4 + $0x788] sm:$0xff]
  %v758 = vld [vmem:[%s4 + $0x790] sm:$0xff]
  %v759 = vld [vmem:[%s4 + $0x798] sm:$0xff]
  %v760 = vld [vmem:[%s4 + $0x7a0] sm:$0xff]
  %v761 = vld [vmem:[%s4 + $0x7a8] sm:$0xff]
  %v762 = vld [vmem:[%s4 + $0x7b0] sm:$0xff]
  %v763 = vld [vmem:[%s4 + $0x7b8] sm:$0xff]
  %v764 = vld [vmem:[%s4 + $0x7c0] sm:$0xf]
  %v765 = vld [vmem:[%s4 + $0x7c8] sm:$0xf]
  %v766 = vld [vmem:[%s4 + $0x7d0] sm:$0xf]
  %v767 = vld [vmem:[%s4 + $0x7d8] sm:$0xf]
  %v769 = vsel %vm498, %v511, 0
  %vm771 = vcmask 1043456
  %v773 = vsel %vm771, %v764, 0
  %v776 = vsel %vm771, %v765, 0
  %v779 = vsel %vm771, %v766, 0
  %v782 = vsel %vm771, %v767, 0
  %784 = vmatpush.msra.mxu0 %v576
  %785 = vmatpush.msra.mxu0 %v572
  %786 = vmatpush.msra.mxu0 %v568
  %787 = vmatpush.msra.mxu0 %v564
  %788 = vmatpush.msra.mxu0 %v560
  %789 = vmatpush.msra.mxu0 %v556
  %790 = vmatpush.msra.mxu0 %v552
  %791 = vmatpush.msra.mxu0 %v548
  %792 = vmatpush.msra.mxu0 %v544
  %793 = vmatpush.msra.mxu0 %v540
  %794 = vmatpush.msra.mxu0 %v536
  %795 = vmatpush.msra.mxu0 %v532
  %796 = vmatpush.msra.mxu0 %v528
  %797 = vmatpush.msra.mxu0 %v524
  %798 = vmatpush.msra.mxu0 %v520
  %799 = vmatpush.msra.mxu0 %v516
  %800 = vmatmul.f32.gmra.mxu0 %v508
  %v801 = vpop.f32.mrf.mxu0
  %v802 = vadd.f32 0.0, %v801
  %803 = vdwg.mxu0
  %804 = vmatpush.msra.mxu0 %v640
  %805 = vmatpush.msra.mxu0 %v636
  %806 = vmatpush.msra.mxu0 %v632
  %807 = vmatpush.msra.mxu0 %v628
  %808 = vmatpush.msra.mxu0 %v624
  %809 = vmatpush.msra.mxu0 %v620
  %810 = vmatpush.msra.mxu0 %v616
  %811 = vmatpush.msra.mxu0 %v612
  %812 = vmatpush.msra.mxu0 %v608
  %813 = vmatpush.msra.mxu0 %v604
  %814 = vmatpush.msra.mxu0 %v600
  %815 = vmatpush.msra.mxu0 %v596
  %816 = vmatpush.msra.mxu0 %v592
  %817 = vmatpush.msra.mxu0 %v588
  %818 = vmatpush.msra.mxu0 %v584
  %819 = vmatpush.msra.mxu0 %v580
  %820 = vmatmul.f32.gmra.mxu0 %v509
  %v821 = vpop.f32.mrf.mxu0
  %v822 = vadd.f32 %v802, %v821
  %823 = vdwg.mxu0
  %824 = vmatpush.msra.mxu0 %v704
  %825 = vmatpush.msra.mxu0 %v700
  %826 = vmatpush.msra.mxu0 %v696
  %827 = vmatpush.msra.mxu0 %v692
  %828 = vmatpush.msra.mxu0 %v688
  %829 = vmatpush.msra.mxu0 %v684
  %830 = vmatpush.msra.mxu0 %v680
  %831 = vmatpush.msra.mxu0 %v676
  %832 = vmatpush.msra.mxu0 %v672
  %833 = vmatpush.msra.mxu0 %v668
  %834 = vmatpush.msra.mxu0 %v664
  %835 = vmatpush.msra.mxu0 %v660
  %836 = vmatpush.msra.mxu0 %v656
  %837 = vmatpush.msra.mxu0 %v652
  %838 = vmatpush.msra.mxu0 %v648
  %839 = vmatpush.msra.mxu0 %v644
  %840 = vmatmul.f32.gmra.mxu0 %v510
  %v841 = vpop.f32.mrf.mxu0
  %v842 = vadd.f32 %v822, %v841
  %843 = vdwg.mxu0
  %844 = vmatpush.msra.mxu0 0.0
  %845 = vmatpush.msra.mxu0 %v773
  %846 = vmatpush.msra.mxu0 %v760
  %847 = vmatpush.msra.mxu0 %v756
  %848 = vmatpush.msra.mxu0 %v752
  %849 = vmatpush.msra.mxu0 %v748
  %850 = vmatpush.msra.mxu0 %v744
  %851 = vmatpush.msra.mxu0 %v740
  %852 = vmatpush.msra.mxu0 %v736
  %853 = vmatpush.msra.mxu0 %v732
  %854 = vmatpush.msra.mxu0 %v728
  %855 = vmatpush.msra.mxu0 %v724
  %856 = vmatpush.msra.mxu0 %v720
  %857 = vmatpush.msra.mxu0 %v716
  %858 = vmatpush.msra.mxu0 %v712
  %859 = vmatpush.msra.mxu0 %v708
  %860 = vmatmul.f32.gmra.mxu0 %v769
  %v861 = vpop.f32.mrf.mxu0
  %v862 = vadd.f32 %v842, %v861
  %863 = vdwg.mxu0
  %864 = vmatpush.msra.mxu0 %v577
  %865 = vmatpush.msra.mxu0 %v573
  %866 = vmatpush.msra.mxu0 %v569
  %867 = vmatpush.msra.mxu0 %v565
  %868 = vmatpush.msra.mxu0 %v561
  %869 = vmatpush.msra.mxu0 %v557
  %870 = vmatpush.msra.mxu0 %v553
  %871 = vmatpush.msra.mxu0 %v549
  %872 = vmatpush.msra.mxu0 %v545
  %873 = vmatpush.msra.mxu0 %v541
  %874 = vmatpush.msra.mxu0 %v537
  %875 = vmatpush.msra.mxu0 %v533
  %876 = vmatpush.msra.mxu0 %v529
  %877 = vmatpush.msra.mxu0 %v525
  %878 = vmatpush.msra.mxu0 %v521
  %879 = vmatpush.msra.mxu0 %v517
  %880 = vmatmul.f32.gmra.mxu0 %v508
  %v881 = vpop.f32.mrf.mxu0
  %v882 = vadd.f32 0.0, %v881
  %883 = vdwg.mxu0
  %884 = vmatpush.msra.mxu0 %v641
  %885 = vmatpush.msra.mxu0 %v637
  %886 = vmatpush.msra.mxu0 %v633
  %887 = vmatpush.msra.mxu0 %v629
  %888 = vmatpush.msra.mxu0 %v625
  %889 = vmatpush.msra.mxu0 %v621
  %890 = vmatpush.msra.mxu0 %v617
  %891 = vmatpush.msra.mxu0 %v613
  %892 = vmatpush.msra.mxu0 %v609
  %893 = vmatpush.msra.mxu0 %v605
  %894 = vmatpush.msra.mxu0 %v601
  %895 = vmatpush.msra.mxu0 %v597
  %896 = vmatpush.msra.mxu0 %v593
  %897 = vmatpush.msra.mxu0 %v589
  %898 = vmatpush.msra.mxu0 %v585
  %899 = vmatpush.msra.mxu0 %v581
  %900 = vmatmul.f32.gmra.mxu0 %v509
  %v901 = vpop.f32.mrf.mxu0
  %v902 = vadd.f32 %v882, %v901
  %903 = vdwg.mxu0
  %904 = vmatpush.msra.mxu0 %v705
  %905 = vmatpush.msra.mxu0 %v701
  %906 = vmatpush.msra.mxu0 %v697
  %907 = vmatpush.msra.mxu0 %v693
  %908 = vmatpush.msra.mxu0 %v689
  %909 = vmatpush.msra.mxu0 %v685
  %910 = vmatpush.msra.mxu0 %v681
  %911 = vmatpush.msra.mxu0 %v677
  %912 = vmatpush.msra.mxu0 %v673
  %913 = vmatpush.msra.mxu0 %v669
  %914 = vmatpush.msra.mxu0 %v665
  %915 = vmatpush.msra.mxu0 %v661
  %916 = vmatpush.msra.mxu0 %v657
  %917 = vmatpush.msra.mxu0 %v653
  %918 = vmatpush.msra.mxu0 %v649
  %919 = vmatpush.msra.mxu0 %v645
  %920 = vmatmul.f32.gmra.mxu0 %v510
  %v921 = vpop.f32.mrf.mxu0
  %v922 = vadd.f32 %v902, %v921
  %923 = vdwg.mxu0
  %924 = vmatpush.msra.mxu0 0.0
  %925 = vmatpush.msra.mxu0 %v776
  %926 = vmatpush.msra.mxu0 %v761
  %927 = vmatpush.msra.mxu0 %v757
  %928 = vmatpush.msra.mxu0 %v753
  %929 = vmatpush.msra.mxu0 %v749
  %930 = vmatpush.msra.mxu0 %v745
  %931 = vmatpush.msra.mxu0 %v741
  %932 = vmatpush.msra.mxu0 %v737
  %933 = vmatpush.msra.mxu0 %v733
  %934 = vmatpush.msra.mxu0 %v729
  %935 = vmatpush.msra.mxu0 %v725
  %936 = vmatpush.msra.mxu0 %v721
  %937 = vmatpush.msra.mxu0 %v717
  %938 = vmatpush.msra.mxu0 %v713
  %939 = vmatpush.msra.mxu0 %v709
  %940 = vmatmul.f32.gmra.mxu0 %v769
  %v941 = vpop.f32.mrf.mxu0
  %v942 = vadd.f32 %v922, %v941
  %943 = vdwg.mxu0
  %944 = vmatpush.msra.mxu0 %v578
  %945 = vmatpush.msra.mxu0 %v574
  %946 = vmatpush.msra.mxu0 %v570
  %947 = vmatpush.msra.mxu0 %v566
  %948 = vmatpush.msra.mxu0 %v562
  %949 = vmatpush.msra.mxu0 %v558
  %950 = vmatpush.msra.mxu0 %v554
  %951 = vmatpush.msra.mxu0 %v550
  %952 = vmatpush.msra.mxu0 %v546
  %953 = vmatpush.msra.mxu0 %v542
  %954 = vmatpush.msra.mxu0 %v538
  %955 = vmatpush.msra.mxu0 %v534
  %956 = vmatpush.msra.mxu0 %v530
  %957 = vmatpush.msra.mxu0 %v526
  %958 = vmatpush.msra.mxu0 %v522
  %959 = vmatpush.msra.mxu0 %v518
  %960 = vmatmul.f32.gmra.mxu0 %v508
  %v961 = vpop.f32.mrf.mxu0
  %v962 = vadd.f32 0.0, %v961
  %963 = vdwg.mxu0
  %964 = vmatpush.msra.mxu0 %v642
  %965 = vmatpush.msra.mxu0 %v638
  %966 = vmatpush.msra.mxu0 %v634
  %967 = vmatpush.msra.mxu0 %v630
  %968 = vmatpush.msra.mxu0 %v626
  %969 = vmatpush.msra.mxu0 %v622
  %970 = vmatpush.msra.mxu0 %v618
  %971 = vmatpush.msra.mxu0 %v614
  %972 = vmatpush.msra.mxu0 %v610
  %973 = vmatpush.msra.mxu0 %v606
  %974 = vmatpush.msra.mxu0 %v602
  %975 = vmatpush.msra.mxu0 %v598
  %976 = vmatpush.msra.mxu0 %v594
  %977 = vmatpush.msra.mxu0 %v590
  %978 = vmatpush.msra.mxu0 %v586
  %979 = vmatpush.msra.mxu0 %v582
  %980 = vmatmul.f32.gmra.mxu0 %v509
  %v981 = vpop.f32.mrf.mxu0
  %v982 = vadd.f32 %v962, %v981
  %983 = vdwg.mxu0
  %984 = vmatpush.msra.mxu0 %v706
  %985 = vmatpush.msra.mxu0 %v702
  %986 = vmatpush.msra.mxu0 %v698
  %987 = vmatpush.msra.mxu0 %v694
  %988 = vmatpush.msra.mxu0 %v690
  %989 = vmatpush.msra.mxu0 %v686
  %990 = vmatpush.msra.mxu0 %v682
  %991 = vmatpush.msra.mxu0 %v678
  %992 = vmatpush.msra.mxu0 %v674
  %993 = vmatpush.msra.mxu0 %v670
  %994 = vmatpush.msra.mxu0 %v666
  %995 = vmatpush.msra.mxu0 %v662
  %996 = vmatpush.msra.mxu0 %v658
  %997 = vmatpush.msra.mxu0 %v654
  %998 = vmatpush.msra.mxu0 %v650
  %999 = vmatpush.msra.mxu0 %v646
  %1000 = vmatmul.f32.gmra.mxu0 %v510
  %v1001 = vpop.f32.mrf.mxu0
  %v1002 = vadd.f32 %v982, %v1001
  %1003 = vdwg.mxu0
  %1004 = vmatpush.msra.mxu0 0.0
  %1005 = vmatpush.msra.mxu0 %v779
  %1006 = vmatpush.msra.mxu0 %v762
  %1007 = vmatpush.msra.mxu0 %v758
  %1008 = vmatpush.msra.mxu0 %v754
  %1009 = vmatpush.msra.mxu0 %v750
  %1010 = vmatpush.msra.mxu0 %v746
  %1011 = vmatpush.msra.mxu0 %v742
  %1012 = vmatpush.msra.mxu0 %v738
  %1013 = vmatpush.msra.mxu0 %v734
  %1014 = vmatpush.msra.mxu0 %v730
  %1015 = vmatpush.msra.mxu0 %v726
  %1016 = vmatpush.msra.mxu0 %v722
  %1017 = vmatpush.msra.mxu0 %v718
  %1018 = vmatpush.msra.mxu0 %v714
  %1019 = vmatpush.msra.mxu0 %v710
  %1020 = vmatmul.f32.gmra.mxu0 %v769
  %v1021 = vpop.f32.mrf.mxu0
  %v1022 = vadd.f32 %v1002, %v1021
  %1023 = vdwg.mxu0
  %1024 = vmatpush.msra.mxu0 %v579
  %1025 = vmatpush.msra.mxu0 %v575
  %1026 = vmatpush.msra.mxu0 %v571
  %1027 = vmatpush.msra.mxu0 %v567
  %1028 = vmatpush.msra.mxu0 %v563
  %1029 = vmatpush.msra.mxu0 %v559
  %1030 = vmatpush.msra.mxu0 %v555
  %1031 = vmatpush.msra.mxu0 %v551
  %1032 = vmatpush.msra.mxu0 %v547
  %1033 = vmatpush.msra.mxu0 %v543
  %1034 = vmatpush.msra.mxu0 %v539
  %1035 = vmatpush.msra.mxu0 %v535
  %1036 = vmatpush.msra.mxu0 %v531
  %1037 = vmatpush.msra.mxu0 %v527
  %1038 = vmatpush.msra.mxu0 %v523
  %1039 = vmatpush.msra.mxu0 %v519
  %1040 = vmatmul.f32.gmra.mxu0 %v508
  %v1041 = vpop.f32.mrf.mxu0
  %v1042 = vadd.f32 0.0, %v1041
  %1043 = vdwg.mxu0
  %1044 = vmatpush.msra.mxu0 %v643
  %1045 = vmatpush.msra.mxu0 %v639
  %1046 = vmatpush.msra.mxu0 %v635
  %1047 = vmatpush.msra.mxu0 %v631
  %1048 = vmatpush.msra.mxu0 %v627
  %1049 = vmatpush.msra.mxu0 %v623
  %1050 = vmatpush.msra.mxu0 %v619
  %1051 = vmatpush.msra.mxu0 %v615
  %1052 = vmatpush.msra.mxu0 %v611
  %1053 = vmatpush.msra.mxu0 %v607
  %1054 = vmatpush.msra.mxu0 %v603
  %1055 = vmatpush.msra.mxu0 %v599
  %1056 = vmatpush.msra.mxu0 %v595
  %1057 = vmatpush.msra.mxu0 %v591
  %1058 = vmatpush.msra.mxu0 %v587
  %1059 = vmatpush.msra.mxu0 %v583
  %1060 = vmatmul.f32.gmra.mxu0 %v509
  %v1061 = vpop.f32.mrf.mxu0
  %v1062 = vadd.f32 %v1042, %v1061
  %1063 = vdwg.mxu0
  %1064 = vmatpush.msra.mxu0 %v707
  %1065 = vmatpush.msra.mxu0 %v703
  %1066 = vmatpush.msra.mxu0 %v699
  %1067 = vmatpush.msra.mxu0 %v695
  %1068 = vmatpush.msra.mxu0 %v691
  %1069 = vmatpush.msra.mxu0 %v687
  %1070 = vmatpush.msra.mxu0 %v683
  %1071 = vmatpush.msra.mxu0 %v679
  %1072 = vmatpush.msra.mxu0 %v675
  %1073 = vmatpush.msra.mxu0 %v671
  %1074 = vmatpush.msra.mxu0 %v667
  %1075 = vmatpush.msra.mxu0 %v663
  %1076 = vmatpush.msra.mxu0 %v659
  %1077 = vmatpush.msra.mxu0 %v655
  %1078 = vmatpush.msra.mxu0 %v651
  %1079 = vmatpush.msra.mxu0 %v647
  %1080 = vmatmul.f32.gmra.mxu0 %v510
  %v1081 = vpop.f32.mrf.mxu0
  %v1082 = vadd.f32 %v1062, %v1081
  %1083 = vdwg.mxu0
  %1084 = vmatpush.msra.mxu0 0.0
  %1085 = vmatpush.msra.mxu0 %v782
  %1086 = vmatpush.msra.mxu0 %v763
  %1087 = vmatpush.msra.mxu0 %v759
  %1088 = vmatpush.msra.mxu0 %v755
  %1089 = vmatpush.msra.mxu0 %v751
  %1090 = vmatpush.msra.mxu0 %v747
  %1091 = vmatpush.msra.mxu0 %v743
  %1092 = vmatpush.msra.mxu0 %v739
  %1093 = vmatpush.msra.mxu0 %v735
  %1094 = vmatpush.msra.mxu0 %v731
  %1095 = vmatpush.msra.mxu0 %v727
  %1096 = vmatpush.msra.mxu0 %v723
  %1097 = vmatpush.msra.mxu0 %v719
  %1098 = vmatpush.msra.mxu0 %v715
  %1099 = vmatpush.msra.mxu0 %v711
  %1100 = vmatmul.f32.gmra.mxu0 %v769
  %v1101 = vpop.f32.mrf.mxu0
  %v1102 = vadd.f32 %v1082, %v1101
  %1103 = vdwg.mxu0
  %v1108 = vrot.slane %v862, 4
  %v1109 = vrot.slane %v942, 4
  %v1110 = vrot.slane %v1022, 4
  %v1111 = vrot.slane %v1102, 4
  %v1116 = vadd.f32 %v512, %v1108
  %v1117 = vadd.f32 %v513, %v1109
  %v1118 = vadd.f32 %v514, %v1110
  %v1119 = vadd.f32 %v515, %v1111
  %v1120 = vtanh.pop %v1116
  %v1121 = vtanh.pop %v1117
  %v1122 = vtanh.pop %v1118
  %v1123 = vtanh.pop %v1119
  %v1128 = vrot.slane %v1120, 4
  %v1129 = vrot.slane %v1121, 4
  %v1130 = vrot.slane %v1122, 4
  %v1131 = vrot.slane %v1123, 4
  %v1136 = vadd.f32 %v508, %v1128
  %v1137 = vadd.f32 %v509, %v1129
  %v1138 = vadd.f32 %v510, %v1130
  %v1139 = vadd.f32 %v511, %v1131
  %v1140 = vld [vmem:[#allocation2 + $0x20] sm:$0xf]
  %v1141 = vld [vmem:[#allocation2 + $0x28] sm:$0xf]
  %v1142 = vld [vmem:[#allocation2 + $0x30] sm:$0xf]
  %v1143 = vld [vmem:[#allocation2 + $0x38] sm:$0xf]
  %v1144 = vsel %vm498, %v1131, 0
  %1146 = vmatpush.msra.mxu0 %v576
  %1147 = vmatpush.msra.mxu0 %v572
  %1148 = vmatpush.msra.mxu0 %v568
  %1149 = vmatpush.msra.mxu0 %v564
  %1150 = vmatpush.msra.mxu0 %v560
  %1151 = vmatpush.msra.mxu0 %v556
  %1152 = vmatpush.msra.mxu0 %v552
  %1153 = vmatpush.msra.mxu0 %v548
  %1154 = vmatpush.msra.mxu0 %v544
  %1155 = vmatpush.msra.mxu0 %v540
  %1156 = vmatpush.msra.mxu0 %v536
  %1157 = vmatpush.msra.mxu0 %v532
  %1158 = vmatpush.msra.mxu0 %v528
  %1159 = vmatpush.msra.mxu0 %v524
  %1160 = vmatpush.msra.mxu0 %v520
  %1161 = vmatpush.msra.mxu0 %v516
  %1162 = vmatmul.f32.gmra.mxu0 %v1128
  %v1163 = vpop.f32.mrf.mxu0
  %v1164 = vadd.f32 0.0, %v1163
  %1165 = vdwg.mxu0
  %1166 = vmatpush.msra.mxu0 %v640
  %1167 = vmatpush.msra.mxu0 %v636
  %1168 = vmatpush.msra.mxu0 %v632
  %1169 = vmatpush.msra.mxu0 %v628
  %1170 = vmatpush.msra.mxu0 %v624
  %1171 = vmatpush.msra.mxu0 %v620
  %1172 = vmatpush.msra.mxu0 %v616
  %1173 = vmatpush.msra.mxu0 %v612
  %1174 = vmatpush.msra.mxu0 %v608
  %1175 = vmatpush.msra.mxu0 %v604
  %1176 = vmatpush.msra.mxu0 %v600
  %1177 = vmatpush.msra.mxu0 %v596
  %1178 = vmatpush.msra.mxu0 %v592
  %1179 = vmatpush.msra.mxu0 %v588
  %1180 = vmatpush.msra.mxu0 %v584
  %1181 = vmatpush.msra.mxu0 %v580
  %1182 = vmatmul.f32.gmra.mxu0 %v1129
  %v1183 = vpop.f32.mrf.mxu0
  %v1184 = vadd.f32 %v1164, %v1183
  %1185 = vdwg.mxu0
  %1186 = vmatpush.msra.mxu0 %v704
  %1187 = vmatpush.msra.mxu0 %v700
  %1188 = vmatpush.msra.mxu0 %v696
  %1189 = vmatpush.msra.mxu0 %v692
  %1190 = vmatpush.msra.mxu0 %v688
  %1191 = vmatpush.msra.mxu0 %v684
  %1192 = vmatpush.msra.mxu0 %v680
  %1193 = vmatpush.msra.mxu0 %v676
  %1194 = vmatpush.msra.mxu0 %v672
  %1195 = vmatpush.msra.mxu0 %v668
  %1196 = vmatpush.msra.mxu0 %v664
  %1197 = vmatpush.msra.mxu0 %v660
  %1198 = vmatpush.msra.mxu0 %v656
  %1199 = vmatpush.msra.mxu0 %v652
  %1200 = vmatpush.msra.mxu0 %v648
  %1201 = vmatpush.msra.mxu0 %v644
  %1202 = vmatmul.f32.gmra.mxu0 %v1130
  %v1203 = vpop.f32.mrf.mxu0
  %v1204 = vadd.f32 %v1184, %v1203
  %1205 = vdwg.mxu0
  %1206 = vmatpush.msra.mxu0 0.0
  %1207 = vmatpush.msra.mxu0 %v773
  %1208 = vmatpush.msra.mxu0 %v760
  %1209 = vmatpush.msra.mxu0 %v756
  %1210 = vmatpush.msra.mxu0 %v752
  %1211 = vmatpush.msra.mxu0 %v748
  %1212 = vmatpush.msra.mxu0 %v744
  %1213 = vmatpush.msra.mxu0 %v740
  %1214 = vmatpush.msra.mxu0 %v736
  %1215 = vmatpush.msra.mxu0 %v732
  %1216 = vmatpush.msra.mxu0 %v728
  %1217 = vmatpush.msra.mxu0 %v724
  %1218 = vmatpush.msra.mxu0 %v720
  %1219 = vmatpush.msra.mxu0 %v716
  %1220 = vmatpush.msra.mxu0 %v712
  %1221 = vmatpush.msra.mxu0 %v708
  %1222 = vmatmul.f32.gmra.mxu0 %v1144
  %v1223 = vpop.f32.mrf.mxu0
  %v1224 = vadd.f32 %v1204, %v1223
  %1225 = vdwg.mxu0
  %1226 = vmatpush.msra.mxu0 %v577
  %1227 = vmatpush.msra.mxu0 %v573
  %1228 = vmatpush.msra.mxu0 %v569
  %1229 = vmatpush.msra.mxu0 %v565
  %1230 = vmatpush.msra.mxu0 %v561
  %1231 = vmatpush.msra.mxu0 %v557
  %1232 = vmatpush.msra.mxu0 %v553
  %1233 = vmatpush.msra.mxu0 %v549
  %1234 = vmatpush.msra.mxu0 %v545
  %1235 = vmatpush.msra.mxu0 %v541
  %1236 = vmatpush.msra.mxu0 %v537
  %1237 = vmatpush.msra.mxu0 %v533
  %1238 = vmatpush.msra.mxu0 %v529
  %1239 = vmatpush.msra.mxu0 %v525
  %1240 = vmatpush.msra.mxu0 %v521
  %1241 = vmatpush.msra.mxu0 %v517
  %1242 = vmatmul.f32.gmra.mxu0 %v1128
  %v1243 = vpop.f32.mrf.mxu0
  %v1244 = vadd.f32 0.0, %v1243
  %1245 = vdwg.mxu0
  %1246 = vmatpush.msra.mxu0 %v641
  %1247 = vmatpush.msra.mxu0 %v637
  %1248 = vmatpush.msra.mxu0 %v633
  %1249 = vmatpush.msra.mxu0 %v629
  %1250 = vmatpush.msra.mxu0 %v625
  %1251 = vmatpush.msra.mxu0 %v621
  %1252 = vmatpush.msra.mxu0 %v617
  %1253 = vmatpush.msra.mxu0 %v613
  %1254 = vmatpush.msra.mxu0 %v609
  %1255 = vmatpush.msra.mxu0 %v605
  %1256 = vmatpush.msra.mxu0 %v601
  %1257 = vmatpush.msra.mxu0 %v597
  %1258 = vmatpush.msra.mxu0 %v593
  %1259 = vmatpush.msra.mxu0 %v589
  %1260 = vmatpush.msra.mxu0 %v585
  %1261 = vmatpush.msra.mxu0 %v581
  %1262 = vmatmul.f32.gmra.mxu0 %v1129
  %v1263 = vpop.f32.mrf.mxu0
  %v1264 = vadd.f32 %v1244, %v1263
  %1265 = vdwg.mxu0
  %1266 = vmatpush.msra.mxu0 %v705
  %1267 = vmatpush.msra.mxu0 %v701
  %1268 = vmatpush.msra.mxu0 %v697
  %1269 = vmatpush.msra.mxu0 %v693
  %1270 = vmatpush.msra.mxu0 %v689
  %1271 = vmatpush.msra.mxu0 %v685
  %1272 = vmatpush.msra.mxu0 %v681
  %1273 = vmatpush.msra.mxu0 %v677
  %1274 = vmatpush.msra.mxu0 %v673
  %1275 = vmatpush.msra.mxu0 %v669
  %1276 = vmatpush.msra.mxu0 %v665
  %1277 = vmatpush.msra.mxu0 %v661
  %1278 = vmatpush.msra.mxu0 %v657
  %1279 = vmatpush.msra.mxu0 %v653
  %1280 = vmatpush.msra.mxu0 %v649
  %1281 = vmatpush.msra.mxu0 %v645
  %1282 = vmatmul.f32.gmra.mxu0 %v1130
  %v1283 = vpop.f32.mrf.mxu0
  %v1284 = vadd.f32 %v1264, %v1283
  %1285 = vdwg.mxu0
  %1286 = vmatpush.msra.mxu0 0.0
  %1287 = vmatpush.msra.mxu0 %v776
  %1288 = vmatpush.msra.mxu0 %v761
  %1289 = vmatpush.msra.mxu0 %v757
  %1290 = vmatpush.msra.mxu0 %v753
  %1291 = vmatpush.msra.mxu0 %v749
  %1292 = vmatpush.msra.mxu0 %v745
  %1293 = vmatpush.msra.mxu0 %v741
  %1294 = vmatpush.msra.mxu0 %v737
  %1295 = vmatpush.msra.mxu0 %v733
  %1296 = vmatpush.msra.mxu0 %v729
  %1297 = vmatpush.msra.mxu0 %v725
  %1298 = vmatpush.msra.mxu0 %v721
  %1299 = vmatpush.msra.mxu0 %v717
  %1300 = vmatpush.msra.mxu0 %v713
  %1301 = vmatpush.msra.mxu0 %v709
  %1302 = vmatmul.f32.gmra.mxu0 %v1144
  %v1303 = vpop.f32.mrf.mxu0
  %v1304 = vadd.f32 %v1284, %v1303
  %1305 = vdwg.mxu0
  %1306 = vmatpush.msra.mxu0 %v578
  %1307 = vmatpush.msra.mxu0 %v574
  %1308 = vmatpush.msra.mxu0 %v570
  %1309 = vmatpush.msra.mxu0 %v566
  %1310 = vmatpush.msra.mxu0 %v562
  %1311 = vmatpush.msra.mxu0 %v558
  %1312 = vmatpush.msra.mxu0 %v554
  %1313 = vmatpush.msra.mxu0 %v550
  %1314 = vmatpush.msra.mxu0 %v546
  %1315 = vmatpush.msra.mxu0 %v542
  %1316 = vmatpush.msra.mxu0 %v538
  %1317 = vmatpush.msra.mxu0 %v534
  %1318 = vmatpush.msra.mxu0 %v530
  %1319 = vmatpush.msra.mxu0 %v526
  %1320 = vmatpush.msra.mxu0 %v522
  %1321 = vmatpush.msra.mxu0 %v518
  %1322 = vmatmul.f32.gmra.mxu0 %v1128
  %v1323 = vpop.f32.mrf.mxu0
  %v1324 = vadd.f32 0.0, %v1323
  %1325 = vdwg.mxu0
  %1326 = vmatpush.msra.mxu0 %v642
  %1327 = vmatpush.msra.mxu0 %v638
  %1328 = vmatpush.msra.mxu0 %v634
  %1329 = vmatpush.msra.mxu0 %v630
  %1330 = vmatpush.msra.mxu0 %v626
  %1331 = vmatpush.msra.mxu0 %v622
  %1332 = vmatpush.msra.mxu0 %v618
  %1333 = vmatpush.msra.mxu0 %v614
  %1334 = vmatpush.msra.mxu0 %v610
  %1335 = vmatpush.msra.mxu0 %v606
  %1336 = vmatpush.msra.mxu0 %v602
  %1337 = vmatpush.msra.mxu0 %v598
  %1338 = vmatpush.msra.mxu0 %v594
  %1339 = vmatpush.msra.mxu0 %v590
  %1340 = vmatpush.msra.mxu0 %v586
  %1341 = vmatpush.msra.mxu0 %v582
  %1342 = vmatmul.f32.gmra.mxu0 %v1129
  %v1343 = vpop.f32.mrf.mxu0
  %v1344 = vadd.f32 %v1324, %v1343
  %1345 = vdwg.mxu0
  %1346 = vmatpush.msra.mxu0 %v706
  %1347 = vmatpush.msra.mxu0 %v702
  %1348 = vmatpush.msra.mxu0 %v698
  %1349 = vmatpush.msra.mxu0 %v694
  %1350 = vmatpush.msra.mxu0 %v690
  %1351 = vmatpush.msra.mxu0 %v686
  %1352 = vmatpush.msra.mxu0 %v682
  %1353 = vmatpush.msra.mxu0 %v678
  %1354 = vmatpush.msra.mxu0 %v674
  %1355 = vmatpush.msra.mxu0 %v670
  %1356 = vmatpush.msra.mxu0 %v666
  %1357 = vmatpush.msra.mxu0 %v662
  %1358 = vmatpush.msra.mxu0 %v658
  %1359 = vmatpush.msra.mxu0 %v654
  %1360 = vmatpush.msra.mxu0 %v650
  %1361 = vmatpush.msra.mxu0 %v646
  %1362 = vmatmul.f32.gmra.mxu0 %v1130
  %v1363 = vpop.f32.mrf.mxu0
  %v1364 = vadd.f32 %v1344, %v1363
  %1365 = vdwg.mxu0
  %1366 = vmatpush.msra.mxu0 0.0
  %1367 = vmatpush.msra.mxu0 %v779
  %1368 = vmatpush.msra.mxu0 %v762
  %1369 = vmatpush.msra.mxu0 %v758
  %1370 = vmatpush.msra.mxu0 %v754
  %1371 = vmatpush.msra.mxu0 %v750
  %1372 = vmatpush.msra.mxu0 %v746
  %1373 = vmatpush.msra.mxu0 %v742
  %1374 = vmatpush.msra.mxu0 %v738
  %1375 = vmatpush.msra.mxu0 %v734
  %1376 = vmatpush.msra.mxu0 %v730
  %1377 = vmatpush.msra.mxu0 %v726
  %1378 = vmatpush.msra.mxu0 %v722
  %1379 = vmatpush.msra.mxu0 %v718
  %1380 = vmatpush.msra.mxu0 %v714
  %1381 = vmatpush.msra.mxu0 %v710
  %1382 = vmatmul.f32.gmra.mxu0 %v1144
  %v1383 = vpop.f32.mrf.mxu0
  %v1384 = vadd.f32 %v1364, %v1383
  %1385 = vdwg.mxu0
  %1386 = vmatpush.msra.mxu0 %v579
  %1387 = vmatpush.msra.mxu0 %v575
  %1388 = vmatpush.msra.mxu0 %v571
  %1389 = vmatpush.msra.mxu0 %v567
  %1390 = vmatpush.msra.mxu0 %v563
  %1391 = vmatpush.msra.mxu0 %v559
  %1392 = vmatpush.msra.mxu0 %v555
  %1393 = vmatpush.msra.mxu0 %v551
  %1394 = vmatpush.msra.mxu0 %v547
  %1395 = vmatpush.msra.mxu0 %v543
  %1396 = vmatpush.msra.mxu0 %v539
  %1397 = vmatpush.msra.mxu0 %v535
  %1398 = vmatpush.msra.mxu0 %v531
  %1399 = vmatpush.msra.mxu0 %v527
  %1400 = vmatpush.msra.mxu0 %v523
  %1401 = vmatpush.msra.mxu0 %v519
  %1402 = vmatmul.f32.gmra.mxu0 %v1128
  %v1403 = vpop.f32.mrf.mxu0
  %v1404 = vadd.f32 0.0, %v1403
  %1405 = vdwg.mxu0
  %1406 = vmatpush.msra.mxu0 %v643
  %1407 = vmatpush.msra.mxu0 %v639
  %1408 = vmatpush.msra.mxu0 %v635
  %1409 = vmatpush.msra.mxu0 %v631
  %1410 = vmatpush.msra.mxu0 %v627
  %1411 = vmatpush.msra.mxu0 %v623
  %1412 = vmatpush.msra.mxu0 %v619
  %1413 = vmatpush.msra.mxu0 %v615
  %1414 = vmatpush.msra.mxu0 %v611
  %1415 = vmatpush.msra.mxu0 %v607
  %1416 = vmatpush.msra.mxu0 %v603
  %1417 = vmatpush.msra.mxu0 %v599
  %1418 = vmatpush.msra.mxu0 %v595
  %1419 = vmatpush.msra.mxu0 %v591
  %1420 = vmatpush.msra.mxu0 %v587
  %1421 = vmatpush.msra.mxu0 %v583
  %1422 = vmatmul.f32.gmra.mxu0 %v1129
  %v1423 = vpop.f32.mrf.mxu0
  %v1424 = vadd.f32 %v1404, %v1423
  %1425 = vdwg.mxu0
  %1426 = vmatpush.msra.mxu0 %v707
  %1427 = vmatpush.msra.mxu0 %v703
  %1428 = vmatpush.msra.mxu0 %v699
  %1429 = vmatpush.msra.mxu0 %v695
  %1430 = vmatpush.msra.mxu0 %v691
  %1431 = vmatpush.msra.mxu0 %v687
  %1432 = vmatpush.msra.mxu0 %v683
  %1433 = vmatpush.msra.mxu0 %v679
  %1434 = vmatpush.msra.mxu0 %v675
  %1435 = vmatpush.msra.mxu0 %v671
  %1436 = vmatpush.msra.mxu0 %v667
  %1437 = vmatpush.msra.mxu0 %v663
  %1438 = vmatpush.msra.mxu0 %v659
  %1439 = vmatpush.msra.mxu0 %v655
  %1440 = vmatpush.msra.mxu0 %v651
  %1441 = vmatpush.msra.mxu0 %v647
  %1442 = vmatmul.f32.gmra.mxu0 %v1130
  %v1443 = vpop.f32.mrf.mxu0
  %v1444 = vadd.f32 %v1424, %v1443
  %1445 = vdwg.mxu0
  %1446 = vmatpush.msra.mxu0 0.0
  %1447 = vmatpush.msra.mxu0 %v782
  %1448 = vmatpush.msra.mxu0 %v763
  %1449 = vmatpush.msra.mxu0 %v759
  %1450 = vmatpush.msra.mxu0 %v755
  %1451 = vmatpush.msra.mxu0 %v751
  %1452 = vmatpush.msra.mxu0 %v747
  %1453 = vmatpush.msra.mxu0 %v743
  %1454 = vmatpush.msra.mxu0 %v739
  %1455 = vmatpush.msra.mxu0 %v735
  %1456 = vmatpush.msra.mxu0 %v731
  %1457 = vmatpush.msra.mxu0 %v727
  %1458 = vmatpush.msra.mxu0 %v723
  %1459 = vmatpush.msra.mxu0 %v719
  %1460 = vmatpush.msra.mxu0 %v715
  %1461 = vmatpush.msra.mxu0 %v711
  %1462 = vmatmul.f32.gmra.mxu0 %v1144
  %v1463 = vpop.f32.mrf.mxu0
  %v1464 = vadd.f32 %v1444, %v1463
  %1465 = vdwg.mxu0
  %v1466 = vadd.f32 %v1140, %v1224
  %v1467 = vadd.f32 %v1141, %v1304
  %v1468 = vadd.f32 %v1142, %v1384
  %v1469 = vadd.f32 %v1143, %v1464
  %v1470 = vtanh.pop %v1466
  %v1471 = vtanh.pop %v1467
  %v1472 = vtanh.pop %v1468
  %v1473 = vtanh.pop %v1469
  %v1474 = vadd.f32 %v1136, %v1470
  %v1475 = vadd.f32 %v1137, %v1471
  %v1476 = vadd.f32 %v1138, %v1472
  %v1477 = vadd.f32 %v1139, %v1473
  %v1478 = vld [vmem:[#allocation2 + $0x20] sm:$0xf0]
  %v1479 = vld [vmem:[#allocation2 + $0x28] sm:$0xf0]
  %v1480 = vld [vmem:[#allocation2 + $0x30] sm:$0xf0]
  %v1481 = vld [vmem:[#allocation2 + $0x38] sm:$0xf0]
  %v1483 = vsel %vm498, %v1473, 0
  %1485 = vmatpush.msra.mxu0 %v576
  %1486 = vmatpush.msra.mxu0 %v572
  %1487 = vmatpush.msra.mxu0 %v568
  %1488 = vmatpush.msra.mxu0 %v564
  %1489 = vmatpush.msra.mxu0 %v560
  %1490 = vmatpush.msra.mxu0 %v556
  %1491 = vmatpush.msra.mxu0 %v552
  %1492 = vmatpush.msra.mxu0 %v548
  %1493 = vmatpush.msra.mxu0 %v544
  %1494 = vmatpush.msra.mxu0 %v540
  %1495 = vmatpush.msra.mxu0 %v536
  %1496 = vmatpush.msra.mxu0 %v532
  %1497 = vmatpush.msra.mxu0 %v528
  %1498 = vmatpush.msra.mxu0 %v524
  %1499 = vmatpush.msra.mxu0 %v520
  %1500 = vmatpush.msra.mxu0 %v516
  %1501 = vmatmul.f32.gmra.mxu0 %v1470
  %v1502 = vpop.f32.mrf.mxu0
  %v1503 = vadd.f32 0.0, %v1502
  %1504 = vdwg.mxu0
  %1505 = vmatpush.msra.mxu0 %v640
  %1506 = vmatpush.msra.mxu0 %v636
  %1507 = vmatpush.msra.mxu0 %v632
  %1508 = vmatpush.msra.mxu0 %v628
  %1509 = vmatpush.msra.mxu0 %v624
  %1510 = vmatpush.msra.mxu0 %v620
  %1511 = vmatpush.msra.mxu0 %v616
  %1512 = vmatpush.msra.mxu0 %v612
  %1513 = vmatpush.msra.mxu0 %v608
  %1514 = vmatpush.msra.mxu0 %v604
  %1515 = vmatpush.msra.mxu0 %v600
  %1516 = vmatpush.msra.mxu0 %v596
  %1517 = vmatpush.msra.mxu0 %v592
  %1518 = vmatpush.msra.mxu0 %v588
  %1519 = vmatpush.msra.mxu0 %v584
  %1520 = vmatpush.msra.mxu0 %v580
  %1521 = vmatmul.f32.gmra.mxu0 %v1471
  %v1522 = vpop.f32.mrf.mxu0
  %v1523 = vadd.f32 %v1503, %v1522
  %1524 = vdwg.mxu0
  %1525 = vmatpush.msra.mxu0 %v704
  %1526 = vmatpush.msra.mxu0 %v700
  %1527 = vmatpush.msra.mxu0 %v696
  %1528 = vmatpush.msra.mxu0 %v692
  %1529 = vmatpush.msra.mxu0 %v688
  %1530 = vmatpush.msra.mxu0 %v684
  %1531 = vmatpush.msra.mxu0 %v680
  %1532 = vmatpush.msra.mxu0 %v676
  %1533 = vmatpush.msra.mxu0 %v672
  %1534 = vmatpush.msra.mxu0 %v668
  %1535 = vmatpush.msra.mxu0 %v664
  %1536 = vmatpush.msra.mxu0 %v660
  %1537 = vmatpush.msra.mxu0 %v656
  %1538 = vmatpush.msra.mxu0 %v652
  %1539 = vmatpush.msra.mxu0 %v648
  %1540 = vmatpush.msra.mxu0 %v644
  %1541 = vmatmul.f32.gmra.mxu0 %v1472
  %v1542 = vpop.f32.mrf.mxu0
  %v1543 = vadd.f32 %v1523, %v1542
  %1544 = vdwg.mxu0
  %1545 = vmatpush.msra.mxu0 0.0
  %1546 = vmatpush.msra.mxu0 %v773
  %1547 = vmatpush.msra.mxu0 %v760
  %1548 = vmatpush.msra.mxu0 %v756
  %1549 = vmatpush.msra.mxu0 %v752
  %1550 = vmatpush.msra.mxu0 %v748
  %1551 = vmatpush.msra.mxu0 %v744
  %1552 = vmatpush.msra.mxu0 %v740
  %1553 = vmatpush.msra.mxu0 %v736
  %1554 = vmatpush.msra.mxu0 %v732
  %1555 = vmatpush.msra.mxu0 %v728
  %1556 = vmatpush.msra.mxu0 %v724
  %1557 = vmatpush.msra.mxu0 %v720
  %1558 = vmatpush.msra.mxu0 %v716
  %1559 = vmatpush.msra.mxu0 %v712
  %1560 = vmatpush.msra.mxu0 %v708
  %1561 = vmatmul.f32.gmra.mxu0 %v1483
  %v1562 = vpop.f32.mrf.mxu0
  %v1563 = vadd.f32 %v1543, %v1562
  %1564 = vdwg.mxu0
  %1565 = vmatpush.msra.mxu0 %v577
  %1566 = vmatpush.msra.mxu0 %v573
  %1567 = vmatpush.msra.mxu0 %v569
  %1568 = vmatpush.msra.mxu0 %v565
  %1569 = vmatpush.msra.mxu0 %v561
  %1570 = vmatpush.msra.mxu0 %v557
  %1571 = vmatpush.msra.mxu0 %v553
  %1572 = vmatpush.msra.mxu0 %v549
  %1573 = vmatpush.msra.mxu0 %v545
  %1574 = vmatpush.msra.mxu0 %v541
  %1575 = vmatpush.msra.mxu0 %v537
  %1576 = vmatpush.msra.mxu0 %v533
  %1577 = vmatpush.msra.mxu0 %v529
  %1578 = vmatpush.msra.mxu0 %v525
  %1579 = vmatpush.msra.mxu0 %v521
  %1580 = vmatpush.msra.mxu0 %v517
  %1581 = vmatmul.f32.gmra.mxu0 %v1470
  %v1582 = vpop.f32.mrf.mxu0
  %v1583 = vadd.f32 0.0, %v1582
  %1584 = vdwg.mxu0
  %1585 = vmatpush.msra.mxu0 %v641
  %1586 = vmatpush.msra.mxu0 %v637
  %1587 = vmatpush.msra.mxu0 %v633
  %1588 = vmatpush.msra.mxu0 %v629
  %1589 = vmatpush.msra.mxu0 %v625
  %1590 = vmatpush.msra.mxu0 %v621
  %1591 = vmatpush.msra.mxu0 %v617
  %1592 = vmatpush.msra.mxu0 %v613
  %1593 = vmatpush.msra.mxu0 %v609
  %1594 = vmatpush.msra.mxu0 %v605
  %1595 = vmatpush.msra.mxu0 %v601
  %1596 = vmatpush.msra.mxu0 %v597
  %1597 = vmatpush.msra.mxu0 %v593
  %1598 = vmatpush.msra.mxu0 %v589
  %1599 = vmatpush.msra.mxu0 %v585
  %1600 = vmatpush.msra.mxu0 %v581
  %1601 = vmatmul.f32.gmra.mxu0 %v1471
  %v1602 = vpop.f32.mrf.mxu0
  %v1603 = vadd.f32 %v1583, %v1602
  %1604 = vdwg.mxu0
  %1605 = vmatpush.msra.mxu0 %v705
  %1606 = vmatpush.msra.mxu0 %v701
  %1607 = vmatpush.msra.mxu0 %v697
  %1608 = vmatpush.msra.mxu0 %v693
  %1609 = vmatpush.msra.mxu0 %v689
  %1610 = vmatpush.msra.mxu0 %v685
  %1611 = vmatpush.msra.mxu0 %v681
  %1612 = vmatpush.msra.mxu0 %v677
  %1613 = vmatpush.msra.mxu0 %v673
  %1614 = vmatpush.msra.mxu0 %v669
  %1615 = vmatpush.msra.mxu0 %v665
  %1616 = vmatpush.msra.mxu0 %v661
  %1617 = vmatpush.msra.mxu0 %v657
  %1618 = vmatpush.msra.mxu0 %v653
  %1619 = vmatpush.msra.mxu0 %v649
  %1620 = vmatpush.msra.mxu0 %v645
  %1621 = vmatmul.f32.gmra.mxu0 %v1472
  %v1622 = vpop.f32.mrf.mxu0
  %v1623 = vadd.f32 %v1603, %v1622
  %1624 = vdwg.mxu0
  %1625 = vmatpush.msra.mxu0 0.0
  %1626 = vmatpush.msra.mxu0 %v776
  %1627 = vmatpush.msra.mxu0 %v761
  %1628 = vmatpush.msra.mxu0 %v757
  %1629 = vmatpush.msra.mxu0 %v753
  %1630 = vmatpush.msra.mxu0 %v749
  %1631 = vmatpush.msra.mxu0 %v745
  %1632 = vmatpush.msra.mxu0 %v741
  %1633 = vmatpush.msra.mxu0 %v737
  %1634 = vmatpush.msra.mxu0 %v733
  %1635 = vmatpush.msra.mxu0 %v729
  %1636 = vmatpush.msra.mxu0 %v725
  %1637 = vmatpush.msra.mxu0 %v721
  %1638 = vmatpush.msra.mxu0 %v717
  %1639 = vmatpush.msra.mxu0 %v713
  %1640 = vmatpush.msra.mxu0 %v709
  %1641 = vmatmul.f32.gmra.mxu0 %v1483
  %v1642 = vpop.f32.mrf.mxu0
  %v1643 = vadd.f32 %v1623, %v1642
  %1644 = vdwg.mxu0
  %1645 = vmatpush.msra.mxu0 %v578
  %1646 = vmatpush.msra.mxu0 %v574
  %1647 = vmatpush.msra.mxu0 %v570
  %1648 = vmatpush.msra.mxu0 %v566
  %1649 = vmatpush.msra.mxu0 %v562
  %1650 = vmatpush.msra.mxu0 %v558
  %1651 = vmatpush.msra.mxu0 %v554
  %1652 = vmatpush.msra.mxu0 %v550
  %1653 = vmatpush.msra.mxu0 %v546
  %1654 = vmatpush.msra.mxu0 %v542
  %1655 = vmatpush.msra.mxu0 %v538
  %1656 = vmatpush.msra.mxu0 %v534
  %1657 = vmatpush.msra.mxu0 %v530
  %1658 = vmatpush.msra.mxu0 %v526
  %1659 = vmatpush.msra.mxu0 %v522
  %1660 = vmatpush.msra.mxu0 %v518
  %1661 = vmatmul.f32.gmra.mxu0 %v1470
  %v1662 = vpop.f32.mrf.mxu0
  %v1663 = vadd.f32 0.0, %v1662
  %1664 = vdwg.mxu0
  %1665 = vmatpush.msra.mxu0 %v642
  %1666 = vmatpush.msra.mxu0 %v638
  %1667 = vmatpush.msra.mxu0 %v634
  %1668 = vmatpush.msra.mxu0 %v630
  %1669 = vmatpush.msra.mxu0 %v626
  %1670 = vmatpush.msra.mxu0 %v622
  %1671 = vmatpush.msra.mxu0 %v618
  %1672 = vmatpush.msra.mxu0 %v614
  %1673 = vmatpush.msra.mxu0 %v610
  %1674 = vmatpush.msra.mxu0 %v606
  %1675 = vmatpush.msra.mxu0 %v602
  %1676 = vmatpush.msra.mxu0 %v598
  %1677 = vmatpush.msra.mxu0 %v594
  %1678 = vmatpush.msra.mxu0 %v590
  %1679 = vmatpush.msra.mxu0 %v586
  %1680 = vmatpush.msra.mxu0 %v582
  %1681 = vmatmul.f32.gmra.mxu0 %v1471
  %v1682 = vpop.f32.mrf.mxu0
  %v1683 = vadd.f32 %v1663, %v1682
  %1684 = vdwg.mxu0
  %1685 = vmatpush.msra.mxu0 %v706
  %1686 = vmatpush.msra.mxu0 %v702
  %1687 = vmatpush.msra.mxu0 %v698
  %1688 = vmatpush.msra.mxu0 %v694
  %1689 = vmatpush.msra.mxu0 %v690
  %1690 = vmatpush.msra.mxu0 %v686
  %1691 = vmatpush.msra.mxu0 %v682
  %1692 = vmatpush.msra.mxu0 %v678
  %1693 = vmatpush.msra.mxu0 %v674
  %1694 = vmatpush.msra.mxu0 %v670
  %1695 = vmatpush.msra.mxu0 %v666
  %1696 = vmatpush.msra.mxu0 %v662
  %1697 = vmatpush.msra.mxu0 %v658
  %1698 = vmatpush.msra.mxu0 %v654
  %1699 = vmatpush.msra.mxu0 %v650
  %1700 = vmatpush.msra.mxu0 %v646
  %1701 = vmatmul.f32.gmra.mxu0 %v1472
  %v1702 = vpop.f32.mrf.mxu0
  %v1703 = vadd.f32 %v1683, %v1702
  %1704 = vdwg.mxu0
  %1705 = vmatpush.msra.mxu0 0.0
  %1706 = vmatpush.msra.mxu0 %v779
  %1707 = vmatpush.msra.mxu0 %v762
  %1708 = vmatpush.msra.mxu0 %v758
  %1709 = vmatpush.msra.mxu0 %v754
  %1710 = vmatpush.msra.mxu0 %v750
  %1711 = vmatpush.msra.mxu0 %v746
  %1712 = vmatpush.msra.mxu0 %v742
  %1713 = vmatpush.msra.mxu0 %v738
  %1714 = vmatpush.msra.mxu0 %v734
  %1715 = vmatpush.msra.mxu0 %v730
  %1716 = vmatpush.msra.mxu0 %v726
  %1717 = vmatpush.msra.mxu0 %v722
  %1718 = vmatpush.msra.mxu0 %v718
  %1719 = vmatpush.msra.mxu0 %v714
  %1720 = vmatpush.msra.mxu0 %v710
  %1721 = vmatmul.f32.gmra.mxu0 %v1483
  %v1722 = vpop.f32.mrf.mxu0
  %v1723 = vadd.f32 %v1703, %v1722
  %1724 = vdwg.mxu0
  %1725 = vmatpush.msra.mxu0 %v579
  %1726 = vmatpush.msra.mxu0 %v575
  %1727 = vmatpush.msra.mxu0 %v571
  %1728 = vmatpush.msra.mxu0 %v567
  %1729 = vmatpush.msra.mxu0 %v563
  %1730 = vmatpush.msra.mxu0 %v559
  %1731 = vmatpush.msra.mxu0 %v555
  %1732 = vmatpush.msra.mxu0 %v551
  %1733 = vmatpush.msra.mxu0 %v547
  %1734 = vmatpush.msra.mxu0 %v543
  %1735 = vmatpush.msra.mxu0 %v539
  %1736 = vmatpush.msra.mxu0 %v535
  %1737 = vmatpush.msra.mxu0 %v531
  %1738 = vmatpush.msra.mxu0 %v527
  %1739 = vmatpush.msra.mxu0 %v523
  %1740 = vmatpush.msra.mxu0 %v519
  %1741 = vmatmul.f32.gmra.mxu0 %v1470
  %v1742 = vpop.f32.mrf.mxu0
  %v1743 = vadd.f32 0.0, %v1742
  %1744 = vdwg.mxu0
  %1745 = vmatpush.msra.mxu0 %v643
  %1746 = vmatpush.msra.mxu0 %v639
  %1747 = vmatpush.msra.mxu0 %v635
  %1748 = vmatpush.msra.mxu0 %v631
  %1749 = vmatpush.msra.mxu0 %v627
  %1750 = vmatpush.msra.mxu0 %v623
  %1751 = vmatpush.msra.mxu0 %v619
  %1752 = vmatpush.msra.mxu0 %v615
  %1753 = vmatpush.msra.mxu0 %v611
  %1754 = vmatpush.msra.mxu0 %v607
  %1755 = vmatpush.msra.mxu0 %v603
  %1756 = vmatpush.msra.mxu0 %v599
  %1757 = vmatpush.msra.mxu0 %v595
  %1758 = vmatpush.msra.mxu0 %v591
  %1759 = vmatpush.msra.mxu0 %v587
  %1760 = vmatpush.msra.mxu0 %v583
  %1761 = vmatmul.f32.gmra.mxu0 %v1471
  %v1762 = vpop.f32.mrf.mxu0
  %v1763 = vadd.f32 %v1743, %v1762
  %1764 = vdwg.mxu0
  %1765 = vmatpush.msra.mxu0 %v707
  %1766 = vmatpush.msra.mxu0 %v703
  %1767 = vmatpush.msra.mxu0 %v699
  %1768 = vmatpush.msra.mxu0 %v695
  %1769 = vmatpush.msra.mxu0 %v691
  %1770 = vmatpush.msra.mxu0 %v687
  %1771 = vmatpush.msra.mxu0 %v683
  %1772 = vmatpush.msra.mxu0 %v679
  %1773 = vmatpush.msra.mxu0 %v675
  %1774 = vmatpush.msra.mxu0 %v671
  %1775 = vmatpush.msra.mxu0 %v667
  %1776 = vmatpush.msra.mxu0 %v663
  %1777 = vmatpush.msra.mxu0 %v659
  %1778 = vmatpush.msra.mxu0 %v655
  %1779 = vmatpush.msra.mxu0 %v651
  %1780 = vmatpush.msra.mxu0 %v647
  %1781 = vmatmul.f32.gmra.mxu0 %v1472
  %v1782 = vpop.f32.mrf.mxu0
  %v1783 = vadd.f32 %v1763, %v1782
  %1784 = vdwg.mxu0
  %1785 = vmatpush.msra.mxu0 0.0
  %1786 = vmatpush.msra.mxu0 %v782
  %1787 = vmatpush.msra.mxu0 %v763
  %1788 = vmatpush.msra.mxu0 %v759
  %1789 = vmatpush.msra.mxu0 %v755
  %1790 = vmatpush.msra.mxu0 %v751
  %1791 = vmatpush.msra.mxu0 %v747
  %1792 = vmatpush.msra.mxu0 %v743
  %1793 = vmatpush.msra.mxu0 %v739
  %1794 = vmatpush.msra.mxu0 %v735
  %1795 = vmatpush.msra.mxu0 %v731
  %1796 = vmatpush.msra.mxu0 %v727
  %1797 = vmatpush.msra.mxu0 %v723
  %1798 = vmatpush.msra.mxu0 %v719
  %1799 = vmatpush.msra.mxu0 %v715
  %1800 = vmatpush.msra.mxu0 %v711
  %1801 = vmatmul.f32.gmra.mxu0 %v1483
  %v1802 = vpop.f32.mrf.mxu0
  %v1803 = vadd.f32 %v1783, %v1802
  %1804 = vdwg.mxu0
  %v1809 = vrot.slane %v1563, 4
  %v1810 = vrot.slane %v1643, 4
  %v1811 = vrot.slane %v1723, 4
  %v1812 = vrot.slane %v1803, 4
  %v1817 = vadd.f32 %v1478, %v1809
  %v1818 = vadd.f32 %v1479, %v1810
  %v1819 = vadd.f32 %v1480, %v1811
  %v1820 = vadd.f32 %v1481, %v1812
  %v1821 = vtanh.pop %v1817
  %v1822 = vtanh.pop %v1818
  %v1823 = vtanh.pop %v1819
  %v1824 = vtanh.pop %v1820
  %v1829 = vrot.slane %v1821, 4
  %v1830 = vrot.slane %v1822, 4
  %v1831 = vrot.slane %v1823, 4
  %v1832 = vrot.slane %v1824, 4
  %v1837 = vadd.f32 %v1474, %v1829
  %v1838 = vadd.f32 %v1475, %v1830
  %v1839 = vadd.f32 %v1476, %v1831
  %v1840 = vadd.f32 %v1477, %v1832
  %v1841 = vmul.f32 %v1837, 0.25
  %v1842 = vmul.f32 %v1838, 0.25
  %v1843 = vmul.f32 %v1839, 0.25
  %v1844 = vmul.f32 %v1840, 0.25
  %v1845 = vld [vmem:[%s8] sm:$0xff]
  %v1846 = vld [vmem:[%s8 + $0x8] sm:$0xff]
  %v1847 = vld [vmem:[%s8 + $0x10] sm:$0xff]
  %v1848 = vld [vmem:[%s8 + $0x18] sm:$0xff]
  %v1849 = vld [vmem:[%s8 + $0x20] sm:$0xff]
  %v1850 = vld [vmem:[%s8 + $0x28] sm:$0xff]
  %v1851 = vld [vmem:[%s8 + $0x30] sm:$0xff]
  %v1852 = vld [vmem:[%s8 + $0x38] sm:$0xff]
  %v1853 = vld [vmem:[%s8 + $0x40] sm:$0xff]
  %v1854 = vld [vmem:[%s8 + $0x48] sm:$0xff]
  %v1855 = vld [vmem:[%s8 + $0x50] sm:$0xff]
  %v1856 = vld [vmem:[%s8 + $0x58] sm:$0xff]
  %v1857 = vld [vmem:[%s8 + $0x60] sm:$0xff]
  %v1858 = vld [vmem:[%s8 + $0x68] sm:$0xff]
  %v1859 = vld [vmem:[%s8 + $0x70] sm:$0xff]
  %v1860 = vld [vmem:[%s8 + $0x78] sm:$0xff]
  %v1861 = vld [vmem:[%s8 + $0x80] sm:$0xff]
  %v1862 = vld [vmem:[%s8 + $0x88] sm:$0xff]
  %v1863 = vld [vmem:[%s8 + $0x90] sm:$0xff]
  %v1864 = vld [vmem:[%s8 + $0x98] sm:$0xff]
  %v1865 = vld [vmem:[%s8 + $0xa0] sm:$0xff]
  %v1866 = vld [vmem:[%s8 + $0xa8] sm:$0xff]
  %v1867 = vld [vmem:[%s8 + $0xb0] sm:$0xff]
  %v1868 = vld [vmem:[%s8 + $0xb8] sm:$0xff]
  %v1869 = vld [vmem:[%s8 + $0xc0] sm:$0xff]
  %v1870 = vld [vmem:[%s8 + $0xc8] sm:$0xff]
  %v1871 = vld [vmem:[%s8 + $0xd0] sm:$0xff]
  %v1872 = vld [vmem:[%s8 + $0xd8] sm:$0xff]
  %v1873 = vld [vmem:[%s8 + $0xe0] sm:$0xff]
  %v1874 = vld [vmem:[%s8 + $0xe8] sm:$0xff]
  %v1875 = vld [vmem:[%s8 + $0xf0] sm:$0xff]
  %v1876 = vld [vmem:[%s8 + $0xf8] sm:$0xff]
  %v1877 = vld [vmem:[%s8 + $0x100] sm:$0xff]
  %v1878 = vld [vmem:[%s8 + $0x108] sm:$0xff]
  %v1879 = vld [vmem:[%s8 + $0x110] sm:$0xff]
  %v1880 = vld [vmem:[%s8 + $0x118] sm:$0xff]
  %v1881 = vld [vmem:[%s8 + $0x120] sm:$0xff]
  %v1882 = vld [vmem:[%s8 + $0x128] sm:$0xff]
  %v1883 = vld [vmem:[%s8 + $0x130] sm:$0xff]
  %v1884 = vld [vmem:[%s8 + $0x138] sm:$0xff]
  %v1885 = vld [vmem:[%s8 + $0x140] sm:$0xff]
  %v1886 = vld [vmem:[%s8 + $0x148] sm:$0xff]
  %v1887 = vld [vmem:[%s8 + $0x150] sm:$0xff]
  %v1888 = vld [vmem:[%s8 + $0x158] sm:$0xff]
  %v1889 = vld [vmem:[%s8 + $0x160] sm:$0xff]
  %v1890 = vld [vmem:[%s8 + $0x168] sm:$0xff]
  %v1891 = vld [vmem:[%s8 + $0x170] sm:$0xff]
  %v1892 = vld [vmem:[%s8 + $0x178] sm:$0xff]
  %v1893 = vld [vmem:[%s8 + $0x180] sm:$0xff]
  %v1894 = vld [vmem:[%s8 + $0x188] sm:$0xff]
  %v1895 = vld [vmem:[%s8 + $0x190] sm:$0xff]
  %v1896 = vld [vmem:[%s8 + $0x198] sm:$0xff]
  %v1897 = vld [vmem:[%s8 + $0x1a0] sm:$0xff]
  %v1898 = vld [vmem:[%s8 + $0x1a8] sm:$0xff]
  %v1899 = vld [vmem:[%s8 + $0x1b0] sm:$0xff]
  %v1900 = vld [vmem:[%s8 + $0x1b8] sm:$0xff]
  %v1901 = vld [vmem:[%s8 + $0x1c0] sm:$0xff]
  %v1902 = vld [vmem:[%s8 + $0x1c8] sm:$0xff]
  %v1903 = vld [vmem:[%s8 + $0x1d0] sm:$0xff]
  %v1904 = vld [vmem:[%s8 + $0x1d8] sm:$0xff]
  %v1905 = vld [vmem:[%s8 + $0x1e0] sm:$0xff]
  %v1906 = vld [vmem:[%s8 + $0x1e8] sm:$0xff]
  %v1907 = vld [vmem:[%s8 + $0x1f0] sm:$0xf]
  %v1908 = vld [vmem:[%s7] sm:$0xf]
  %v1909 = vld [vmem:[%s9] sm:$0xff]
  %v1910 = vld [vmem:[%s9 + $0x8] sm:$0x7]
  %vm1911 = vcmask 89088
  %v1913 = vsel %vm1911, %v1908, 0
  %vm1915 = vcmask 1042432
  %v1917 = vsel %vm1915, %v1910, 0
  %1919 = vmatpush.msra.mxu0 0.0
  %1920 = vmatpush.msra.mxu0 0.0
  %1921 = vmatpush.msra.mxu0 0.0
  %1922 = vmatpush.msra.mxu0 0.0
  %1923 = vmatpush.msra.mxu0 0.0
  %1924 = vmatpush.msra.mxu0 0.0
  %1925 = vmatpush.msra.mxu0 0.0
  %1926 = vmatpush.msra.mxu0 0.0
  %1927 = vmatpush.msra.mxu0 0.0
  %1928 = vmatpush.msra.mxu0 0.0
  %1929 = vmatpush.msra.mxu0 0.0
  %1930 = vmatpush.msra.mxu0 0.0
  %1931 = vmatpush.msra.mxu0 0.0
  %1932 = vmatpush.msra.mxu0 0.0
  %1933 = vmatpush.msra.mxu0 %v1917
  %1934 = vmatpush.msra.mxu0 %v1909
  %1935 = vmatmul.f32.gmra.mxu0 %v1913
  %v1936 = vpop.f32.mrf.mxu0
  %v1937 = vadd.f32 0.0, %v1936
  %1938 = vdwg.mxu0
  %v1940 = vsel %vm498, %v1844, 0
  %v1943 = vsel %vm771, %v1907, 0
  %1945 = vmatpush.msra.mxu0 %v1860
  %1946 = vmatpush.msra.mxu0 %v1859
  %1947 = vmatpush.msra.mxu0 %v1858
  %1948 = vmatpush.msra.mxu0 %v1857
  %1949 = vmatpush.msra.mxu0 %v1856
  %1950 = vmatpush.msra.mxu0 %v1855
  %1951 = vmatpush.msra.mxu0 %v1854
  %1952 = vmatpush.msra.mxu0 %v1853
  %1953 = vmatpush.msra.mxu0 %v1852
  %1954 = vmatpush.msra.mxu0 %v1851
  %1955 = vmatpush.msra.mxu0 %v1850
  %1956 = vmatpush.msra.mxu0 %v1849
  %1957 = vmatpush.msra.mxu0 %v1848
  %1958 = vmatpush.msra.mxu0 %v1847
  %1959 = vmatpush.msra.mxu0 %v1846
  %1960 = vmatpush.msra.mxu0 %v1845
  %1961 = vmatmul.f32.gmra.mxu0 %v1841
  %v1962 = vpop.f32.mrf.mxu0
  %v1963 = vadd.f32 %v1937, %v1962
  %1964 = vdwg.mxu0
  %1965 = vmatpush.msra.mxu0 %v1876
  %1966 = vmatpush.msra.mxu0 %v1875
  %1967 = vmatpush.msra.mxu0 %v1874
  %1968 = vmatpush.msra.mxu0 %v1873
  %1969 = vmatpush.msra.mxu0 %v1872
  %1970 = vmatpush.msra.mxu0 %v1871
  %1971 = vmatpush.msra.mxu0 %v1870
  %1972 = vmatpush.msra.mxu0 %v1869
  %1973 = vmatpush.msra.mxu0 %v1868
  %1974 = vmatpush.msra.mxu0 %v1867
  %1975 = vmatpush.msra.mxu0 %v1866
  %1976 = vmatpush.msra.mxu0 %v1865
  %1977 = vmatpush.msra.mxu0 %v1864
  %1978 = vmatpush.msra.mxu0 %v1863
  %1979 = vmatpush.msra.mxu0 %v1862
  %1980 = vmatpush.msra.mxu0 %v1861
  %1981 = vmatmul.f32.gmra.mxu0 %v1842
  %v1982 = vpop.f32.mrf.mxu0
  %v1983 = vadd.f32 %v1963, %v1982
  %1984 = vdwg.mxu0
  %1985 = vmatpush.msra.mxu0 %v1892
  %1986 = vmatpush.msra.mxu0 %v1891
  %1987 = vmatpush.msra.mxu0 %v1890
  %1988 = vmatpush.msra.mxu0 %v1889
  %1989 = vmatpush.msra.mxu0 %v1888
  %1990 = vmatpush.msra.mxu0 %v1887
  %1991 = vmatpush.msra.mxu0 %v1886
  %1992 = vmatpush.msra.mxu0 %v1885
  %1993 = vmatpush.msra.mxu0 %v1884
  %1994 = vmatpush.msra.mxu0 %v1883
  %1995 = vmatpush.msra.mxu0 %v1882
  %1996 = vmatpush.msra.mxu0 %v1881
  %1997 = vmatpush.msra.mxu0 %v1880
  %1998 = vmatpush.msra.mxu0 %v1879
  %1999 = vmatpush.msra.mxu0 %v1878
  %2000 = vmatpush.msra.mxu0 %v1877
  %2001 = vmatmul.f32.gmra.mxu0 %v1843
  %v2002 = vpop.f32.mrf.mxu0
  %v2003 = vadd.f32 %v1983, %v2002
  %2004 = vdwg.mxu0
  %2005 = vmatpush.msra.mxu0 0.0
  %2006 = vmatpush.msra.mxu0 %v1943
  %2007 = vmatpush.msra.mxu0 %v1906
  %2008 = vmatpush.msra.mxu0 %v1905
  %2009 = vmatpush.msra.mxu0 %v1904
  %2010 = vmatpush.msra.mxu0 %v1903
  %2011 = vmatpush.msra.mxu0 %v1902
  %2012 = vmatpush.msra.mxu0 %v1901
  %2013 = vmatpush.msra.mxu0 %v1900
  %2014 = vmatpush.msra.mxu0 %v1899
  %2015 = vmatpush.msra.mxu0 %v1898
  %2016 = vmatpush.msra.mxu0 %v1897
  %2017 = vmatpush.msra.mxu0 %v1896
  %2018 = vmatpush.msra.mxu0 %v1895
  %2019 = vmatpush.msra.mxu0 %v1894
  %2020 = vmatpush.msra.mxu0 %v1893
  %2021 = vmatmul.f32.gmra.mxu0 %v1940
  %v2022 = vpop.f32.mrf.mxu0
  %v2023 = vadd.f32 %v2003, %v2022
  %2024 = vdwg.mxu0
  %v2025 = vld [vmem:[%s10] sm:$0x1]
  %v2027 = vperm.slane %v2025, 0
  %v2029 = vadd.f32 %v2023, %v2027
  %v2030 = vld [vmem:[%s11] sm:$0xff]
  %v2031 = vld [vmem:[%s11 + $0x8] sm:$0xff]
  %v2032 = vld [vmem:[%s11 + $0x10] sm:$0xff]
  %v2033 = vld [vmem:[%s11 + $0x18] sm:$0xff]
  %v2034 = vld [vmem:[%s11 + $0x20] sm:$0xff]
  %v2035 = vld [vmem:[%s11 + $0x28] sm:$0xff]
  %v2036 = vld [vmem:[%s11 + $0x30] sm:$0xff]
  %v2037 = vld [vmem:[%s11 + $0x38] sm:$0xff]
  %v2038 = vld [vmem:[%s11 + $0x40] sm:$0xff]
  %v2039 = vld [vmem:[%s11 + $0x48] sm:$0xff]
  %v2040 = vld [vmem:[%s11 + $0x50] sm:$0xff]
  %v2041 = vld [vmem:[%s11 + $0x58] sm:$0xff]
  %v2042 = vld [vmem:[%s11 + $0x60] sm:$0xff]
  %v2043 = vld [vmem:[%s11 + $0x68] sm:$0xff]
  %v2044 = vld [vmem:[%s11 + $0x70] sm:$0xff]
  %v2045 = vld [vmem:[%s11 + $0x78] sm:$0xff]
  %v2046 = vld [vmem:[%s12] sm:$0x1]
  %v2048 = vperm.slane %v2046, 0
  %2050 = vmatpush.msra.mxu0 %v2045
  %2051 = vmatpush.msra.mxu0 %v2044
  %2052 = vmatpush.msra.mxu0 %v2043
  %2053 = vmatpush.msra.mxu0 %v2042
  %2054 = vmatpush.msra.mxu0 %v2041
  %2055 = vmatpush.msra.mxu0 %v2040
  %2056 = vmatpush.msra.mxu0 %v2039
  %2057 = vmatpush.msra.mxu0 %v2038
  %2058 = vmatpush.msra.mxu0 %v2037
  %2059 = vmatpush.msra.mxu0 %v2036
  %2060 = vmatpush.msra.mxu0 %v2035
  %2061 = vmatpush.msra.mxu0 %v2034
  %2062 = vmatpush.msra.mxu0 %v2033
  %2063 = vmatpush.msra.mxu0 %v2032
  %2064 = vmatpush.msra.mxu0 %v2031
  %2065 = vmatpush.msra.mxu0 %v2030
  %2066 = vmatmul.f32.gmra.mxu0 %v2029
  %v2067 = vpop.f32.mrf.mxu0
  %v2068 = vadd.f32 %v2048, %v2067
  %2069 = vdwg.mxu0
  %vm2070 = vcmask 519168
  %2071 = vst.msk [vmem:[#allocation3] sm:$0xf] %vm2070, %v2068
  %v2072 = vld [vmem:[#allocation3] sm:$0x3]
  %v2073 = vld [vmem:[#allocation3 + $0x2] sm:$0x3]
  %v2074 = vld [vmem:[%s14] sm:$0xff]
  %v2075 = vld [vmem:[%s14 + $0x8] sm:$0xff]
  %v2076 = vld [vmem:[%s14 + $0x10] sm:$0xff]
  %v2077 = vld [vmem:[%s14 + $0x18] sm:$0xff]
  %v2078 = vld [vmem:[%s14 + $0x20] sm:$0xff]
  %v2079 = vld [vmem:[%s14 + $0x28] sm:$0xff]
  %v2080 = vld [vmem:[%s14 + $0x30] sm:$0xff]
  %v2081 = vld [vmem:[%s14 + $0x38] sm:$0xff]
  %v2082 = vld [vmem:[%s16] sm:$0xff]
  %v2083 = vld [vmem:[%s16 + $0x8] sm:$0xff]
  %v2084 = vld [vmem:[%s16 + $0x10] sm:$0xff]
  %v2085 = vld [vmem:[%s16 + $0x18] sm:$0xff]
  %v2086 = vld [vmem:[%s16 + $0x20] sm:$0xff]
  %v2087 = vld [vmem:[%s16 + $0x28] sm:$0xff]
  %v2088 = vld [vmem:[%s16 + $0x30] sm:$0xff]
  %v2089 = vld [vmem:[%s16 + $0x38] sm:$0xff]
  %vm2090 = vcmask 523264
  %v2092 = vsel %vm2090, %v2073, 0
  %2094 = vmatpush.msra.mxu0 0.0
  %2095 = vmatpush.msra.mxu0 0.0
  %2096 = vmatpush.msra.mxu0 0.0
  %2097 = vmatpush.msra.mxu0 0.0
  %2098 = vmatpush.msra.mxu0 0.0
  %2099 = vmatpush.msra.mxu0 0.0
  %2100 = vmatpush.msra.mxu0 0.0
  %2101 = vmatpush.msra.mxu0 0.0
  %2102 = vmatpush.msra.mxu0 %v2089
  %2103 = vmatpush.msra.mxu0 %v2088
  %2104 = vmatpush.msra.mxu0 %v2087
  %2105 = vmatpush.msra.mxu0 %v2086
  %2106 = vmatpush.msra.mxu0 %v2085
  %2107 = vmatpush.msra.mxu0 %v2084
  %2108 = vmatpush.msra.mxu0 %v2083
  %2109 = vmatpush.msra.mxu0 %v2082
  %2110 = vmatmul.f32.gmra.mxu0 %v2092
  %v2111 = vpop.f32.mrf.mxu0
  %v2112 = vadd.f32 0.0, %v2111
  %2113 = vdwg.mxu0
  %v2115 = vsel %vm2090, %v2072, 0
  %2117 = vmatpush.msra.mxu0 0.0
  %2118 = vmatpush.msra.mxu0 0.0
  %2119 = vmatpush.msra.mxu0 0.0
  %2120 = vmatpush.msra.mxu0 0.0
  %2121 = vmatpush.msra.mxu0 0.0
  %2122 = vmatpush.msra.mxu0 0.0
  %2123 = vmatpush.msra.mxu0 0.0
  %2124 = vmatpush.msra.mxu0 0.0
  %2125 = vmatpush.msra.mxu0 %v2081
  %2126 = vmatpush.msra.mxu0 %v2080
  %2127 = vmatpush.msra.mxu0 %v2079
  %2128 = vmatpush.msra.mxu0 %v2078
  %2129 = vmatpush.msra.mxu0 %v2077
  %2130 = vmatpush.msra.mxu0 %v2076
  %2131 = vmatpush.msra.mxu0 %v2075
  %2132 = vmatpush.msra.mxu0 %v2074
  %2133 = vmatmul.f32.gmra.mxu0 %v2115
  %v2134 = vpop.f32.mrf.mxu0
  %v2135 = vadd.f32 %v2112, %v2134
  %2136 = vdwg.mxu0
  %v2137 = vld [vmem:[%s13] sm:$0x3]
  %v2138 = vld [vmem:[%s15] sm:$0x1]
  %2140 = vset.pattern.permute.xlu0 0
  %2141 = vperm.xlu0 %2140, %v2137
  %v2142 = vpop.permute.xlu0 %2141
  %v2145 = vperm.slane %v2138, 0
  %v2147 = vmul.f32 %v2142, %v2145
  %v2148 = vadd.f32 %v2135, %v2147
  %v2149 = vld [vmem:[%s17] sm:$0x1]
  %v2151 = vperm.slane %v2149, 0
  %v2153 = vadd.f32 %v2148, %v2151
  %v2154 = vsub.f32 0.0, %v2153
  %v2155 = vmul.f32 %v2154, 1.442695
  %v2156 = vpow.pop %v2155
  %v2157 = vadd.f32 %v2156, 1.0
  %v2158 = vrcp.pop %v2157
  %v2159 = vmul.f32 %v2157, %v2158
  %v2160 = vsub.f32 1.0, %v2159
  %v2161 = vmul.f32 %v2158, %v2160
  %v2162 = vadd.f32 %v2158, %v2161
  %vm2163 = vweird.f32 %v2157
  %vm2164 = vweird.f32 %v2158
  %vm2165 = vmor %vm2163, %vm2164
  %v2166 = vsel %vm2165, %v2158, %v2162
  %v2167 = vand.u32 2147483647, %v2157
  %vm2168 = vcmp.eq.f32.partialorder %v2167, 8.507059e+37
  %v2169 = vand.u32 %v2157, 2147483648
  %v2170 = vor.u32 1.1754944e-38, %v2169
  %v2171 = vsel %vm2168, %v2170, %v2166
  %v2172 = vmul.f32 1.0, %v2171
  %v2173 = vld [vmem:[%s18] sm:$0x1]
  %v2175 = vperm.slane %v2173, 0
  %v2177 = vmul.f32 %v2172, %v2175
  %vm2178 = vcmask 517120
  %v2179 = vsel %vm2178, %v2177, 0.0
  %2180 = vadd.xlane.f32.xlu0 %v2179
  %v2181 = vpop.xlane.xlu0 %2180
  %v2182 = vld [vmem:[#allocation4] sm:$0x1]
  %v2184 = vperm.slane %v2182, 0
  %v2186 = vadd.f32 %v2181, %v2184
  %v2187 = vsub.f32 0.0, %v2186
  %v2188 = vmul.f32 %v2187, 1.442695
  %v2189 = vpow.pop %v2188
  %v2190 = vadd.f32 %v2189, 1.0
  %v2191 = vrcp.pop %v2190
  %v2192 = vmul.f32 %v2190, %v2191
  %v2193 = vsub.f32 1.0, %v2192
  %v2194 = vmul.f32 %v2191, %v2193
  %v2195 = vadd.f32 %v2191, %v2194
  %vm2196 = vweird.f32 %v2190
  %vm2197 = vweird.f32 %v2191
  %vm2198 = vmor %vm2196, %vm2197
  %v2199 = vsel %vm2198, %v2191, %v2195
  %v2200 = vand.u32 2147483647, %v2190
  %vm2201 = vcmp.eq.f32.partialorder %v2200, 8.507059e+37
  %v2202 = vand.u32 %v2190, 2147483648
  %v2203 = vor.u32 1.1754944e-38, %v2202
  %v2204 = vsel %vm2201, %v2203, %v2199
  %v2205 = vmul.f32 1.0, %v2204
  %vm2206 = vcmask 1024
  %2207 = vst.msk [vmem:[%s20] sm:$0x3] %vm2206, %v2205
  // Predicated region
  $region82: #{siamese_forward.5} parent=0 // pred_check
    _
  $region83: #{siamese_forward.5} parent=0 // pred_check_branch
    %2209 = sbr.rel (0) target = $region85
  $region84: #{siamese_forward.5} parent=0 // pred_region
    _
  $region85: #{siamese_forward.5} parent=0 // pred_fallthru
    _
  // Predicated region
  $region86: #{siamese_forward.5} parent=0 // pred_check
    _
  $region87: #{siamese_forward.5} parent=0 // pred_check_branch
    %2211 = sbr.rel (0) target = $region89
  $region88: #{siamese_forward.5} parent=0 // pred_region
    _
  $region89: #{siamese_forward.5} parent=0 // pred_fallthru
    _

</llo_original>
